<compile_context>
chip_gen: v6e
topology: v6e:2x2x1
jax: 0.10.0
libtpu: 0.0.40
codegen_flags: <defaults>
</compile_context>

<pallas_src>
import math

import numpy as np
import jax
import jax.numpy as jnp
from jax.experimental import pallas as pl
from jax.experimental.pallas import tpu as pltpu

LANE = 128                    # channel padding / lane-block width
MXU_DTYPE = jnp.bfloat16      # MXU operand dtype (f32 accumulation + epilogue)
ACC_DTYPE = jnp.float32


# ----------------------------------------------------------------------------
# Model configuration (mirrors the PyTorch module layer-by-layer).
# ----------------------------------------------------------------------------
def _out_dim(d, k, s, p):
    return (d + 2 * p - k) // s + 1


def model_config(input_channels, num_classes, patch_size=5):
    p1 = 1 if patch_size == 3 else 0
    layers = [
        dict(name="conv1", cin=1,  cout=20, k=(3, 3, 3), s=(1, 1, 1), p=(p1, p1, p1), relu=True),
        dict(name="pool1", cin=20, cout=20, k=(3, 1, 1), s=(2, 1, 1), p=(1, 0, 0),    relu=False),
        dict(name="conv2", cin=20, cout=35, k=(3, 3, 3), s=(1, 1, 1), p=(1, 0, 0),    relu=True),
        dict(name="pool2", cin=35, cout=35, k=(3, 1, 1), s=(2, 1, 1), p=(1, 0, 0),    relu=False),
        dict(name="conv3", cin=35, cout=35, k=(3, 1, 1), s=(1, 1, 1), p=(1, 0, 0),    relu=True),
        dict(name="conv4", cin=35, cout=35, k=(2, 1, 1), s=(2, 1, 1), p=(1, 0, 0),    relu=True),
    ]
    d, h, w = input_channels, patch_size, patch_size
    for L in layers:
        kd, kh, kw = L["k"]
        sd, sh, sw = L["s"]
        pd, ph, pw = L["p"]
        assert sh == 1 and sw == 1, "spatial strides must be 1 (as in the reference module)"
        assert L["cin"] <= LANE and L["cout"] <= LANE
        L["din"], L["hin"], L["win"] = d, h, w
        L["dout"] = _out_dim(d, kd, sd, pd)
        L["hout"] = _out_dim(h, kh, sh, ph)
        L["wout"] = _out_dim(w, kw, sw, pw)
        d, h, w = L["dout"], L["hout"], L["wout"]
    assert layers[0]["cin"] == 1
    assert num_classes <= LANE
    c_last = layers[-1]["cout"]
    features_size = c_last * d * h * w   # matches torch: x.view(-1, C*D*H*W) on NCDHW
    # The flatten + Linear is expressed as one more "conv" whose kernel covers the whole
    # remaining (D, H, W) volume -> it reuses the generic tap-reduction code path.
    fc_layer = dict(name="fc", cin=c_last, cout=num_classes,
                    k=(d, h, w), s=(1, 1, 1), p=(0, 0, 0), relu=False,
                    din=d, hin=h, win=w, dout=1, hout=1, wout=1)
    return dict(layers=layers, fc_layer=fc_layer,
                features_size=features_size,
                input_channels=input_channels, patch_size=patch_size,
                num_classes=num_classes, d4=d, h4=h, w4=w)


# ----------------------------------------------------------------------------
# Parameter init (kaiming-normal weights, zero biases — as the PyTorch weight_init).
# ----------------------------------------------------------------------------
def init_params(key, cfg):
    params = {}
    keys = jax.random.split(key, len(cfg["layers"]) + 1)
    for k, L in zip(keys[:-1], cfg["layers"]):
        cout, cin = L["cout"], L["cin"]
        kd, kh, kw = L["k"]
        fan_in = cin * kd * kh * kw
        std = math.sqrt(2.0 / fan_in)
        params[L["name"] + "_w"] = std * jax.random.normal(k, (cout, cin, kd, kh, kw), jnp.float32)
        params[L["name"] + "_b"] = jnp.zeros((cout,), jnp.float32)
    fs = cfg["features_size"]
    std = math.sqrt(2.0 / fs)
    params["fc_w"] = std * jax.random.normal(keys[-1], (cfg["num_classes"], fs), jnp.float32)
    params["fc_b"] = jnp.zeros((cfg["num_classes"],), jnp.float32)
    return params


# ----------------------------------------------------------------------------
# One-time weight repacking (channel padding to 128 lanes, tap concatenation,
# conv1 spatial folding, fc flatten-order remap).  Done once at init, never per step.
# ----------------------------------------------------------------------------
def _depth_sel(d_in, d_out, kd, sd, pd):
    """0/1 matrices implementing the depth taps (stride + zero padding folded in)."""
    s = np.zeros((kd, d_out, d_in), np.float32)
    for dd in range(kd):
        for do in range(d_out):
            j = do * sd + dd - pd
            if 0 <= j < d_in:
                s[dd, do, j] = 1.0
    return s


def pack_params(params, cfg):
    ncls = cfg["num_classes"]

    def host(a):
        return np.asarray(jax.device_get(a), np.float32)

    packed = []

    # --- conv1: Cin == 1, so input spatial sites live on lanes and the 3x3 spatial
    #     kernel is folded into a (P*P -> S_out*128) packed weight per depth tap. ---
    L = cfg["layers"][0]
    w = host(params[L["name"] + "_w"])
    b = host(params[L["name"] + "_b"])
    kd, kh, kw = L["k"]
    pd, ph, pw = L["p"]
    din, hin, win = L["din"], L["hin"], L["win"]
    dout, hout, wout = L["dout"], L["hout"], L["wout"]
    cout = L["cout"]
    s_out = hout * wout
    sel1 = _depth_sel(din, dout, kd, L["s"][0], pd)
    w1big = np.zeros((kd, hin * win, s_out * LANE), np.float32)
    for dd in range(kd):
        for ho in range(hout):
            for wo in range(wout):
                so = ho * wout + wo
                for hh in range(kh):
                    for ww in range(kw):
                        hi = ho + hh - ph
                        wi = wo + ww - pw
                        if 0 <= hi < hin and 0 <= wi < win:
                            w1big[dd, hi * win + wi, so * LANE:so * LANE + cout] += w[:, 0, dd, hh, ww]
    b1 = np.zeros((1, s_out * LANE), np.float32)
    for so in range(s_out):
        b1[0, so * LANE:so * LANE + cout] = b
    packed += [jnp.asarray(sel1, MXU_DTYPE),
               jnp.asarray(w1big, MXU_DTYPE),
               jnp.asarray(b1, jnp.float32)]

    # --- pool1 .. conv4, plus the fc expressed as a full-volume conv. ---
    for L in cfg["layers"][1:] + [cfg["fc_layer"]]:
        if L["name"] == "fc":
            fcw = host(params["fc_w"])
            # torch flatten order on (N, C, D, H, W) -> feature = ((c*D + d)*H + h)*W + w
            w = fcw.reshape(ncls, L["cin"], L["k"][0], L["k"][1], L["k"][2])
            b = host(params["fc_b"])
        else:
            w = host(params[L["name"] + "_w"])
            b = host(params[L["name"] + "_b"])
        kd, kh, kw = L["k"]
        cin, cout = L["cin"], L["cout"]
        sel = _depth_sel(L["din"], L["dout"], kd, L["s"][0], L["p"][0])
        ntaps = kh * kw * kd
        wcat = np.zeros((ntaps * LANE, LANE), np.float32)
        ti = 0
        for hh in range(kh):            # tap order (hh, ww, dd) must match the kernel
            for ww in range(kw):
                for dd in range(kd):
                    wcat[ti * LANE:ti * LANE + cin, :cout] = w[:, :, dd, hh, ww].T
                    ti += 1
        brow = np.zeros((1, LANE), np.float32)
        brow[0, :cout] = b
        packed += [jnp.asarray(sel, MXU_DTYPE),
                   jnp.asarray(wcat, MXU_DTYPE),
                   jnp.asarray(brow, jnp.float32)]
    return packed


# ----------------------------------------------------------------------------
# The fused Pallas kernel: whole forward pass for one sample per grid step.
# ----------------------------------------------------------------------------
def _make_kernel(cfg):
    conv1 = cfg["layers"][0]
    rest = cfg["layers"][1:] + [cfg["fc_layer"]]

    def kernel(*refs):
        out_ref = refs[-1]
        x_ref = refs[0]
        sel1_ref, w1_ref, b1_ref = refs[1], refs[2], refs[3]
        layer_refs = []
        idx = 4
        for _ in rest:
            layer_refs.append((refs[idx], refs[idx + 1], refs[idx + 2]))
            idx += 3

        # ---------------- conv1 ----------------
        kd1 = conv1["k"][0]
        d1 = conv1["dout"]
        s1 = conv1["hout"] * conv1["wout"]
        x0 = x_ref[0].astype(MXU_DTYPE)                               # (D0, P*P)
        acc = jnp.zeros((d1, s1 * LANE), ACC_DTYPE)
        for dd in range(kd1):
            shifted = jnp.dot(sel1_ref[dd], x0,
                              preferred_element_type=ACC_DTYPE).astype(MXU_DTYPE)   # (d1, P*P)
            acc = acc + jnp.dot(shifted, w1_ref[dd],
                                preferred_element_type=ACC_DTYPE)                    # (d1, s1*128)
        acc = jnp.maximum(acc + b1_ref[...], 0.0)                      # bias + ReLU, f32
        act = acc.astype(MXU_DTYPE)                                    # lane-dense activation

        # ------------- pool1 .. conv4, fc -------------
        for L, (sel_ref, w_ref, b_ref) in zip(rest, layer_refs):
            kd, kh, kw = L["k"]
            ph, pw = L["p"][1], L["p"][2]
            hin, win = L["hin"], L["win"]
            hout, wout = L["hout"], L["wout"]
            dout = L["dout"]
            # Depth taps (stride-2 + zero-pad folded into 0/1 selection matmuls),
            # applied to the full-width activation -> stays entirely in VMEM.
            taps = [jnp.dot(sel_ref[dd], act,
                            preferred_element_type=ACC_DTYPE).astype(MXU_DTYPE)
                    for dd in range(kd)]                               # (dout, hin*win*128)
            blocks = []
            for ho in range(hout):
                for wo in range(wout):
                    cols = []
                    for hh in range(kh):                               # order (hh, ww, dd)
                        for ww in range(kw):
                            hi = ho + hh - ph
                            wi = wo + ww - pw
                            for dd in range(kd):
                                if 0 <= hi < hin and 0 <= wi < win:
                                    si = hi * win + wi
                                    cols.append(taps[dd][:, si * LANE:(si + 1) * LANE])
                                else:                                  # spatial zero padding
                                    cols.append(jnp.zeros((dout, LANE), MXU_DTYPE))
                    kcat = cols[0] if len(cols) == 1 else jnp.concatenate(cols, axis=1)
                    o = jnp.dot(kcat, w_ref[...],
                                preferred_element_type=ACC_DTYPE)      # (dout, 128), lane-dense
                    o = o + b_ref[...]
                    if L["relu"]:
                        o = jnp.maximum(o, 0.0)
                    blocks.append(o)
            if L is rest[-1]:
                out_ref[0] = blocks[0]                                 # (1, 128) f32 logits block
            else:
                nxt = blocks[0] if len(blocks) == 1 else jnp.concatenate(blocks, axis=1)
                act = nxt.astype(MXU_DTYPE)

    n_inputs = 1 + 3 + 3 * len(rest)
    return kernel, n_inputs


def _const_index_map(ndim):
    def imap(i):
        return (0,) * ndim
    return imap


def _cost(cfg, n, x_bytes, packed):
    flops = 0
    L1 = cfg["layers"][0]
    pp = L1["hin"] * L1["win"]
    s1 = L1["hout"] * L1["wout"]
    flops += L1["k"][0] * 2 * (L1["dout"] * L1["din"] * pp + L1["dout"] * pp * s1 * LANE)
    for L in cfg["layers"][1:] + [cfg["fc_layer"]]:
        kd, kh, kw = L["k"]
        sin = L["hin"] * L["win"]
        sout = L["hout"] * L["wout"]
        flops += kd * 2 * L["dout"] * L["din"] * sin * LANE
        flops += sout * 2 * L["dout"] * (kd * kh * kw * LANE) * LANE
    flops *= n
    bytes_accessed = x_bytes + n * LANE * 4
    bytes_accessed += sum(int(a.size) * a.dtype.itemsize for a in packed)
    return int(flops), int(bytes_accessed)


def make_forward(cfg):
    kernel, n_inputs = _make_kernel(cfg)
    d0 = cfg["input_channels"]
    pp = cfg["patch_size"] * cfg["patch_size"]
    ncls = cfg["num_classes"]

    def fwd(x, packed):
        assert len(packed) == n_inputs - 1
        n = x.shape[0]
        x2 = x.reshape(n, d0, pp).astype(jnp.float32)
        in_specs = [pl.BlockSpec((1, d0, pp), lambda i: (i, 0, 0))]
        for arr in packed:
            # full-array blocks with constant index maps: weights are DMA'd to VMEM once.
            in_specs.append(pl.BlockSpec(arr.shape, _const_index_map(arr.ndim)))
        flops, bytes_accessed = _cost(cfg, n, x2.size * x2.dtype.itemsize, packed)
        out = pl.pallas_call(
            kernel,
            grid=(n,),
            in_specs=in_specs,
            out_specs=pl.BlockSpec((1, 1, LANE), lambda i: (i, 0, 0)),
            out_shape=jax.ShapeDtypeStruct((n, 1, LANE), jnp.float32),
            compiler_params=pltpu.CompilerParams(
                dimension_semantics=("parallel",),      # batch axis -> both TCs on v7x
                vmem_limit_bytes=32 * 1024 * 1024,
            ),
            cost_estimate=pl.CostEstimate(
                flops=flops, transcendentals=0, bytes_accessed=bytes_accessed),
        )(x2, *packed)
        return out[:, 0, :ncls]

    return jax.jit(fwd)


# ----------------------------------------------------------------------------
# Demo / smoke test
# ----------------------------------------------------------------------------
if __name__ == "__main__":
    input_channels = 16   # spectral bands (depth D)
    patch_size = 5
    num_classes = 8
    batch = 2

    cfg = model_config(input_channels, num_classes, patch_size)

    key = jax.random.PRNGKey(0)
    pkey, xkey = jax.random.split(key)
    params = init_params(pkey, cfg)
    packed = pack_params(params, cfg)     # one-time weight repack (bf16, lane-padded)
    forward = make_forward(cfg)

    x = jax.random.normal(
        xkey, (batch, 1, input_channels, patch_size, patch_size), jnp.float32)

    logits = jax.block_until_ready(forward(x, packed))

    assert logits.shape == (batch, num_classes), logits.shape
    assert bool(jnp.all(jnp.isfinite(logits)))
    print("KERNEL_OK")
</pallas_src>

<mosaic_0001>
module attributes {stable_mosaic.version = 11 : i64} {
  func.func @kernel(%arg0: i32, %arg1: memref<1x16x25xf32, #tpu.memory_space<vmem>>, %arg2: memref<3x14x16xbf16, #tpu.memory_space<vmem>>, %arg3: memref<3x25x1152xbf16, #tpu.memory_space<vmem>>, %arg4: memref<1x1152xf32, #tpu.memory_space<vmem>>, %arg5: memref<3x7x14xbf16, #tpu.memory_space<vmem>>, %arg6: memref<384x128xbf16, #tpu.memory_space<vmem>>, %arg7: memref<1x128xf32, #tpu.memory_space<vmem>>, %arg8: memref<3x7x7xbf16, #tpu.memory_space<vmem>>, %arg9: memref<3456x128xbf16, #tpu.memory_space<vmem>>, %arg10: memref<1x128xf32, #tpu.memory_space<vmem>>, %arg11: memref<3x4x7xbf16, #tpu.memory_space<vmem>>, %arg12: memref<384x128xbf16, #tpu.memory_space<vmem>>, %arg13: memref<1x128xf32, #tpu.memory_space<vmem>>, %arg14: memref<3x4x4xbf16, #tpu.memory_space<vmem>>, %arg15: memref<384x128xbf16, #tpu.memory_space<vmem>>, %arg16: memref<1x128xf32, #tpu.memory_space<vmem>>, %arg17: memref<2x3x4xbf16, #tpu.memory_space<vmem>>, %arg18: memref<256x128xbf16, #tpu.memory_space<vmem>>, %arg19: memref<1x128xf32, #tpu.memory_space<vmem>>, %arg20: memref<3x1x3xbf16, #tpu.memory_space<vmem>>, %arg21: memref<384x128xbf16, #tpu.memory_space<vmem>>, %arg22: memref<1x128xf32, #tpu.memory_space<vmem>>, %arg23: memref<1x1x128xf32, #tpu.memory_space<vmem>>) attributes {dimension_semantics = [#tpu.dimension_semantics<parallel>], iteration_bounds = array<i64: 2>, scalar_prefetch = 0 : i64, scratch_operands = 0 : i64, tpu.core_type = #tpu.core_type<tc>, window_params = [{transform_indices = @transform_0, window_bounds = array<i64: 1, 16, 25>}, {pipeline_mode = #tpu.pipeline_mode<synchronous>, transform_indices = @transform_1, window_bounds = array<i64: 3, 14, 16>}, {pipeline_mode = #tpu.pipeline_mode<synchronous>, transform_indices = @transform_2, window_bounds = array<i64: 3, 25, 1152>}, {pipeline_mode = #tpu.pipeline_mode<synchronous>, transform_indices = @transform_3, window_bounds = array<i64: 1, 1152>}, {pipeline_mode = #tpu.pipeline_mode<synchronous>, transform_indices = @transform_4, window_bounds = array<i64: 3, 7, 14>}, {pipeline_mode = #tpu.pipeline_mode<synchronous>, transform_indices = @transform_5, window_bounds = array<i64: 384, 128>}, {pipeline_mode = #tpu.pipeline_mode<synchronous>, transform_indices = @transform_6, window_bounds = array<i64: 1, 128>}, {pipeline_mode = #tpu.pipeline_mode<synchronous>, transform_indices = @transform_7, window_bounds = array<i64: 3, 7, 7>}, {pipeline_mode = #tpu.pipeline_mode<synchronous>, transform_indices = @transform_8, window_bounds = array<i64: 3456, 128>}, {pipeline_mode = #tpu.pipeline_mode<synchronous>, transform_indices = @transform_9, window_bounds = array<i64: 1, 128>}, {pipeline_mode = #tpu.pipeline_mode<synchronous>, transform_indices = @transform_10, window_bounds = array<i64: 3, 4, 7>}, {pipeline_mode = #tpu.pipeline_mode<synchronous>, transform_indices = @transform_11, window_bounds = array<i64: 384, 128>}, {pipeline_mode = #tpu.pipeline_mode<synchronous>, transform_indices = @transform_12, window_bounds = array<i64: 1, 128>}, {pipeline_mode = #tpu.pipeline_mode<synchronous>, transform_indices = @transform_13, window_bounds = array<i64: 3, 4, 4>}, {pipeline_mode = #tpu.pipeline_mode<synchronous>, transform_indices = @transform_14, window_bounds = array<i64: 384, 128>}, {pipeline_mode = #tpu.pipeline_mode<synchronous>, transform_indices = @transform_15, window_bounds = array<i64: 1, 128>}, {pipeline_mode = #tpu.pipeline_mode<synchronous>, transform_indices = @transform_16, window_bounds = array<i64: 2, 3, 4>}, {pipeline_mode = #tpu.pipeline_mode<synchronous>, transform_indices = @transform_17, window_bounds = array<i64: 256, 128>}, {pipeline_mode = #tpu.pipeline_mode<synchronous>, transform_indices = @transform_18, window_bounds = array<i64: 1, 128>}, {pipeline_mode = #tpu.pipeline_mode<synchronous>, transform_indices = @transform_19, window_bounds = array<i64: 3, 1, 3>}, {pipeline_mode = #tpu.pipeline_mode<synchronous>, transform_indices = @transform_20, window_bounds = array<i64: 384, 128>}, {pipeline_mode = #tpu.pipeline_mode<synchronous>, transform_indices = @transform_21, window_bounds = array<i64: 1, 128>}, {transform_indices = @transform_22, window_bounds = array<i64: 1, 1, 128>}]} {
    %c0 = arith.constant 0 : index
    %c0_0 = arith.constant 0 : index
    %c0_1 = arith.constant 0 : index
    %0 = vector.load %arg1[%c0, %c0_0, %c0_1] : memref<1x16x25xf32, #tpu.memory_space<vmem>>, vector<1x16x25xf32>
    %1 = vector.shape_cast %0 : vector<1x16x25xf32> to vector<16x25xf32>
    %2 = arith.truncf %1 : vector<16x25xf32> to vector<16x25xbf16>
    %cst = arith.constant 0.000000e+00 : f32
    %3 = vector.broadcast %cst : f32 to vector<14x1152xf32>
    %c0_2 = arith.constant 0 : index
    %c0_3 = arith.constant 0 : index
    %c0_4 = arith.constant 0 : index
    %4 = vector.load %arg2[%c0_2, %c0_3, %c0_4] : memref<3x14x16xbf16, #tpu.memory_space<vmem>>, vector<1x14x16xbf16>
    %5 = vector.shape_cast %4 : vector<1x14x16xbf16> to vector<14x16xbf16>
    %cst_5 = arith.constant dense<0.000000e+00> : vector<14x25xf32>
    %6 = tpu.matmul %5, %2, %cst_5 {dimension_numbers = #tpu.dot_dimension_numbers<[1], [0], [0], [1], [0, 0, 1, 1], [], []>} : vector<14x16xbf16>, vector<16x25xbf16>, vector<14x25xf32> -> vector<14x25xf32>
    %7 = arith.truncf %6 : vector<14x25xf32> to vector<14x25xbf16>
    %c0_6 = arith.constant 0 : index
    %c0_7 = arith.constant 0 : index
    %c0_8 = arith.constant 0 : index
    %8 = vector.load %arg3[%c0_6, %c0_7, %c0_8] : memref<3x25x1152xbf16, #tpu.memory_space<vmem>>, vector<1x25x1152xbf16>
    %9 = vector.shape_cast %8 : vector<1x25x1152xbf16> to vector<25x1152xbf16>
    %cst_9 = arith.constant dense<0.000000e+00> : vector<14x1152xf32>
    %10 = tpu.matmul %7, %9, %cst_9 {dimension_numbers = #tpu.dot_dimension_numbers<[1], [0], [0], [1], [0, 0, 1, 1], [], []>} : vector<14x25xbf16>, vector<25x1152xbf16>, vector<14x1152xf32> -> vector<14x1152xf32>
    %11 = arith.addf %3, %10 : vector<14x1152xf32>
    %c1 = arith.constant 1 : index
    %c0_10 = arith.constant 0 : index
    %c0_11 = arith.constant 0 : index
    %12 = vector.load %arg2[%c1, %c0_10, %c0_11] : memref<3x14x16xbf16, #tpu.memory_space<vmem>>, vector<1x14x16xbf16>
    %13 = vector.shape_cast %12 : vector<1x14x16xbf16> to vector<14x16xbf16>
    %cst_12 = arith.constant dense<0.000000e+00> : vector<14x25xf32>
    %14 = tpu.matmul %13, %2, %cst_12 {dimension_numbers = #tpu.dot_dimension_numbers<[1], [0], [0], [1], [0, 0, 1, 1], [], []>} : vector<14x16xbf16>, vector<16x25xbf16>, vector<14x25xf32> -> vector<14x25xf32>
    %15 = arith.truncf %14 : vector<14x25xf32> to vector<14x25xbf16>
    %c1_13 = arith.constant 1 : index
    %c0_14 = arith.constant 0 : index
    %c0_15 = arith.constant 0 : index
    %16 = vector.load %arg3[%c1_13, %c0_14, %c0_15] : memref<3x25x1152xbf16, #tpu.memory_space<vmem>>, vector<1x25x1152xbf16>
    %17 = vector.shape_cast %16 : vector<1x25x1152xbf16> to vector<25x1152xbf16>
    %cst_16 = arith.constant dense<0.000000e+00> : vector<14x1152xf32>
    %18 = tpu.matmul %15, %17, %cst_16 {dimension_numbers = #tpu.dot_dimension_numbers<[1], [0], [0], [1], [0, 0, 1, 1], [], []>} : vector<14x25xbf16>, vector<25x1152xbf16>, vector<14x1152xf32> -> vector<14x1152xf32>
    %19 = arith.addf %11, %18 : vector<14x1152xf32>
    %c2 = arith.constant 2 : index
    %c0_17 = arith.constant 0 : index
    %c0_18 = arith.constant 0 : index
    %20 = vector.load %arg2[%c2, %c0_17, %c0_18] : memref<3x14x16xbf16, #tpu.memory_space<vmem>>, vector<1x14x16xbf16>
    %21 = vector.shape_cast %20 : vector<1x14x16xbf16> to vector<14x16xbf16>
    %cst_19 = arith.constant dense<0.000000e+00> : vector<14x25xf32>
    %22 = tpu.matmul %21, %2, %cst_19 {dimension_numbers = #tpu.dot_dimension_numbers<[1], [0], [0], [1], [0, 0, 1, 1], [], []>} : vector<14x16xbf16>, vector<16x25xbf16>, vector<14x25xf32> -> vector<14x25xf32>
    %23 = arith.truncf %22 : vector<14x25xf32> to vector<14x25xbf16>
    %c2_20 = arith.constant 2 : index
    %c0_21 = arith.constant 0 : index
    %c0_22 = arith.constant 0 : index
    %24 = vector.load %arg3[%c2_20, %c0_21, %c0_22] : memref<3x25x1152xbf16, #tpu.memory_space<vmem>>, vector<1x25x1152xbf16>
    %25 = vector.shape_cast %24 : vector<1x25x1152xbf16> to vector<25x1152xbf16>
    %cst_23 = arith.constant dense<0.000000e+00> : vector<14x1152xf32>
    %26 = tpu.matmul %23, %25, %cst_23 {dimension_numbers = #tpu.dot_dimension_numbers<[1], [0], [0], [1], [0, 0, 1, 1], [], []>} : vector<14x25xbf16>, vector<25x1152xbf16>, vector<14x1152xf32> -> vector<14x1152xf32>
    %27 = arith.addf %19, %26 : vector<14x1152xf32>
    %c0_24 = arith.constant 0 : index
    %c0_25 = arith.constant 0 : index
    %28 = vector.load %arg4[%c0_24, %c0_25] : memref<1x1152xf32, #tpu.memory_space<vmem>>, vector<1x1152xf32>
    %29 = vector.broadcast %28 : vector<1x1152xf32> to vector<14x1152xf32>
    %30 = arith.addf %27, %29 : vector<14x1152xf32>
    %cst_26 = arith.constant 0.000000e+00 : f32
    %31 = vector.broadcast %cst_26 : f32 to vector<14x1152xf32>
    %32 = arith.maximumf %30, %31 : vector<14x1152xf32>
    %33 = arith.truncf %32 : vector<14x1152xf32> to vector<14x1152xbf16>
    %c0_27 = arith.constant 0 : index
    %c0_28 = arith.constant 0 : index
    %c0_29 = arith.constant 0 : index
    %34 = vector.load %arg5[%c0_27, %c0_28, %c0_29] : memref<3x7x14xbf16, #tpu.memory_space<vmem>>, vector<1x7x14xbf16>
    %35 = vector.shape_cast %34 : vector<1x7x14xbf16> to vector<7x14xbf16>
    %cst_30 = arith.constant dense<0.000000e+00> : vector<7x1152xf32>
    %36 = tpu.matmul %35, %33, %cst_30 {dimension_numbers = #tpu.dot_dimension_numbers<[1], [0], [0], [1], [0, 0, 1, 1], [], []>} : vector<7x14xbf16>, vector<14x1152xbf16>, vector<7x1152xf32> -> vector<7x1152xf32>
    %37 = arith.truncf %36 : vector<7x1152xf32> to vector<7x1152xbf16>
    %c1_31 = arith.constant 1 : index
    %c0_32 = arith.constant 0 : index
    %c0_33 = arith.constant 0 : index
    %38 = vector.load %arg5[%c1_31, %c0_32, %c0_33] : memref<3x7x14xbf16, #tpu.memory_space<vmem>>, vector<1x7x14xbf16>
    %39 = vector.shape_cast %38 : vector<1x7x14xbf16> to vector<7x14xbf16>
    %cst_34 = arith.constant dense<0.000000e+00> : vector<7x1152xf32>
    %40 = tpu.matmul %39, %33, %cst_34 {dimension_numbers = #tpu.dot_dimension_numbers<[1], [0], [0], [1], [0, 0, 1, 1], [], []>} : vector<7x14xbf16>, vector<14x1152xbf16>, vector<7x1152xf32> -> vector<7x1152xf32>
    %41 = arith.truncf %40 : vector<7x1152xf32> to vector<7x1152xbf16>
    %c2_35 = arith.constant 2 : index
    %c0_36 = arith.constant 0 : index
    %c0_37 = arith.constant 0 : index
    %42 = vector.load %arg5[%c2_35, %c0_36, %c0_37] : memref<3x7x14xbf16, #tpu.memory_space<vmem>>, vector<1x7x14xbf16>
    %43 = vector.shape_cast %42 : vector<1x7x14xbf16> to vector<7x14xbf16>
    %cst_38 = arith.constant dense<0.000000e+00> : vector<7x1152xf32>
    %44 = tpu.matmul %43, %33, %cst_38 {dimension_numbers = #tpu.dot_dimension_numbers<[1], [0], [0], [1], [0, 0, 1, 1], [], []>} : vector<7x14xbf16>, vector<14x1152xbf16>, vector<7x1152xf32> -> vector<7x1152xf32>
    %45 = arith.truncf %44 : vector<7x1152xf32> to vector<7x1152xbf16>
    %46 = vector.extract_strided_slice %37 {offsets = [0, 0], sizes = [7, 128], strides = [1, 1]} : vector<7x1152xbf16> to vector<7x128xbf16>
    %47 = vector.extract_strided_slice %41 {offsets = [0, 0], sizes = [7, 128], strides = [1, 1]} : vector<7x1152xbf16> to vector<7x128xbf16>
    %48 = vector.extract_strided_slice %45 {offsets = [0, 0], sizes = [7, 128], strides = [1, 1]} : vector<7x1152xbf16> to vector<7x128xbf16>
    %49 = tpu.concatenate %46, %47, %48 in 1 : vector<7x128xbf16>, vector<7x128xbf16>, vector<7x128xbf16> -> vector<7x384xbf16>
    %c0_39 = arith.constant 0 : index
    %c0_40 = arith.constant 0 : index
    %50 = vector.load %arg6[%c0_39, %c0_40] : memref<384x128xbf16, #tpu.memory_space<vmem>>, vector<384x128xbf16>
    %cst_41 = arith.constant dense<0.000000e+00> : vector<7x128xf32>
    %51 = tpu.matmul %49, %50, %cst_41 {dimension_numbers = #tpu.dot_dimension_numbers<[1], [0], [0], [1], [0, 0, 1, 1], [], []>} : vector<7x384xbf16>, vector<384x128xbf16>, vector<7x128xf32> -> vector<7x128xf32>
    %c0_42 = arith.constant 0 : index
    %c0_43 = arith.constant 0 : index
    %52 = vector.load %arg7[%c0_42, %c0_43] : memref<1x128xf32, #tpu.memory_space<vmem>>, vector<1x128xf32>
    %53 = vector.broadcast %52 : vector<1x128xf32> to vector<7x128xf32>
    %54 = arith.addf %51, %53 : vector<7x128xf32>
    %55 = vector.extract_strided_slice %37 {offsets = [0, 128], sizes = [7, 128], strides = [1, 1]} : vector<7x1152xbf16> to vector<7x128xbf16>
    %56 = vector.extract_strided_slice %41 {offsets = [0, 128], sizes = [7, 128], strides = [1, 1]} : vector<7x1152xbf16> to vector<7x128xbf16>
    %57 = vector.extract_strided_slice %45 {offsets = [0, 128], sizes = [7, 128], strides = [1, 1]} : vector<7x1152xbf16> to vector<7x128xbf16>
    %58 = tpu.concatenate %55, %56, %57 in 1 : vector<7x128xbf16>, vector<7x128xbf16>, vector<7x128xbf16> -> vector<7x384xbf16>
    %c0_44 = arith.constant 0 : index
    %c0_45 = arith.constant 0 : index
    %59 = vector.load %arg6[%c0_44, %c0_45] : memref<384x128xbf16, #tpu.memory_space<vmem>>, vector<384x128xbf16>
    %cst_46 = arith.constant dense<0.000000e+00> : vector<7x128xf32>
    %60 = tpu.matmul %58, %59, %cst_46 {dimension_numbers = #tpu.dot_dimension_numbers<[1], [0], [0], [1], [0, 0, 1, 1], [], []>} : vector<7x384xbf16>, vector<384x128xbf16>, vector<7x128xf32> -> vector<7x128xf32>
    %c0_47 = arith.constant 0 : index
    %c0_48 = arith.constant 0 : index
    %61 = vector.load %arg7[%c0_47, %c0_48] : memref<1x128xf32, #tpu.memory_space<vmem>>, vector<1x128xf32>
    %62 = vector.broadcast %61 : vector<1x128xf32> to vector<7x128xf32>
    %63 = arith.addf %60, %62 : vector<7x128xf32>
    %64 = vector.extract_strided_slice %37 {offsets = [0, 256], sizes = [7, 128], strides = [1, 1]} : vector<7x1152xbf16> to vector<7x128xbf16>
    %65 = vector.extract_strided_slice %41 {offsets = [0, 256], sizes = [7, 128], strides = [1, 1]} : vector<7x1152xbf16> to vector<7x128xbf16>
    %66 = vector.extract_strided_slice %45 {offsets = [0, 256], sizes = [7, 128], strides = [1, 1]} : vector<7x1152xbf16> to vector<7x128xbf16>
    %67 = tpu.concatenate %64, %65, %66 in 1 : vector<7x128xbf16>, vector<7x128xbf16>, vector<7x128xbf16> -> vector<7x384xbf16>
    %c0_49 = arith.constant 0 : index
    %c0_50 = arith.constant 0 : index
    %68 = vector.load %arg6[%c0_49, %c0_50] : memref<384x128xbf16, #tpu.memory_space<vmem>>, vector<384x128xbf16>
    %cst_51 = arith.constant dense<0.000000e+00> : vector<7x128xf32>
    %69 = tpu.matmul %67, %68, %cst_51 {dimension_numbers = #tpu.dot_dimension_numbers<[1], [0], [0], [1], [0, 0, 1, 1], [], []>} : vector<7x384xbf16>, vector<384x128xbf16>, vector<7x128xf32> -> vector<7x128xf32>
    %c0_52 = arith.constant 0 : index
    %c0_53 = arith.constant 0 : index
    %70 = vector.load %arg7[%c0_52, %c0_53] : memref<1x128xf32, #tpu.memory_space<vmem>>, vector<1x128xf32>
    %71 = vector.broadcast %70 : vector<1x128xf32> to vector<7x128xf32>
    %72 = arith.addf %69, %71 : vector<7x128xf32>
    %73 = vector.extract_strided_slice %37 {offsets = [0, 384], sizes = [7, 128], strides = [1, 1]} : vector<7x1152xbf16> to vector<7x128xbf16>
    %74 = vector.extract_strided_slice %41 {offsets = [0, 384], sizes = [7, 128], strides = [1, 1]} : vector<7x1152xbf16> to vector<7x128xbf16>
    %75 = vector.extract_strided_slice %45 {offsets = [0, 384], sizes = [7, 128], strides = [1, 1]} : vector<7x1152xbf16> to vector<7x128xbf16>
    %76 = tpu.concatenate %73, %74, %75 in 1 : vector<7x128xbf16>, vector<7x128xbf16>, vector<7x128xbf16> -> vector<7x384xbf16>
    %c0_54 = arith.constant 0 : index
    %c0_55 = arith.constant 0 : index
    %77 = vector.load %arg6[%c0_54, %c0_55] : memref<384x128xbf16, #tpu.memory_space<vmem>>, vector<384x128xbf16>
    %cst_56 = arith.constant dense<0.000000e+00> : vector<7x128xf32>
    %78 = tpu.matmul %76, %77, %cst_56 {dimension_numbers = #tpu.dot_dimension_numbers<[1], [0], [0], [1], [0, 0, 1, 1], [], []>} : vector<7x384xbf16>, vector<384x128xbf16>, vector<7x128xf32> -> vector<7x128xf32>
    %c0_57 = arith.constant 0 : index
    %c0_58 = arith.constant 0 : index
    %79 = vector.load %arg7[%c0_57, %c0_58] : memref<1x128xf32, #tpu.memory_space<vmem>>, vector<1x128xf32>
    %80 = vector.broadcast %79 : vector<1x128xf32> to vector<7x128xf32>
    %81 = arith.addf %78, %80 : vector<7x128xf32>
    %82 = vector.extract_strided_slice %37 {offsets = [0, 512], sizes = [7, 128], strides = [1, 1]} : vector<7x1152xbf16> to vector<7x128xbf16>
    %83 = vector.extract_strided_slice %41 {offsets = [0, 512], sizes = [7, 128], strides = [1, 1]} : vector<7x1152xbf16> to vector<7x128xbf16>
    %84 = vector.extract_strided_slice %45 {offsets = [0, 512], sizes = [7, 128], strides = [1, 1]} : vector<7x1152xbf16> to vector<7x128xbf16>
    %85 = tpu.concatenate %82, %83, %84 in 1 : vector<7x128xbf16>, vector<7x128xbf16>, vector<7x128xbf16> -> vector<7x384xbf16>
    %c0_59 = arith.constant 0 : index
    %c0_60 = arith.constant 0 : index
    %86 = vector.load %arg6[%c0_59, %c0_60] : memref<384x128xbf16, #tpu.memory_space<vmem>>, vector<384x128xbf16>
    %cst_61 = arith.constant dense<0.000000e+00> : vector<7x128xf32>
    %87 = tpu.matmul %85, %86, %cst_61 {dimension_numbers = #tpu.dot_dimension_numbers<[1], [0], [0], [1], [0, 0, 1, 1], [], []>} : vector<7x384xbf16>, vector<384x128xbf16>, vector<7x128xf32> -> vector<7x128xf32>
    %c0_62 = arith.constant 0 : index
    %c0_63 = arith.constant 0 : index
    %88 = vector.load %arg7[%c0_62, %c0_63] : memref<1x128xf32, #tpu.memory_space<vmem>>, vector<1x128xf32>
    %89 = vector.broadcast %88 : vector<1x128xf32> to vector<7x128xf32>
    %90 = arith.addf %87, %89 : vector<7x128xf32>
    %91 = vector.extract_strided_slice %37 {offsets = [0, 640], sizes = [7, 128], strides = [1, 1]} : vector<7x1152xbf16> to vector<7x128xbf16>
    %92 = vector.extract_strided_slice %41 {offsets = [0, 640], sizes = [7, 128], strides = [1, 1]} : vector<7x1152xbf16> to vector<7x128xbf16>
    %93 = vector.extract_strided_slice %45 {offsets = [0, 640], sizes = [7, 128], strides = [1, 1]} : vector<7x1152xbf16> to vector<7x128xbf16>
    %94 = tpu.concatenate %91, %92, %93 in 1 : vector<7x128xbf16>, vector<7x128xbf16>, vector<7x128xbf16> -> vector<7x384xbf16>
    %c0_64 = arith.constant 0 : index
    %c0_65 = arith.constant 0 : index
    %95 = vector.load %arg6[%c0_64, %c0_65] : memref<384x128xbf16, #tpu.memory_space<vmem>>, vector<384x128xbf16>
    %cst_66 = arith.constant dense<0.000000e+00> : vector<7x128xf32>
    %96 = tpu.matmul %94, %95, %cst_66 {dimension_numbers = #tpu.dot_dimension_numbers<[1], [0], [0], [1], [0, 0, 1, 1], [], []>} : vector<7x384xbf16>, vector<384x128xbf16>, vector<7x128xf32> -> vector<7x128xf32>
    %c0_67 = arith.constant 0 : index
    %c0_68 = arith.constant 0 : index
    %97 = vector.load %arg7[%c0_67, %c0_68] : memref<1x128xf32, #tpu.memory_space<vmem>>, vector<1x128xf32>
    %98 = vector.broadcast %97 : vector<1x128xf32> to vector<7x128xf32>
    %99 = arith.addf %96, %98 : vector<7x128xf32>
    %100 = vector.extract_strided_slice %37 {offsets = [0, 768], sizes = [7, 128], strides = [1, 1]} : vector<7x1152xbf16> to vector<7x128xbf16>
    %101 = vector.extract_strided_slice %41 {offsets = [0, 768], sizes = [7, 128], strides = [1, 1]} : vector<7x1152xbf16> to vector<7x128xbf16>
    %102 = vector.extract_strided_slice %45 {offsets = [0, 768], sizes = [7, 128], strides = [1, 1]} : vector<7x1152xbf16> to vector<7x128xbf16>
    %103 = tpu.concatenate %100, %101, %102 in 1 : vector<7x128xbf16>, vector<7x128xbf16>, vector<7x128xbf16> -> vector<7x384xbf16>
    %c0_69 = arith.constant 0 : index
    %c0_70 = arith.constant 0 : index
    %104 = vector.load %arg6[%c0_69, %c0_70] : memref<384x128xbf16, #tpu.memory_space<vmem>>, vector<384x128xbf16>
    %cst_71 = arith.constant dense<0.000000e+00> : vector<7x128xf32>
    %105 = tpu.matmul %103, %104, %cst_71 {dimension_numbers = #tpu.dot_dimension_numbers<[1], [0], [0], [1], [0, 0, 1, 1], [], []>} : vector<7x384xbf16>, vector<384x128xbf16>, vector<7x128xf32> -> vector<7x128xf32>
    %c0_72 = arith.constant 0 : index
    %c0_73 = arith.constant 0 : index
    %106 = vector.load %arg7[%c0_72, %c0_73] : memref<1x128xf32, #tpu.memory_space<vmem>>, vector<1x128xf32>
    %107 = vector.broadcast %106 : vector<1x128xf32> to vector<7x128xf32>
    %108 = arith.addf %105, %107 : vector<7x128xf32>
    %109 = vector.extract_strided_slice %37 {offsets = [0, 896], sizes = [7, 128], strides = [1, 1]} : vector<7x1152xbf16> to vector<7x128xbf16>
    %110 = vector.extract_strided_slice %41 {offsets = [0, 896], sizes = [7, 128], strides = [1, 1]} : vector<7x1152xbf16> to vector<7x128xbf16>
    %111 = vector.extract_strided_slice %45 {offsets = [0, 896], sizes = [7, 128], strides = [1, 1]} : vector<7x1152xbf16> to vector<7x128xbf16>
    %112 = tpu.concatenate %109, %110, %111 in 1 : vector<7x128xbf16>, vector<7x128xbf16>, vector<7x128xbf16> -> vector<7x384xbf16>
    %c0_74 = arith.constant 0 : index
    %c0_75 = arith.constant 0 : index
    %113 = vector.load %arg6[%c0_74, %c0_75] : memref<384x128xbf16, #tpu.memory_space<vmem>>, vector<384x128xbf16>
    %cst_76 = arith.constant dense<0.000000e+00> : vector<7x128xf32>
    %114 = tpu.matmul %112, %113, %cst_76 {dimension_numbers = #tpu.dot_dimension_numbers<[1], [0], [0], [1], [0, 0, 1, 1], [], []>} : vector<7x384xbf16>, vector<384x128xbf16>, vector<7x128xf32> -> vector<7x128xf32>
    %c0_77 = arith.constant 0 : index
    %c0_78 = arith.constant 0 : index
    %115 = vector.load %arg7[%c0_77, %c0_78] : memref<1x128xf32, #tpu.memory_space<vmem>>, vector<1x128xf32>
    %116 = vector.broadcast %115 : vector<1x128xf32> to vector<7x128xf32>
    %117 = arith.addf %114, %116 : vector<7x128xf32>
    %118 = vector.extract_strided_slice %37 {offsets = [0, 1024], sizes = [7, 128], strides = [1, 1]} : vector<7x1152xbf16> to vector<7x128xbf16>
    %119 = vector.extract_strided_slice %41 {offsets = [0, 1024], sizes = [7, 128], strides = [1, 1]} : vector<7x1152xbf16> to vector<7x128xbf16>
    %120 = vector.extract_strided_slice %45 {offsets = [0, 1024], sizes = [7, 128], strides = [1, 1]} : vector<7x1152xbf16> to vector<7x128xbf16>
    %121 = tpu.concatenate %118, %119, %120 in 1 : vector<7x128xbf16>, vector<7x128xbf16>, vector<7x128xbf16> -> vector<7x384xbf16>
    %c0_79 = arith.constant 0 : index
    %c0_80 = arith.constant 0 : index
    %122 = vector.load %arg6[%c0_79, %c0_80] : memref<384x128xbf16, #tpu.memory_space<vmem>>, vector<384x128xbf16>
    %cst_81 = arith.constant dense<0.000000e+00> : vector<7x128xf32>
    %123 = tpu.matmul %121, %122, %cst_81 {dimension_numbers = #tpu.dot_dimension_numbers<[1], [0], [0], [1], [0, 0, 1, 1], [], []>} : vector<7x384xbf16>, vector<384x128xbf16>, vector<7x128xf32> -> vector<7x128xf32>
    %c0_82 = arith.constant 0 : index
    %c0_83 = arith.constant 0 : index
    %124 = vector.load %arg7[%c0_82, %c0_83] : memref<1x128xf32, #tpu.memory_space<vmem>>, vector<1x128xf32>
    %125 = vector.broadcast %124 : vector<1x128xf32> to vector<7x128xf32>
    %126 = arith.addf %123, %125 : vector<7x128xf32>
    %127 = tpu.concatenate %54, %63, %72, %81, %90, %99, %108, %117, %126 in 1 : vector<7x128xf32>, vector<7x128xf32>, vector<7x128xf32>, vector<7x128xf32>, vector<7x128xf32>, vector<7x128xf32>, vector<7x128xf32>, vector<7x128xf32>, vector<7x128xf32> -> vector<7x1152xf32>
    %128 = arith.truncf %127 : vector<7x1152xf32> to vector<7x1152xbf16>
    %c0_84 = arith.constant 0 : index
    %c0_85 = arith.constant 0 : index
    %c0_86 = arith.constant 0 : index
    %129 = vector.load %arg8[%c0_84, %c0_85, %c0_86] : memref<3x7x7xbf16, #tpu.memory_space<vmem>>, vector<1x7x7xbf16>
    %130 = vector.shape_cast %129 : vector<1x7x7xbf16> to vector<7x7xbf16>
    %cst_87 = arith.constant dense<0.000000e+00> : vector<7x1152xf32>
    %131 = tpu.matmul %130, %128, %cst_87 {dimension_numbers = #tpu.dot_dimension_numbers<[1], [0], [0], [1], [0, 0, 1, 1], [], []>} : vector<7x7xbf16>, vector<7x1152xbf16>, vector<7x1152xf32> -> vector<7x1152xf32>
    %132 = arith.truncf %131 : vector<7x1152xf32> to vector<7x1152xbf16>
    %c1_88 = arith.constant 1 : index
    %c0_89 = arith.constant 0 : index
    %c0_90 = arith.constant 0 : index
    %133 = vector.load %arg8[%c1_88, %c0_89, %c0_90] : memref<3x7x7xbf16, #tpu.memory_space<vmem>>, vector<1x7x7xbf16>
    %134 = vector.shape_cast %133 : vector<1x7x7xbf16> to vector<7x7xbf16>
    %cst_91 = arith.constant dense<0.000000e+00> : vector<7x1152xf32>
    %135 = tpu.matmul %134, %128, %cst_91 {dimension_numbers = #tpu.dot_dimension_numbers<[1], [0], [0], [1], [0, 0, 1, 1], [], []>} : vector<7x7xbf16>, vector<7x1152xbf16>, vector<7x1152xf32> -> vector<7x1152xf32>
    %136 = arith.truncf %135 : vector<7x1152xf32> to vector<7x1152xbf16>
    %c2_92 = arith.constant 2 : index
    %c0_93 = arith.constant 0 : index
    %c0_94 = arith.constant 0 : index
    %137 = vector.load %arg8[%c2_92, %c0_93, %c0_94] : memref<3x7x7xbf16, #tpu.memory_space<vmem>>, vector<1x7x7xbf16>
    %138 = vector.shape_cast %137 : vector<1x7x7xbf16> to vector<7x7xbf16>
    %cst_95 = arith.constant dense<0.000000e+00> : vector<7x1152xf32>
    %139 = tpu.matmul %138, %128, %cst_95 {dimension_numbers = #tpu.dot_dimension_numbers<[1], [0], [0], [1], [0, 0, 1, 1], [], []>} : vector<7x7xbf16>, vector<7x1152xbf16>, vector<7x1152xf32> -> vector<7x1152xf32>
    %140 = arith.truncf %139 : vector<7x1152xf32> to vector<7x1152xbf16>
    %141 = vector.extract_strided_slice %132 {offsets = [0, 0], sizes = [7, 128], strides = [1, 1]} : vector<7x1152xbf16> to vector<7x128xbf16>
    %142 = vector.extract_strided_slice %136 {offsets = [0, 0], sizes = [7, 128], strides = [1, 1]} : vector<7x1152xbf16> to vector<7x128xbf16>
    %143 = vector.extract_strided_slice %140 {offsets = [0, 0], sizes = [7, 128], strides = [1, 1]} : vector<7x1152xbf16> to vector<7x128xbf16>
    %144 = vector.extract_strided_slice %132 {offsets = [0, 128], sizes = [7, 128], strides = [1, 1]} : vector<7x1152xbf16> to vector<7x128xbf16>
    %145 = vector.extract_strided_slice %136 {offsets = [0, 128], sizes = [7, 128], strides = [1, 1]} : vector<7x1152xbf16> to vector<7x128xbf16>
    %146 = vector.extract_strided_slice %140 {offsets = [0, 128], sizes = [7, 128], strides = [1, 1]} : vector<7x1152xbf16> to vector<7x128xbf16>
    %147 = vector.extract_strided_slice %132 {offsets = [0, 256], sizes = [7, 128], strides = [1, 1]} : vector<7x1152xbf16> to vector<7x128xbf16>
    %148 = vector.extract_strided_slice %136 {offsets = [0, 256], sizes = [7, 128], strides = [1, 1]} : vector<7x1152xbf16> to vector<7x128xbf16>
    %149 = vector.extract_strided_slice %140 {offsets = [0, 256], sizes = [7, 128], strides = [1, 1]} : vector<7x1152xbf16> to vector<7x128xbf16>
    %150 = vector.extract_strided_slice %132 {offsets = [0, 384], sizes = [7, 128], strides = [1, 1]} : vector<7x1152xbf16> to vector<7x128xbf16>
    %151 = vector.extract_strided_slice %136 {offsets = [0, 384], sizes = [7, 128], strides = [1, 1]} : vector<7x1152xbf16> to vector<7x128xbf16>
    %152 = vector.extract_strided_slice %140 {offsets = [0, 384], sizes = [7, 128], strides = [1, 1]} : vector<7x1152xbf16> to vector<7x128xbf16>
    %153 = vector.extract_strided_slice %132 {offsets = [0, 512], sizes = [7, 128], strides = [1, 1]} : vector<7x1152xbf16> to vector<7x128xbf16>
    %154 = vector.extract_strided_slice %136 {offsets = [0, 512], sizes = [7, 128], strides = [1, 1]} : vector<7x1152xbf16> to vector<7x128xbf16>
    %155 = vector.extract_strided_slice %140 {offsets = [0, 512], sizes = [7, 128], strides = [1, 1]} : vector<7x1152xbf16> to vector<7x128xbf16>
    %156 = vector.extract_strided_slice %132 {offsets = [0, 640], sizes = [7, 128], strides = [1, 1]} : vector<7x1152xbf16> to vector<7x128xbf16>
    %157 = vector.extract_strided_slice %136 {offsets = [0, 640], sizes = [7, 128], strides = [1, 1]} : vector<7x1152xbf16> to vector<7x128xbf16>
    %158 = vector.extract_strided_slice %140 {offsets = [0, 640], sizes = [7, 128], strides = [1, 1]} : vector<7x1152xbf16> to vector<7x128xbf16>
    %159 = vector.extract_strided_slice %132 {offsets = [0, 768], sizes = [7, 128], strides = [1, 1]} : vector<7x1152xbf16> to vector<7x128xbf16>
    %160 = vector.extract_strided_slice %136 {offsets = [0, 768], sizes = [7, 128], strides = [1, 1]} : vector<7x1152xbf16> to vector<7x128xbf16>
    %161 = vector.extract_strided_slice %140 {offsets = [0, 768], sizes = [7, 128], strides = [1, 1]} : vector<7x1152xbf16> to vector<7x128xbf16>
    %162 = vector.extract_strided_slice %132 {offsets = [0, 896], sizes = [7, 128], strides = [1, 1]} : vector<7x1152xbf16> to vector<7x128xbf16>
    %163 = vector.extract_strided_slice %136 {offsets = [0, 896], sizes = [7, 128], strides = [1, 1]} : vector<7x1152xbf16> to vector<7x128xbf16>
    %164 = vector.extract_strided_slice %140 {offsets = [0, 896], sizes = [7, 128], strides = [1, 1]} : vector<7x1152xbf16> to vector<7x128xbf16>
    %165 = vector.extract_strided_slice %132 {offsets = [0, 1024], sizes = [7, 128], strides = [1, 1]} : vector<7x1152xbf16> to vector<7x128xbf16>
    %166 = vector.extract_strided_slice %136 {offsets = [0, 1024], sizes = [7, 128], strides = [1, 1]} : vector<7x1152xbf16> to vector<7x128xbf16>
    %167 = vector.extract_strided_slice %140 {offsets = [0, 1024], sizes = [7, 128], strides = [1, 1]} : vector<7x1152xbf16> to vector<7x128xbf16>
    %168 = tpu.concatenate %141, %142, %143, %144, %145, %146, %147, %148, %149, %150, %151, %152, %153, %154, %155, %156 in 1 : vector<7x128xbf16>, vector<7x128xbf16>, vector<7x128xbf16>, vector<7x128xbf16>, vector<7x128xbf16>, vector<7x128xbf16>, vector<7x128xbf16>, vector<7x128xbf16>, vector<7x128xbf16>, vector<7x128xbf16>, vector<7x128xbf16>, vector<7x128xbf16>, vector<7x128xbf16>, vector<7x128xbf16>, vector<7x128xbf16>, vector<7x128xbf16> -> vector<7x2048xbf16>
    %169 = tpu.concatenate %157, %158, %159, %160, %161, %162, %163, %164, %165, %166, %167 in 1 : vector<7x128xbf16>, vector<7x128xbf16>, vector<7x128xbf16>, vector<7x128xbf16>, vector<7x128xbf16>, vector<7x128xbf16>, vector<7x128xbf16>, vector<7x128xbf16>, vector<7x128xbf16>, vector<7x128xbf16>, vector<7x128xbf16> -> vector<7x1408xbf16>
    %170 = tpu.concatenate %168, %169 in 1 : vector<7x2048xbf16>, vector<7x1408xbf16> -> vector<7x3456xbf16>
    %c0_96 = arith.constant 0 : index
    %c0_97 = arith.constant 0 : index
    %171 = vector.load %arg9[%c0_96, %c0_97] : memref<3456x128xbf16, #tpu.memory_space<vmem>>, vector<3456x128xbf16>
    %cst_98 = arith.constant dense<0.000000e+00> : vector<7x128xf32>
    %172 = tpu.matmul %170, %171, %cst_98 {dimension_numbers = #tpu.dot_dimension_numbers<[1], [0], [0], [1], [0, 0, 1, 1], [], []>} : vector<7x3456xbf16>, vector<3456x128xbf16>, vector<7x128xf32> -> vector<7x128xf32>
    %c0_99 = arith.constant 0 : index
    %c0_100 = arith.constant 0 : index
    %173 = vector.load %arg10[%c0_99, %c0_100] : memref<1x128xf32, #tpu.memory_space<vmem>>, vector<1x128xf32>
    %174 = vector.broadcast %173 : vector<1x128xf32> to vector<7x128xf32>
    %175 = arith.addf %172, %174 : vector<7x128xf32>
    %cst_101 = arith.constant 0.000000e+00 : f32
    %176 = vector.broadcast %cst_101 : f32 to vector<7x128xf32>
    %177 = arith.maximumf %175, %176 : vector<7x128xf32>
    %178 = arith.truncf %177 : vector<7x128xf32> to vector<7x128xbf16>
    %c0_102 = arith.constant 0 : index
    %c0_103 = arith.constant 0 : index
    %c0_104 = arith.constant 0 : index
    %179 = vector.load %arg11[%c0_102, %c0_103, %c0_104] : memref<3x4x7xbf16, #tpu.memory_space<vmem>>, vector<1x4x7xbf16>
    %180 = vector.shape_cast %179 : vector<1x4x7xbf16> to vector<4x7xbf16>
    %cst_105 = arith.constant dense<0.000000e+00> : vector<4x128xf32>
    %181 = tpu.matmul %180, %178, %cst_105 {dimension_numbers = #tpu.dot_dimension_numbers<[1], [0], [0], [1], [0, 0, 1, 1], [], []>} : vector<4x7xbf16>, vector<7x128xbf16>, vector<4x128xf32> -> vector<4x128xf32>
    %182 = arith.truncf %181 : vector<4x128xf32> to vector<4x128xbf16>
    %c1_106 = arith.constant 1 : index
    %c0_107 = arith.constant 0 : index
    %c0_108 = arith.constant 0 : index
    %183 = vector.load %arg11[%c1_106, %c0_107, %c0_108] : memref<3x4x7xbf16, #tpu.memory_space<vmem>>, vector<1x4x7xbf16>
    %184 = vector.shape_cast %183 : vector<1x4x7xbf16> to vector<4x7xbf16>
    %cst_109 = arith.constant dense<0.000000e+00> : vector<4x128xf32>
    %185 = tpu.matmul %184, %178, %cst_109 {dimension_numbers = #tpu.dot_dimension_numbers<[1], [0], [0], [1], [0, 0, 1, 1], [], []>} : vector<4x7xbf16>, vector<7x128xbf16>, vector<4x128xf32> -> vector<4x128xf32>
    %186 = arith.truncf %185 : vector<4x128xf32> to vector<4x128xbf16>
    %c2_110 = arith.constant 2 : index
    %c0_111 = arith.constant 0 : index
    %c0_112 = arith.constant 0 : index
    %187 = vector.load %arg11[%c2_110, %c0_111, %c0_112] : memref<3x4x7xbf16, #tpu.memory_space<vmem>>, vector<1x4x7xbf16>
    %188 = vector.shape_cast %187 : vector<1x4x7xbf16> to vector<4x7xbf16>
    %cst_113 = arith.constant dense<0.000000e+00> : vector<4x128xf32>
    %189 = tpu.matmul %188, %178, %cst_113 {dimension_numbers = #tpu.dot_dimension_numbers<[1], [0], [0], [1], [0, 0, 1, 1], [], []>} : vector<4x7xbf16>, vector<7x128xbf16>, vector<4x128xf32> -> vector<4x128xf32>
    %190 = arith.truncf %189 : vector<4x128xf32> to vector<4x128xbf16>
    %191 = tpu.concatenate %182, %186, %190 in 1 : vector<4x128xbf16>, vector<4x128xbf16>, vector<4x128xbf16> -> vector<4x384xbf16>
    %c0_114 = arith.constant 0 : index
    %c0_115 = arith.constant 0 : index
    %192 = vector.load %arg12[%c0_114, %c0_115] : memref<384x128xbf16, #tpu.memory_space<vmem>>, vector<384x128xbf16>
    %cst_116 = arith.constant dense<0.000000e+00> : vector<4x128xf32>
    %193 = tpu.matmul %191, %192, %cst_116 {dimension_numbers = #tpu.dot_dimension_numbers<[1], [0], [0], [1], [0, 0, 1, 1], [], []>} : vector<4x384xbf16>, vector<384x128xbf16>, vector<4x128xf32> -> vector<4x128xf32>
    %c0_117 = arith.constant 0 : index
    %c0_118 = arith.constant 0 : index
    %194 = vector.load %arg13[%c0_117, %c0_118] : memref<1x128xf32, #tpu.memory_space<vmem>>, vector<1x128xf32>
    %195 = vector.broadcast %194 : vector<1x128xf32> to vector<4x128xf32>
    %196 = arith.addf %193, %195 : vector<4x128xf32>
    %197 = arith.truncf %196 : vector<4x128xf32> to vector<4x128xbf16>
    %c0_119 = arith.constant 0 : index
    %c0_120 = arith.constant 0 : index
    %c0_121 = arith.constant 0 : index
    %198 = vector.load %arg14[%c0_119, %c0_120, %c0_121] : memref<3x4x4xbf16, #tpu.memory_space<vmem>>, vector<1x4x4xbf16>
    %199 = vector.shape_cast %198 : vector<1x4x4xbf16> to vector<4x4xbf16>
    %cst_122 = arith.constant dense<0.000000e+00> : vector<4x128xf32>
    %200 = tpu.matmul %199, %197, %cst_122 {dimension_numbers = #tpu.dot_dimension_numbers<[1], [0], [0], [1], [0, 0, 1, 1], [], []>} : vector<4x4xbf16>, vector<4x128xbf16>, vector<4x128xf32> -> vector<4x128xf32>
    %201 = arith.truncf %200 : vector<4x128xf32> to vector<4x128xbf16>
    %c1_123 = arith.constant 1 : index
    %c0_124 = arith.constant 0 : index
    %c0_125 = arith.constant 0 : index
    %202 = vector.load %arg14[%c1_123, %c0_124, %c0_125] : memref<3x4x4xbf16, #tpu.memory_space<vmem>>, vector<1x4x4xbf16>
    %203 = vector.shape_cast %202 : vector<1x4x4xbf16> to vector<4x4xbf16>
    %cst_126 = arith.constant dense<0.000000e+00> : vector<4x128xf32>
    %204 = tpu.matmul %203, %197, %cst_126 {dimension_numbers = #tpu.dot_dimension_numbers<[1], [0], [0], [1], [0, 0, 1, 1], [], []>} : vector<4x4xbf16>, vector<4x128xbf16>, vector<4x128xf32> -> vector<4x128xf32>
    %205 = arith.truncf %204 : vector<4x128xf32> to vector<4x128xbf16>
    %c2_127 = arith.constant 2 : index
    %c0_128 = arith.constant 0 : index
    %c0_129 = arith.constant 0 : index
    %206 = vector.load %arg14[%c2_127, %c0_128, %c0_129] : memref<3x4x4xbf16, #tpu.memory_space<vmem>>, vector<1x4x4xbf16>
    %207 = vector.shape_cast %206 : vector<1x4x4xbf16> to vector<4x4xbf16>
    %cst_130 = arith.constant dense<0.000000e+00> : vector<4x128xf32>
    %208 = tpu.matmul %207, %197, %cst_130 {dimension_numbers = #tpu.dot_dimension_numbers<[1], [0], [0], [1], [0, 0, 1, 1], [], []>} : vector<4x4xbf16>, vector<4x128xbf16>, vector<4x128xf32> -> vector<4x128xf32>
    %209 = arith.truncf %208 : vector<4x128xf32> to vector<4x128xbf16>
    %210 = tpu.concatenate %201, %205, %209 in 1 : vector<4x128xbf16>, vector<4x128xbf16>, vector<4x128xbf16> -> vector<4x384xbf16>
    %c0_131 = arith.constant 0 : index
    %c0_132 = arith.constant 0 : index
    %211 = vector.load %arg15[%c0_131, %c0_132] : memref<384x128xbf16, #tpu.memory_space<vmem>>, vector<384x128xbf16>
    %cst_133 = arith.constant dense<0.000000e+00> : vector<4x128xf32>
    %212 = tpu.matmul %210, %211, %cst_133 {dimension_numbers = #tpu.dot_dimension_numbers<[1], [0], [0], [1], [0, 0, 1, 1], [], []>} : vector<4x384xbf16>, vector<384x128xbf16>, vector<4x128xf32> -> vector<4x128xf32>
    %c0_134 = arith.constant 0 : index
    %c0_135 = arith.constant 0 : index
    %213 = vector.load %arg16[%c0_134, %c0_135] : memref<1x128xf32, #tpu.memory_space<vmem>>, vector<1x128xf32>
    %214 = vector.broadcast %213 : vector<1x128xf32> to vector<4x128xf32>
    %215 = arith.addf %212, %214 : vector<4x128xf32>
    %cst_136 = arith.constant 0.000000e+00 : f32
    %216 = vector.broadcast %cst_136 : f32 to vector<4x128xf32>
    %217 = arith.maximumf %215, %216 : vector<4x128xf32>
    %218 = arith.truncf %217 : vector<4x128xf32> to vector<4x128xbf16>
    %c0_137 = arith.constant 0 : index
    %c0_138 = arith.constant 0 : index
    %c0_139 = arith.constant 0 : index
    %219 = vector.load %arg17[%c0_137, %c0_138, %c0_139] : memref<2x3x4xbf16, #tpu.memory_space<vmem>>, vector<1x3x4xbf16>
    %220 = vector.shape_cast %219 : vector<1x3x4xbf16> to vector<3x4xbf16>
    %cst_140 = arith.constant dense<0.000000e+00> : vector<3x128xf32>
    %221 = tpu.matmul %220, %218, %cst_140 {dimension_numbers = #tpu.dot_dimension_numbers<[1], [0], [0], [1], [0, 0, 1, 1], [], []>} : vector<3x4xbf16>, vector<4x128xbf16>, vector<3x128xf32> -> vector<3x128xf32>
    %222 = arith.truncf %221 : vector<3x128xf32> to vector<3x128xbf16>
    %c1_141 = arith.constant 1 : index
    %c0_142 = arith.constant 0 : index
    %c0_143 = arith.constant 0 : index
    %223 = vector.load %arg17[%c1_141, %c0_142, %c0_143] : memref<2x3x4xbf16, #tpu.memory_space<vmem>>, vector<1x3x4xbf16>
    %224 = vector.shape_cast %223 : vector<1x3x4xbf16> to vector<3x4xbf16>
    %cst_144 = arith.constant dense<0.000000e+00> : vector<3x128xf32>
    %225 = tpu.matmul %224, %218, %cst_144 {dimension_numbers = #tpu.dot_dimension_numbers<[1], [0], [0], [1], [0, 0, 1, 1], [], []>} : vector<3x4xbf16>, vector<4x128xbf16>, vector<3x128xf32> -> vector<3x128xf32>
    %226 = arith.truncf %225 : vector<3x128xf32> to vector<3x128xbf16>
    %227 = tpu.concatenate %222, %226 in 1 : vector<3x128xbf16>, vector<3x128xbf16> -> vector<3x256xbf16>
    %c0_145 = arith.constant 0 : index
    %c0_146 = arith.constant 0 : index
    %228 = vector.load %arg18[%c0_145, %c0_146] : memref<256x128xbf16, #tpu.memory_space<vmem>>, vector<256x128xbf16>
    %cst_147 = arith.constant dense<0.000000e+00> : vector<3x128xf32>
    %229 = tpu.matmul %227, %228, %cst_147 {dimension_numbers = #tpu.dot_dimension_numbers<[1], [0], [0], [1], [0, 0, 1, 1], [], []>} : vector<3x256xbf16>, vector<256x128xbf16>, vector<3x128xf32> -> vector<3x128xf32>
    %c0_148 = arith.constant 0 : index
    %c0_149 = arith.constant 0 : index
    %230 = vector.load %arg19[%c0_148, %c0_149] : memref<1x128xf32, #tpu.memory_space<vmem>>, vector<1x128xf32>
    %231 = vector.broadcast %230 : vector<1x128xf32> to vector<3x128xf32>
    %232 = arith.addf %229, %231 : vector<3x128xf32>
    %cst_150 = arith.constant 0.000000e+00 : f32
    %233 = vector.broadcast %cst_150 : f32 to vector<3x128xf32>
    %234 = arith.maximumf %232, %233 : vector<3x128xf32>
    %235 = arith.truncf %234 : vector<3x128xf32> to vector<3x128xbf16>
    %c0_151 = arith.constant 0 : index
    %c0_152 = arith.constant 0 : index
    %c0_153 = arith.constant 0 : index
    %236 = vector.load %arg20[%c0_151, %c0_152, %c0_153] : memref<3x1x3xbf16, #tpu.memory_space<vmem>>, vector<1x1x3xbf16>
    %237 = vector.shape_cast %236 : vector<1x1x3xbf16> to vector<1x3xbf16>
    %cst_154 = arith.constant dense<0.000000e+00> : vector<1x128xf32>
    %238 = tpu.matmul %237, %235, %cst_154 {dimension_numbers = #tpu.dot_dimension_numbers<[1], [0], [0], [1], [0, 0, 1, 1], [], []>} : vector<1x3xbf16>, vector<3x128xbf16>, vector<1x128xf32> -> vector<1x128xf32>
    %239 = arith.truncf %238 : vector<1x128xf32> to vector<1x128xbf16>
    %c1_155 = arith.constant 1 : index
    %c0_156 = arith.constant 0 : index
    %c0_157 = arith.constant 0 : index
    %240 = vector.load %arg20[%c1_155, %c0_156, %c0_157] : memref<3x1x3xbf16, #tpu.memory_space<vmem>>, vector<1x1x3xbf16>
    %241 = vector.shape_cast %240 : vector<1x1x3xbf16> to vector<1x3xbf16>
    %cst_158 = arith.constant dense<0.000000e+00> : vector<1x128xf32>
    %242 = tpu.matmul %241, %235, %cst_158 {dimension_numbers = #tpu.dot_dimension_numbers<[1], [0], [0], [1], [0, 0, 1, 1], [], []>} : vector<1x3xbf16>, vector<3x128xbf16>, vector<1x128xf32> -> vector<1x128xf32>
    %243 = arith.truncf %242 : vector<1x128xf32> to vector<1x128xbf16>
    %c2_159 = arith.constant 2 : index
    %c0_160 = arith.constant 0 : index
    %c0_161 = arith.constant 0 : index
    %244 = vector.load %arg20[%c2_159, %c0_160, %c0_161] : memref<3x1x3xbf16, #tpu.memory_space<vmem>>, vector<1x1x3xbf16>
    %245 = vector.shape_cast %244 : vector<1x1x3xbf16> to vector<1x3xbf16>
    %cst_162 = arith.constant dense<0.000000e+00> : vector<1x128xf32>
    %246 = tpu.matmul %245, %235, %cst_162 {dimension_numbers = #tpu.dot_dimension_numbers<[1], [0], [0], [1], [0, 0, 1, 1], [], []>} : vector<1x3xbf16>, vector<3x128xbf16>, vector<1x128xf32> -> vector<1x128xf32>
    %247 = arith.truncf %246 : vector<1x128xf32> to vector<1x128xbf16>
    %248 = tpu.concatenate %239, %243, %247 in 1 : vector<1x128xbf16>, vector<1x128xbf16>, vector<1x128xbf16> -> vector<1x384xbf16>
    %c0_163 = arith.constant 0 : index
    %c0_164 = arith.constant 0 : index
    %249 = vector.load %arg21[%c0_163, %c0_164] : memref<384x128xbf16, #tpu.memory_space<vmem>>, vector<384x128xbf16>
    %cst_165 = arith.constant dense<0.000000e+00> : vector<1x128xf32>
    %250 = tpu.matmul %248, %249, %cst_165 {dimension_numbers = #tpu.dot_dimension_numbers<[1], [0], [0], [1], [0, 0, 1, 1], [], []>} : vector<1x384xbf16>, vector<384x128xbf16>, vector<1x128xf32> -> vector<1x128xf32>
    %c0_166 = arith.constant 0 : index
    %c0_167 = arith.constant 0 : index
    %251 = vector.load %arg22[%c0_166, %c0_167] : memref<1x128xf32, #tpu.memory_space<vmem>>, vector<1x128xf32>
    %252 = arith.addf %250, %251 : vector<1x128xf32>
    %c0_168 = arith.constant 0 : index
    %c0_169 = arith.constant 0 : index
    %c0_170 = arith.constant 0 : index
    %253 = vector.load %arg23[%c0_168, %c0_169, %c0_170] : memref<1x1x128xf32, #tpu.memory_space<vmem>>, vector<1x1x128xf32>
    %254 = vector.shape_cast %253 : vector<1x1x128xf32> to vector<1x128xf32>
    %255 = vector.shape_cast %252 : vector<1x128xf32> to vector<1x1x128xf32>
    tpu.vector_store %arg23[%c0_168, %c0_169, %c0_170], %255 {strides = array<i32>} : memref<1x1x128xf32, #tpu.memory_space<vmem>>, vector<1x1x128xf32>,
    return
  }
  func.func @transform_0(%arg0: i32) -> (i32, i32, i32) {
    %c0_i32 = arith.constant 0 : i32
    %c0_i32_0 = arith.constant 0 : i32
    %c0_i32_1 = arith.constant 0 : i32
    return %arg0, %c0_i32, %c0_i32_0 : i32, i32, i32
  }
  func.func @transform_1(%arg0: i32) -> (i32, i32, i32) {
    %c0_i32 = arith.constant 0 : i32
    %c0_i32_0 = arith.constant 0 : i32
    %c0_i32_1 = arith.constant 0 : i32
    %c0_i32_2 = arith.constant 0 : i32
    return %c0_i32, %c0_i32_0, %c0_i32_1 : i32, i32, i32
  }
  func.func @transform_2(%arg0: i32) -> (i32, i32, i32) {
    %c0_i32 = arith.constant 0 : i32
    %c0_i32_0 = arith.constant 0 : i32
    %c0_i32_1 = arith.constant 0 : i32
    %c0_i32_2 = arith.constant 0 : i32
    return %c0_i32, %c0_i32_0, %c0_i32_1 : i32, i32, i32
  }
  func.func @transform_3(%arg0: i32) -> (i32, i32) {
    %c0_i32 = arith.constant 0 : i32
    %c0_i32_0 = arith.constant 0 : i32
    %c0_i32_1 = arith.constant 0 : i32
    return %c0_i32, %c0_i32_0 : i32, i32
  }
  func.func @transform_4(%arg0: i32) -> (i32, i32, i32) {
    %c0_i32 = arith.constant 0 : i32
    %c0_i32_0 = arith.constant 0 : i32
    %c0_i32_1 = arith.constant 0 : i32
    %c0_i32_2 = arith.constant 0 : i32
    return %c0_i32, %c0_i32_0, %c0_i32_1 : i32, i32, i32
  }
  func.func @transform_5(%arg0: i32) -> (i32, i32) {
    %c0_i32 = arith.constant 0 : i32
    %c0_i32_0 = arith.constant 0 : i32
    %c0_i32_1 = arith.constant 0 : i32
    return %c0_i32, %c0_i32_0 : i32, i32
  }
  func.func @transform_6(%arg0: i32) -> (i32, i32) {
    %c0_i32 = arith.constant 0 : i32
    %c0_i32_0 = arith.constant 0 : i32
    %c0_i32_1 = arith.constant 0 : i32
    return %c0_i32, %c0_i32_0 : i32, i32
  }
  func.func @transform_7(%arg0: i32) -> (i32, i32, i32) {
    %c0_i32 = arith.constant 0 : i32
    %c0_i32_0 = arith.constant 0 : i32
    %c0_i32_1 = arith.constant 0 : i32
    %c0_i32_2 = arith.constant 0 : i32
    return %c0_i32, %c0_i32_0, %c0_i32_1 : i32, i32, i32
  }
  func.func @transform_8(%arg0: i32) -> (i32, i32) {
    %c0_i32 = arith.constant 0 : i32
    %c0_i32_0 = arith.constant 0 : i32
    %c0_i32_1 = arith.constant 0 : i32
    return %c0_i32, %c0_i32_0 : i32, i32
  }
  func.func @transform_9(%arg0: i32) -> (i32, i32) {
    %c0_i32 = arith.constant 0 : i32
    %c0_i32_0 = arith.constant 0 : i32
    %c0_i32_1 = arith.constant 0 : i32
    return %c0_i32, %c0_i32_0 : i32, i32
  }
  func.func @transform_10(%arg0: i32) -> (i32, i32, i32) {
    %c0_i32 = arith.constant 0 : i32
    %c0_i32_0 = arith.constant 0 : i32
    %c0_i32_1 = arith.constant 0 : i32
    %c0_i32_2 = arith.constant 0 : i32
    return %c0_i32, %c0_i32_0, %c0_i32_1 : i32, i32, i32
  }
  func.func @transform_11(%arg0: i32) -> (i32, i32) {
    %c0_i32 = arith.constant 0 : i32
    %c0_i32_0 = arith.constant 0 : i32
    %c0_i32_1 = arith.constant 0 : i32
    return %c0_i32, %c0_i32_0 : i32, i32
  }
  func.func @transform_12(%arg0: i32) -> (i32, i32) {
    %c0_i32 = arith.constant 0 : i32
    %c0_i32_0 = arith.constant 0 : i32
    %c0_i32_1 = arith.constant 0 : i32
    return %c0_i32, %c0_i32_0 : i32, i32
  }
  func.func @transform_13(%arg0: i32) -> (i32, i32, i32) {
    %c0_i32 = arith.constant 0 : i32
    %c0_i32_0 = arith.constant 0 : i32
    %c0_i32_1 = arith.constant 0 : i32
    %c0_i32_2 = arith.constant 0 : i32
    return %c0_i32, %c0_i32_0, %c0_i32_1 : i32, i32, i32
  }
  func.func @transform_14(%arg0: i32) -> (i32, i32) {
    %c0_i32 = arith.constant 0 : i32
    %c0_i32_0 = arith.constant 0 : i32
    %c0_i32_1 = arith.constant 0 : i32
    return %c0_i32, %c0_i32_0 : i32, i32
  }
  func.func @transform_15(%arg0: i32) -> (i32, i32) {
    %c0_i32 = arith.constant 0 : i32
    %c0_i32_0 = arith.constant 0 : i32
    %c0_i32_1 = arith.constant 0 : i32
    return %c0_i32, %c0_i32_0 : i32, i32
  }
  func.func @transform_16(%arg0: i32) -> (i32, i32, i32) {
    %c0_i32 = arith.constant 0 : i32
    %c0_i32_0 = arith.constant 0 : i32
    %c0_i32_1 = arith.constant 0 : i32
    %c0_i32_2 = arith.constant 0 : i32
    return %c0_i32, %c0_i32_0, %c0_i32_1 : i32, i32, i32
  }
  func.func @transform_17(%arg0: i32) -> (i32, i32) {
    %c0_i32 = arith.constant 0 : i32
    %c0_i32_0 = arith.constant 0 : i32
    %c0_i32_1 = arith.constant 0 : i32
    return %c0_i32, %c0_i32_0 : i32, i32
  }
  func.func @transform_18(%arg0: i32) -> (i32, i32) {
    %c0_i32 = arith.constant 0 : i32
    %c0_i32_0 = arith.constant 0 : i32
    %c0_i32_1 = arith.constant 0 : i32
    return %c0_i32, %c0_i32_0 : i32, i32
  }
  func.func @transform_19(%arg0: i32) -> (i32, i32, i32) {
    %c0_i32 = arith.constant 0 : i32
    %c0_i32_0 = arith.constant 0 : i32
    %c0_i32_1 = arith.constant 0 : i32
    %c0_i32_2 = arith.constant 0 : i32
    return %c0_i32, %c0_i32_0, %c0_i32_1 : i32, i32, i32
  }
  func.func @transform_20(%arg0: i32) -> (i32, i32) {
    %c0_i32 = arith.constant 0 : i32
    %c0_i32_0 = arith.constant 0 : i32
    %c0_i32_1 = arith.constant 0 : i32
    return %c0_i32, %c0_i32_0 : i32, i32
  }
  func.func @transform_21(%arg0: i32) -> (i32, i32) {
    %c0_i32 = arith.constant 0 : i32
    %c0_i32_0 = arith.constant 0 : i32
    %c0_i32_1 = arith.constant 0 : i32
    return %c0_i32, %c0_i32_0 : i32, i32
  }
  func.func @transform_22(%arg0: i32) -> (i32, i32, i32) {
    %c0_i32 = arith.constant 0 : i32
    %c0_i32_0 = arith.constant 0 : i32
    %c0_i32_1 = arith.constant 0 : i32
    return %arg0, %c0_i32, %c0_i32_0 : i32, i32, i32
  }
}

</mosaic_0001>

<llo_original>
// kernel: fwd.1
$region0: #{fwd.1}
  #allocation0 [shape = 'u32[]', space=smem, size = 0x4, offset = 0x4, fixed_abs, tag = 'smem constant byte address 0x4 - core index']
  #allocation1 [shape = 'u32[144,128]{1,0:T(1,128)}', space=vmem, size = 0x12000, scoped, tag = 'internal scratch']
  %s0 = inlined_call_operand.vmem [shape: f32[2,16,25], index: 0, kind: input, shape index: {}]
  %s1 = inlined_call_operand.vmem [shape: bf16[3,14,16], index: 1, kind: input, shape index: {}]
  %s2 = inlined_call_operand.hbm [shape: bf16[3,25,1152], index: 2, kind: input, shape index: {}]
  %s3 = inlined_call_operand.hbm [shape: f32[1,1152], index: 3, kind: input, shape index: {}]
  %s4 = inlined_call_operand.hbm [shape: bf16[3,7,14], index: 4, kind: input, shape index: {}]
  %s5 = inlined_call_operand.vmem [shape: bf16[384,128], index: 5, kind: input, shape index: {}]
  %s6 = inlined_call_operand.hbm [shape: f32[1,128], index: 6, kind: input, shape index: {}]
  %s7 = inlined_call_operand.hbm [shape: bf16[3,7,7], index: 7, kind: input, shape index: {}]
  %s8 = inlined_call_operand.hbm [shape: bf16[3456,128], index: 8, kind: input, shape index: {}]
  %s9 = inlined_call_operand.hbm [shape: f32[1,128], index: 9, kind: input, shape index: {}]
  %s10 = inlined_call_operand.hbm [shape: bf16[3,4,7], index: 10, kind: input, shape index: {}]
  %s11 = inlined_call_operand.hbm [shape: bf16[384,128], index: 11, kind: input, shape index: {}]
  %s12 = inlined_call_operand.vmem [shape: f32[1,128], index: 12, kind: input, shape index: {}]
  %s13 = inlined_call_operand.hbm [shape: bf16[3,4,4], index: 13, kind: input, shape index: {}]
  %s14 = inlined_call_operand.hbm [shape: bf16[384,128], index: 14, kind: input, shape index: {}]
  %s15 = inlined_call_operand.hbm [shape: f32[1,128], index: 15, kind: input, shape index: {}]
  %s16 = inlined_call_operand.vmem [shape: bf16[2,3,4], index: 16, kind: input, shape index: {}]
  %s17 = inlined_call_operand.hbm [shape: bf16[256,128], index: 17, kind: input, shape index: {}]
  %s18 = inlined_call_operand.hbm [shape: f32[1,128], index: 18, kind: input, shape index: {}]
  %s19 = inlined_call_operand.vmem [shape: bf16[3,1,3], index: 19, kind: input, shape index: {}]
  %s20 = inlined_call_operand.hbm [shape: bf16[384,128], index: 20, kind: input, shape index: {}]
  %s21 = inlined_call_operand.hbm [shape: f32[1,128], index: 21, kind: input, shape index: {}]
  %s22 = inlined_call_operand.hbm [shape: f32[2,1,128], index: 22, kind: output, shape index: {}]
  %s23 = sld [smem:[#allocation0]]
  $region185: #{fwd.1} parent=0
    _
  %s25 = ssub.s32 1, %s23
  %s26 = scalar_select 0, %s25, %s23
  $region1: #{fwd.1} parent=0
    #allocation2 [shape = 'u8[221184]{0}', space=vmem, size = 0x36000, scoped, tag = 'input window, operand 2, single buffered']
    #allocation3 [shape = 's32[2]{0}', space=sflag, size = 0x8, scoped, tag = 'scoped memory for fwd.1']
    #allocation4 [shape = 's32[2]{0}', space=sflag, size = 0x8, scoped, tag = 'scoped memory for fwd.1']
    #allocation5 [shape = 'u8[4608]{0}', space=vmem, size = 0x1400, scoped, tag = 'input window, operand 3, single buffered']
    #allocation6 [shape = 's32[1]{0}', space=sflag, size = 0x4, scoped, tag = 'scoped memory for fwd.1']
    #allocation7 [shape = 'u8[6144]{0}', space=vmem, size = 0x1800, scoped, tag = 'input window, operand 4, single buffered']
    #allocation8 [shape = 'u8[512]{0}', space=vmem, size = 0x400, scoped, tag = 'input window, operand 6, single buffered']
    #allocation9 [shape = 's32[1]{0}', space=sflag, size = 0x4, scoped, tag = 'scoped memory for fwd.1']
    #allocation10 [shape = 'u8[6144]{0}', space=vmem, size = 0x1800, scoped, tag = 'input window, operand 7, single buffered']
    #allocation11 [shape = 'u8[884736]{0}', space=vmem, size = 0xd8000, scoped, tag = 'input window, operand 8, single buffered']
    #allocation12 [shape = 's32[1]{0}', space=sflag, size = 0x4, scoped, tag = 'scoped memory for fwd.1']
    #allocation13 [shape = 'u8[512]{0}', space=vmem, size = 0x400, scoped, tag = 'input window, operand 9, single buffered']
    #allocation14 [shape = 'u8[3072]{0}', space=vmem, size = 0xc00, scoped, tag = 'input window, operand 10, single buffered']
    #allocation15 [shape = 's32[1]{0}', space=sflag, size = 0x4, scoped, tag = 'scoped memory for fwd.1']
    #allocation16 [shape = 'u8[98304]{0}', space=vmem, size = 0x18000, scoped, tag = 'input window, operand 11, single buffered']
    #allocation17 [shape = 'u8[3072]{0}', space=vmem, size = 0xc00, scoped, tag = 'input window, operand 13, single buffered']
    #allocation18 [shape = 's32[1]{0}', space=sflag, size = 0x4, scoped, tag = 'scoped memory for fwd.1']
    #allocation19 [shape = 'u8[98304]{0}', space=vmem, size = 0x18000, scoped, tag = 'input window, operand 14, single buffered']
    #allocation20 [shape = 'u8[512]{0}', space=vmem, size = 0x400, scoped, tag = 'input window, operand 15, single buffered']
    #allocation21 [shape = 's32[1]{0}', space=sflag, size = 0x4, scoped, tag = 'scoped memory for fwd.1']
    #allocation22 [shape = 'u8[65536]{0}', space=vmem, size = 0x10000, scoped, tag = 'input window, operand 17, single buffered']
    #allocation23 [shape = 'u8[512]{0}', space=vmem, size = 0x400, scoped, tag = 'input window, operand 18, single buffered']
    #allocation24 [shape = 's32[1]{0}', space=sflag, size = 0x4, scoped, tag = 'scoped memory for fwd.1']
    #allocation25 [shape = 'u8[98304]{0}', space=vmem, size = 0x18000, scoped, tag = 'input window, operand 20, single buffered']
    #allocation26 [shape = 'u8[512]{0}', space=vmem, size = 0x400, scoped, tag = 'input window, operand 21, single buffered']
    #allocation27 [shape = 's32[1]{0}', space=sflag, size = 0x4, scoped, tag = 'scoped memory for fwd.1']
    #allocation28 [shape = 'u8[1024]{0}', space=vmem, size = 0x400, scoped, tag = 'output window, operand 0']
    %27 = vsyncpa [#allocation3], 0
    %28 = vsyncpa [#allocation6], 0
    %29 = vsyncpa [#allocation9], 0
    %30 = vsyncpa [#allocation12], 0
    %31 = vsyncpa [#allocation15], 0
    %32 = vsyncpa [#allocation18], 0
    %33 = vsyncpa [#allocation21], 0
    %34 = vsyncpa [#allocation24], 0
    %35 = vsyncpa [#allocation27], 0
    %36 = vsyncpa [#allocation4], 0
    %s37 = scalar_lea.sflag [#allocation4], 1
    %38 = vsyncpa %s37, 0
    loop: start=0, step=1, limit=4
    $region2: #{fwd.1} parent=1 // loop_pre_header
      _
    $region3: #{fwd.1} parent=1 // loop_header
      %s40 = sphi 0, %s44
      %p41 = scmp.ge.s32.totalorder %s40, 4
      %s50 = sphi 0, %s52
      %s53 = sphi 0, %s50
      %s54 = sphi 0, %s53
      %s70 = sphi 0, %s54
      %s74 = sphi 0, %s74
      %s76 = sphi 0, %s74
      %s77 = sphi 0, %s76
      %s91 = sphi 0, %s77
      %s95 = sphi 0, %s95
      %s97 = sphi 0, %s95
      %s98 = sphi 0, %s97
      %s112 = sphi 0, %s98
      %s116 = sphi 0, %s116
      %s118 = sphi 0, %s116
      %s119 = sphi 0, %s118
      %s133 = sphi 0, %s119
      %s137 = sphi 0, %s137
      %s139 = sphi 0, %s137
      %s140 = sphi 0, %s139
      %s154 = sphi 0, %s140
      %s158 = sphi 0, %s158
      %s160 = sphi 0, %s158
      %s161 = sphi 0, %s160
      %s175 = sphi 0, %s161
      %s179 = sphi 0, %s179
      %s181 = sphi 0, %s179
      %s182 = sphi 0, %s181
      %s196 = sphi 0, %s182
      %s200 = sphi 0, %s200
      %s202 = sphi 0, %s200
      %s203 = sphi 0, %s202
      %s217 = sphi 0, %s203
      %s221 = sphi 0, %s221
      %s223 = sphi 0, %s221
      %s224 = sphi 0, %s223
      %s238 = sphi 0, %s224
      %s242 = sphi 0, %s242
      %s244 = sphi 0, %s242
      %s245 = sphi 0, %s244
      %s259 = sphi 0, %s245
      %s263 = sphi 0, %s263
      %s265 = sphi 0, %s263
      %s266 = sphi 0, %s265
      %s280 = sphi 0, %s266
      %s284 = sphi 0, %s284
      %s286 = sphi 0, %s284
      %s287 = sphi 0, %s286
      %s301 = sphi 0, %s287
      %s305 = sphi 0, %s305
      %s307 = sphi 0, %s305
      %s308 = sphi 0, %s307
      %s322 = sphi 0, %s308
      %s326 = sphi 0, %s326
      %s328 = sphi 0, %s326
      %s329 = sphi 0, %s328
      %s343 = sphi 0, %s329
      %s347 = sphi 0, %s347
      %s349 = sphi 0, %s347
      %s350 = sphi 0, %s349
      %s364 = sphi 0, %s350
      %s368 = sphi 0, %s368
      %s370 = sphi 0, %s368
      %s371 = sphi 0, %s370
      %s385 = sphi 0, %s371
      %s389 = sphi 0, %s389
      %s391 = sphi 0, %s389
      %s392 = sphi 0, %s391
      %s406 = sphi 0, %s392
      %s410 = sphi 0, %s410
      %s412 = sphi 0, %s410
      %s413 = sphi 0, %s412
      %s427 = sphi 0, %s413
      %s431 = sphi 0, %s431
      %s433 = sphi 0, %s431
      %s434 = sphi 0, %s433
      %s448 = sphi 0, %s434
      %s452 = sphi 0, %s452
      %s454 = sphi 0, %s452
      %s455 = sphi 0, %s454
      %s469 = sphi 0, %s455
      %s473 = sphi 0, %s473
      %s475 = sphi 0, %s473
      %s476 = sphi 0, %s475
      %s490 = sphi 0, %s476
      %s494 = sphi 0, %s494
      %s496 = sphi 0, %s494
      %s497 = sphi 0, %s496
      %s511 = sphi 0, %s497
      %s517 = sphi 0, %s519
      %s520 = sphi 0, %s517
      %s521 = sphi 0, %s520
      %s537 = sphi 0, %s521
    $region4: #{fwd.1} parent=1 // loop_header_branch
      %43 = sbr.rel (%p41) target = $region8
    $region5: #{fwd.1} parent=1 // loop_body
      %s45 = ssub.s32 %s40, 1
      %s46 = ssub.s32 %s40, 2
      %s47 = sadd.s32 %s40, 1
      %s48 = ssub.s32 %s40, %s47
      %p49 = scmp.eq.s32.totalorder %s48, 0
      %s51 = sadd.s32 %s50, 1
      %s52 = scalar_select %p49, %s50, %s51
      %p55 = pneg %p49
      %p56 = scmp.eq.s32.totalorder %s40, 1
      %p57 = por %p55, %p56
      %p58 = scmp.ne.s32.totalorder %s50, %s53
      %p59 = scmp.eq.s32.totalorder %s40, 0
      %p60 = por %p58, %p59
      %p61 = scmp.ne.s32.totalorder %s50, %s53
      %p62 = scmp.eq.s32.totalorder %s45, 1
      %p63 = por %p61, %p62
      %p64 = scmp.ne.s32.totalorder %s53, %s54
      %p65 = scmp.eq.s32.totalorder %s45, 0
      %p66 = por %p64, %p65
      %p67 = scmp.ne.s32.totalorder %s53, %s54
      %p68 = scmp.eq.s32.totalorder %s46, 1
      %p69 = por %p67, %p68
      %p71 = scmp.ne.s32.totalorder %s54, %s70
      %p72 = scmp.eq.s32.totalorder %s46, 0
      %p73 = por %p71, %p72
      %s75 = sadd.s32 %s74, 1
      %p78 = scmp.eq.s32.totalorder %s40, 1
      %p79 = scmp.ne.s32.totalorder %s74, %s76
      %p80 = scmp.eq.s32.totalorder %s40, 0
      %p81 = por %p79, %p80
      %p82 = scmp.ne.s32.totalorder %s74, %s76
      %p83 = scmp.eq.s32.totalorder %s45, 1
      %p84 = por %p82, %p83
      %p85 = scmp.ne.s32.totalorder %s76, %s77
      %p86 = scmp.eq.s32.totalorder %s45, 0
      %p87 = por %p85, %p86
      %p88 = scmp.ne.s32.totalorder %s76, %s77
      %p89 = scmp.eq.s32.totalorder %s46, 1
      %p90 = por %p88, %p89
      %p92 = scmp.ne.s32.totalorder %s77, %s91
      %p93 = scmp.eq.s32.totalorder %s46, 0
      %p94 = por %p92, %p93
      %s96 = sadd.s32 %s95, 1
      %p99 = scmp.eq.s32.totalorder %s40, 1
      %p100 = scmp.ne.s32.totalorder %s95, %s97
      %p101 = scmp.eq.s32.totalorder %s40, 0
      %p102 = por %p100, %p101
      %p103 = scmp.ne.s32.totalorder %s95, %s97
      %p104 = scmp.eq.s32.totalorder %s45, 1
      %p105 = por %p103, %p104
      %p106 = scmp.ne.s32.totalorder %s97, %s98
      %p107 = scmp.eq.s32.totalorder %s45, 0
      %p108 = por %p106, %p107
      %p109 = scmp.ne.s32.totalorder %s97, %s98
      %p110 = scmp.eq.s32.totalorder %s46, 1
      %p111 = por %p109, %p110
      %p113 = scmp.ne.s32.totalorder %s98, %s112
      %p114 = scmp.eq.s32.totalorder %s46, 0
      %p115 = por %p113, %p114
      %s117 = sadd.s32 %s116, 1
      %p120 = scmp.eq.s32.totalorder %s40, 1
      %p121 = scmp.ne.s32.totalorder %s116, %s118
      %p122 = scmp.eq.s32.totalorder %s40, 0
      %p123 = por %p121, %p122
      %p124 = scmp.ne.s32.totalorder %s116, %s118
      %p125 = scmp.eq.s32.totalorder %s45, 1
      %p126 = por %p124, %p125
      %p127 = scmp.ne.s32.totalorder %s118, %s119
      %p128 = scmp.eq.s32.totalorder %s45, 0
      %p129 = por %p127, %p128
      %p130 = scmp.ne.s32.totalorder %s118, %s119
      %p131 = scmp.eq.s32.totalorder %s46, 1
      %p132 = por %p130, %p131
      %p134 = scmp.ne.s32.totalorder %s119, %s133
      %p135 = scmp.eq.s32.totalorder %s46, 0
      %p136 = por %p134, %p135
      %s138 = sadd.s32 %s137, 1
      %p141 = scmp.eq.s32.totalorder %s40, 1
      %p142 = scmp.ne.s32.totalorder %s137, %s139
      %p143 = scmp.eq.s32.totalorder %s40, 0
      %p144 = por %p142, %p143
      %p145 = scmp.ne.s32.totalorder %s137, %s139
      %p146 = scmp.eq.s32.totalorder %s45, 1
      %p147 = por %p145, %p146
      %p148 = scmp.ne.s32.totalorder %s139, %s140
      %p149 = scmp.eq.s32.totalorder %s45, 0
      %p150 = por %p148, %p149
      %p151 = scmp.ne.s32.totalorder %s139, %s140
      %p152 = scmp.eq.s32.totalorder %s46, 1
      %p153 = por %p151, %p152
      %p155 = scmp.ne.s32.totalorder %s140, %s154
      %p156 = scmp.eq.s32.totalorder %s46, 0
      %p157 = por %p155, %p156
      %s159 = sadd.s32 %s158, 1
      %p162 = scmp.eq.s32.totalorder %s40, 1
      %p163 = scmp.ne.s32.totalorder %s158, %s160
      %p164 = scmp.eq.s32.totalorder %s40, 0
      %p165 = por %p163, %p164
      %p166 = scmp.ne.s32.totalorder %s158, %s160
      %p167 = scmp.eq.s32.totalorder %s45, 1
      %p168 = por %p166, %p167
      %p169 = scmp.ne.s32.totalorder %s160, %s161
      %p170 = scmp.eq.s32.totalorder %s45, 0
      %p171 = por %p169, %p170
      %p172 = scmp.ne.s32.totalorder %s160, %s161
      %p173 = scmp.eq.s32.totalorder %s46, 1
      %p174 = por %p172, %p173
      %p176 = scmp.ne.s32.totalorder %s161, %s175
      %p177 = scmp.eq.s32.totalorder %s46, 0
      %p178 = por %p176, %p177
      %s180 = sadd.s32 %s179, 1
      %p183 = scmp.eq.s32.totalorder %s40, 1
      %p184 = scmp.ne.s32.totalorder %s179, %s181
      %p185 = scmp.eq.s32.totalorder %s40, 0
      %p186 = por %p184, %p185
      %p187 = scmp.ne.s32.totalorder %s179, %s181
      %p188 = scmp.eq.s32.totalorder %s45, 1
      %p189 = por %p187, %p188
      %p190 = scmp.ne.s32.totalorder %s181, %s182
      %p191 = scmp.eq.s32.totalorder %s45, 0
      %p192 = por %p190, %p191
      %p193 = scmp.ne.s32.totalorder %s181, %s182
      %p194 = scmp.eq.s32.totalorder %s46, 1
      %p195 = por %p193, %p194
      %p197 = scmp.ne.s32.totalorder %s182, %s196
      %p198 = scmp.eq.s32.totalorder %s46, 0
      %p199 = por %p197, %p198
      %s201 = sadd.s32 %s200, 1
      %p204 = scmp.eq.s32.totalorder %s40, 1
      %p205 = scmp.ne.s32.totalorder %s200, %s202
      %p206 = scmp.eq.s32.totalorder %s40, 0
      %p207 = por %p205, %p206
      %p208 = scmp.ne.s32.totalorder %s200, %s202
      %p209 = scmp.eq.s32.totalorder %s45, 1
      %p210 = por %p208, %p209
      %p211 = scmp.ne.s32.totalorder %s202, %s203
      %p212 = scmp.eq.s32.totalorder %s45, 0
      %p213 = por %p211, %p212
      %p214 = scmp.ne.s32.totalorder %s202, %s203
      %p215 = scmp.eq.s32.totalorder %s46, 1
      %p216 = por %p214, %p215
      %p218 = scmp.ne.s32.totalorder %s203, %s217
      %p219 = scmp.eq.s32.totalorder %s46, 0
      %p220 = por %p218, %p219
      %s222 = sadd.s32 %s221, 1
      %p225 = scmp.eq.s32.totalorder %s40, 1
      %p226 = scmp.ne.s32.totalorder %s221, %s223
      %p227 = scmp.eq.s32.totalorder %s40, 0
      %p228 = por %p226, %p227
      %p229 = scmp.ne.s32.totalorder %s221, %s223
      %p230 = scmp.eq.s32.totalorder %s45, 1
      %p231 = por %p229, %p230
      %p232 = scmp.ne.s32.totalorder %s223, %s224
      %p233 = scmp.eq.s32.totalorder %s45, 0
      %p234 = por %p232, %p233
      %p235 = scmp.ne.s32.totalorder %s223, %s224
      %p236 = scmp.eq.s32.totalorder %s46, 1
      %p237 = por %p235, %p236
      %p239 = scmp.ne.s32.totalorder %s224, %s238
      %p240 = scmp.eq.s32.totalorder %s46, 0
      %p241 = por %p239, %p240
      %s243 = sadd.s32 %s242, 1
      %p246 = scmp.eq.s32.totalorder %s40, 1
      %p247 = scmp.ne.s32.totalorder %s242, %s244
      %p248 = scmp.eq.s32.totalorder %s40, 0
      %p249 = por %p247, %p248
      %p250 = scmp.ne.s32.totalorder %s242, %s244
      %p251 = scmp.eq.s32.totalorder %s45, 1
      %p252 = por %p250, %p251
      %p253 = scmp.ne.s32.totalorder %s244, %s245
      %p254 = scmp.eq.s32.totalorder %s45, 0
      %p255 = por %p253, %p254
      %p256 = scmp.ne.s32.totalorder %s244, %s245
      %p257 = scmp.eq.s32.totalorder %s46, 1
      %p258 = por %p256, %p257
      %p260 = scmp.ne.s32.totalorder %s245, %s259
      %p261 = scmp.eq.s32.totalorder %s46, 0
      %p262 = por %p260, %p261
      %s264 = sadd.s32 %s263, 1
      %p267 = scmp.eq.s32.totalorder %s40, 1
      %p268 = scmp.ne.s32.totalorder %s263, %s265
      %p269 = scmp.eq.s32.totalorder %s40, 0
      %p270 = por %p268, %p269
      %p271 = scmp.ne.s32.totalorder %s263, %s265
      %p272 = scmp.eq.s32.totalorder %s45, 1
      %p273 = por %p271, %p272
      %p274 = scmp.ne.s32.totalorder %s265, %s266
      %p275 = scmp.eq.s32.totalorder %s45, 0
      %p276 = por %p274, %p275
      %p277 = scmp.ne.s32.totalorder %s265, %s266
      %p278 = scmp.eq.s32.totalorder %s46, 1
      %p279 = por %p277, %p278
      %p281 = scmp.ne.s32.totalorder %s266, %s280
      %p282 = scmp.eq.s32.totalorder %s46, 0
      %p283 = por %p281, %p282
      %s285 = sadd.s32 %s284, 1
      %p288 = scmp.eq.s32.totalorder %s40, 1
      %p289 = scmp.ne.s32.totalorder %s284, %s286
      %p290 = scmp.eq.s32.totalorder %s40, 0
      %p291 = por %p289, %p290
      %p292 = scmp.ne.s32.totalorder %s284, %s286
      %p293 = scmp.eq.s32.totalorder %s45, 1
      %p294 = por %p292, %p293
      %p295 = scmp.ne.s32.totalorder %s286, %s287
      %p296 = scmp.eq.s32.totalorder %s45, 0
      %p297 = por %p295, %p296
      %p298 = scmp.ne.s32.totalorder %s286, %s287
      %p299 = scmp.eq.s32.totalorder %s46, 1
      %p300 = por %p298, %p299
      %p302 = scmp.ne.s32.totalorder %s287, %s301
      %p303 = scmp.eq.s32.totalorder %s46, 0
      %p304 = por %p302, %p303
      %s306 = sadd.s32 %s305, 1
      %p309 = scmp.eq.s32.totalorder %s40, 1
      %p310 = scmp.ne.s32.totalorder %s305, %s307
      %p311 = scmp.eq.s32.totalorder %s40, 0
      %p312 = por %p310, %p311
      %p313 = scmp.ne.s32.totalorder %s305, %s307
      %p314 = scmp.eq.s32.totalorder %s45, 1
      %p315 = por %p313, %p314
      %p316 = scmp.ne.s32.totalorder %s307, %s308
      %p317 = scmp.eq.s32.totalorder %s45, 0
      %p318 = por %p316, %p317
      %p319 = scmp.ne.s32.totalorder %s307, %s308
      %p320 = scmp.eq.s32.totalorder %s46, 1
      %p321 = por %p319, %p320
      %p323 = scmp.ne.s32.totalorder %s308, %s322
      %p324 = scmp.eq.s32.totalorder %s46, 0
      %p325 = por %p323, %p324
      %s327 = sadd.s32 %s326, 1
      %p330 = scmp.eq.s32.totalorder %s40, 1
      %p331 = scmp.ne.s32.totalorder %s326, %s328
      %p332 = scmp.eq.s32.totalorder %s40, 0
      %p333 = por %p331, %p332
      %p334 = scmp.ne.s32.totalorder %s326, %s328
      %p335 = scmp.eq.s32.totalorder %s45, 1
      %p336 = por %p334, %p335
      %p337 = scmp.ne.s32.totalorder %s328, %s329
      %p338 = scmp.eq.s32.totalorder %s45, 0
      %p339 = por %p337, %p338
      %p340 = scmp.ne.s32.totalorder %s328, %s329
      %p341 = scmp.eq.s32.totalorder %s46, 1
      %p342 = por %p340, %p341
      %p344 = scmp.ne.s32.totalorder %s329, %s343
      %p345 = scmp.eq.s32.totalorder %s46, 0
      %p346 = por %p344, %p345
      %s348 = sadd.s32 %s347, 1
      %p351 = scmp.eq.s32.totalorder %s40, 1
      %p352 = scmp.ne.s32.totalorder %s347, %s349
      %p353 = scmp.eq.s32.totalorder %s40, 0
      %p354 = por %p352, %p353
      %p355 = scmp.ne.s32.totalorder %s347, %s349
      %p356 = scmp.eq.s32.totalorder %s45, 1
      %p357 = por %p355, %p356
      %p358 = scmp.ne.s32.totalorder %s349, %s350
      %p359 = scmp.eq.s32.totalorder %s45, 0
      %p360 = por %p358, %p359
      %p361 = scmp.ne.s32.totalorder %s349, %s350
      %p362 = scmp.eq.s32.totalorder %s46, 1
      %p363 = por %p361, %p362
      %p365 = scmp.ne.s32.totalorder %s350, %s364
      %p366 = scmp.eq.s32.totalorder %s46, 0
      %p367 = por %p365, %p366
      %s369 = sadd.s32 %s368, 1
      %p372 = scmp.eq.s32.totalorder %s40, 1
      %p373 = scmp.ne.s32.totalorder %s368, %s370
      %p374 = scmp.eq.s32.totalorder %s40, 0
      %p375 = por %p373, %p374
      %p376 = scmp.ne.s32.totalorder %s368, %s370
      %p377 = scmp.eq.s32.totalorder %s45, 1
      %p378 = por %p376, %p377
      %p379 = scmp.ne.s32.totalorder %s370, %s371
      %p380 = scmp.eq.s32.totalorder %s45, 0
      %p381 = por %p379, %p380
      %p382 = scmp.ne.s32.totalorder %s370, %s371
      %p383 = scmp.eq.s32.totalorder %s46, 1
      %p384 = por %p382, %p383
      %p386 = scmp.ne.s32.totalorder %s371, %s385
      %p387 = scmp.eq.s32.totalorder %s46, 0
      %p388 = por %p386, %p387
      %s390 = sadd.s32 %s389, 1
      %p393 = scmp.eq.s32.totalorder %s40, 1
      %p394 = scmp.ne.s32.totalorder %s389, %s391
      %p395 = scmp.eq.s32.totalorder %s40, 0
      %p396 = por %p394, %p395
      %p397 = scmp.ne.s32.totalorder %s389, %s391
      %p398 = scmp.eq.s32.totalorder %s45, 1
      %p399 = por %p397, %p398
      %p400 = scmp.ne.s32.totalorder %s391, %s392
      %p401 = scmp.eq.s32.totalorder %s45, 0
      %p402 = por %p400, %p401
      %p403 = scmp.ne.s32.totalorder %s391, %s392
      %p404 = scmp.eq.s32.totalorder %s46, 1
      %p405 = por %p403, %p404
      %p407 = scmp.ne.s32.totalorder %s392, %s406
      %p408 = scmp.eq.s32.totalorder %s46, 0
      %p409 = por %p407, %p408
      %s411 = sadd.s32 %s410, 1
      %p414 = scmp.eq.s32.totalorder %s40, 1
      %p415 = scmp.ne.s32.totalorder %s410, %s412
      %p416 = scmp.eq.s32.totalorder %s40, 0
      %p417 = por %p415, %p416
      %p418 = scmp.ne.s32.totalorder %s410, %s412
      %p419 = scmp.eq.s32.totalorder %s45, 1
      %p420 = por %p418, %p419
      %p421 = scmp.ne.s32.totalorder %s412, %s413
      %p422 = scmp.eq.s32.totalorder %s45, 0
      %p423 = por %p421, %p422
      %p424 = scmp.ne.s32.totalorder %s412, %s413
      %p425 = scmp.eq.s32.totalorder %s46, 1
      %p426 = por %p424, %p425
      %p428 = scmp.ne.s32.totalorder %s413, %s427
      %p429 = scmp.eq.s32.totalorder %s46, 0
      %p430 = por %p428, %p429
      %s432 = sadd.s32 %s431, 1
      %p435 = scmp.eq.s32.totalorder %s40, 1
      %p436 = scmp.ne.s32.totalorder %s431, %s433
      %p437 = scmp.eq.s32.totalorder %s40, 0
      %p438 = por %p436, %p437
      %p439 = scmp.ne.s32.totalorder %s431, %s433
      %p440 = scmp.eq.s32.totalorder %s45, 1
      %p441 = por %p439, %p440
      %p442 = scmp.ne.s32.totalorder %s433, %s434
      %p443 = scmp.eq.s32.totalorder %s45, 0
      %p444 = por %p442, %p443
      %p445 = scmp.ne.s32.totalorder %s433, %s434
      %p446 = scmp.eq.s32.totalorder %s46, 1
      %p447 = por %p445, %p446
      %p449 = scmp.ne.s32.totalorder %s434, %s448
      %p450 = scmp.eq.s32.totalorder %s46, 0
      %p451 = por %p449, %p450
      %s453 = sadd.s32 %s452, 1
      %p456 = scmp.eq.s32.totalorder %s40, 1
      %p457 = scmp.ne.s32.totalorder %s452, %s454
      %p458 = scmp.eq.s32.totalorder %s40, 0
      %p459 = por %p457, %p458
      %p460 = scmp.ne.s32.totalorder %s452, %s454
      %p461 = scmp.eq.s32.totalorder %s45, 1
      %p462 = por %p460, %p461
      %p463 = scmp.ne.s32.totalorder %s454, %s455
      %p464 = scmp.eq.s32.totalorder %s45, 0
      %p465 = por %p463, %p464
      %p466 = scmp.ne.s32.totalorder %s454, %s455
      %p467 = scmp.eq.s32.totalorder %s46, 1
      %p468 = por %p466, %p467
      %p470 = scmp.ne.s32.totalorder %s455, %s469
      %p471 = scmp.eq.s32.totalorder %s46, 0
      %p472 = por %p470, %p471
      %s474 = sadd.s32 %s473, 1
      %p477 = scmp.eq.s32.totalorder %s40, 1
      %p478 = scmp.ne.s32.totalorder %s473, %s475
      %p479 = scmp.eq.s32.totalorder %s40, 0
      %p480 = por %p478, %p479
      %p481 = scmp.ne.s32.totalorder %s473, %s475
      %p482 = scmp.eq.s32.totalorder %s45, 1
      %p483 = por %p481, %p482
      %p484 = scmp.ne.s32.totalorder %s475, %s476
      %p485 = scmp.eq.s32.totalorder %s45, 0
      %p486 = por %p484, %p485
      %p487 = scmp.ne.s32.totalorder %s475, %s476
      %p488 = scmp.eq.s32.totalorder %s46, 1
      %p489 = por %p487, %p488
      %p491 = scmp.ne.s32.totalorder %s476, %s490
      %p492 = scmp.eq.s32.totalorder %s46, 0
      %p493 = por %p491, %p492
      %s495 = sadd.s32 %s494, 1
      %p498 = scmp.eq.s32.totalorder %s40, 1
      %p499 = scmp.ne.s32.totalorder %s494, %s496
      %p500 = scmp.eq.s32.totalorder %s40, 0
      %p501 = por %p499, %p500
      %p502 = scmp.ne.s32.totalorder %s494, %s496
      %p503 = scmp.eq.s32.totalorder %s45, 1
      %p504 = por %p502, %p503
      %p505 = scmp.ne.s32.totalorder %s496, %s497
      %p506 = scmp.eq.s32.totalorder %s45, 0
      %p507 = por %p505, %p506
      %p508 = scmp.ne.s32.totalorder %s496, %s497
      %p509 = scmp.eq.s32.totalorder %s46, 1
      %p510 = por %p508, %p509
      %p512 = scmp.ne.s32.totalorder %s497, %s511
      %p513 = scmp.eq.s32.totalorder %s46, 0
      %p514 = por %p512, %p513
      %s515 = ssub.s32 %s40, %s47
      %p516 = scmp.eq.s32.totalorder %s515, 0
      %s518 = sadd.s32 %s517, 1
      %s519 = scalar_select %p516, %s517, %s518
      %p522 = pneg %p516
      %p523 = scmp.eq.s32.totalorder %s40, 1
      %p524 = por %p522, %p523
      %p525 = scmp.ne.s32.totalorder %s517, %s520
      %p526 = scmp.eq.s32.totalorder %s40, 0
      %p527 = por %p525, %p526
      %p528 = scmp.ne.s32.totalorder %s517, %s520
      %p529 = scmp.eq.s32.totalorder %s45, 1
      %p530 = por %p528, %p529
      %p531 = scmp.ne.s32.totalorder %s520, %s521
      %p532 = scmp.eq.s32.totalorder %s45, 0
      %p533 = por %p531, %p532
      %p534 = scmp.ne.s32.totalorder %s520, %s521
      %p535 = scmp.eq.s32.totalorder %s46, 1
      %p536 = por %p534, %p535
      %p538 = scmp.ne.s32.totalorder %s521, %s537
      %p539 = scmp.eq.s32.totalorder %s46, 0
      %p540 = por %p538, %p539
      %p541 = scmp.le.s32.totalorder 1, %s40
      %p542 = scmp.lt.s32.totalorder %s40, 3
      %p543 = pnand %p541, %p542
      %p544 = pneg %p543
      // Predicated region
      $region9: #{fwd.1} parent=5 // pred_check
        _
      $region10: #{fwd.1} parent=5 // pred_check_branch
        %546 = sbr.rel (%p543) target = $region12
      $region11: #{fwd.1} parent=5 // pred_region
        %s547 = ssub.s32 %s40, 1
        // Predicated region
        $region13: #{fwd.1} parent=11 // pred_check
          %p548 = pneg %p87
        $region14: #{fwd.1} parent=11 // pred_check_branch
          %550 = sbr.rel (%p548) target = $region16
        $region15: #{fwd.1} parent=11 // pred_region
          _
        $region16: #{fwd.1} parent=11 // pred_fallthru
          _
        // Predicated region
        $region17: #{fwd.1} parent=11 // pred_check
          %p551 = pneg %p108
        $region18: #{fwd.1} parent=11 // pred_check_branch
          %553 = sbr.rel (%p551) target = $region20
        $region19: #{fwd.1} parent=11 // pred_region
          %s555 = ssub.s32 6912, 6912
          %556 = vsyncadd [#allocation3], %s555
          %s557 = sshll.u32 [#allocation2], 4
          %s558 = int_to_ptr.vmem [resolvable:$true] %s557
          %563 = dma.hbm_to_vmem [thread:$0]  %s2, 6912, %s558, [#allocation3], 576, 576, 36
        $region20: #{fwd.1} parent=11 // pred_fallthru
          _
        // Predicated region
        $region21: #{fwd.1} parent=11 // pred_check
          %p564 = pneg %p129
        $region22: #{fwd.1} parent=11 // pred_check_branch
          %566 = sbr.rel (%p564) target = $region24
        $region23: #{fwd.1} parent=11 // pred_region
          %s568 = ssub.s32 144, 144
          %569 = vsyncadd [#allocation6], %s568
          %s571 = sshll.u32 [#allocation5], 4
          %s572 = int_to_ptr.vmem [resolvable:$true] %s571
          %574 = dma.hbm_to_vmem [thread:$0]  %s3, 144, %s572, [#allocation6]
        $region24: #{fwd.1} parent=11 // pred_fallthru
          _
        // Predicated region
        $region25: #{fwd.1} parent=11 // pred_check
          %p575 = pneg %p150
        $region26: #{fwd.1} parent=11 // pred_check_branch
          %577 = sbr.rel (%p575) target = $region28
        $region27: #{fwd.1} parent=11 // pred_region
          %s579 = ssub.s32 192, 192
          %580 = vsyncadd [#allocation6], %s579
          %s581 = sshll.u32 [#allocation7], 4
          %s582 = int_to_ptr.vmem [resolvable:$true] %s581
          %587 = dma.hbm_to_vmem [thread:$0]  %s4, 192, %s582, [#allocation6], 64, 64, 4
        $region28: #{fwd.1} parent=11 // pred_fallthru
          _
        // Predicated region
        $region29: #{fwd.1} parent=11 // pred_check
          %p588 = pneg %p171
        $region30: #{fwd.1} parent=11 // pred_check_branch
          %590 = sbr.rel (%p588) target = $region32
        $region31: #{fwd.1} parent=11 // pred_region
          _
        $region32: #{fwd.1} parent=11 // pred_fallthru
          _
        // Predicated region
        $region33: #{fwd.1} parent=11 // pred_check
          %p591 = pneg %p192
        $region34: #{fwd.1} parent=11 // pred_check_branch
          %593 = sbr.rel (%p591) target = $region36
        $region35: #{fwd.1} parent=11 // pred_region
          %s595 = ssub.s32 16, 16
          %596 = vsyncadd [#allocation9], %s595
          %s598 = sshll.u32 [#allocation8], 4
          %s599 = int_to_ptr.vmem [resolvable:$true] %s598
          %601 = dma.hbm_to_vmem [thread:$0]  %s6, 16, %s599, [#allocation9]
        $region36: #{fwd.1} parent=11 // pred_fallthru
          _
        // Predicated region
        $region37: #{fwd.1} parent=11 // pred_check
          %p602 = pneg %p213
        $region38: #{fwd.1} parent=11 // pred_check_branch
          %604 = sbr.rel (%p602) target = $region40
        $region39: #{fwd.1} parent=11 // pred_region
          %s606 = ssub.s32 192, 192
          %607 = vsyncadd [#allocation9], %s606
          %s608 = sshll.u32 [#allocation10], 4
          %s609 = int_to_ptr.vmem [resolvable:$true] %s608
          %614 = dma.hbm_to_vmem [thread:$0]  %s7, 192, %s609, [#allocation9], 64, 64, 4
        $region40: #{fwd.1} parent=11 // pred_fallthru
          _
        // Predicated region
        $region41: #{fwd.1} parent=11 // pred_check
          %p615 = pneg %p234
        $region42: #{fwd.1} parent=11 // pred_check_branch
          %617 = sbr.rel (%p615) target = $region44
        $region43: #{fwd.1} parent=11 // pred_region
          %s619 = ssub.s32 27648, 27648
          %620 = vsyncadd [#allocation12], %s619
          %s621 = sshll.u32 [#allocation11], 4
          %s622 = int_to_ptr.vmem [resolvable:$true] %s621
          %627 = dma.hbm_to_vmem [thread:$0]  %s8, 27648, %s622, [#allocation12], 64, 64, 4
        $region44: #{fwd.1} parent=11 // pred_fallthru
          _
        // Predicated region
        $region45: #{fwd.1} parent=11 // pred_check
          %p628 = pneg %p255
        $region46: #{fwd.1} parent=11 // pred_check_branch
          %630 = sbr.rel (%p628) target = $region48
        $region47: #{fwd.1} parent=11 // pred_region
          %s632 = ssub.s32 16, 16
          %633 = vsyncadd [#allocation12], %s632
          %s635 = sshll.u32 [#allocation13], 4
          %s636 = int_to_ptr.vmem [resolvable:$true] %s635
          %638 = dma.hbm_to_vmem [thread:$0]  %s9, 16, %s636, [#allocation12]
        $region48: #{fwd.1} parent=11 // pred_fallthru
          _
        // Predicated region
        $region49: #{fwd.1} parent=11 // pred_check
          %p639 = pneg %p276
        $region50: #{fwd.1} parent=11 // pred_check_branch
          %641 = sbr.rel (%p639) target = $region52
        $region51: #{fwd.1} parent=11 // pred_region
          %s643 = ssub.s32 96, 96
          %644 = vsyncadd [#allocation15], %s643
          %s645 = sshll.u32 [#allocation14], 4
          %s646 = int_to_ptr.vmem [resolvable:$true] %s645
          %651 = dma.hbm_to_vmem [thread:$0]  %s10, 96, %s646, [#allocation15], 32, 32, 2
        $region52: #{fwd.1} parent=11 // pred_fallthru
          _
        // Predicated region
        $region53: #{fwd.1} parent=11 // pred_check
          %p652 = pneg %p297
        $region54: #{fwd.1} parent=11 // pred_check_branch
          %654 = sbr.rel (%p652) target = $region56
        $region55: #{fwd.1} parent=11 // pred_region
          %s656 = ssub.s32 3072, 3072
          %657 = vsyncadd [#allocation15], %s656
          %s658 = sshll.u32 [#allocation16], 4
          %s659 = int_to_ptr.vmem [resolvable:$true] %s658
          %664 = dma.hbm_to_vmem [thread:$0]  %s11, 3072, %s659, [#allocation15], 64, 64, 4
        $region56: #{fwd.1} parent=11 // pred_fallthru
          _
        // Predicated region
        $region57: #{fwd.1} parent=11 // pred_check
          %p665 = pneg %p318
        $region58: #{fwd.1} parent=11 // pred_check_branch
          %667 = sbr.rel (%p665) target = $region60
        $region59: #{fwd.1} parent=11 // pred_region
          _
        $region60: #{fwd.1} parent=11 // pred_fallthru
          _
        // Predicated region
        $region61: #{fwd.1} parent=11 // pred_check
          %p668 = pneg %p339
        $region62: #{fwd.1} parent=11 // pred_check_branch
          %670 = sbr.rel (%p668) target = $region64
        $region63: #{fwd.1} parent=11 // pred_region
          %s672 = ssub.s32 96, 96
          %673 = vsyncadd [#allocation18], %s672
          %s674 = sshll.u32 [#allocation17], 4
          %s675 = int_to_ptr.vmem [resolvable:$true] %s674
          %680 = dma.hbm_to_vmem [thread:$0]  %s13, 96, %s675, [#allocation18], 32, 32, 2
        $region64: #{fwd.1} parent=11 // pred_fallthru
          _
        // Predicated region
        $region65: #{fwd.1} parent=11 // pred_check
          %p681 = pneg %p360
        $region66: #{fwd.1} parent=11 // pred_check_branch
          %683 = sbr.rel (%p681) target = $region68
        $region67: #{fwd.1} parent=11 // pred_region
          %s685 = ssub.s32 3072, 3072
          %686 = vsyncadd [#allocation18], %s685
          %s687 = sshll.u32 [#allocation19], 4
          %s688 = int_to_ptr.vmem [resolvable:$true] %s687
          %693 = dma.hbm_to_vmem [thread:$0]  %s14, 3072, %s688, [#allocation18], 64, 64, 4
        $region68: #{fwd.1} parent=11 // pred_fallthru
          _
        // Predicated region
        $region69: #{fwd.1} parent=11 // pred_check
          %p694 = pneg %p381
        $region70: #{fwd.1} parent=11 // pred_check_branch
          %696 = sbr.rel (%p694) target = $region72
        $region71: #{fwd.1} parent=11 // pred_region
          %s698 = ssub.s32 16, 16
          %699 = vsyncadd [#allocation21], %s698
          %s701 = sshll.u32 [#allocation20], 4
          %s702 = int_to_ptr.vmem [resolvable:$true] %s701
          %704 = dma.hbm_to_vmem [thread:$0]  %s15, 16, %s702, [#allocation21]
        $region72: #{fwd.1} parent=11 // pred_fallthru
          _
        // Predicated region
        $region73: #{fwd.1} parent=11 // pred_check
          %p705 = pneg %p402
        $region74: #{fwd.1} parent=11 // pred_check_branch
          %707 = sbr.rel (%p705) target = $region76
        $region75: #{fwd.1} parent=11 // pred_region
          _
        $region76: #{fwd.1} parent=11 // pred_fallthru
          _
        // Predicated region
        $region77: #{fwd.1} parent=11 // pred_check
          %p708 = pneg %p423
        $region78: #{fwd.1} parent=11 // pred_check_branch
          %710 = sbr.rel (%p708) target = $region80
        $region79: #{fwd.1} parent=11 // pred_region
          %s712 = ssub.s32 2048, 2048
          %713 = vsyncadd [#allocation21], %s712
          %s714 = sshll.u32 [#allocation22], 4
          %s715 = int_to_ptr.vmem [resolvable:$true] %s714
          %720 = dma.hbm_to_vmem [thread:$0]  %s17, 2048, %s715, [#allocation21], 64, 64, 4
        $region80: #{fwd.1} parent=11 // pred_fallthru
          _
        // Predicated region
        $region81: #{fwd.1} parent=11 // pred_check
          %p721 = pneg %p444
        $region82: #{fwd.1} parent=11 // pred_check_branch
          %723 = sbr.rel (%p721) target = $region84
        $region83: #{fwd.1} parent=11 // pred_region
          %s725 = ssub.s32 16, 16
          %726 = vsyncadd [#allocation24], %s725
          %s728 = sshll.u32 [#allocation23], 4
          %s729 = int_to_ptr.vmem [resolvable:$true] %s728
          %731 = dma.hbm_to_vmem [thread:$0]  %s18, 16, %s729, [#allocation24]
        $region84: #{fwd.1} parent=11 // pred_fallthru
          _
        // Predicated region
        $region85: #{fwd.1} parent=11 // pred_check
          %p732 = pneg %p465
        $region86: #{fwd.1} parent=11 // pred_check_branch
          %734 = sbr.rel (%p732) target = $region88
        $region87: #{fwd.1} parent=11 // pred_region
          _
        $region88: #{fwd.1} parent=11 // pred_fallthru
          _
        // Predicated region
        $region89: #{fwd.1} parent=11 // pred_check
          %p735 = pneg %p486
        $region90: #{fwd.1} parent=11 // pred_check_branch
          %737 = sbr.rel (%p735) target = $region92
        $region91: #{fwd.1} parent=11 // pred_region
          %s739 = ssub.s32 3072, 3072
          %740 = vsyncadd [#allocation24], %s739
          %s741 = sshll.u32 [#allocation25], 4
          %s742 = int_to_ptr.vmem [resolvable:$true] %s741
          %747 = dma.hbm_to_vmem [thread:$0]  %s20, 3072, %s742, [#allocation24], 64, 64, 4
        $region92: #{fwd.1} parent=11 // pred_fallthru
          _
        // Predicated region
        $region93: #{fwd.1} parent=11 // pred_check
          %p748 = pneg %p507
        $region94: #{fwd.1} parent=11 // pred_check_branch
          %750 = sbr.rel (%p748) target = $region96
        $region95: #{fwd.1} parent=11 // pred_region
          %s752 = ssub.s32 16, 16
          %753 = vsyncadd [#allocation27], %s752
          %s755 = sshll.u32 [#allocation26], 4
          %s756 = int_to_ptr.vmem [resolvable:$true] %s755
          %758 = dma.hbm_to_vmem [thread:$0]  %s21, 16, %s756, [#allocation27]
        $region96: #{fwd.1} parent=11 // pred_fallthru
          _
      $region12: #{fwd.1} parent=5 // pred_fallthru
        _
      %p759 = scmp.lt.s32.totalorder %s40, 2
      // Predicated region
      $region97: #{fwd.1} parent=5 // pred_check
        %p760 = pneg %p759
      $region98: #{fwd.1} parent=5 // pred_check_branch
        %762 = sbr.rel (%p760) target = $region100
      $region99: #{fwd.1} parent=5 // pred_region
        // Predicated region
        $region101: #{fwd.1} parent=99 // pred_check
          %p763 = pneg %p60
        $region102: #{fwd.1} parent=99 // pred_check_branch
          %765 = sbr.rel (%p763) target = $region104
        $region103: #{fwd.1} parent=99 // pred_region
          %p766 = scmp.lt.s32.totalorder %s40, 1
          %s767 = scalar_select %p766, %s40, 1
          %s768 = smul.addr %s767, 2
          %s769 = smul.addr %s768, 8
          %s770 = scalar_lea.vmem %s0, %s769
        $region104: #{fwd.1} parent=99 // pred_fallthru
          _
      $region100: #{fwd.1} parent=5 // pred_fallthru
        _
      %p771 = scmp.le.s32.totalorder 1, %s40
      %p772 = scmp.lt.s32.totalorder %s40, 3
      %p773 = pnand %p771, %p772
      %p774 = pneg %p773
      // Predicated region
      $region105: #{fwd.1} parent=5 // pred_check
        _
      $region106: #{fwd.1} parent=5 // pred_check_branch
        %776 = sbr.rel (%p773) target = $region108
      $region107: #{fwd.1} parent=5 // pred_region
        %s777 = ssub.s32 %s40, 1
        // Predicated region
        $region109: #{fwd.1} parent=107 // pred_check
          %p778 = pneg %p108
        $region110: #{fwd.1} parent=107 // pred_check_branch
          %780 = sbr.rel (%p778) target = $region112
        $region111: #{fwd.1} parent=107 // pred_region
          %781 = dma.done [#allocation3], 6912
        $region112: #{fwd.1} parent=107 // pred_fallthru
          _
        // Predicated region
        $region113: #{fwd.1} parent=107 // pred_check
          %p782 = pneg %p129
        $region114: #{fwd.1} parent=107 // pred_check_branch
          %784 = sbr.rel (%p782) target = $region116
        $region115: #{fwd.1} parent=107 // pred_region
          %785 = dma.done [#allocation6], 144
        $region116: #{fwd.1} parent=107 // pred_fallthru
          _
        // Predicated region
        $region117: #{fwd.1} parent=107 // pred_check
          %p786 = pneg %p150
        $region118: #{fwd.1} parent=107 // pred_check_branch
          %788 = sbr.rel (%p786) target = $region120
        $region119: #{fwd.1} parent=107 // pred_region
          %789 = dma.done [#allocation6], 192
        $region120: #{fwd.1} parent=107 // pred_fallthru
          _
        // Predicated region
        $region121: #{fwd.1} parent=107 // pred_check
          %p790 = pneg %p192
        $region122: #{fwd.1} parent=107 // pred_check_branch
          %792 = sbr.rel (%p790) target = $region124
        $region123: #{fwd.1} parent=107 // pred_region
          %793 = dma.done [#allocation9], 16
        $region124: #{fwd.1} parent=107 // pred_fallthru
          _
        // Predicated region
        $region125: #{fwd.1} parent=107 // pred_check
          %p794 = pneg %p213
        $region126: #{fwd.1} parent=107 // pred_check_branch
          %796 = sbr.rel (%p794) target = $region128
        $region127: #{fwd.1} parent=107 // pred_region
          %797 = dma.done [#allocation9], 192
        $region128: #{fwd.1} parent=107 // pred_fallthru
          _
        // Predicated region
        $region129: #{fwd.1} parent=107 // pred_check
          %p798 = pneg %p234
        $region130: #{fwd.1} parent=107 // pred_check_branch
          %800 = sbr.rel (%p798) target = $region132
        $region131: #{fwd.1} parent=107 // pred_region
          %801 = dma.done [#allocation12], 27648
        $region132: #{fwd.1} parent=107 // pred_fallthru
          _
        // Predicated region
        $region133: #{fwd.1} parent=107 // pred_check
          %p802 = pneg %p255
        $region134: #{fwd.1} parent=107 // pred_check_branch
          %804 = sbr.rel (%p802) target = $region136
        $region135: #{fwd.1} parent=107 // pred_region
          %805 = dma.done [#allocation12], 16
        $region136: #{fwd.1} parent=107 // pred_fallthru
          _
        // Predicated region
        $region137: #{fwd.1} parent=107 // pred_check
          %p806 = pneg %p276
        $region138: #{fwd.1} parent=107 // pred_check_branch
          %808 = sbr.rel (%p806) target = $region140
        $region139: #{fwd.1} parent=107 // pred_region
          %809 = dma.done [#allocation15], 96
        $region140: #{fwd.1} parent=107 // pred_fallthru
          _
        // Predicated region
        $region141: #{fwd.1} parent=107 // pred_check
          %p810 = pneg %p297
        $region142: #{fwd.1} parent=107 // pred_check_branch
          %812 = sbr.rel (%p810) target = $region144
        $region143: #{fwd.1} parent=107 // pred_region
          %813 = dma.done [#allocation15], 3072
        $region144: #{fwd.1} parent=107 // pred_fallthru
          _
        // Predicated region
        $region145: #{fwd.1} parent=107 // pred_check
          %p814 = pneg %p339
        $region146: #{fwd.1} parent=107 // pred_check_branch
          %816 = sbr.rel (%p814) target = $region148
        $region147: #{fwd.1} parent=107 // pred_region
          %817 = dma.done [#allocation18], 96
        $region148: #{fwd.1} parent=107 // pred_fallthru
          _
        // Predicated region
        $region149: #{fwd.1} parent=107 // pred_check
          %p818 = pneg %p360
        $region150: #{fwd.1} parent=107 // pred_check_branch
          %820 = sbr.rel (%p818) target = $region152
        $region151: #{fwd.1} parent=107 // pred_region
          %821 = dma.done [#allocation18], 3072
        $region152: #{fwd.1} parent=107 // pred_fallthru
          _
        // Predicated region
        $region153: #{fwd.1} parent=107 // pred_check
          %p822 = pneg %p381
        $region154: #{fwd.1} parent=107 // pred_check_branch
          %824 = sbr.rel (%p822) target = $region156
        $region155: #{fwd.1} parent=107 // pred_region
          %825 = dma.done [#allocation21], 16
        $region156: #{fwd.1} parent=107 // pred_fallthru
          _
        // Predicated region
        $region157: #{fwd.1} parent=107 // pred_check
          %p826 = pneg %p423
        $region158: #{fwd.1} parent=107 // pred_check_branch
          %828 = sbr.rel (%p826) target = $region160
        $region159: #{fwd.1} parent=107 // pred_region
          %829 = dma.done [#allocation21], 2048
        $region160: #{fwd.1} parent=107 // pred_fallthru
          _
        // Predicated region
        $region161: #{fwd.1} parent=107 // pred_check
          %p830 = pneg %p444
        $region162: #{fwd.1} parent=107 // pred_check_branch
          %832 = sbr.rel (%p830) target = $region164
        $region163: #{fwd.1} parent=107 // pred_region
          %833 = dma.done [#allocation24], 16
        $region164: #{fwd.1} parent=107 // pred_fallthru
          _
        // Predicated region
        $region165: #{fwd.1} parent=107 // pred_check
          %p834 = pneg %p486
        $region166: #{fwd.1} parent=107 // pred_check_branch
          %836 = sbr.rel (%p834) target = $region168
        $region167: #{fwd.1} parent=107 // pred_region
          %837 = dma.done [#allocation24], 3072
        $region168: #{fwd.1} parent=107 // pred_fallthru
          _
        // Predicated region
        $region169: #{fwd.1} parent=107 // pred_check
          %p838 = pneg %p507
        $region170: #{fwd.1} parent=107 // pred_check_branch
          %840 = sbr.rel (%p838) target = $region172
        $region171: #{fwd.1} parent=107 // pred_region
          %841 = dma.done [#allocation27], 16
        $region172: #{fwd.1} parent=107 // pred_fallthru
          _
        %p842 = scmp.lt.s32.totalorder %s45, 1
        %s843 = scalar_select %p842, %s45, 1
        %s844 = smul.addr %s843, 2
        %s845 = smul.addr %s844, 8
        %s846 = scalar_lea.vmem %s0, %s845
        %p847 = pneg %p66
        %p848 = pneg %p63
        %p849 = pneg %p87
        %p850 = pneg %p84
        %p851 = pneg %p108
        %p852 = pneg %p105
        %p853 = pneg %p129
        %p854 = pneg %p126
        %p855 = pneg %p150
        %p856 = pneg %p147
        %p857 = pneg %p171
        %p858 = pneg %p168
        %p859 = pneg %p192
        %p860 = pneg %p189
        %p861 = pneg %p213
        %p862 = pneg %p210
        %p863 = pneg %p234
        %p864 = pneg %p231
        %p865 = pneg %p255
        %p866 = pneg %p252
        %p867 = pneg %p276
        %p868 = pneg %p273
        %p869 = pneg %p297
        %p870 = pneg %p294
        %p871 = pneg %p318
        %p872 = pneg %p315
        %p873 = pneg %p339
        %p874 = pneg %p336
        %p875 = pneg %p360
        %p876 = pneg %p357
        %p877 = pneg %p381
        %p878 = pneg %p378
        %p879 = pneg %p402
        %p880 = pneg %p399
        %p881 = pneg %p423
        %p882 = pneg %p420
        %p883 = pneg %p444
        %p884 = pneg %p441
        %p885 = pneg %p465
        %p886 = pneg %p462
        %p887 = pneg %p486
        %p888 = pneg %p483
        %p889 = pneg %p507
        %p890 = pneg %p504
        %p891 = pneg %p533
        %p892 = pneg %p530
        %s893 = sand.u32 %s520, 1
        %s894 = scalar_lea.sflag [#allocation4], %s893
        %s895 = sand.u32 %s520, 1
        %s896 = scalar_lea.vmem [#allocation28], %s895
        %p897 = scmp.lt.s32.totalorder %s45, 1
        %s898 = scalar_select %p897, %s45, 1
        %s899 = smul.addr %s898, 2
        %s900 = smul.addr %s899, 8
        %s901 = scalar_lea.vmem %s0, %s900
        %v903 = vld [vmem:[%s901] sm:$0xff]
        %v904 = vld [vmem:[%s901 + $0x8] sm:$0xff]
        %v905 = vpack.c.bf16 %v904, %v903
        %v906 = vld [vmem:[%s1] sm:$0xf]
        %v907 = vld [vmem:[%s1 + $0x4] sm:$0x7]
        %v910 = vunpack.c.l.b16 %v906
        %v911 = vunpack.c.l.b16 %v907
        %v912 = vpack.c.b16 %v911, %v910
        %vm913 = vcmask 130048
        %v915 = vsel %vm913, %v912, 0
        %917 = vmatprep.subr.bf16.mxu0 0
        %918 = vmatpush1.bf16.msra.mxu0 0
        %919 = vmatprep.subr.bf16.mxu0 0
        %920 = vmatpush1.bf16.msra.mxu0 0
        %921 = vmatprep.subr.bf16.mxu0 0
        %922 = vmatpush1.bf16.msra.mxu0 0
        %923 = vmatprep.subr.bf16.mxu0 0
        %924 = vmatpush1.bf16.msra.mxu0 0
        %925 = vmatprep.subr.bf16.mxu0 0
        %926 = vmatpush1.bf16.msra.mxu0 0
        %927 = vmatprep.subr.bf16.mxu0 0
        %928 = vmatpush1.bf16.msra.mxu0 0
        %929 = vmatprep.subr.bf16.mxu0 0
        %930 = vmatpush1.bf16.msra.mxu0 0
        %931 = vmatprep.subr.bf16.mxu0 0
        %932 = vmatpush1.bf16.msra.mxu0 %v905
        %933 = vmatprep.subr.bf16.mxu0 0
        %934 = vmatpush2.bf16.msra.mxu0 0
        %935 = vmatprep.subr.bf16.mxu0 0
        %936 = vmatpush2.bf16.msra.mxu0 0
        %937 = vmatprep.subr.bf16.mxu0 0
        %938 = vmatpush2.bf16.msra.mxu0 0
        %939 = vmatprep.subr.bf16.mxu0 0
        %940 = vmatpush2.bf16.msra.mxu0 0
        %941 = vmatprep.subr.bf16.mxu0 0
        %942 = vmatpush2.bf16.msra.mxu0 0
        %943 = vmatprep.subr.bf16.mxu0 0
        %944 = vmatpush2.bf16.msra.mxu0 0
        %945 = vmatprep.subr.bf16.mxu0 0
        %946 = vmatpush2.bf16.msra.mxu0 0
        %947 = vmatprep.subr.bf16.mxu0 0
        %948 = vmatpush2.bf16.msra.mxu0 0
        %949 = vmatprep.mubr.bf16.mxu0 0
        %950 = vmatmul.mubr.bf16.gmra.mxu0 %v915
        %v951 = vpop.f32.mrf.mxu0
        %v952 = vadd.f32 0.0, %v951
        %v953 = vpop.f32.mrf.mxu0
        %v954 = vpop.f32.mrf.mxu0
        %v955 = vadd.f32 0.0, %v954
        %v956 = vpop.f32.mrf.mxu0
        %957 = vdwg.mxu0
        %v958 = vpack.c.bf16 %v955, %v952
        %v959 = vld [vmem:[#allocation2] sm:$0xff]
        %v960 = vld [vmem:[#allocation2 + $0x8] sm:$0xff]
        %v961 = vld [vmem:[#allocation2 + $0x10] sm:$0xff]
        %v962 = vld [vmem:[#allocation2 + $0x18] sm:$0xff]
        %v963 = vld [vmem:[#allocation2 + $0x20] sm:$0xf]
        %v964 = vld [vmem:[#allocation2 + $0x24] sm:$0xff]
        %v965 = vld [vmem:[#allocation2 + $0x2c] sm:$0xff]
        %v966 = vld [vmem:[#allocation2 + $0x34] sm:$0xff]
        %v967 = vld [vmem:[#allocation2 + $0x3c] sm:$0xff]
        %v968 = vld [vmem:[#allocation2 + $0x44] sm:$0xf]
        %v969 = vld [vmem:[#allocation2 + $0x48] sm:$0xff]
        %v970 = vld [vmem:[#allocation2 + $0x50] sm:$0xff]
        %v971 = vld [vmem:[#allocation2 + $0x58] sm:$0xff]
        %v972 = vld [vmem:[#allocation2 + $0x60] sm:$0xff]
        %v973 = vld [vmem:[#allocation2 + $0x68] sm:$0xf]
        %v974 = vld [vmem:[#allocation2 + $0x6c] sm:$0x11]
        %v975 = vld [vmem:[#allocation2 + $0x74] sm:$0x11]
        %v976 = vld [vmem:[#allocation2 + $0x7c] sm:$0x11]
        %v977 = vld [vmem:[#allocation2 + $0x84] sm:$0x11]
        %v978 = vld [vmem:[#allocation2 + $0x8c] sm:$0x1]
        %s979 = scalar_lea.vmem %s1, 8
        %v980 = vld [vmem:[%s979] sm:$0xf]
        %v981 = vld [vmem:[%s979 + $0x4] sm:$0x7]
        %v984 = vunpack.c.l.b16 %v980
        %v985 = vunpack.c.l.b16 %v981
        %v986 = vpack.c.b16 %v985, %v984
        %v988 = vsel %vm913, %v986, 0
        %990 = vmatprep.subr.bf16.mxu0 0
        %991 = vmatpush1.bf16.msra.mxu0 0
        %992 = vmatprep.subr.bf16.mxu0 0
        %993 = vmatpush1.bf16.msra.mxu0 0
        %994 = vmatprep.subr.bf16.mxu0 0
        %995 = vmatpush1.bf16.msra.mxu0 0
        %996 = vmatprep.subr.bf16.mxu0 0
        %997 = vmatpush1.bf16.msra.mxu0 0
        %998 = vmatprep.subr.bf16.mxu0 0
        %999 = vmatpush1.bf16.msra.mxu0 0
        %1000 = vmatprep.subr.bf16.mxu0 0
        %1001 = vmatpush1.bf16.msra.mxu0 0
        %1002 = vmatprep.subr.bf16.mxu0 0
        %1003 = vmatpush1.bf16.msra.mxu0 0
        %1004 = vmatprep.subr.bf16.mxu0 0
        %1005 = vmatpush1.bf16.msra.mxu0 %v905
        %1006 = vmatprep.subr.bf16.mxu0 0
        %1007 = vmatpush2.bf16.msra.mxu0 0
        %1008 = vmatprep.subr.bf16.mxu0 0
        %1009 = vmatpush2.bf16.msra.mxu0 0
        %1010 = vmatprep.subr.bf16.mxu0 0
        %1011 = vmatpush2.bf16.msra.mxu0 0
        %1012 = vmatprep.subr.bf16.mxu0 0
        %1013 = vmatpush2.bf16.msra.mxu0 0
        %1014 = vmatprep.subr.bf16.mxu0 0
        %1015 = vmatpush2.bf16.msra.mxu0 0
        %1016 = vmatprep.subr.bf16.mxu0 0
        %1017 = vmatpush2.bf16.msra.mxu0 0
        %1018 = vmatprep.subr.bf16.mxu0 0
        %1019 = vmatpush2.bf16.msra.mxu0 0
        %1020 = vmatprep.subr.bf16.mxu0 0
        %1021 = vmatpush2.bf16.msra.mxu0 0
        %1022 = vmatprep.mubr.bf16.mxu0 0
        %1023 = vmatmul.mubr.bf16.gmra.mxu0 %v988
        %v1024 = vpop.f32.mrf.mxu0
        %v1025 = vadd.f32 0.0, %v1024
        %v1026 = vpop.f32.mrf.mxu0
        %v1027 = vpop.f32.mrf.mxu0
        %v1028 = vadd.f32 0.0, %v1027
        %v1029 = vpop.f32.mrf.mxu0
        %1030 = vdwg.mxu0
        %v1031 = vpack.c.bf16 %v1028, %v1025
        %s1032 = scalar_lea.vmem [#allocation2], 144
        %v1033 = vld [vmem:[%s1032] sm:$0xff]
        %v1034 = vld [vmem:[%s1032 + $0x8] sm:$0xff]
        %v1035 = vld [vmem:[%s1032 + $0x10] sm:$0xff]
        %v1036 = vld [vmem:[%s1032 + $0x18] sm:$0xff]
        %v1037 = vld [vmem:[%s1032 + $0x20] sm:$0xf]
        %v1038 = vld [vmem:[%s1032 + $0x24] sm:$0xff]
        %v1039 = vld [vmem:[%s1032 + $0x2c] sm:$0xff]
        %v1040 = vld [vmem:[%s1032 + $0x34] sm:$0xff]
        %v1041 = vld [vmem:[%s1032 + $0x3c] sm:$0xff]
        %v1042 = vld [vmem:[%s1032 + $0x44] sm:$0xf]
        %v1043 = vld [vmem:[%s1032 + $0x48] sm:$0xff]
        %v1044 = vld [vmem:[%s1032 + $0x50] sm:$0xff]
        %v1045 = vld [vmem:[%s1032 + $0x58] sm:$0xff]
        %v1046 = vld [vmem:[%s1032 + $0x60] sm:$0xff]
        %v1047 = vld [vmem:[%s1032 + $0x68] sm:$0xf]
        %v1048 = vld [vmem:[%s1032 + $0x6c] sm:$0x11]
        %v1049 = vld [vmem:[%s1032 + $0x74] sm:$0x11]
        %v1050 = vld [vmem:[%s1032 + $0x7c] sm:$0x11]
        %v1051 = vld [vmem:[%s1032 + $0x84] sm:$0x11]
        %v1052 = vld [vmem:[%s1032 + $0x8c] sm:$0x1]
        %v1073 = vunpack.c.l.b16 %v1033
        %v1074 = vunpack.c.h.b16 %v1033
        %v1075 = vunpack.c.l.b16 %v1034
        %v1076 = vunpack.c.h.b16 %v1034
        %v1077 = vunpack.c.l.b16 %v1035
        %v1078 = vunpack.c.h.b16 %v1035
        %v1079 = vunpack.c.l.b16 %v1036
        %v1080 = vunpack.c.h.b16 %v1036
        %v1081 = vunpack.c.l.b16 %v1037
        %v1082 = vunpack.c.l.b16 %v1038
        %v1083 = vunpack.c.h.b16 %v1038
        %v1084 = vunpack.c.l.b16 %v1039
        %v1085 = vunpack.c.h.b16 %v1039
        %v1086 = vunpack.c.l.b16 %v1040
        %v1087 = vunpack.c.h.b16 %v1040
        %v1088 = vunpack.c.l.b16 %v1041
        %v1089 = vunpack.c.h.b16 %v1041
        %v1090 = vunpack.c.l.b16 %v1042
        %v1091 = vunpack.c.l.b16 %v1043
        %v1092 = vunpack.c.h.b16 %v1043
        %v1093 = vunpack.c.l.b16 %v1044
        %v1094 = vunpack.c.h.b16 %v1044
        %v1095 = vunpack.c.l.b16 %v1045
        %v1096 = vunpack.c.h.b16 %v1045
        %v1097 = vunpack.c.l.b16 %v1046
        %v1098 = vunpack.c.h.b16 %v1046
        %v1099 = vunpack.c.l.b16 %v1047
        %v1100 = vunpack.c.l.b16 %v1048
        %v1101 = vunpack.c.h.b16 %v1048
        %v1102 = vunpack.c.l.b16 %v1049
        %v1103 = vunpack.c.h.b16 %v1049
        %v1104 = vunpack.c.l.b16 %v1050
        %v1105 = vunpack.c.h.b16 %v1050
        %v1106 = vunpack.c.l.b16 %v1051
        %v1107 = vunpack.c.h.b16 %v1051
        %v1108 = vunpack.c.l.b16 %v1052
        %v1109 = vpack.c.b16 %v1082, %v1073
        %v1110 = vpack.c.b16 %v1083, %v1074
        %v1111 = vpack.c.b16 %v1084, %v1075
        %v1112 = vpack.c.b16 %v1085, %v1076
        %v1113 = vpack.c.b16 %v1086, %v1077
        %v1114 = vpack.c.b16 %v1087, %v1078
        %v1115 = vpack.c.b16 %v1088, %v1079
        %v1116 = vpack.c.b16 %v1089, %v1080
        %v1117 = vpack.c.b16 %v1090, %v1081
        %v1118 = vpack.c.b16 %v1100, %v1091
        %v1119 = vpack.c.b16 %v1101, %v1092
        %v1120 = vpack.c.b16 %v1102, %v1093
        %v1121 = vpack.c.b16 %v1103, %v1094
        %v1122 = vpack.c.b16 %v1104, %v1095
        %v1123 = vpack.c.b16 %v1105, %v1096
        %v1124 = vpack.c.b16 %v1106, %v1097
        %v1125 = vpack.c.b16 %v1107, %v1098
        %v1126 = vpack.c.b16 %v1108, %v1099
        %vm1136 = vcmask 203776
        %v1138 = vsel %vm1136, %v1031, 0
        %vm1140 = vcmask 1043456
        %vm1141 = vcmask 1044480
        %v1142 = vsel %vm1140, 4294967295, 65535
        %v1143 = vsel %vm1141, %v1142, 0
        %v1145 = vand.u32 %v1118, %v1143
        %v1148 = vand.u32 %v1119, %v1143
        %v1151 = vand.u32 %v1120, %v1143
        %v1154 = vand.u32 %v1121, %v1143
        %v1157 = vand.u32 %v1122, %v1143
        %v1160 = vand.u32 %v1123, %v1143
        %v1163 = vand.u32 %v1124, %v1143
        %v1166 = vand.u32 %v1125, %v1143
        %v1169 = vand.u32 %v1126, %v1143
        %1171 = vmatprep.subr.bf16.mxu0 0
        %1172 = vmatpush1.bf16.msra.mxu0 0
        %1173 = vmatprep.subr.bf16.mxu0 0
        %1174 = vmatpush1.bf16.msra.mxu0 0
        %1175 = vmatprep.subr.bf16.mxu0 0
        %1176 = vmatpush1.bf16.msra.mxu0 0
        %1177 = vmatprep.subr.bf16.mxu0 0
        %1178 = vmatpush1.bf16.msra.mxu0 0
        %1179 = vmatprep.subr.bf16.mxu0 0
        %1180 = vmatpush1.bf16.msra.mxu0 0
        %1181 = vmatprep.subr.bf16.mxu0 0
        %1182 = vmatpush1.bf16.msra.mxu0 0
        %1183 = vmatprep.subr.bf16.mxu0 %v1148
        %1184 = vmatpush1.bf16.msra.mxu0 %v1145
        %1185 = vmatprep.subr.bf16.mxu0 %v1110
        %1186 = vmatpush1.bf16.msra.mxu0 %v1109
        %1187 = vmatprep.subr.bf16.mxu0 0
        %1188 = vmatpush2.bf16.msra.mxu0 0
        %1189 = vmatprep.subr.bf16.mxu0 0
        %1190 = vmatpush2.bf16.msra.mxu0 0
        %1191 = vmatprep.subr.bf16.mxu0 0
        %1192 = vmatpush2.bf16.msra.mxu0 0
        %1193 = vmatprep.subr.bf16.mxu0 0
        %1194 = vmatpush2.bf16.msra.mxu0 0
        %1195 = vmatprep.subr.bf16.mxu0 0
        %1196 = vmatpush2.bf16.msra.mxu0 0
        %1197 = vmatprep.subr.bf16.mxu0 0
        %1198 = vmatpush2.bf16.msra.mxu0 0
        %1199 = vmatprep.subr.bf16.mxu0 0
        %1200 = vmatpush2.bf16.msra.mxu0 0
        %1201 = vmatprep.subr.bf16.mxu0 0
        %1202 = vmatpush2.bf16.msra.mxu0 0
        %1203 = vmatprep.mubr.bf16.mxu0 0
        %1204 = vmatmul.mubr.bf16.gmra.mxu0 %v1138
        %v1205 = vpop.f32.mrf.mxu0
        %v1206 = vadd.f32 0.0, %v1205
        %v1207 = vpop.f32.mrf.mxu0
        %v1208 = vadd.f32 0.0, %v1207
        %v1209 = vpop.f32.mrf.mxu0
        %v1210 = vadd.f32 0.0, %v1209
        %v1211 = vpop.f32.mrf.mxu0
        %v1212 = vadd.f32 0.0, %v1211
        %1213 = vdwg.mxu0
        %1214 = vmatprep.subr.bf16.mxu0 0
        %1215 = vmatpush1.bf16.msra.mxu0 0
        %1216 = vmatprep.subr.bf16.mxu0 0
        %1217 = vmatpush1.bf16.msra.mxu0 0
        %1218 = vmatprep.subr.bf16.mxu0 0
        %1219 = vmatpush1.bf16.msra.mxu0 0
        %1220 = vmatprep.subr.bf16.mxu0 0
        %1221 = vmatpush1.bf16.msra.mxu0 0
        %1222 = vmatprep.subr.bf16.mxu0 0
        %1223 = vmatpush1.bf16.msra.mxu0 0
        %1224 = vmatprep.subr.bf16.mxu0 0
        %1225 = vmatpush1.bf16.msra.mxu0 0
        %1226 = vmatprep.subr.bf16.mxu0 %v1154
        %1227 = vmatpush1.bf16.msra.mxu0 %v1151
        %1228 = vmatprep.subr.bf16.mxu0 %v1112
        %1229 = vmatpush1.bf16.msra.mxu0 %v1111
        %1230 = vmatprep.subr.bf16.mxu0 0
        %1231 = vmatpush2.bf16.msra.mxu0 0
        %1232 = vmatprep.subr.bf16.mxu0 0
        %1233 = vmatpush2.bf16.msra.mxu0 0
        %1234 = vmatprep.subr.bf16.mxu0 0
        %1235 = vmatpush2.bf16.msra.mxu0 0
        %1236 = vmatprep.subr.bf16.mxu0 0
        %1237 = vmatpush2.bf16.msra.mxu0 0
        %1238 = vmatprep.subr.bf16.mxu0 0
        %1239 = vmatpush2.bf16.msra.mxu0 0
        %1240 = vmatprep.subr.bf16.mxu0 0
        %1241 = vmatpush2.bf16.msra.mxu0 0
        %1242 = vmatprep.subr.bf16.mxu0 0
        %1243 = vmatpush2.bf16.msra.mxu0 0
        %1244 = vmatprep.subr.bf16.mxu0 0
        %1245 = vmatpush2.bf16.msra.mxu0 0
        %1246 = vmatprep.mubr.bf16.mxu0 0
        %1247 = vmatmul.mubr.bf16.gmra.mxu0 %v1138
        %v1248 = vpop.f32.mrf.mxu0
        %v1249 = vadd.f32 0.0, %v1248
        %v1250 = vpop.f32.mrf.mxu0
        %v1251 = vadd.f32 0.0, %v1250
        %v1252 = vpop.f32.mrf.mxu0
        %v1253 = vadd.f32 0.0, %v1252
        %v1254 = vpop.f32.mrf.mxu0
        %v1255 = vadd.f32 0.0, %v1254
        %1256 = vdwg.mxu0
        %1257 = vmatprep.subr.bf16.mxu0 0
        %1258 = vmatpush1.bf16.msra.mxu0 0
        %1259 = vmatprep.subr.bf16.mxu0 0
        %1260 = vmatpush1.bf16.msra.mxu0 0
        %1261 = vmatprep.subr.bf16.mxu0 0
        %1262 = vmatpush1.bf16.msra.mxu0 0
        %1263 = vmatprep.subr.bf16.mxu0 0
        %1264 = vmatpush1.bf16.msra.mxu0 0
        %1265 = vmatprep.subr.bf16.mxu0 0
        %1266 = vmatpush1.bf16.msra.mxu0 0
        %1267 = vmatprep.subr.bf16.mxu0 0
        %1268 = vmatpush1.bf16.msra.mxu0 0
        %1269 = vmatprep.subr.bf16.mxu0 %v1160
        %1270 = vmatpush1.bf16.msra.mxu0 %v1157
        %1271 = vmatprep.subr.bf16.mxu0 %v1114
        %1272 = vmatpush1.bf16.msra.mxu0 %v1113
        %1273 = vmatprep.subr.bf16.mxu0 0
        %1274 = vmatpush2.bf16.msra.mxu0 0
        %1275 = vmatprep.subr.bf16.mxu0 0
        %1276 = vmatpush2.bf16.msra.mxu0 0
        %1277 = vmatprep.subr.bf16.mxu0 0
        %1278 = vmatpush2.bf16.msra.mxu0 0
        %1279 = vmatprep.subr.bf16.mxu0 0
        %1280 = vmatpush2.bf16.msra.mxu0 0
        %1281 = vmatprep.subr.bf16.mxu0 0
        %1282 = vmatpush2.bf16.msra.mxu0 0
        %1283 = vmatprep.subr.bf16.mxu0 0
        %1284 = vmatpush2.bf16.msra.mxu0 0
        %1285 = vmatprep.subr.bf16.mxu0 0
        %1286 = vmatpush2.bf16.msra.mxu0 0
        %1287 = vmatprep.subr.bf16.mxu0 0
        %1288 = vmatpush2.bf16.msra.mxu0 0
        %1289 = vmatprep.mubr.bf16.mxu0 0
        %1290 = vmatmul.mubr.bf16.gmra.mxu0 %v1138
        %v1291 = vpop.f32.mrf.mxu0
        %v1292 = vadd.f32 0.0, %v1291
        %v1293 = vpop.f32.mrf.mxu0
        %v1294 = vadd.f32 0.0, %v1293
        %v1295 = vpop.f32.mrf.mxu0
        %v1296 = vadd.f32 0.0, %v1295
        %v1297 = vpop.f32.mrf.mxu0
        %v1298 = vadd.f32 0.0, %v1297
        %1299 = vdwg.mxu0
        %1300 = vmatprep.subr.bf16.mxu0 0
        %1301 = vmatpush1.bf16.msra.mxu0 0
        %1302 = vmatprep.subr.bf16.mxu0 0
        %1303 = vmatpush1.bf16.msra.mxu0 0
        %1304 = vmatprep.subr.bf16.mxu0 0
        %1305 = vmatpush1.bf16.msra.mxu0 0
        %1306 = vmatprep.subr.bf16.mxu0 0
        %1307 = vmatpush1.bf16.msra.mxu0 0
        %1308 = vmatprep.subr.bf16.mxu0 0
        %1309 = vmatpush1.bf16.msra.mxu0 0
        %1310 = vmatprep.subr.bf16.mxu0 0
        %1311 = vmatpush1.bf16.msra.mxu0 0
        %1312 = vmatprep.subr.bf16.mxu0 %v1166
        %1313 = vmatpush1.bf16.msra.mxu0 %v1163
        %1314 = vmatprep.subr.bf16.mxu0 %v1116
        %1315 = vmatpush1.bf16.msra.mxu0 %v1115
        %1316 = vmatprep.subr.bf16.mxu0 0
        %1317 = vmatpush2.bf16.msra.mxu0 0
        %1318 = vmatprep.subr.bf16.mxu0 0
        %1319 = vmatpush2.bf16.msra.mxu0 0
        %1320 = vmatprep.subr.bf16.mxu0 0
        %1321 = vmatpush2.bf16.msra.mxu0 0
        %1322 = vmatprep.subr.bf16.mxu0 0
        %1323 = vmatpush2.bf16.msra.mxu0 0
        %1324 = vmatprep.subr.bf16.mxu0 0
        %1325 = vmatpush2.bf16.msra.mxu0 0
        %1326 = vmatprep.subr.bf16.mxu0 0
        %1327 = vmatpush2.bf16.msra.mxu0 0
        %1328 = vmatprep.subr.bf16.mxu0 0
        %1329 = vmatpush2.bf16.msra.mxu0 0
        %1330 = vmatprep.subr.bf16.mxu0 0
        %1331 = vmatpush2.bf16.msra.mxu0 0
        %1332 = vmatprep.mubr.bf16.mxu0 0
        %1333 = vmatmul.mubr.bf16.gmra.mxu0 %v1138
        %v1334 = vpop.f32.mrf.mxu0
        %v1335 = vadd.f32 0.0, %v1334
        %v1336 = vpop.f32.mrf.mxu0
        %v1337 = vadd.f32 0.0, %v1336
        %v1338 = vpop.f32.mrf.mxu0
        %v1339 = vadd.f32 0.0, %v1338
        %v1340 = vpop.f32.mrf.mxu0
        %v1341 = vadd.f32 0.0, %v1340
        %1342 = vdwg.mxu0
        %1343 = vmatprep.subr.bf16.mxu0 0
        %1344 = vmatpush1.bf16.msra.mxu0 0
        %1345 = vmatprep.subr.bf16.mxu0 0
        %1346 = vmatpush1.bf16.msra.mxu0 0
        %1347 = vmatprep.subr.bf16.mxu0 0
        %1348 = vmatpush1.bf16.msra.mxu0 0
        %1349 = vmatprep.subr.bf16.mxu0 0
        %1350 = vmatpush1.bf16.msra.mxu0 0
        %1351 = vmatprep.subr.bf16.mxu0 0
        %1352 = vmatpush1.bf16.msra.mxu0 0
        %1353 = vmatprep.subr.bf16.mxu0 0
        %1354 = vmatpush1.bf16.msra.mxu0 0
        %1355 = vmatprep.subr.bf16.mxu0 0
        %1356 = vmatpush1.bf16.msra.mxu0 %v1169
        %1357 = vmatprep.subr.bf16.mxu0 0
        %1358 = vmatpush1.bf16.msra.mxu0 %v1117
        %1359 = vmatprep.subr.bf16.mxu0 0
        %1360 = vmatpush2.bf16.msra.mxu0 0
        %1361 = vmatprep.subr.bf16.mxu0 0
        %1362 = vmatpush2.bf16.msra.mxu0 0
        %1363 = vmatprep.subr.bf16.mxu0 0
        %1364 = vmatpush2.bf16.msra.mxu0 0
        %1365 = vmatprep.subr.bf16.mxu0 0
        %1366 = vmatpush2.bf16.msra.mxu0 0
        %1367 = vmatprep.subr.bf16.mxu0 0
        %1368 = vmatpush2.bf16.msra.mxu0 0
        %1369 = vmatprep.subr.bf16.mxu0 0
        %1370 = vmatpush2.bf16.msra.mxu0 0
        %1371 = vmatprep.subr.bf16.mxu0 0
        %1372 = vmatpush2.bf16.msra.mxu0 0
        %1373 = vmatprep.subr.bf16.mxu0 0
        %1374 = vmatpush2.bf16.msra.mxu0 0
        %1375 = vmatprep.mubr.bf16.mxu0 0
        %1376 = vmatmul.mubr.bf16.gmra.mxu0 %v1138
        %v1377 = vpop.f32.mrf.mxu0
        %v1378 = vadd.f32 0.0, %v1377
        %v1379 = vpop.f32.mrf.mxu0
        %v1380 = vpop.f32.mrf.mxu0
        %v1381 = vadd.f32 0.0, %v1380
        %v1382 = vpop.f32.mrf.mxu0
        %1383 = vdwg.mxu0
        %v1404 = vunpack.c.l.b16 %v959
        %v1405 = vunpack.c.h.b16 %v959
        %v1406 = vunpack.c.l.b16 %v960
        %v1407 = vunpack.c.h.b16 %v960
        %v1408 = vunpack.c.l.b16 %v961
        %v1409 = vunpack.c.h.b16 %v961
        %v1410 = vunpack.c.l.b16 %v962
        %v1411 = vunpack.c.h.b16 %v962
        %v1412 = vunpack.c.l.b16 %v963
        %v1413 = vunpack.c.l.b16 %v964
        %v1414 = vunpack.c.h.b16 %v964
        %v1415 = vunpack.c.l.b16 %v965
        %v1416 = vunpack.c.h.b16 %v965
        %v1417 = vunpack.c.l.b16 %v966
        %v1418 = vunpack.c.h.b16 %v966
        %v1419 = vunpack.c.l.b16 %v967
        %v1420 = vunpack.c.h.b16 %v967
        %v1421 = vunpack.c.l.b16 %v968
        %v1422 = vunpack.c.l.b16 %v969
        %v1423 = vunpack.c.h.b16 %v969
        %v1424 = vunpack.c.l.b16 %v970
        %v1425 = vunpack.c.h.b16 %v970
        %v1426 = vunpack.c.l.b16 %v971
        %v1427 = vunpack.c.h.b16 %v971
        %v1428 = vunpack.c.l.b16 %v972
        %v1429 = vunpack.c.h.b16 %v972
        %v1430 = vunpack.c.l.b16 %v973
        %v1431 = vunpack.c.l.b16 %v974
        %v1432 = vunpack.c.h.b16 %v974
        %v1433 = vunpack.c.l.b16 %v975
        %v1434 = vunpack.c.h.b16 %v975
        %v1435 = vunpack.c.l.b16 %v976
        %v1436 = vunpack.c.h.b16 %v976
        %v1437 = vunpack.c.l.b16 %v977
        %v1438 = vunpack.c.h.b16 %v977
        %v1439 = vunpack.c.l.b16 %v978
        %v1440 = vpack.c.b16 %v1413, %v1404
        %v1441 = vpack.c.b16 %v1414, %v1405
        %v1442 = vpack.c.b16 %v1415, %v1406
        %v1443 = vpack.c.b16 %v1416, %v1407
        %v1444 = vpack.c.b16 %v1417, %v1408
        %v1445 = vpack.c.b16 %v1418, %v1409
        %v1446 = vpack.c.b16 %v1419, %v1410
        %v1447 = vpack.c.b16 %v1420, %v1411
        %v1448 = vpack.c.b16 %v1421, %v1412
        %v1449 = vpack.c.b16 %v1431, %v1422
        %v1450 = vpack.c.b16 %v1432, %v1423
        %v1451 = vpack.c.b16 %v1433, %v1424
        %v1452 = vpack.c.b16 %v1434, %v1425
        %v1453 = vpack.c.b16 %v1435, %v1426
        %v1454 = vpack.c.b16 %v1436, %v1427
        %v1455 = vpack.c.b16 %v1437, %v1428
        %v1456 = vpack.c.b16 %v1438, %v1429
        %v1457 = vpack.c.b16 %v1439, %v1430
        %v1468 = vsel %vm1136, %v958, 0
        %v1471 = vand.u32 %v1449, %v1143
        %v1474 = vand.u32 %v1450, %v1143
        %v1477 = vand.u32 %v1451, %v1143
        %v1480 = vand.u32 %v1452, %v1143
        %v1483 = vand.u32 %v1453, %v1143
        %v1486 = vand.u32 %v1454, %v1143
        %v1489 = vand.u32 %v1455, %v1143
        %v1492 = vand.u32 %v1456, %v1143
        %v1495 = vand.u32 %v1457, %v1143
        %1497 = vmatprep.subr.bf16.mxu0 0
        %1498 = vmatpush1.bf16.msra.mxu0 0
        %1499 = vmatprep.subr.bf16.mxu0 0
        %1500 = vmatpush1.bf16.msra.mxu0 0
        %1501 = vmatprep.subr.bf16.mxu0 0
        %1502 = vmatpush1.bf16.msra.mxu0 0
        %1503 = vmatprep.subr.bf16.mxu0 0
        %1504 = vmatpush1.bf16.msra.mxu0 0
        %1505 = vmatprep.subr.bf16.mxu0 0
        %1506 = vmatpush1.bf16.msra.mxu0 0
        %1507 = vmatprep.subr.bf16.mxu0 0
        %1508 = vmatpush1.bf16.msra.mxu0 0
        %1509 = vmatprep.subr.bf16.mxu0 %v1474
        %1510 = vmatpush1.bf16.msra.mxu0 %v1471
        %1511 = vmatprep.subr.bf16.mxu0 %v1441
        %1512 = vmatpush1.bf16.msra.mxu0 %v1440
        %1513 = vmatprep.subr.bf16.mxu0 0
        %1514 = vmatpush2.bf16.msra.mxu0 0
        %1515 = vmatprep.subr.bf16.mxu0 0
        %1516 = vmatpush2.bf16.msra.mxu0 0
        %1517 = vmatprep.subr.bf16.mxu0 0
        %1518 = vmatpush2.bf16.msra.mxu0 0
        %1519 = vmatprep.subr.bf16.mxu0 0
        %1520 = vmatpush2.bf16.msra.mxu0 0
        %1521 = vmatprep.subr.bf16.mxu0 0
        %1522 = vmatpush2.bf16.msra.mxu0 0
        %1523 = vmatprep.subr.bf16.mxu0 0
        %1524 = vmatpush2.bf16.msra.mxu0 0
        %1525 = vmatprep.subr.bf16.mxu0 0
        %1526 = vmatpush2.bf16.msra.mxu0 0
        %1527 = vmatprep.subr.bf16.mxu0 0
        %1528 = vmatpush2.bf16.msra.mxu0 0
        %1529 = vmatprep.mubr.bf16.mxu0 0
        %1530 = vmatmul.mubr.bf16.gmra.mxu0 %v1468
        %v1531 = vpop.f32.mrf.mxu0
        %v1532 = vadd.f32 %v1206, %v1531
        %v1533 = vpop.f32.mrf.mxu0
        %v1534 = vadd.f32 %v1208, %v1533
        %v1535 = vpop.f32.mrf.mxu0
        %v1536 = vadd.f32 %v1210, %v1535
        %v1537 = vpop.f32.mrf.mxu0
        %v1538 = vadd.f32 %v1212, %v1537
        %1539 = vdwg.mxu0
        %1540 = vmatprep.subr.bf16.mxu0 0
        %1541 = vmatpush1.bf16.msra.mxu0 0
        %1542 = vmatprep.subr.bf16.mxu0 0
        %1543 = vmatpush1.bf16.msra.mxu0 0
        %1544 = vmatprep.subr.bf16.mxu0 0
        %1545 = vmatpush1.bf16.msra.mxu0 0
        %1546 = vmatprep.subr.bf16.mxu0 0
        %1547 = vmatpush1.bf16.msra.mxu0 0
        %1548 = vmatprep.subr.bf16.mxu0 0
        %1549 = vmatpush1.bf16.msra.mxu0 0
        %1550 = vmatprep.subr.bf16.mxu0 0
        %1551 = vmatpush1.bf16.msra.mxu0 0
        %1552 = vmatprep.subr.bf16.mxu0 %v1480
        %1553 = vmatpush1.bf16.msra.mxu0 %v1477
        %1554 = vmatprep.subr.bf16.mxu0 %v1443
        %1555 = vmatpush1.bf16.msra.mxu0 %v1442
        %1556 = vmatprep.subr.bf16.mxu0 0
        %1557 = vmatpush2.bf16.msra.mxu0 0
        %1558 = vmatprep.subr.bf16.mxu0 0
        %1559 = vmatpush2.bf16.msra.mxu0 0
        %1560 = vmatprep.subr.bf16.mxu0 0
        %1561 = vmatpush2.bf16.msra.mxu0 0
        %1562 = vmatprep.subr.bf16.mxu0 0
        %1563 = vmatpush2.bf16.msra.mxu0 0
        %1564 = vmatprep.subr.bf16.mxu0 0
        %1565 = vmatpush2.bf16.msra.mxu0 0
        %1566 = vmatprep.subr.bf16.mxu0 0
        %1567 = vmatpush2.bf16.msra.mxu0 0
        %1568 = vmatprep.subr.bf16.mxu0 0
        %1569 = vmatpush2.bf16.msra.mxu0 0
        %1570 = vmatprep.subr.bf16.mxu0 0
        %1571 = vmatpush2.bf16.msra.mxu0 0
        %1572 = vmatprep.mubr.bf16.mxu0 0
        %1573 = vmatmul.mubr.bf16.gmra.mxu0 %v1468
        %v1574 = vpop.f32.mrf.mxu0
        %v1575 = vadd.f32 %v1249, %v1574
        %v1576 = vpop.f32.mrf.mxu0
        %v1577 = vadd.f32 %v1251, %v1576
        %v1578 = vpop.f32.mrf.mxu0
        %v1579 = vadd.f32 %v1253, %v1578
        %v1580 = vpop.f32.mrf.mxu0
        %v1581 = vadd.f32 %v1255, %v1580
        %1582 = vdwg.mxu0
        %1583 = vmatprep.subr.bf16.mxu0 0
        %1584 = vmatpush1.bf16.msra.mxu0 0
        %1585 = vmatprep.subr.bf16.mxu0 0
        %1586 = vmatpush1.bf16.msra.mxu0 0
        %1587 = vmatprep.subr.bf16.mxu0 0
        %1588 = vmatpush1.bf16.msra.mxu0 0
        %1589 = vmatprep.subr.bf16.mxu0 0
        %1590 = vmatpush1.bf16.msra.mxu0 0
        %1591 = vmatprep.subr.bf16.mxu0 0
        %1592 = vmatpush1.bf16.msra.mxu0 0
        %1593 = vmatprep.subr.bf16.mxu0 0
        %1594 = vmatpush1.bf16.msra.mxu0 0
        %1595 = vmatprep.subr.bf16.mxu0 %v1486
        %1596 = vmatpush1.bf16.msra.mxu0 %v1483
        %1597 = vmatprep.subr.bf16.mxu0 %v1445
        %1598 = vmatpush1.bf16.msra.mxu0 %v1444
        %1599 = vmatprep.subr.bf16.mxu0 0
        %1600 = vmatpush2.bf16.msra.mxu0 0
        %1601 = vmatprep.subr.bf16.mxu0 0
        %1602 = vmatpush2.bf16.msra.mxu0 0
        %1603 = vmatprep.subr.bf16.mxu0 0
        %1604 = vmatpush2.bf16.msra.mxu0 0
        %1605 = vmatprep.subr.bf16.mxu0 0
        %1606 = vmatpush2.bf16.msra.mxu0 0
        %1607 = vmatprep.subr.bf16.mxu0 0
        %1608 = vmatpush2.bf16.msra.mxu0 0
        %1609 = vmatprep.subr.bf16.mxu0 0
        %1610 = vmatpush2.bf16.msra.mxu0 0
        %1611 = vmatprep.subr.bf16.mxu0 0
        %1612 = vmatpush2.bf16.msra.mxu0 0
        %1613 = vmatprep.subr.bf16.mxu0 0
        %1614 = vmatpush2.bf16.msra.mxu0 0
        %1615 = vmatprep.mubr.bf16.mxu0 0
        %1616 = vmatmul.mubr.bf16.gmra.mxu0 %v1468
        %v1617 = vpop.f32.mrf.mxu0
        %v1618 = vadd.f32 %v1292, %v1617
        %v1619 = vpop.f32.mrf.mxu0
        %v1620 = vadd.f32 %v1294, %v1619
        %v1621 = vpop.f32.mrf.mxu0
        %v1622 = vadd.f32 %v1296, %v1621
        %v1623 = vpop.f32.mrf.mxu0
        %v1624 = vadd.f32 %v1298, %v1623
        %1625 = vdwg.mxu0
        %1626 = vmatprep.subr.bf16.mxu0 0
        %1627 = vmatpush1.bf16.msra.mxu0 0
        %1628 = vmatprep.subr.bf16.mxu0 0
        %1629 = vmatpush1.bf16.msra.mxu0 0
        %1630 = vmatprep.subr.bf16.mxu0 0
        %1631 = vmatpush1.bf16.msra.mxu0 0
        %1632 = vmatprep.subr.bf16.mxu0 0
        %1633 = vmatpush1.bf16.msra.mxu0 0
        %1634 = vmatprep.subr.bf16.mxu0 0
        %1635 = vmatpush1.bf16.msra.mxu0 0
        %1636 = vmatprep.subr.bf16.mxu0 0
        %1637 = vmatpush1.bf16.msra.mxu0 0
        %1638 = vmatprep.subr.bf16.mxu0 %v1492
        %1639 = vmatpush1.bf16.msra.mxu0 %v1489
        %1640 = vmatprep.subr.bf16.mxu0 %v1447
        %1641 = vmatpush1.bf16.msra.mxu0 %v1446
        %1642 = vmatprep.subr.bf16.mxu0 0
        %1643 = vmatpush2.bf16.msra.mxu0 0
        %1644 = vmatprep.subr.bf16.mxu0 0
        %1645 = vmatpush2.bf16.msra.mxu0 0
        %1646 = vmatprep.subr.bf16.mxu0 0
        %1647 = vmatpush2.bf16.msra.mxu0 0
        %1648 = vmatprep.subr.bf16.mxu0 0
        %1649 = vmatpush2.bf16.msra.mxu0 0
        %1650 = vmatprep.subr.bf16.mxu0 0
        %1651 = vmatpush2.bf16.msra.mxu0 0
        %1652 = vmatprep.subr.bf16.mxu0 0
        %1653 = vmatpush2.bf16.msra.mxu0 0
        %1654 = vmatprep.subr.bf16.mxu0 0
        %1655 = vmatpush2.bf16.msra.mxu0 0
        %1656 = vmatprep.subr.bf16.mxu0 0
        %1657 = vmatpush2.bf16.msra.mxu0 0
        %1658 = vmatprep.mubr.bf16.mxu0 0
        %1659 = vmatmul.mubr.bf16.gmra.mxu0 %v1468
        %v1660 = vpop.f32.mrf.mxu0
        %v1661 = vadd.f32 %v1335, %v1660
        %v1662 = vpop.f32.mrf.mxu0
        %v1663 = vadd.f32 %v1337, %v1662
        %v1664 = vpop.f32.mrf.mxu0
        %v1665 = vadd.f32 %v1339, %v1664
        %v1666 = vpop.f32.mrf.mxu0
        %v1667 = vadd.f32 %v1341, %v1666
        %1668 = vdwg.mxu0
        %1669 = vmatprep.subr.bf16.mxu0 0
        %1670 = vmatpush1.bf16.msra.mxu0 0
        %1671 = vmatprep.subr.bf16.mxu0 0
        %1672 = vmatpush1.bf16.msra.mxu0 0
        %1673 = vmatprep.subr.bf16.mxu0 0
        %1674 = vmatpush1.bf16.msra.mxu0 0
        %1675 = vmatprep.subr.bf16.mxu0 0
        %1676 = vmatpush1.bf16.msra.mxu0 0
        %1677 = vmatprep.subr.bf16.mxu0 0
        %1678 = vmatpush1.bf16.msra.mxu0 0
        %1679 = vmatprep.subr.bf16.mxu0 0
        %1680 = vmatpush1.bf16.msra.mxu0 0
        %1681 = vmatprep.subr.bf16.mxu0 0
        %1682 = vmatpush1.bf16.msra.mxu0 %v1495
        %1683 = vmatprep.subr.bf16.mxu0 0
        %1684 = vmatpush1.bf16.msra.mxu0 %v1448
        %1685 = vmatprep.subr.bf16.mxu0 0
        %1686 = vmatpush2.bf16.msra.mxu0 0
        %1687 = vmatprep.subr.bf16.mxu0 0
        %1688 = vmatpush2.bf16.msra.mxu0 0
        %1689 = vmatprep.subr.bf16.mxu0 0
        %1690 = vmatpush2.bf16.msra.mxu0 0
        %1691 = vmatprep.subr.bf16.mxu0 0
        %1692 = vmatpush2.bf16.msra.mxu0 0
        %1693 = vmatprep.subr.bf16.mxu0 0
        %1694 = vmatpush2.bf16.msra.mxu0 0
        %1695 = vmatprep.subr.bf16.mxu0 0
        %1696 = vmatpush2.bf16.msra.mxu0 0
        %1697 = vmatprep.subr.bf16.mxu0 0
        %1698 = vmatpush2.bf16.msra.mxu0 0
        %1699 = vmatprep.subr.bf16.mxu0 0
        %1700 = vmatpush2.bf16.msra.mxu0 0
        %1701 = vmatprep.mubr.bf16.mxu0 0
        %1702 = vmatmul.mubr.bf16.gmra.mxu0 %v1468
        %v1703 = vpop.f32.mrf.mxu0
        %v1704 = vadd.f32 %v1378, %v1703
        %v1705 = vpop.f32.mrf.mxu0
        %v1706 = vpop.f32.mrf.mxu0
        %v1707 = vadd.f32 %v1381, %v1706
        %v1708 = vpop.f32.mrf.mxu0
        %1709 = vdwg.mxu0
        %s1710 = scalar_lea.vmem %s1, 16
        %v1711 = vld [vmem:[%s1710] sm:$0xf]
        %v1712 = vld [vmem:[%s1710 + $0x4] sm:$0x7]
        %v1715 = vunpack.c.l.b16 %v1711
        %v1716 = vunpack.c.l.b16 %v1712
        %v1717 = vpack.c.b16 %v1716, %v1715
        %v1719 = vsel %vm913, %v1717, 0
        %1721 = vmatprep.subr.bf16.mxu0 0
        %1722 = vmatpush1.bf16.msra.mxu0 0
        %1723 = vmatprep.subr.bf16.mxu0 0
        %1724 = vmatpush1.bf16.msra.mxu0 0
        %1725 = vmatprep.subr.bf16.mxu0 0
        %1726 = vmatpush1.bf16.msra.mxu0 0
        %1727 = vmatprep.subr.bf16.mxu0 0
        %1728 = vmatpush1.bf16.msra.mxu0 0
        %1729 = vmatprep.subr.bf16.mxu0 0
        %1730 = vmatpush1.bf16.msra.mxu0 0
        %1731 = vmatprep.subr.bf16.mxu0 0
        %1732 = vmatpush1.bf16.msra.mxu0 0
        %1733 = vmatprep.subr.bf16.mxu0 0
        %1734 = vmatpush1.bf16.msra.mxu0 0
        %1735 = vmatprep.subr.bf16.mxu0 0
        %1736 = vmatpush1.bf16.msra.mxu0 %v905
        %1737 = vmatprep.subr.bf16.mxu0 0
        %1738 = vmatpush2.bf16.msra.mxu0 0
        %1739 = vmatprep.subr.bf16.mxu0 0
        %1740 = vmatpush2.bf16.msra.mxu0 0
        %1741 = vmatprep.subr.bf16.mxu0 0
        %1742 = vmatpush2.bf16.msra.mxu0 0
        %1743 = vmatprep.subr.bf16.mxu0 0
        %1744 = vmatpush2.bf16.msra.mxu0 0
        %1745 = vmatprep.subr.bf16.mxu0 0
        %1746 = vmatpush2.bf16.msra.mxu0 0
        %1747 = vmatprep.subr.bf16.mxu0 0
        %1748 = vmatpush2.bf16.msra.mxu0 0
        %1749 = vmatprep.subr.bf16.mxu0 0
        %1750 = vmatpush2.bf16.msra.mxu0 0
        %1751 = vmatprep.subr.bf16.mxu0 0
        %1752 = vmatpush2.bf16.msra.mxu0 0
        %1753 = vmatprep.mubr.bf16.mxu0 0
        %1754 = vmatmul.mubr.bf16.gmra.mxu0 %v1719
        %v1755 = vpop.f32.mrf.mxu0
        %v1756 = vadd.f32 0.0, %v1755
        %v1757 = vpop.f32.mrf.mxu0
        %v1758 = vpop.f32.mrf.mxu0
        %v1759 = vadd.f32 0.0, %v1758
        %v1760 = vpop.f32.mrf.mxu0
        %1761 = vdwg.mxu0
        %v1762 = vpack.c.bf16 %v1759, %v1756
        %s1763 = scalar_lea.vmem [#allocation2], 288
        %v1764 = vld [vmem:[%s1763] sm:$0xff]
        %v1765 = vld [vmem:[%s1763 + $0x8] sm:$0xff]
        %v1766 = vld [vmem:[%s1763 + $0x10] sm:$0xff]
        %v1767 = vld [vmem:[%s1763 + $0x18] sm:$0xff]
        %v1768 = vld [vmem:[%s1763 + $0x20] sm:$0xf]
        %v1769 = vld [vmem:[%s1763 + $0x24] sm:$0xff]
        %v1770 = vld [vmem:[%s1763 + $0x2c] sm:$0xff]
        %v1771 = vld [vmem:[%s1763 + $0x34] sm:$0xff]
        %v1772 = vld [vmem:[%s1763 + $0x3c] sm:$0xff]
        %v1773 = vld [vmem:[%s1763 + $0x44] sm:$0xf]
        %v1774 = vld [vmem:[%s1763 + $0x48] sm:$0xff]
        %v1775 = vld [vmem:[%s1763 + $0x50] sm:$0xff]
        %v1776 = vld [vmem:[%s1763 + $0x58] sm:$0xff]
        %v1777 = vld [vmem:[%s1763 + $0x60] sm:$0xff]
        %v1778 = vld [vmem:[%s1763 + $0x68] sm:$0xf]
        %v1779 = vld [vmem:[%s1763 + $0x6c] sm:$0x11]
        %v1780 = vld [vmem:[%s1763 + $0x74] sm:$0x11]
        %v1781 = vld [vmem:[%s1763 + $0x7c] sm:$0x11]
        %v1782 = vld [vmem:[%s1763 + $0x84] sm:$0x11]
        %v1783 = vld [vmem:[%s1763 + $0x8c] sm:$0x1]
        %v1804 = vunpack.c.l.b16 %v1764
        %v1805 = vunpack.c.h.b16 %v1764
        %v1806 = vunpack.c.l.b16 %v1765
        %v1807 = vunpack.c.h.b16 %v1765
        %v1808 = vunpack.c.l.b16 %v1766
        %v1809 = vunpack.c.h.b16 %v1766
        %v1810 = vunpack.c.l.b16 %v1767
        %v1811 = vunpack.c.h.b16 %v1767
        %v1812 = vunpack.c.l.b16 %v1768
        %v1813 = vunpack.c.l.b16 %v1769
        %v1814 = vunpack.c.h.b16 %v1769
        %v1815 = vunpack.c.l.b16 %v1770
        %v1816 = vunpack.c.h.b16 %v1770
        %v1817 = vunpack.c.l.b16 %v1771
        %v1818 = vunpack.c.h.b16 %v1771
        %v1819 = vunpack.c.l.b16 %v1772
        %v1820 = vunpack.c.h.b16 %v1772
        %v1821 = vunpack.c.l.b16 %v1773
        %v1822 = vunpack.c.l.b16 %v1774
        %v1823 = vunpack.c.h.b16 %v1774
        %v1824 = vunpack.c.l.b16 %v1775
        %v1825 = vunpack.c.h.b16 %v1775
        %v1826 = vunpack.c.l.b16 %v1776
        %v1827 = vunpack.c.h.b16 %v1776
        %v1828 = vunpack.c.l.b16 %v1777
        %v1829 = vunpack.c.h.b16 %v1777
        %v1830 = vunpack.c.l.b16 %v1778
        %v1831 = vunpack.c.l.b16 %v1779
        %v1832 = vunpack.c.h.b16 %v1779
        %v1833 = vunpack.c.l.b16 %v1780
        %v1834 = vunpack.c.h.b16 %v1780
        %v1835 = vunpack.c.l.b16 %v1781
        %v1836 = vunpack.c.h.b16 %v1781
        %v1837 = vunpack.c.l.b16 %v1782
        %v1838 = vunpack.c.h.b16 %v1782
        %v1839 = vunpack.c.l.b16 %v1783
        %v1840 = vpack.c.b16 %v1813, %v1804
        %v1841 = vpack.c.b16 %v1814, %v1805
        %v1842 = vpack.c.b16 %v1815, %v1806
        %v1843 = vpack.c.b16 %v1816, %v1807
        %v1844 = vpack.c.b16 %v1817, %v1808
        %v1845 = vpack.c.b16 %v1818, %v1809
        %v1846 = vpack.c.b16 %v1819, %v1810
        %v1847 = vpack.c.b16 %v1820, %v1811
        %v1848 = vpack.c.b16 %v1821, %v1812
        %v1849 = vpack.c.b16 %v1831, %v1822
        %v1850 = vpack.c.b16 %v1832, %v1823
        %v1851 = vpack.c.b16 %v1833, %v1824
        %v1852 = vpack.c.b16 %v1834, %v1825
        %v1853 = vpack.c.b16 %v1835, %v1826
        %v1854 = vpack.c.b16 %v1836, %v1827
        %v1855 = vpack.c.b16 %v1837, %v1828
        %v1856 = vpack.c.b16 %v1838, %v1829
        %v1857 = vpack.c.b16 %v1839, %v1830
        %v1868 = vsel %vm1136, %v1762, 0
        %v1871 = vand.u32 %v1849, %v1143
        %v1874 = vand.u32 %v1850, %v1143
        %v1877 = vand.u32 %v1851, %v1143
        %v1880 = vand.u32 %v1852, %v1143
        %v1883 = vand.u32 %v1853, %v1143
        %v1886 = vand.u32 %v1854, %v1143
        %v1889 = vand.u32 %v1855, %v1143
        %v1892 = vand.u32 %v1856, %v1143
        %v1895 = vand.u32 %v1857, %v1143
        %1897 = vmatprep.subr.bf16.mxu0 0
        %1898 = vmatpush1.bf16.msra.mxu0 0
        %1899 = vmatprep.subr.bf16.mxu0 0
        %1900 = vmatpush1.bf16.msra.mxu0 0
        %1901 = vmatprep.subr.bf16.mxu0 0
        %1902 = vmatpush1.bf16.msra.mxu0 0
        %1903 = vmatprep.subr.bf16.mxu0 0
        %1904 = vmatpush1.bf16.msra.mxu0 0
        %1905 = vmatprep.subr.bf16.mxu0 0
        %1906 = vmatpush1.bf16.msra.mxu0 0
        %1907 = vmatprep.subr.bf16.mxu0 0
        %1908 = vmatpush1.bf16.msra.mxu0 0
        %1909 = vmatprep.subr.bf16.mxu0 %v1874
        %1910 = vmatpush1.bf16.msra.mxu0 %v1871
        %1911 = vmatprep.subr.bf16.mxu0 %v1841
        %1912 = vmatpush1.bf16.msra.mxu0 %v1840
        %1913 = vmatprep.subr.bf16.mxu0 0
        %1914 = vmatpush2.bf16.msra.mxu0 0
        %1915 = vmatprep.subr.bf16.mxu0 0
        %1916 = vmatpush2.bf16.msra.mxu0 0
        %1917 = vmatprep.subr.bf16.mxu0 0
        %1918 = vmatpush2.bf16.msra.mxu0 0
        %1919 = vmatprep.subr.bf16.mxu0 0
        %1920 = vmatpush2.bf16.msra.mxu0 0
        %1921 = vmatprep.subr.bf16.mxu0 0
        %1922 = vmatpush2.bf16.msra.mxu0 0
        %1923 = vmatprep.subr.bf16.mxu0 0
        %1924 = vmatpush2.bf16.msra.mxu0 0
        %1925 = vmatprep.subr.bf16.mxu0 0
        %1926 = vmatpush2.bf16.msra.mxu0 0
        %1927 = vmatprep.subr.bf16.mxu0 0
        %1928 = vmatpush2.bf16.msra.mxu0 0
        %1929 = vmatprep.mubr.bf16.mxu0 0
        %1930 = vmatmul.mubr.bf16.gmra.mxu0 %v1868
        %v1931 = vpop.f32.mrf.mxu0
        %v1932 = vadd.f32 0.0, %v1931
        %v1933 = vpop.f32.mrf.mxu0
        %v1934 = vadd.f32 0.0, %v1933
        %v1935 = vpop.f32.mrf.mxu0
        %v1936 = vadd.f32 0.0, %v1935
        %v1937 = vpop.f32.mrf.mxu0
        %v1938 = vadd.f32 0.0, %v1937
        %1939 = vdwg.mxu0
        %1940 = vmatprep.subr.bf16.mxu0 0
        %1941 = vmatpush1.bf16.msra.mxu0 0
        %1942 = vmatprep.subr.bf16.mxu0 0
        %1943 = vmatpush1.bf16.msra.mxu0 0
        %1944 = vmatprep.subr.bf16.mxu0 0
        %1945 = vmatpush1.bf16.msra.mxu0 0
        %1946 = vmatprep.subr.bf16.mxu0 0
        %1947 = vmatpush1.bf16.msra.mxu0 0
        %1948 = vmatprep.subr.bf16.mxu0 0
        %1949 = vmatpush1.bf16.msra.mxu0 0
        %1950 = vmatprep.subr.bf16.mxu0 0
        %1951 = vmatpush1.bf16.msra.mxu0 0
        %1952 = vmatprep.subr.bf16.mxu0 %v1880
        %1953 = vmatpush1.bf16.msra.mxu0 %v1877
        %1954 = vmatprep.subr.bf16.mxu0 %v1843
        %1955 = vmatpush1.bf16.msra.mxu0 %v1842
        %1956 = vmatprep.subr.bf16.mxu0 0
        %1957 = vmatpush2.bf16.msra.mxu0 0
        %1958 = vmatprep.subr.bf16.mxu0 0
        %1959 = vmatpush2.bf16.msra.mxu0 0
        %1960 = vmatprep.subr.bf16.mxu0 0
        %1961 = vmatpush2.bf16.msra.mxu0 0
        %1962 = vmatprep.subr.bf16.mxu0 0
        %1963 = vmatpush2.bf16.msra.mxu0 0
        %1964 = vmatprep.subr.bf16.mxu0 0
        %1965 = vmatpush2.bf16.msra.mxu0 0
        %1966 = vmatprep.subr.bf16.mxu0 0
        %1967 = vmatpush2.bf16.msra.mxu0 0
        %1968 = vmatprep.subr.bf16.mxu0 0
        %1969 = vmatpush2.bf16.msra.mxu0 0
        %1970 = vmatprep.subr.bf16.mxu0 0
        %1971 = vmatpush2.bf16.msra.mxu0 0
        %1972 = vmatprep.mubr.bf16.mxu0 0
        %1973 = vmatmul.mubr.bf16.gmra.mxu0 %v1868
        %v1974 = vpop.f32.mrf.mxu0
        %v1975 = vadd.f32 0.0, %v1974
        %v1976 = vpop.f32.mrf.mxu0
        %v1977 = vadd.f32 0.0, %v1976
        %v1978 = vpop.f32.mrf.mxu0
        %v1979 = vadd.f32 0.0, %v1978
        %v1980 = vpop.f32.mrf.mxu0
        %v1981 = vadd.f32 0.0, %v1980
        %1982 = vdwg.mxu0
        %1983 = vmatprep.subr.bf16.mxu0 0
        %1984 = vmatpush1.bf16.msra.mxu0 0
        %1985 = vmatprep.subr.bf16.mxu0 0
        %1986 = vmatpush1.bf16.msra.mxu0 0
        %1987 = vmatprep.subr.bf16.mxu0 0
        %1988 = vmatpush1.bf16.msra.mxu0 0
        %1989 = vmatprep.subr.bf16.mxu0 0
        %1990 = vmatpush1.bf16.msra.mxu0 0
        %1991 = vmatprep.subr.bf16.mxu0 0
        %1992 = vmatpush1.bf16.msra.mxu0 0
        %1993 = vmatprep.subr.bf16.mxu0 0
        %1994 = vmatpush1.bf16.msra.mxu0 0
        %1995 = vmatprep.subr.bf16.mxu0 %v1886
        %1996 = vmatpush1.bf16.msra.mxu0 %v1883
        %1997 = vmatprep.subr.bf16.mxu0 %v1845
        %1998 = vmatpush1.bf16.msra.mxu0 %v1844
        %1999 = vmatprep.subr.bf16.mxu0 0
        %2000 = vmatpush2.bf16.msra.mxu0 0
        %2001 = vmatprep.subr.bf16.mxu0 0
        %2002 = vmatpush2.bf16.msra.mxu0 0
        %2003 = vmatprep.subr.bf16.mxu0 0
        %2004 = vmatpush2.bf16.msra.mxu0 0
        %2005 = vmatprep.subr.bf16.mxu0 0
        %2006 = vmatpush2.bf16.msra.mxu0 0
        %2007 = vmatprep.subr.bf16.mxu0 0
        %2008 = vmatpush2.bf16.msra.mxu0 0
        %2009 = vmatprep.subr.bf16.mxu0 0
        %2010 = vmatpush2.bf16.msra.mxu0 0
        %2011 = vmatprep.subr.bf16.mxu0 0
        %2012 = vmatpush2.bf16.msra.mxu0 0
        %2013 = vmatprep.subr.bf16.mxu0 0
        %2014 = vmatpush2.bf16.msra.mxu0 0
        %2015 = vmatprep.mubr.bf16.mxu0 0
        %2016 = vmatmul.mubr.bf16.gmra.mxu0 %v1868
        %v2017 = vpop.f32.mrf.mxu0
        %v2018 = vadd.f32 0.0, %v2017
        %v2019 = vpop.f32.mrf.mxu0
        %v2020 = vadd.f32 0.0, %v2019
        %v2021 = vpop.f32.mrf.mxu0
        %v2022 = vadd.f32 0.0, %v2021
        %v2023 = vpop.f32.mrf.mxu0
        %v2024 = vadd.f32 0.0, %v2023
        %2025 = vdwg.mxu0
        %2026 = vmatprep.subr.bf16.mxu0 0
        %2027 = vmatpush1.bf16.msra.mxu0 0
        %2028 = vmatprep.subr.bf16.mxu0 0
        %2029 = vmatpush1.bf16.msra.mxu0 0
        %2030 = vmatprep.subr.bf16.mxu0 0
        %2031 = vmatpush1.bf16.msra.mxu0 0
        %2032 = vmatprep.subr.bf16.mxu0 0
        %2033 = vmatpush1.bf16.msra.mxu0 0
        %2034 = vmatprep.subr.bf16.mxu0 0
        %2035 = vmatpush1.bf16.msra.mxu0 0
        %2036 = vmatprep.subr.bf16.mxu0 0
        %2037 = vmatpush1.bf16.msra.mxu0 0
        %2038 = vmatprep.subr.bf16.mxu0 %v1892
        %2039 = vmatpush1.bf16.msra.mxu0 %v1889
        %2040 = vmatprep.subr.bf16.mxu0 %v1847
        %2041 = vmatpush1.bf16.msra.mxu0 %v1846
        %2042 = vmatprep.subr.bf16.mxu0 0
        %2043 = vmatpush2.bf16.msra.mxu0 0
        %2044 = vmatprep.subr.bf16.mxu0 0
        %2045 = vmatpush2.bf16.msra.mxu0 0
        %2046 = vmatprep.subr.bf16.mxu0 0
        %2047 = vmatpush2.bf16.msra.mxu0 0
        %2048 = vmatprep.subr.bf16.mxu0 0
        %2049 = vmatpush2.bf16.msra.mxu0 0
        %2050 = vmatprep.subr.bf16.mxu0 0
        %2051 = vmatpush2.bf16.msra.mxu0 0
        %2052 = vmatprep.subr.bf16.mxu0 0
        %2053 = vmatpush2.bf16.msra.mxu0 0
        %2054 = vmatprep.subr.bf16.mxu0 0
        %2055 = vmatpush2.bf16.msra.mxu0 0
        %2056 = vmatprep.subr.bf16.mxu0 0
        %2057 = vmatpush2.bf16.msra.mxu0 0
        %2058 = vmatprep.mubr.bf16.mxu0 0
        %2059 = vmatmul.mubr.bf16.gmra.mxu0 %v1868
        %v2060 = vpop.f32.mrf.mxu0
        %v2061 = vadd.f32 0.0, %v2060
        %v2062 = vpop.f32.mrf.mxu0
        %v2063 = vadd.f32 0.0, %v2062
        %v2064 = vpop.f32.mrf.mxu0
        %v2065 = vadd.f32 0.0, %v2064
        %v2066 = vpop.f32.mrf.mxu0
        %v2067 = vadd.f32 0.0, %v2066
        %2068 = vdwg.mxu0
        %2069 = vmatprep.subr.bf16.mxu0 0
        %2070 = vmatpush1.bf16.msra.mxu0 0
        %2071 = vmatprep.subr.bf16.mxu0 0
        %2072 = vmatpush1.bf16.msra.mxu0 0
        %2073 = vmatprep.subr.bf16.mxu0 0
        %2074 = vmatpush1.bf16.msra.mxu0 0
        %2075 = vmatprep.subr.bf16.mxu0 0
        %2076 = vmatpush1.bf16.msra.mxu0 0
        %2077 = vmatprep.subr.bf16.mxu0 0
        %2078 = vmatpush1.bf16.msra.mxu0 0
        %2079 = vmatprep.subr.bf16.mxu0 0
        %2080 = vmatpush1.bf16.msra.mxu0 0
        %2081 = vmatprep.subr.bf16.mxu0 0
        %2082 = vmatpush1.bf16.msra.mxu0 %v1895
        %2083 = vmatprep.subr.bf16.mxu0 0
        %2084 = vmatpush1.bf16.msra.mxu0 %v1848
        %2085 = vmatprep.subr.bf16.mxu0 0
        %2086 = vmatpush2.bf16.msra.mxu0 0
        %2087 = vmatprep.subr.bf16.mxu0 0
        %2088 = vmatpush2.bf16.msra.mxu0 0
        %2089 = vmatprep.subr.bf16.mxu0 0
        %2090 = vmatpush2.bf16.msra.mxu0 0
        %2091 = vmatprep.subr.bf16.mxu0 0
        %2092 = vmatpush2.bf16.msra.mxu0 0
        %2093 = vmatprep.subr.bf16.mxu0 0
        %2094 = vmatpush2.bf16.msra.mxu0 0
        %2095 = vmatprep.subr.bf16.mxu0 0
        %2096 = vmatpush2.bf16.msra.mxu0 0
        %2097 = vmatprep.subr.bf16.mxu0 0
        %2098 = vmatpush2.bf16.msra.mxu0 0
        %2099 = vmatprep.subr.bf16.mxu0 0
        %2100 = vmatpush2.bf16.msra.mxu0 0
        %2101 = vmatprep.mubr.bf16.mxu0 0
        %2102 = vmatmul.mubr.bf16.gmra.mxu0 %v1868
        %v2103 = vpop.f32.mrf.mxu0
        %v2104 = vadd.f32 0.0, %v2103
        %v2105 = vpop.f32.mrf.mxu0
        %v2106 = vpop.f32.mrf.mxu0
        %v2107 = vadd.f32 0.0, %v2106
        %v2108 = vpop.f32.mrf.mxu0
        %2109 = vdwg.mxu0
        %v2110 = vadd.f32 %v1532, %v1932
        %v2111 = vadd.f32 %v1534, %v1934
        %v2112 = vadd.f32 %v1575, %v1975
        %v2113 = vadd.f32 %v1577, %v1977
        %v2114 = vadd.f32 %v1618, %v2018
        %v2115 = vadd.f32 %v1620, %v2020
        %v2116 = vadd.f32 %v1661, %v2061
        %v2117 = vadd.f32 %v1663, %v2063
        %v2118 = vadd.f32 %v1704, %v2104
        %v2119 = vadd.f32 %v1536, %v1936
        %v2120 = vadd.f32 %v1538, %v1938
        %v2121 = vadd.f32 %v1579, %v1979
        %v2122 = vadd.f32 %v1581, %v1981
        %v2123 = vadd.f32 %v1622, %v2022
        %v2124 = vadd.f32 %v1624, %v2024
        %v2125 = vadd.f32 %v1665, %v2065
        %v2126 = vadd.f32 %v1667, %v2067
        %v2127 = vadd.f32 %v1707, %v2107
        %v2128 = vld [vmem:[#allocation5] sm:$0xff]
        %v2129 = vld [vmem:[#allocation5 + $0x8] sm:$0x1]
        %v2132 = vlaneseq
        %v2133 = vshrl.u32 %v2132, 7
        %v2134 = vsub.s32 0, %v2133
        %v2135 = vrot.slane %v2128, %v2134
        %v2136 = vlaneseq
        %v2137 = vshrl.u32 %v2136, 7
        %v2138 = vsub.s32 1, %v2137
        %v2139 = vrot.slane %v2128, %v2138
        %v2140 = vlaneseq
        %v2141 = vshrl.u32 %v2140, 7
        %v2142 = vsub.s32 2, %v2141
        %v2143 = vrot.slane %v2128, %v2142
        %v2144 = vlaneseq
        %v2145 = vshrl.u32 %v2144, 7
        %v2146 = vsub.s32 3, %v2145
        %v2147 = vrot.slane %v2128, %v2146
        %v2148 = vlaneseq
        %v2149 = vshrl.u32 %v2148, 7
        %v2150 = vsub.s32 4, %v2149
        %v2151 = vrot.slane %v2128, %v2150
        %v2152 = vlaneseq
        %v2153 = vshrl.u32 %v2152, 7
        %v2154 = vsub.s32 5, %v2153
        %v2155 = vrot.slane %v2128, %v2154
        %v2156 = vlaneseq
        %v2157 = vshrl.u32 %v2156, 7
        %v2158 = vsub.s32 6, %v2157
        %v2159 = vrot.slane %v2128, %v2158
        %v2160 = vlaneseq
        %v2161 = vshrl.u32 %v2160, 7
        %v2162 = vsub.s32 7, %v2161
        %v2163 = vrot.slane %v2128, %v2162
        %v2164 = vlaneseq
        %v2165 = vshrl.u32 %v2164, 7
        %v2166 = vsub.s32 0, %v2165
        %v2167 = vrot.slane %v2129, %v2166
        %v2177 = vadd.f32 %v2110, %v2135
        %v2178 = vadd.f32 %v2111, %v2139
        %v2179 = vadd.f32 %v2112, %v2143
        %v2180 = vadd.f32 %v2113, %v2147
        %v2181 = vadd.f32 %v2114, %v2151
        %v2182 = vadd.f32 %v2115, %v2155
        %v2183 = vadd.f32 %v2116, %v2159
        %v2184 = vadd.f32 %v2117, %v2163
        %v2185 = vadd.f32 %v2118, %v2167
        %v2186 = vadd.f32 %v2119, %v2135
        %v2187 = vadd.f32 %v2120, %v2139
        %v2188 = vadd.f32 %v2121, %v2143
        %v2189 = vadd.f32 %v2122, %v2147
        %v2190 = vadd.f32 %v2123, %v2151
        %v2191 = vadd.f32 %v2124, %v2155
        %v2192 = vadd.f32 %v2125, %v2159
        %v2193 = vadd.f32 %v2126, %v2163
        %v2194 = vadd.f32 %v2127, %v2167
        %v2195 = vmax.f32 %v2177, 0.0
        %v2196 = vmax.f32 %v2178, 0.0
        %v2197 = vmax.f32 %v2179, 0.0
        %v2198 = vmax.f32 %v2180, 0.0
        %v2199 = vmax.f32 %v2181, 0.0
        %v2200 = vmax.f32 %v2182, 0.0
        %v2201 = vmax.f32 %v2183, 0.0
        %v2202 = vmax.f32 %v2184, 0.0
        %v2203 = vmax.f32 %v2185, 0.0
        %v2204 = vmax.f32 %v2186, 0.0
        %v2205 = vmax.f32 %v2187, 0.0
        %v2206 = vmax.f32 %v2188, 0.0
        %v2207 = vmax.f32 %v2189, 0.0
        %v2208 = vmax.f32 %v2190, 0.0
        %v2209 = vmax.f32 %v2191, 0.0
        %v2210 = vmax.f32 %v2192, 0.0
        %v2211 = vmax.f32 %v2193, 0.0
        %v2212 = vmax.f32 %v2194, 0.0
        %v2213 = vpack.c.bf16 %v2204, %v2195
        %v2214 = vpack.c.bf16 %v2205, %v2196
        %v2215 = vpack.c.bf16 %v2206, %v2197
        %v2216 = vpack.c.bf16 %v2207, %v2198
        %v2217 = vpack.c.bf16 %v2208, %v2199
        %v2218 = vpack.c.bf16 %v2209, %v2200
        %v2219 = vpack.c.bf16 %v2210, %v2201
        %v2220 = vpack.c.bf16 %v2211, %v2202
        %v2221 = vpack.c.bf16 %v2212, %v2203
        %v2222 = vld [vmem:[#allocation7] sm:$0xf]
        %vm2223 = vcmask 113664
        %v2225 = vsel %vm2223, %v2222, 0
        %vm2227 = vcmask 1046528
        %v2229 = vsel %vm2227, %v2213, 0
        %v2232 = vsel %vm2227, %v2214, 0
        %v2235 = vsel %vm2227, %v2215, 0
        %v2238 = vsel %vm2227, %v2216, 0
        %v2241 = vsel %vm2227, %v2217, 0
        %v2244 = vsel %vm2227, %v2218, 0
        %v2247 = vsel %vm2227, %v2219, 0
        %v2250 = vsel %vm2227, %v2220, 0
        %v2253 = vsel %vm2227, %v2221, 0
        %2255 = vmatprep.subr.bf16.mxu0 0
        %2256 = vmatpush1.bf16.msra.mxu0 0
        %2257 = vmatprep.subr.bf16.mxu0 0
        %2258 = vmatpush1.bf16.msra.mxu0 0
        %2259 = vmatprep.subr.bf16.mxu0 0
        %2260 = vmatpush1.bf16.msra.mxu0 0
        %2261 = vmatprep.subr.bf16.mxu0 0
        %2262 = vmatpush1.bf16.msra.mxu0 0
        %2263 = vmatprep.subr.bf16.mxu0 0
        %2264 = vmatpush1.bf16.msra.mxu0 0
        %2265 = vmatprep.subr.bf16.mxu0 0
        %2266 = vmatpush1.bf16.msra.mxu0 0
        %2267 = vmatprep.subr.bf16.mxu0 0
        %2268 = vmatpush1.bf16.msra.mxu0 0
        %2269 = vmatprep.subr.bf16.mxu0 %v2232
        %2270 = vmatpush1.bf16.msra.mxu0 %v2229
        %2271 = vmatprep.subr.bf16.mxu0 0
        %2272 = vmatpush2.bf16.msra.mxu0 0
        %2273 = vmatprep.subr.bf16.mxu0 0
        %2274 = vmatpush2.bf16.msra.mxu0 0
        %2275 = vmatprep.subr.bf16.mxu0 0
        %2276 = vmatpush2.bf16.msra.mxu0 0
        %2277 = vmatprep.subr.bf16.mxu0 0
        %2278 = vmatpush2.bf16.msra.mxu0 0
        %2279 = vmatprep.subr.bf16.mxu0 0
        %2280 = vmatpush2.bf16.msra.mxu0 0
        %2281 = vmatprep.subr.bf16.mxu0 0
        %2282 = vmatpush2.bf16.msra.mxu0 0
        %2283 = vmatprep.subr.bf16.mxu0 0
        %2284 = vmatpush2.bf16.msra.mxu0 0
        %2285 = vmatprep.subr.bf16.mxu0 0
        %2286 = vmatpush2.bf16.msra.mxu0 0
        %2287 = vmatprep.mubr.bf16.mxu0 0
        %2288 = vmatmul.mubr.bf16.gmra.mxu0 %v2225
        %v2289 = vpop.f32.mrf.mxu0
        %v2290 = vadd.f32 0.0, %v2289
        %v2291 = vpop.f32.mrf.mxu0
        %v2292 = vadd.f32 0.0, %v2291
        %v2293 = vpop.f32.mrf.mxu0
        %v2294 = vpop.f32.mrf.mxu0
        %2295 = vdwg.mxu0
        %2296 = vmatprep.subr.bf16.mxu0 0
        %2297 = vmatpush1.bf16.msra.mxu0 0
        %2298 = vmatprep.subr.bf16.mxu0 0
        %2299 = vmatpush1.bf16.msra.mxu0 0
        %2300 = vmatprep.subr.bf16.mxu0 0
        %2301 = vmatpush1.bf16.msra.mxu0 0
        %2302 = vmatprep.subr.bf16.mxu0 0
        %2303 = vmatpush1.bf16.msra.mxu0 0
        %2304 = vmatprep.subr.bf16.mxu0 0
        %2305 = vmatpush1.bf16.msra.mxu0 0
        %2306 = vmatprep.subr.bf16.mxu0 0
        %2307 = vmatpush1.bf16.msra.mxu0 0
        %2308 = vmatprep.subr.bf16.mxu0 0
        %2309 = vmatpush1.bf16.msra.mxu0 0
        %2310 = vmatprep.subr.bf16.mxu0 %v2238
        %2311 = vmatpush1.bf16.msra.mxu0 %v2235
        %2312 = vmatprep.subr.bf16.mxu0 0
        %2313 = vmatpush2.bf16.msra.mxu0 0
        %2314 = vmatprep.subr.bf16.mxu0 0
        %2315 = vmatpush2.bf16.msra.mxu0 0
        %2316 = vmatprep.subr.bf16.mxu0 0
        %2317 = vmatpush2.bf16.msra.mxu0 0
        %2318 = vmatprep.subr.bf16.mxu0 0
        %2319 = vmatpush2.bf16.msra.mxu0 0
        %2320 = vmatprep.subr.bf16.mxu0 0
        %2321 = vmatpush2.bf16.msra.mxu0 0
        %2322 = vmatprep.subr.bf16.mxu0 0
        %2323 = vmatpush2.bf16.msra.mxu0 0
        %2324 = vmatprep.subr.bf16.mxu0 0
        %2325 = vmatpush2.bf16.msra.mxu0 0
        %2326 = vmatprep.subr.bf16.mxu0 0
        %2327 = vmatpush2.bf16.msra.mxu0 0
        %2328 = vmatprep.mubr.bf16.mxu0 0
        %2329 = vmatmul.mubr.bf16.gmra.mxu0 %v2225
        %v2330 = vpop.f32.mrf.mxu0
        %v2331 = vadd.f32 0.0, %v2330
        %v2332 = vpop.f32.mrf.mxu0
        %v2333 = vadd.f32 0.0, %v2332
        %v2334 = vpop.f32.mrf.mxu0
        %v2335 = vpop.f32.mrf.mxu0
        %2336 = vdwg.mxu0
        %2337 = vmatprep.subr.bf16.mxu0 0
        %2338 = vmatpush1.bf16.msra.mxu0 0
        %2339 = vmatprep.subr.bf16.mxu0 0
        %2340 = vmatpush1.bf16.msra.mxu0 0
        %2341 = vmatprep.subr.bf16.mxu0 0
        %2342 = vmatpush1.bf16.msra.mxu0 0
        %2343 = vmatprep.subr.bf16.mxu0 0
        %2344 = vmatpush1.bf16.msra.mxu0 0
        %2345 = vmatprep.subr.bf16.mxu0 0
        %2346 = vmatpush1.bf16.msra.mxu0 0
        %2347 = vmatprep.subr.bf16.mxu0 0
        %2348 = vmatpush1.bf16.msra.mxu0 0
        %2349 = vmatprep.subr.bf16.mxu0 0
        %2350 = vmatpush1.bf16.msra.mxu0 0
        %2351 = vmatprep.subr.bf16.mxu0 %v2244
        %2352 = vmatpush1.bf16.msra.mxu0 %v2241
        %2353 = vmatprep.subr.bf16.mxu0 0
        %2354 = vmatpush2.bf16.msra.mxu0 0
        %2355 = vmatprep.subr.bf16.mxu0 0
        %2356 = vmatpush2.bf16.msra.mxu0 0
        %2357 = vmatprep.subr.bf16.mxu0 0
        %2358 = vmatpush2.bf16.msra.mxu0 0
        %2359 = vmatprep.subr.bf16.mxu0 0
        %2360 = vmatpush2.bf16.msra.mxu0 0
        %2361 = vmatprep.subr.bf16.mxu0 0
        %2362 = vmatpush2.bf16.msra.mxu0 0
        %2363 = vmatprep.subr.bf16.mxu0 0
        %2364 = vmatpush2.bf16.msra.mxu0 0
        %2365 = vmatprep.subr.bf16.mxu0 0
        %2366 = vmatpush2.bf16.msra.mxu0 0
        %2367 = vmatprep.subr.bf16.mxu0 0
        %2368 = vmatpush2.bf16.msra.mxu0 0
        %2369 = vmatprep.mubr.bf16.mxu0 0
        %2370 = vmatmul.mubr.bf16.gmra.mxu0 %v2225
        %v2371 = vpop.f32.mrf.mxu0
        %v2372 = vadd.f32 0.0, %v2371
        %v2373 = vpop.f32.mrf.mxu0
        %v2374 = vadd.f32 0.0, %v2373
        %v2375 = vpop.f32.mrf.mxu0
        %v2376 = vpop.f32.mrf.mxu0
        %2377 = vdwg.mxu0
        %2378 = vmatprep.subr.bf16.mxu0 0
        %2379 = vmatpush1.bf16.msra.mxu0 0
        %2380 = vmatprep.subr.bf16.mxu0 0
        %2381 = vmatpush1.bf16.msra.mxu0 0
        %2382 = vmatprep.subr.bf16.mxu0 0
        %2383 = vmatpush1.bf16.msra.mxu0 0
        %2384 = vmatprep.subr.bf16.mxu0 0
        %2385 = vmatpush1.bf16.msra.mxu0 0
        %2386 = vmatprep.subr.bf16.mxu0 0
        %2387 = vmatpush1.bf16.msra.mxu0 0
        %2388 = vmatprep.subr.bf16.mxu0 0
        %2389 = vmatpush1.bf16.msra.mxu0 0
        %2390 = vmatprep.subr.bf16.mxu0 0
        %2391 = vmatpush1.bf16.msra.mxu0 0
        %2392 = vmatprep.subr.bf16.mxu0 %v2250
        %2393 = vmatpush1.bf16.msra.mxu0 %v2247
        %2394 = vmatprep.subr.bf16.mxu0 0
        %2395 = vmatpush2.bf16.msra.mxu0 0
        %2396 = vmatprep.subr.bf16.mxu0 0
        %2397 = vmatpush2.bf16.msra.mxu0 0
        %2398 = vmatprep.subr.bf16.mxu0 0
        %2399 = vmatpush2.bf16.msra.mxu0 0
        %2400 = vmatprep.subr.bf16.mxu0 0
        %2401 = vmatpush2.bf16.msra.mxu0 0
        %2402 = vmatprep.subr.bf16.mxu0 0
        %2403 = vmatpush2.bf16.msra.mxu0 0
        %2404 = vmatprep.subr.bf16.mxu0 0
        %2405 = vmatpush2.bf16.msra.mxu0 0
        %2406 = vmatprep.subr.bf16.mxu0 0
        %2407 = vmatpush2.bf16.msra.mxu0 0
        %2408 = vmatprep.subr.bf16.mxu0 0
        %2409 = vmatpush2.bf16.msra.mxu0 0
        %2410 = vmatprep.mubr.bf16.mxu0 0
        %2411 = vmatmul.mubr.bf16.gmra.mxu0 %v2225
        %v2412 = vpop.f32.mrf.mxu0
        %v2413 = vadd.f32 0.0, %v2412
        %v2414 = vpop.f32.mrf.mxu0
        %v2415 = vadd.f32 0.0, %v2414
        %v2416 = vpop.f32.mrf.mxu0
        %v2417 = vpop.f32.mrf.mxu0
        %2418 = vdwg.mxu0
        %2419 = vmatprep.subr.bf16.mxu0 0
        %2420 = vmatpush1.bf16.msra.mxu0 0
        %2421 = vmatprep.subr.bf16.mxu0 0
        %2422 = vmatpush1.bf16.msra.mxu0 0
        %2423 = vmatprep.subr.bf16.mxu0 0
        %2424 = vmatpush1.bf16.msra.mxu0 0
        %2425 = vmatprep.subr.bf16.mxu0 0
        %2426 = vmatpush1.bf16.msra.mxu0 0
        %2427 = vmatprep.subr.bf16.mxu0 0
        %2428 = vmatpush1.bf16.msra.mxu0 0
        %2429 = vmatprep.subr.bf16.mxu0 0
        %2430 = vmatpush1.bf16.msra.mxu0 0
        %2431 = vmatprep.subr.bf16.mxu0 0
        %2432 = vmatpush1.bf16.msra.mxu0 0
        %2433 = vmatprep.subr.bf16.mxu0 0
        %2434 = vmatpush1.bf16.msra.mxu0 %v2253
        %2435 = vmatprep.subr.bf16.mxu0 0
        %2436 = vmatpush2.bf16.msra.mxu0 0
        %2437 = vmatprep.subr.bf16.mxu0 0
        %2438 = vmatpush2.bf16.msra.mxu0 0
        %2439 = vmatprep.subr.bf16.mxu0 0
        %2440 = vmatpush2.bf16.msra.mxu0 0
        %2441 = vmatprep.subr.bf16.mxu0 0
        %2442 = vmatpush2.bf16.msra.mxu0 0
        %2443 = vmatprep.subr.bf16.mxu0 0
        %2444 = vmatpush2.bf16.msra.mxu0 0
        %2445 = vmatprep.subr.bf16.mxu0 0
        %2446 = vmatpush2.bf16.msra.mxu0 0
        %2447 = vmatprep.subr.bf16.mxu0 0
        %2448 = vmatpush2.bf16.msra.mxu0 0
        %2449 = vmatprep.subr.bf16.mxu0 0
        %2450 = vmatpush2.bf16.msra.mxu0 0
        %2451 = vmatprep.mubr.bf16.mxu0 0
        %2452 = vmatmul.mubr.bf16.gmra.mxu0 %v2225
        %v2453 = vpop.f32.mrf.mxu0
        %v2454 = vadd.f32 0.0, %v2453
        %v2455 = vpop.f32.mrf.mxu0
        %v2456 = vpop.f32.mrf.mxu0
        %v2457 = vpop.f32.mrf.mxu0
        %2458 = vdwg.mxu0
        %v2459 = vpack.c.bf16 %v2290, %v2290
        %v2460 = vpack.c.bf16 %v2292, %v2292
        %v2461 = vpack.c.bf16 %v2331, %v2331
        %v2462 = vpack.c.bf16 %v2333, %v2333
        %v2463 = vpack.c.bf16 %v2372, %v2372
        %v2464 = vpack.c.bf16 %v2374, %v2374
        %v2465 = vpack.c.bf16 %v2413, %v2413
        %v2466 = vpack.c.bf16 %v2415, %v2415
        %v2467 = vpack.c.bf16 %v2454, %v2454
        %s2468 = scalar_lea.vmem [#allocation7], 4
        %v2469 = vld [vmem:[%s2468] sm:$0xf]
        %v2471 = vsel %vm2223, %v2469, 0
        %2473 = vmatprep.subr.bf16.mxu0 0
        %2474 = vmatpush1.bf16.msra.mxu0 0
        %2475 = vmatprep.subr.bf16.mxu0 0
        %2476 = vmatpush1.bf16.msra.mxu0 0
        %2477 = vmatprep.subr.bf16.mxu0 0
        %2478 = vmatpush1.bf16.msra.mxu0 0
        %2479 = vmatprep.subr.bf16.mxu0 0
        %2480 = vmatpush1.bf16.msra.mxu0 0
        %2481 = vmatprep.subr.bf16.mxu0 0
        %2482 = vmatpush1.bf16.msra.mxu0 0
        %2483 = vmatprep.subr.bf16.mxu0 0
        %2484 = vmatpush1.bf16.msra.mxu0 0
        %2485 = vmatprep.subr.bf16.mxu0 0
        %2486 = vmatpush1.bf16.msra.mxu0 0
        %2487 = vmatprep.subr.bf16.mxu0 %v2232
        %2488 = vmatpush1.bf16.msra.mxu0 %v2229
        %2489 = vmatprep.subr.bf16.mxu0 0
        %2490 = vmatpush2.bf16.msra.mxu0 0
        %2491 = vmatprep.subr.bf16.mxu0 0
        %2492 = vmatpush2.bf16.msra.mxu0 0
        %2493 = vmatprep.subr.bf16.mxu0 0
        %2494 = vmatpush2.bf16.msra.mxu0 0
        %2495 = vmatprep.subr.bf16.mxu0 0
        %2496 = vmatpush2.bf16.msra.mxu0 0
        %2497 = vmatprep.subr.bf16.mxu0 0
        %2498 = vmatpush2.bf16.msra.mxu0 0
        %2499 = vmatprep.subr.bf16.mxu0 0
        %2500 = vmatpush2.bf16.msra.mxu0 0
        %2501 = vmatprep.subr.bf16.mxu0 0
        %2502 = vmatpush2.bf16.msra.mxu0 0
        %2503 = vmatprep.subr.bf16.mxu0 0
        %2504 = vmatpush2.bf16.msra.mxu0 0
        %2505 = vmatprep.mubr.bf16.mxu0 0
        %2506 = vmatmul.mubr.bf16.gmra.mxu0 %v2471
        %v2507 = vpop.f32.mrf.mxu0
        %v2508 = vadd.f32 0.0, %v2507
        %v2509 = vpop.f32.mrf.mxu0
        %v2510 = vadd.f32 0.0, %v2509
        %v2511 = vpop.f32.mrf.mxu0
        %v2512 = vpop.f32.mrf.mxu0
        %2513 = vdwg.mxu0
        %2514 = vmatprep.subr.bf16.mxu0 0
        %2515 = vmatpush1.bf16.msra.mxu0 0
        %2516 = vmatprep.subr.bf16.mxu0 0
        %2517 = vmatpush1.bf16.msra.mxu0 0
        %2518 = vmatprep.subr.bf16.mxu0 0
        %2519 = vmatpush1.bf16.msra.mxu0 0
        %2520 = vmatprep.subr.bf16.mxu0 0
        %2521 = vmatpush1.bf16.msra.mxu0 0
        %2522 = vmatprep.subr.bf16.mxu0 0
        %2523 = vmatpush1.bf16.msra.mxu0 0
        %2524 = vmatprep.subr.bf16.mxu0 0
        %2525 = vmatpush1.bf16.msra.mxu0 0
        %2526 = vmatprep.subr.bf16.mxu0 0
        %2527 = vmatpush1.bf16.msra.mxu0 0
        %2528 = vmatprep.subr.bf16.mxu0 %v2238
        %2529 = vmatpush1.bf16.msra.mxu0 %v2235
        %2530 = vmatprep.subr.bf16.mxu0 0
        %2531 = vmatpush2.bf16.msra.mxu0 0
        %2532 = vmatprep.subr.bf16.mxu0 0
        %2533 = vmatpush2.bf16.msra.mxu0 0
        %2534 = vmatprep.subr.bf16.mxu0 0
        %2535 = vmatpush2.bf16.msra.mxu0 0
        %2536 = vmatprep.subr.bf16.mxu0 0
        %2537 = vmatpush2.bf16.msra.mxu0 0
        %2538 = vmatprep.subr.bf16.mxu0 0
        %2539 = vmatpush2.bf16.msra.mxu0 0
        %2540 = vmatprep.subr.bf16.mxu0 0
        %2541 = vmatpush2.bf16.msra.mxu0 0
        %2542 = vmatprep.subr.bf16.mxu0 0
        %2543 = vmatpush2.bf16.msra.mxu0 0
        %2544 = vmatprep.subr.bf16.mxu0 0
        %2545 = vmatpush2.bf16.msra.mxu0 0
        %2546 = vmatprep.mubr.bf16.mxu0 0
        %2547 = vmatmul.mubr.bf16.gmra.mxu0 %v2471
        %v2548 = vpop.f32.mrf.mxu0
        %v2549 = vadd.f32 0.0, %v2548
        %v2550 = vpop.f32.mrf.mxu0
        %v2551 = vadd.f32 0.0, %v2550
        %v2552 = vpop.f32.mrf.mxu0
        %v2553 = vpop.f32.mrf.mxu0
        %2554 = vdwg.mxu0
        %2555 = vmatprep.subr.bf16.mxu0 0
        %2556 = vmatpush1.bf16.msra.mxu0 0
        %2557 = vmatprep.subr.bf16.mxu0 0
        %2558 = vmatpush1.bf16.msra.mxu0 0
        %2559 = vmatprep.subr.bf16.mxu0 0
        %2560 = vmatpush1.bf16.msra.mxu0 0
        %2561 = vmatprep.subr.bf16.mxu0 0
        %2562 = vmatpush1.bf16.msra.mxu0 0
        %2563 = vmatprep.subr.bf16.mxu0 0
        %2564 = vmatpush1.bf16.msra.mxu0 0
        %2565 = vmatprep.subr.bf16.mxu0 0
        %2566 = vmatpush1.bf16.msra.mxu0 0
        %2567 = vmatprep.subr.bf16.mxu0 0
        %2568 = vmatpush1.bf16.msra.mxu0 0
        %2569 = vmatprep.subr.bf16.mxu0 %v2244
        %2570 = vmatpush1.bf16.msra.mxu0 %v2241
        %2571 = vmatprep.subr.bf16.mxu0 0
        %2572 = vmatpush2.bf16.msra.mxu0 0
        %2573 = vmatprep.subr.bf16.mxu0 0
        %2574 = vmatpush2.bf16.msra.mxu0 0
        %2575 = vmatprep.subr.bf16.mxu0 0
        %2576 = vmatpush2.bf16.msra.mxu0 0
        %2577 = vmatprep.subr.bf16.mxu0 0
        %2578 = vmatpush2.bf16.msra.mxu0 0
        %2579 = vmatprep.subr.bf16.mxu0 0
        %2580 = vmatpush2.bf16.msra.mxu0 0
        %2581 = vmatprep.subr.bf16.mxu0 0
        %2582 = vmatpush2.bf16.msra.mxu0 0
        %2583 = vmatprep.subr.bf16.mxu0 0
        %2584 = vmatpush2.bf16.msra.mxu0 0
        %2585 = vmatprep.subr.bf16.mxu0 0
        %2586 = vmatpush2.bf16.msra.mxu0 0
        %2587 = vmatprep.mubr.bf16.mxu0 0
        %2588 = vmatmul.mubr.bf16.gmra.mxu0 %v2471
        %v2589 = vpop.f32.mrf.mxu0
        %v2590 = vadd.f32 0.0, %v2589
        %v2591 = vpop.f32.mrf.mxu0
        %v2592 = vadd.f32 0.0, %v2591
        %v2593 = vpop.f32.mrf.mxu0
        %v2594 = vpop.f32.mrf.mxu0
        %2595 = vdwg.mxu0
        %2596 = vmatprep.subr.bf16.mxu0 0
        %2597 = vmatpush1.bf16.msra.mxu0 0
        %2598 = vmatprep.subr.bf16.mxu0 0
        %2599 = vmatpush1.bf16.msra.mxu0 0
        %2600 = vmatprep.subr.bf16.mxu0 0
        %2601 = vmatpush1.bf16.msra.mxu0 0
        %2602 = vmatprep.subr.bf16.mxu0 0
        %2603 = vmatpush1.bf16.msra.mxu0 0
        %2604 = vmatprep.subr.bf16.mxu0 0
        %2605 = vmatpush1.bf16.msra.mxu0 0
        %2606 = vmatprep.subr.bf16.mxu0 0
        %2607 = vmatpush1.bf16.msra.mxu0 0
        %2608 = vmatprep.subr.bf16.mxu0 0
        %2609 = vmatpush1.bf16.msra.mxu0 0
        %2610 = vmatprep.subr.bf16.mxu0 %v2250
        %2611 = vmatpush1.bf16.msra.mxu0 %v2247
        %2612 = vmatprep.subr.bf16.mxu0 0
        %2613 = vmatpush2.bf16.msra.mxu0 0
        %2614 = vmatprep.subr.bf16.mxu0 0
        %2615 = vmatpush2.bf16.msra.mxu0 0
        %2616 = vmatprep.subr.bf16.mxu0 0
        %2617 = vmatpush2.bf16.msra.mxu0 0
        %2618 = vmatprep.subr.bf16.mxu0 0
        %2619 = vmatpush2.bf16.msra.mxu0 0
        %2620 = vmatprep.subr.bf16.mxu0 0
        %2621 = vmatpush2.bf16.msra.mxu0 0
        %2622 = vmatprep.subr.bf16.mxu0 0
        %2623 = vmatpush2.bf16.msra.mxu0 0
        %2624 = vmatprep.subr.bf16.mxu0 0
        %2625 = vmatpush2.bf16.msra.mxu0 0
        %2626 = vmatprep.subr.bf16.mxu0 0
        %2627 = vmatpush2.bf16.msra.mxu0 0
        %2628 = vmatprep.mubr.bf16.mxu0 0
        %2629 = vmatmul.mubr.bf16.gmra.mxu0 %v2471
        %v2630 = vpop.f32.mrf.mxu0
        %v2631 = vadd.f32 0.0, %v2630
        %v2632 = vpop.f32.mrf.mxu0
        %v2633 = vadd.f32 0.0, %v2632
        %v2634 = vpop.f32.mrf.mxu0
        %v2635 = vpop.f32.mrf.mxu0
        %2636 = vdwg.mxu0
        %2637 = vmatprep.subr.bf16.mxu0 0
        %2638 = vmatpush1.bf16.msra.mxu0 0
        %2639 = vmatprep.subr.bf16.mxu0 0
        %2640 = vmatpush1.bf16.msra.mxu0 0
        %2641 = vmatprep.subr.bf16.mxu0 0
        %2642 = vmatpush1.bf16.msra.mxu0 0
        %2643 = vmatprep.subr.bf16.mxu0 0
        %2644 = vmatpush1.bf16.msra.mxu0 0
        %2645 = vmatprep.subr.bf16.mxu0 0
        %2646 = vmatpush1.bf16.msra.mxu0 0
        %2647 = vmatprep.subr.bf16.mxu0 0
        %2648 = vmatpush1.bf16.msra.mxu0 0
        %2649 = vmatprep.subr.bf16.mxu0 0
        %2650 = vmatpush1.bf16.msra.mxu0 0
        %2651 = vmatprep.subr.bf16.mxu0 0
        %2652 = vmatpush1.bf16.msra.mxu0 %v2253
        %2653 = vmatprep.subr.bf16.mxu0 0
        %2654 = vmatpush2.bf16.msra.mxu0 0
        %2655 = vmatprep.subr.bf16.mxu0 0
        %2656 = vmatpush2.bf16.msra.mxu0 0
        %2657 = vmatprep.subr.bf16.mxu0 0
        %2658 = vmatpush2.bf16.msra.mxu0 0
        %2659 = vmatprep.subr.bf16.mxu0 0
        %2660 = vmatpush2.bf16.msra.mxu0 0
        %2661 = vmatprep.subr.bf16.mxu0 0
        %2662 = vmatpush2.bf16.msra.mxu0 0
        %2663 = vmatprep.subr.bf16.mxu0 0
        %2664 = vmatpush2.bf16.msra.mxu0 0
        %2665 = vmatprep.subr.bf16.mxu0 0
        %2666 = vmatpush2.bf16.msra.mxu0 0
        %2667 = vmatprep.subr.bf16.mxu0 0
        %2668 = vmatpush2.bf16.msra.mxu0 0
        %2669 = vmatprep.mubr.bf16.mxu0 0
        %2670 = vmatmul.mubr.bf16.gmra.mxu0 %v2471
        %v2671 = vpop.f32.mrf.mxu0
        %v2672 = vadd.f32 0.0, %v2671
        %v2673 = vpop.f32.mrf.mxu0
        %v2674 = vpop.f32.mrf.mxu0
        %v2675 = vpop.f32.mrf.mxu0
        %2676 = vdwg.mxu0
        %v2677 = vpack.c.bf16 %v2508, %v2508
        %v2678 = vpack.c.bf16 %v2510, %v2510
        %v2679 = vpack.c.bf16 %v2549, %v2549
        %v2680 = vpack.c.bf16 %v2551, %v2551
        %v2681 = vpack.c.bf16 %v2590, %v2590
        %v2682 = vpack.c.bf16 %v2592, %v2592
        %v2683 = vpack.c.bf16 %v2631, %v2631
        %v2684 = vpack.c.bf16 %v2633, %v2633
        %v2685 = vpack.c.bf16 %v2672, %v2672
        %s2686 = scalar_lea.vmem [#allocation7], 8
        %v2687 = vld [vmem:[%s2686] sm:$0xf]
        %v2689 = vsel %vm2223, %v2687, 0
        %2691 = vmatprep.subr.bf16.mxu0 0
        %2692 = vmatpush1.bf16.msra.mxu0 0
        %2693 = vmatprep.subr.bf16.mxu0 0
        %2694 = vmatpush1.bf16.msra.mxu0 0
        %2695 = vmatprep.subr.bf16.mxu0 0
        %2696 = vmatpush1.bf16.msra.mxu0 0
        %2697 = vmatprep.subr.bf16.mxu0 0
        %2698 = vmatpush1.bf16.msra.mxu0 0
        %2699 = vmatprep.subr.bf16.mxu0 0
        %2700 = vmatpush1.bf16.msra.mxu0 0
        %2701 = vmatprep.subr.bf16.mxu0 0
        %2702 = vmatpush1.bf16.msra.mxu0 0
        %2703 = vmatprep.subr.bf16.mxu0 0
        %2704 = vmatpush1.bf16.msra.mxu0 0
        %2705 = vmatprep.subr.bf16.mxu0 %v2232
        %2706 = vmatpush1.bf16.msra.mxu0 %v2229
        %2707 = vmatprep.subr.bf16.mxu0 0
        %2708 = vmatpush2.bf16.msra.mxu0 0
        %2709 = vmatprep.subr.bf16.mxu0 0
        %2710 = vmatpush2.bf16.msra.mxu0 0
        %2711 = vmatprep.subr.bf16.mxu0 0
        %2712 = vmatpush2.bf16.msra.mxu0 0
        %2713 = vmatprep.subr.bf16.mxu0 0
        %2714 = vmatpush2.bf16.msra.mxu0 0
        %2715 = vmatprep.subr.bf16.mxu0 0
        %2716 = vmatpush2.bf16.msra.mxu0 0
        %2717 = vmatprep.subr.bf16.mxu0 0
        %2718 = vmatpush2.bf16.msra.mxu0 0
        %2719 = vmatprep.subr.bf16.mxu0 0
        %2720 = vmatpush2.bf16.msra.mxu0 0
        %2721 = vmatprep.subr.bf16.mxu0 0
        %2722 = vmatpush2.bf16.msra.mxu0 0
        %2723 = vmatprep.mubr.bf16.mxu0 0
        %2724 = vmatmul.mubr.bf16.gmra.mxu0 %v2689
        %v2725 = vpop.f32.mrf.mxu0
        %v2726 = vadd.f32 0.0, %v2725
        %v2727 = vpop.f32.mrf.mxu0
        %v2728 = vadd.f32 0.0, %v2727
        %v2729 = vpop.f32.mrf.mxu0
        %v2730 = vpop.f32.mrf.mxu0
        %2731 = vdwg.mxu0
        %2732 = vmatprep.subr.bf16.mxu0 0
        %2733 = vmatpush1.bf16.msra.mxu0 0
        %2734 = vmatprep.subr.bf16.mxu0 0
        %2735 = vmatpush1.bf16.msra.mxu0 0
        %2736 = vmatprep.subr.bf16.mxu0 0
        %2737 = vmatpush1.bf16.msra.mxu0 0
        %2738 = vmatprep.subr.bf16.mxu0 0
        %2739 = vmatpush1.bf16.msra.mxu0 0
        %2740 = vmatprep.subr.bf16.mxu0 0
        %2741 = vmatpush1.bf16.msra.mxu0 0
        %2742 = vmatprep.subr.bf16.mxu0 0
        %2743 = vmatpush1.bf16.msra.mxu0 0
        %2744 = vmatprep.subr.bf16.mxu0 0
        %2745 = vmatpush1.bf16.msra.mxu0 0
        %2746 = vmatprep.subr.bf16.mxu0 %v2238
        %2747 = vmatpush1.bf16.msra.mxu0 %v2235
        %2748 = vmatprep.subr.bf16.mxu0 0
        %2749 = vmatpush2.bf16.msra.mxu0 0
        %2750 = vmatprep.subr.bf16.mxu0 0
        %2751 = vmatpush2.bf16.msra.mxu0 0
        %2752 = vmatprep.subr.bf16.mxu0 0
        %2753 = vmatpush2.bf16.msra.mxu0 0
        %2754 = vmatprep.subr.bf16.mxu0 0
        %2755 = vmatpush2.bf16.msra.mxu0 0
        %2756 = vmatprep.subr.bf16.mxu0 0
        %2757 = vmatpush2.bf16.msra.mxu0 0
        %2758 = vmatprep.subr.bf16.mxu0 0
        %2759 = vmatpush2.bf16.msra.mxu0 0
        %2760 = vmatprep.subr.bf16.mxu0 0
        %2761 = vmatpush2.bf16.msra.mxu0 0
        %2762 = vmatprep.subr.bf16.mxu0 0
        %2763 = vmatpush2.bf16.msra.mxu0 0
        %2764 = vmatprep.mubr.bf16.mxu0 0
        %2765 = vmatmul.mubr.bf16.gmra.mxu0 %v2689
        %v2766 = vpop.f32.mrf.mxu0
        %v2767 = vadd.f32 0.0, %v2766
        %v2768 = vpop.f32.mrf.mxu0
        %v2769 = vadd.f32 0.0, %v2768
        %v2770 = vpop.f32.mrf.mxu0
        %v2771 = vpop.f32.mrf.mxu0
        %2772 = vdwg.mxu0
        %2773 = vmatprep.subr.bf16.mxu0 0
        %2774 = vmatpush1.bf16.msra.mxu0 0
        %2775 = vmatprep.subr.bf16.mxu0 0
        %2776 = vmatpush1.bf16.msra.mxu0 0
        %2777 = vmatprep.subr.bf16.mxu0 0
        %2778 = vmatpush1.bf16.msra.mxu0 0
        %2779 = vmatprep.subr.bf16.mxu0 0
        %2780 = vmatpush1.bf16.msra.mxu0 0
        %2781 = vmatprep.subr.bf16.mxu0 0
        %2782 = vmatpush1.bf16.msra.mxu0 0
        %2783 = vmatprep.subr.bf16.mxu0 0
        %2784 = vmatpush1.bf16.msra.mxu0 0
        %2785 = vmatprep.subr.bf16.mxu0 0
        %2786 = vmatpush1.bf16.msra.mxu0 0
        %2787 = vmatprep.subr.bf16.mxu0 %v2244
        %2788 = vmatpush1.bf16.msra.mxu0 %v2241
        %2789 = vmatprep.subr.bf16.mxu0 0
        %2790 = vmatpush2.bf16.msra.mxu0 0
        %2791 = vmatprep.subr.bf16.mxu0 0
        %2792 = vmatpush2.bf16.msra.mxu0 0
        %2793 = vmatprep.subr.bf16.mxu0 0
        %2794 = vmatpush2.bf16.msra.mxu0 0
        %2795 = vmatprep.subr.bf16.mxu0 0
        %2796 = vmatpush2.bf16.msra.mxu0 0
        %2797 = vmatprep.subr.bf16.mxu0 0
        %2798 = vmatpush2.bf16.msra.mxu0 0
        %2799 = vmatprep.subr.bf16.mxu0 0
        %2800 = vmatpush2.bf16.msra.mxu0 0
        %2801 = vmatprep.subr.bf16.mxu0 0
        %2802 = vmatpush2.bf16.msra.mxu0 0
        %2803 = vmatprep.subr.bf16.mxu0 0
        %2804 = vmatpush2.bf16.msra.mxu0 0
        %2805 = vmatprep.mubr.bf16.mxu0 0
        %2806 = vmatmul.mubr.bf16.gmra.mxu0 %v2689
        %v2807 = vpop.f32.mrf.mxu0
        %v2808 = vadd.f32 0.0, %v2807
        %v2809 = vpop.f32.mrf.mxu0
        %v2810 = vadd.f32 0.0, %v2809
        %v2811 = vpop.f32.mrf.mxu0
        %v2812 = vpop.f32.mrf.mxu0
        %2813 = vdwg.mxu0
        %2814 = vmatprep.subr.bf16.mxu0 0
        %2815 = vmatpush1.bf16.msra.mxu0 0
        %2816 = vmatprep.subr.bf16.mxu0 0
        %2817 = vmatpush1.bf16.msra.mxu0 0
        %2818 = vmatprep.subr.bf16.mxu0 0
        %2819 = vmatpush1.bf16.msra.mxu0 0
        %2820 = vmatprep.subr.bf16.mxu0 0
        %2821 = vmatpush1.bf16.msra.mxu0 0
        %2822 = vmatprep.subr.bf16.mxu0 0
        %2823 = vmatpush1.bf16.msra.mxu0 0
        %2824 = vmatprep.subr.bf16.mxu0 0
        %2825 = vmatpush1.bf16.msra.mxu0 0
        %2826 = vmatprep.subr.bf16.mxu0 0
        %2827 = vmatpush1.bf16.msra.mxu0 0
        %2828 = vmatprep.subr.bf16.mxu0 %v2250
        %2829 = vmatpush1.bf16.msra.mxu0 %v2247
        %2830 = vmatprep.subr.bf16.mxu0 0
        %2831 = vmatpush2.bf16.msra.mxu0 0
        %2832 = vmatprep.subr.bf16.mxu0 0
        %2833 = vmatpush2.bf16.msra.mxu0 0
        %2834 = vmatprep.subr.bf16.mxu0 0
        %2835 = vmatpush2.bf16.msra.mxu0 0
        %2836 = vmatprep.subr.bf16.mxu0 0
        %2837 = vmatpush2.bf16.msra.mxu0 0
        %2838 = vmatprep.subr.bf16.mxu0 0
        %2839 = vmatpush2.bf16.msra.mxu0 0
        %2840 = vmatprep.subr.bf16.mxu0 0
        %2841 = vmatpush2.bf16.msra.mxu0 0
        %2842 = vmatprep.subr.bf16.mxu0 0
        %2843 = vmatpush2.bf16.msra.mxu0 0
        %2844 = vmatprep.subr.bf16.mxu0 0
        %2845 = vmatpush2.bf16.msra.mxu0 0
        %2846 = vmatprep.mubr.bf16.mxu0 0
        %2847 = vmatmul.mubr.bf16.gmra.mxu0 %v2689
        %v2848 = vpop.f32.mrf.mxu0
        %v2849 = vadd.f32 0.0, %v2848
        %v2850 = vpop.f32.mrf.mxu0
        %v2851 = vadd.f32 0.0, %v2850
        %v2852 = vpop.f32.mrf.mxu0
        %v2853 = vpop.f32.mrf.mxu0
        %2854 = vdwg.mxu0
        %2855 = vmatprep.subr.bf16.mxu0 0
        %2856 = vmatpush1.bf16.msra.mxu0 0
        %2857 = vmatprep.subr.bf16.mxu0 0
        %2858 = vmatpush1.bf16.msra.mxu0 0
        %2859 = vmatprep.subr.bf16.mxu0 0
        %2860 = vmatpush1.bf16.msra.mxu0 0
        %2861 = vmatprep.subr.bf16.mxu0 0
        %2862 = vmatpush1.bf16.msra.mxu0 0
        %2863 = vmatprep.subr.bf16.mxu0 0
        %2864 = vmatpush1.bf16.msra.mxu0 0
        %2865 = vmatprep.subr.bf16.mxu0 0
        %2866 = vmatpush1.bf16.msra.mxu0 0
        %2867 = vmatprep.subr.bf16.mxu0 0
        %2868 = vmatpush1.bf16.msra.mxu0 0
        %2869 = vmatprep.subr.bf16.mxu0 0
        %2870 = vmatpush1.bf16.msra.mxu0 %v2253
        %2871 = vmatprep.subr.bf16.mxu0 0
        %2872 = vmatpush2.bf16.msra.mxu0 0
        %2873 = vmatprep.subr.bf16.mxu0 0
        %2874 = vmatpush2.bf16.msra.mxu0 0
        %2875 = vmatprep.subr.bf16.mxu0 0
        %2876 = vmatpush2.bf16.msra.mxu0 0
        %2877 = vmatprep.subr.bf16.mxu0 0
        %2878 = vmatpush2.bf16.msra.mxu0 0
        %2879 = vmatprep.subr.bf16.mxu0 0
        %2880 = vmatpush2.bf16.msra.mxu0 0
        %2881 = vmatprep.subr.bf16.mxu0 0
        %2882 = vmatpush2.bf16.msra.mxu0 0
        %2883 = vmatprep.subr.bf16.mxu0 0
        %2884 = vmatpush2.bf16.msra.mxu0 0
        %2885 = vmatprep.subr.bf16.mxu0 0
        %2886 = vmatpush2.bf16.msra.mxu0 0
        %2887 = vmatprep.mubr.bf16.mxu0 0
        %2888 = vmatmul.mubr.bf16.gmra.mxu0 %v2689
        %v2889 = vpop.f32.mrf.mxu0
        %v2890 = vadd.f32 0.0, %v2889
        %v2891 = vpop.f32.mrf.mxu0
        %v2892 = vpop.f32.mrf.mxu0
        %v2893 = vpop.f32.mrf.mxu0
        %2894 = vdwg.mxu0
        %v2895 = vpack.c.bf16 %v2726, %v2726
        %v2896 = vpack.c.bf16 %v2728, %v2728
        %v2897 = vpack.c.bf16 %v2767, %v2767
        %v2898 = vpack.c.bf16 %v2769, %v2769
        %v2899 = vpack.c.bf16 %v2808, %v2808
        %v2900 = vpack.c.bf16 %v2810, %v2810
        %v2901 = vpack.c.bf16 %v2849, %v2849
        %v2902 = vpack.c.bf16 %v2851, %v2851
        %v2903 = vpack.c.bf16 %v2890, %v2890
        %v2904 = vld [vmem:[%s5] sm:$0xf]
        %v2905 = vld [vmem:[%s5 + $0x4] sm:$0xf]
        %v2906 = vld [vmem:[%s5 + $0x8] sm:$0xf]
        %v2907 = vld [vmem:[%s5 + $0xc] sm:$0xf]
        %v2908 = vld [vmem:[%s5 + $0x10] sm:$0xf]
        %v2909 = vld [vmem:[%s5 + $0x14] sm:$0xf]
        %v2910 = vld [vmem:[%s5 + $0x18] sm:$0xf]
        %v2911 = vld [vmem:[%s5 + $0x1c] sm:$0xf]
        %v2912 = vld [vmem:[%s5 + $0x20] sm:$0xf]
        %v2913 = vld [vmem:[%s5 + $0x24] sm:$0xf]
        %v2914 = vld [vmem:[%s5 + $0x28] sm:$0xf]
        %v2915 = vld [vmem:[%s5 + $0x2c] sm:$0xf]
        %v2916 = vld [vmem:[%s5 + $0x30] sm:$0xf]
        %v2917 = vld [vmem:[%s5 + $0x34] sm:$0xf]
        %v2918 = vld [vmem:[%s5 + $0x38] sm:$0xf]
        %v2919 = vld [vmem:[%s5 + $0x3c] sm:$0xf]
        %v2920 = vld [vmem:[%s5 + $0x40] sm:$0xf]
        %v2921 = vld [vmem:[%s5 + $0x44] sm:$0xf]
        %v2922 = vld [vmem:[%s5 + $0x48] sm:$0xf]
        %v2923 = vld [vmem:[%s5 + $0x4c] sm:$0xf]
        %v2924 = vld [vmem:[%s5 + $0x50] sm:$0xf]
        %v2925 = vld [vmem:[%s5 + $0x54] sm:$0xf]
        %v2926 = vld [vmem:[%s5 + $0x58] sm:$0xf]
        %v2927 = vld [vmem:[%s5 + $0x5c] sm:$0xf]
        %v2928 = vld [vmem:[%s5 + $0x60] sm:$0xf]
        %v2929 = vld [vmem:[%s5 + $0x64] sm:$0xf]
        %v2930 = vld [vmem:[%s5 + $0x68] sm:$0xf]
        %v2931 = vld [vmem:[%s5 + $0x6c] sm:$0xf]
        %v2932 = vld [vmem:[%s5 + $0x70] sm:$0xf]
        %v2933 = vld [vmem:[%s5 + $0x74] sm:$0xf]
        %v2934 = vld [vmem:[%s5 + $0x78] sm:$0xf]
        %v2935 = vld [vmem:[%s5 + $0x7c] sm:$0xf]
        %v2936 = vld [vmem:[%s5 + $0x80] sm:$0xf]
        %v2937 = vld [vmem:[%s5 + $0x84] sm:$0xf]
        %v2938 = vld [vmem:[%s5 + $0x88] sm:$0xf]
        %v2939 = vld [vmem:[%s5 + $0x8c] sm:$0xf]
        %v2940 = vld [vmem:[%s5 + $0x90] sm:$0xf]
        %v2941 = vld [vmem:[%s5 + $0x94] sm:$0xf]
        %v2942 = vld [vmem:[%s5 + $0x98] sm:$0xf]
        %v2943 = vld [vmem:[%s5 + $0x9c] sm:$0xf]
        %v2944 = vld [vmem:[%s5 + $0xa0] sm:$0xf]
        %v2945 = vld [vmem:[%s5 + $0xa4] sm:$0xf]
        %v2946 = vld [vmem:[%s5 + $0xa8] sm:$0xf]
        %v2947 = vld [vmem:[%s5 + $0xac] sm:$0xf]
        %v2948 = vld [vmem:[%s5 + $0xb0] sm:$0xf]
        %v2949 = vld [vmem:[%s5 + $0xb4] sm:$0xf]
        %v2950 = vld [vmem:[%s5 + $0xb8] sm:$0xf]
        %v2951 = vld [vmem:[%s5 + $0xbc] sm:$0xf]
        %v2952 = vld [vmem:[#allocation8] sm:$0x1]
        %v2954 = vlaneseq
        %v2955 = vshrl.u32 %v2954, 7
        %v2956 = vsub.s32 0, %v2955
        %v2957 = vrot.slane %v2952, %v2956
        %v3007 = vunpack.c.l.b16 %v2904
        %v3008 = vunpack.c.l.b16 %v2905
        %v3009 = vunpack.c.l.b16 %v2906
        %v3010 = vunpack.c.l.b16 %v2907
        %v3011 = vunpack.c.l.b16 %v2908
        %v3012 = vunpack.c.l.b16 %v2909
        %v3013 = vunpack.c.l.b16 %v2910
        %v3014 = vunpack.c.l.b16 %v2911
        %v3015 = vunpack.c.l.b16 %v2912
        %v3016 = vunpack.c.l.b16 %v2913
        %v3017 = vunpack.c.l.b16 %v2914
        %v3018 = vunpack.c.l.b16 %v2915
        %v3019 = vunpack.c.l.b16 %v2916
        %v3020 = vunpack.c.l.b16 %v2917
        %v3021 = vunpack.c.l.b16 %v2918
        %v3022 = vunpack.c.l.b16 %v2919
        %v3023 = vunpack.c.l.b16 %v2920
        %v3024 = vunpack.c.l.b16 %v2921
        %v3025 = vunpack.c.l.b16 %v2922
        %v3026 = vunpack.c.l.b16 %v2923
        %v3027 = vunpack.c.l.b16 %v2924
        %v3028 = vunpack.c.l.b16 %v2925
        %v3029 = vunpack.c.l.b16 %v2926
        %v3030 = vunpack.c.l.b16 %v2927
        %v3031 = vunpack.c.l.b16 %v2928
        %v3032 = vunpack.c.l.b16 %v2929
        %v3033 = vunpack.c.l.b16 %v2930
        %v3034 = vunpack.c.l.b16 %v2931
        %v3035 = vunpack.c.l.b16 %v2932
        %v3036 = vunpack.c.l.b16 %v2933
        %v3037 = vunpack.c.l.b16 %v2934
        %v3038 = vunpack.c.l.b16 %v2935
        %v3039 = vunpack.c.l.b16 %v2936
        %v3040 = vunpack.c.l.b16 %v2937
        %v3041 = vunpack.c.l.b16 %v2938
        %v3042 = vunpack.c.l.b16 %v2939
        %v3043 = vunpack.c.l.b16 %v2940
        %v3044 = vunpack.c.l.b16 %v2941
        %v3045 = vunpack.c.l.b16 %v2942
        %v3046 = vunpack.c.l.b16 %v2943
        %v3047 = vunpack.c.l.b16 %v2944
        %v3048 = vunpack.c.l.b16 %v2945
        %v3049 = vunpack.c.l.b16 %v2946
        %v3050 = vunpack.c.l.b16 %v2947
        %v3051 = vunpack.c.l.b16 %v2948
        %v3052 = vunpack.c.l.b16 %v2949
        %v3053 = vunpack.c.l.b16 %v2950
        %v3054 = vunpack.c.l.b16 %v2951
        %v3055 = vpack.c.b16 %v3008, %v3007
        %v3056 = vpack.c.b16 %v3010, %v3009
        %v3057 = vpack.c.b16 %v3012, %v3011
        %v3058 = vpack.c.b16 %v3014, %v3013
        %v3059 = vpack.c.b16 %v3016, %v3015
        %v3060 = vpack.c.b16 %v3018, %v3017
        %v3061 = vpack.c.b16 %v3020, %v3019
        %v3062 = vpack.c.b16 %v3022, %v3021
        %v3063 = vpack.c.b16 %v3024, %v3023
        %v3064 = vpack.c.b16 %v3026, %v3025
        %v3065 = vpack.c.b16 %v3028, %v3027
        %v3066 = vpack.c.b16 %v3030, %v3029
        %v3067 = vpack.c.b16 %v3032, %v3031
        %v3068 = vpack.c.b16 %v3034, %v3033
        %v3069 = vpack.c.b16 %v3036, %v3035
        %v3070 = vpack.c.b16 %v3038, %v3037
        %v3071 = vpack.c.b16 %v3040, %v3039
        %v3072 = vpack.c.b16 %v3042, %v3041
        %v3073 = vpack.c.b16 %v3044, %v3043
        %v3074 = vpack.c.b16 %v3046, %v3045
        %v3075 = vpack.c.b16 %v3048, %v3047
        %v3076 = vpack.c.b16 %v3050, %v3049
        %v3077 = vpack.c.b16 %v3052, %v3051
        %v3078 = vpack.c.b16 %v3054, %v3053
        %3103 = vmatprep.subr.bf16.mxu0 0
        %3104 = vmatpush1.bf16.msra.mxu0 %v3062
        %3105 = vmatprep.subr.bf16.mxu0 0
        %3106 = vmatpush1.bf16.msra.mxu0 %v3061
        %3107 = vmatprep.subr.bf16.mxu0 0
        %3108 = vmatpush1.bf16.msra.mxu0 %v3060
        %3109 = vmatprep.subr.bf16.mxu0 0
        %3110 = vmatpush1.bf16.msra.mxu0 %v3059
        %3111 = vmatprep.subr.bf16.mxu0 0
        %3112 = vmatpush1.bf16.msra.mxu0 %v3058
        %3113 = vmatprep.subr.bf16.mxu0 0
        %3114 = vmatpush1.bf16.msra.mxu0 %v3057
        %3115 = vmatprep.subr.bf16.mxu0 0
        %3116 = vmatpush1.bf16.msra.mxu0 %v3056
        %3117 = vmatprep.subr.bf16.mxu0 0
        %3118 = vmatpush1.bf16.msra.mxu0 %v3055
        %3119 = vmatprep.subr.bf16.mxu0 0
        %3120 = vmatpush2.bf16.msra.mxu0 %v3070
        %3121 = vmatprep.subr.bf16.mxu0 0
        %3122 = vmatpush2.bf16.msra.mxu0 %v3069
        %3123 = vmatprep.subr.bf16.mxu0 0
        %3124 = vmatpush2.bf16.msra.mxu0 %v3068
        %3125 = vmatprep.subr.bf16.mxu0 0
        %3126 = vmatpush2.bf16.msra.mxu0 %v3067
        %3127 = vmatprep.subr.bf16.mxu0 0
        %3128 = vmatpush2.bf16.msra.mxu0 %v3066
        %3129 = vmatprep.subr.bf16.mxu0 0
        %3130 = vmatpush2.bf16.msra.mxu0 %v3065
        %3131 = vmatprep.subr.bf16.mxu0 0
        %3132 = vmatpush2.bf16.msra.mxu0 %v3064
        %3133 = vmatprep.subr.bf16.mxu0 0
        %3134 = vmatpush2.bf16.msra.mxu0 %v3063
        %3135 = vmatprep.mubr.bf16.mxu0 %v2677
        %3136 = vmatmul.mubr.bf16.gmra.mxu0 %v2459
        %v3137 = vpop.f32.mrf.mxu0
        %v3138 = vadd.f32 %v2957, %v3137
        %v3139 = vpop.f32.mrf.mxu0
        %v3140 = vpop.f32.mrf.mxu0
        %v3141 = vpop.f32.mrf.mxu0
        %3142 = vdwg.mxu0
        %3143 = vmatprep.subr.bf16.mxu0 0
        %3144 = vmatpush1.bf16.msra.mxu0 %v3078
        %3145 = vmatprep.subr.bf16.mxu0 0
        %3146 = vmatpush1.bf16.msra.mxu0 %v3077
        %3147 = vmatprep.subr.bf16.mxu0 0
        %3148 = vmatpush1.bf16.msra.mxu0 %v3076
        %3149 = vmatprep.subr.bf16.mxu0 0
        %3150 = vmatpush1.bf16.msra.mxu0 %v3075
        %3151 = vmatprep.subr.bf16.mxu0 0
        %3152 = vmatpush1.bf16.msra.mxu0 %v3074
        %3153 = vmatprep.subr.bf16.mxu0 0
        %3154 = vmatpush1.bf16.msra.mxu0 %v3073
        %3155 = vmatprep.subr.bf16.mxu0 0
        %3156 = vmatpush1.bf16.msra.mxu0 %v3072
        %3157 = vmatprep.subr.bf16.mxu0 0
        %3158 = vmatpush1.bf16.msra.mxu0 %v3071
        %3159 = vmatprep.subr.bf16.mxu0 0
        %3160 = vmatpush2.bf16.msra.mxu0 0
        %3161 = vmatprep.subr.bf16.mxu0 0
        %3162 = vmatpush2.bf16.msra.mxu0 0
        %3163 = vmatprep.subr.bf16.mxu0 0
        %3164 = vmatpush2.bf16.msra.mxu0 0
        %3165 = vmatprep.subr.bf16.mxu0 0
        %3166 = vmatpush2.bf16.msra.mxu0 0
        %3167 = vmatprep.subr.bf16.mxu0 0
        %3168 = vmatpush2.bf16.msra.mxu0 0
        %3169 = vmatprep.subr.bf16.mxu0 0
        %3170 = vmatpush2.bf16.msra.mxu0 0
        %3171 = vmatprep.subr.bf16.mxu0 0
        %3172 = vmatpush2.bf16.msra.mxu0 0
        %3173 = vmatprep.subr.bf16.mxu0 0
        %3174 = vmatpush2.bf16.msra.mxu0 0
        %3175 = vmatprep.mubr.bf16.mxu0 0
        %3176 = vmatmul.mubr.bf16.gmra.mxu0 %v2895
        %v3177 = vpop.f32.mrf.mxu0
        %v3178 = vadd.f32 %v3138, %v3177
        %v3179 = vpop.f32.mrf.mxu0
        %v3180 = vpop.f32.mrf.mxu0
        %v3181 = vpop.f32.mrf.mxu0
        %3182 = vdwg.mxu0
        %3183 = vmatprep.subr.bf16.mxu0 0
        %3184 = vmatpush1.bf16.msra.mxu0 %v3062
        %3185 = vmatprep.subr.bf16.mxu0 0
        %3186 = vmatpush1.bf16.msra.mxu0 %v3061
        %3187 = vmatprep.subr.bf16.mxu0 0
        %3188 = vmatpush1.bf16.msra.mxu0 %v3060
        %3189 = vmatprep.subr.bf16.mxu0 0
        %3190 = vmatpush1.bf16.msra.mxu0 %v3059
        %3191 = vmatprep.subr.bf16.mxu0 0
        %3192 = vmatpush1.bf16.msra.mxu0 %v3058
        %3193 = vmatprep.subr.bf16.mxu0 0
        %3194 = vmatpush1.bf16.msra.mxu0 %v3057
        %3195 = vmatprep.subr.bf16.mxu0 0
        %3196 = vmatpush1.bf16.msra.mxu0 %v3056
        %3197 = vmatprep.subr.bf16.mxu0 0
        %3198 = vmatpush1.bf16.msra.mxu0 %v3055
        %3199 = vmatprep.subr.bf16.mxu0 0
        %3200 = vmatpush2.bf16.msra.mxu0 %v3070
        %3201 = vmatprep.subr.bf16.mxu0 0
        %3202 = vmatpush2.bf16.msra.mxu0 %v3069
        %3203 = vmatprep.subr.bf16.mxu0 0
        %3204 = vmatpush2.bf16.msra.mxu0 %v3068
        %3205 = vmatprep.subr.bf16.mxu0 0
        %3206 = vmatpush2.bf16.msra.mxu0 %v3067
        %3207 = vmatprep.subr.bf16.mxu0 0
        %3208 = vmatpush2.bf16.msra.mxu0 %v3066
        %3209 = vmatprep.subr.bf16.mxu0 0
        %3210 = vmatpush2.bf16.msra.mxu0 %v3065
        %3211 = vmatprep.subr.bf16.mxu0 0
        %3212 = vmatpush2.bf16.msra.mxu0 %v3064
        %3213 = vmatprep.subr.bf16.mxu0 0
        %3214 = vmatpush2.bf16.msra.mxu0 %v3063
        %3215 = vmatprep.mubr.bf16.mxu0 %v2678
        %3216 = vmatmul.mubr.bf16.gmra.mxu0 %v2460
        %v3217 = vpop.f32.mrf.mxu0
        %v3218 = vadd.f32 %v2957, %v3217
        %v3219 = vpop.f32.mrf.mxu0
        %v3220 = vpop.f32.mrf.mxu0
        %v3221 = vpop.f32.mrf.mxu0
        %3222 = vdwg.mxu0
        %3223 = vmatprep.subr.bf16.mxu0 0
        %3224 = vmatpush1.bf16.msra.mxu0 %v3078
        %3225 = vmatprep.subr.bf16.mxu0 0
        %3226 = vmatpush1.bf16.msra.mxu0 %v3077
        %3227 = vmatprep.subr.bf16.mxu0 0
        %3228 = vmatpush1.bf16.msra.mxu0 %v3076
        %3229 = vmatprep.subr.bf16.mxu0 0
        %3230 = vmatpush1.bf16.msra.mxu0 %v3075
        %3231 = vmatprep.subr.bf16.mxu0 0
        %3232 = vmatpush1.bf16.msra.mxu0 %v3074
        %3233 = vmatprep.subr.bf16.mxu0 0
        %3234 = vmatpush1.bf16.msra.mxu0 %v3073
        %3235 = vmatprep.subr.bf16.mxu0 0
        %3236 = vmatpush1.bf16.msra.mxu0 %v3072
        %3237 = vmatprep.subr.bf16.mxu0 0
        %3238 = vmatpush1.bf16.msra.mxu0 %v3071
        %3239 = vmatprep.subr.bf16.mxu0 0
        %3240 = vmatpush2.bf16.msra.mxu0 0
        %3241 = vmatprep.subr.bf16.mxu0 0
        %3242 = vmatpush2.bf16.msra.mxu0 0
        %3243 = vmatprep.subr.bf16.mxu0 0
        %3244 = vmatpush2.bf16.msra.mxu0 0
        %3245 = vmatprep.subr.bf16.mxu0 0
        %3246 = vmatpush2.bf16.msra.mxu0 0
        %3247 = vmatprep.subr.bf16.mxu0 0
        %3248 = vmatpush2.bf16.msra.mxu0 0
        %3249 = vmatprep.subr.bf16.mxu0 0
        %3250 = vmatpush2.bf16.msra.mxu0 0
        %3251 = vmatprep.subr.bf16.mxu0 0
        %3252 = vmatpush2.bf16.msra.mxu0 0
        %3253 = vmatprep.subr.bf16.mxu0 0
        %3254 = vmatpush2.bf16.msra.mxu0 0
        %3255 = vmatprep.mubr.bf16.mxu0 0
        %3256 = vmatmul.mubr.bf16.gmra.mxu0 %v2896
        %v3257 = vpop.f32.mrf.mxu0
        %v3258 = vadd.f32 %v3218, %v3257
        %v3259 = vpop.f32.mrf.mxu0
        %v3260 = vpop.f32.mrf.mxu0
        %v3261 = vpop.f32.mrf.mxu0
        %3262 = vdwg.mxu0
        %3263 = vmatprep.subr.bf16.mxu0 0
        %3264 = vmatpush1.bf16.msra.mxu0 %v3062
        %3265 = vmatprep.subr.bf16.mxu0 0
        %3266 = vmatpush1.bf16.msra.mxu0 %v3061
        %3267 = vmatprep.subr.bf16.mxu0 0
        %3268 = vmatpush1.bf16.msra.mxu0 %v3060
        %3269 = vmatprep.subr.bf16.mxu0 0
        %3270 = vmatpush1.bf16.msra.mxu0 %v3059
        %3271 = vmatprep.subr.bf16.mxu0 0
        %3272 = vmatpush1.bf16.msra.mxu0 %v3058
        %3273 = vmatprep.subr.bf16.mxu0 0
        %3274 = vmatpush1.bf16.msra.mxu0 %v3057
        %3275 = vmatprep.subr.bf16.mxu0 0
        %3276 = vmatpush1.bf16.msra.mxu0 %v3056
        %3277 = vmatprep.subr.bf16.mxu0 0
        %3278 = vmatpush1.bf16.msra.mxu0 %v3055
        %3279 = vmatprep.subr.bf16.mxu0 0
        %3280 = vmatpush2.bf16.msra.mxu0 %v3070
        %3281 = vmatprep.subr.bf16.mxu0 0
        %3282 = vmatpush2.bf16.msra.mxu0 %v3069
        %3283 = vmatprep.subr.bf16.mxu0 0
        %3284 = vmatpush2.bf16.msra.mxu0 %v3068
        %3285 = vmatprep.subr.bf16.mxu0 0
        %3286 = vmatpush2.bf16.msra.mxu0 %v3067
        %3287 = vmatprep.subr.bf16.mxu0 0
        %3288 = vmatpush2.bf16.msra.mxu0 %v3066
        %3289 = vmatprep.subr.bf16.mxu0 0
        %3290 = vmatpush2.bf16.msra.mxu0 %v3065
        %3291 = vmatprep.subr.bf16.mxu0 0
        %3292 = vmatpush2.bf16.msra.mxu0 %v3064
        %3293 = vmatprep.subr.bf16.mxu0 0
        %3294 = vmatpush2.bf16.msra.mxu0 %v3063
        %3295 = vmatprep.mubr.bf16.mxu0 %v2679
        %3296 = vmatmul.mubr.bf16.gmra.mxu0 %v2461
        %v3297 = vpop.f32.mrf.mxu0
        %v3298 = vadd.f32 %v2957, %v3297
        %v3299 = vpop.f32.mrf.mxu0
        %v3300 = vpop.f32.mrf.mxu0
        %v3301 = vpop.f32.mrf.mxu0
        %3302 = vdwg.mxu0
        %3303 = vmatprep.subr.bf16.mxu0 0
        %3304 = vmatpush1.bf16.msra.mxu0 %v3078
        %3305 = vmatprep.subr.bf16.mxu0 0
        %3306 = vmatpush1.bf16.msra.mxu0 %v3077
        %3307 = vmatprep.subr.bf16.mxu0 0
        %3308 = vmatpush1.bf16.msra.mxu0 %v3076
        %3309 = vmatprep.subr.bf16.mxu0 0
        %3310 = vmatpush1.bf16.msra.mxu0 %v3075
        %3311 = vmatprep.subr.bf16.mxu0 0
        %3312 = vmatpush1.bf16.msra.mxu0 %v3074
        %3313 = vmatprep.subr.bf16.mxu0 0
        %3314 = vmatpush1.bf16.msra.mxu0 %v3073
        %3315 = vmatprep.subr.bf16.mxu0 0
        %3316 = vmatpush1.bf16.msra.mxu0 %v3072
        %3317 = vmatprep.subr.bf16.mxu0 0
        %3318 = vmatpush1.bf16.msra.mxu0 %v3071
        %3319 = vmatprep.subr.bf16.mxu0 0
        %3320 = vmatpush2.bf16.msra.mxu0 0
        %3321 = vmatprep.subr.bf16.mxu0 0
        %3322 = vmatpush2.bf16.msra.mxu0 0
        %3323 = vmatprep.subr.bf16.mxu0 0
        %3324 = vmatpush2.bf16.msra.mxu0 0
        %3325 = vmatprep.subr.bf16.mxu0 0
        %3326 = vmatpush2.bf16.msra.mxu0 0
        %3327 = vmatprep.subr.bf16.mxu0 0
        %3328 = vmatpush2.bf16.msra.mxu0 0
        %3329 = vmatprep.subr.bf16.mxu0 0
        %3330 = vmatpush2.bf16.msra.mxu0 0
        %3331 = vmatprep.subr.bf16.mxu0 0
        %3332 = vmatpush2.bf16.msra.mxu0 0
        %3333 = vmatprep.subr.bf16.mxu0 0
        %3334 = vmatpush2.bf16.msra.mxu0 0
        %3335 = vmatprep.mubr.bf16.mxu0 0
        %3336 = vmatmul.mubr.bf16.gmra.mxu0 %v2897
        %v3337 = vpop.f32.mrf.mxu0
        %v3338 = vadd.f32 %v3298, %v3337
        %v3339 = vpop.f32.mrf.mxu0
        %v3340 = vpop.f32.mrf.mxu0
        %v3341 = vpop.f32.mrf.mxu0
        %3342 = vdwg.mxu0
        %3343 = vmatprep.subr.bf16.mxu0 0
        %3344 = vmatpush1.bf16.msra.mxu0 %v3062
        %3345 = vmatprep.subr.bf16.mxu0 0
        %3346 = vmatpush1.bf16.msra.mxu0 %v3061
        %3347 = vmatprep.subr.bf16.mxu0 0
        %3348 = vmatpush1.bf16.msra.mxu0 %v3060
        %3349 = vmatprep.subr.bf16.mxu0 0
        %3350 = vmatpush1.bf16.msra.mxu0 %v3059
        %3351 = vmatprep.subr.bf16.mxu0 0
        %3352 = vmatpush1.bf16.msra.mxu0 %v3058
        %3353 = vmatprep.subr.bf16.mxu0 0
        %3354 = vmatpush1.bf16.msra.mxu0 %v3057
        %3355 = vmatprep.subr.bf16.mxu0 0
        %3356 = vmatpush1.bf16.msra.mxu0 %v3056
        %3357 = vmatprep.subr.bf16.mxu0 0
        %3358 = vmatpush1.bf16.msra.mxu0 %v3055
        %3359 = vmatprep.subr.bf16.mxu0 0
        %3360 = vmatpush2.bf16.msra.mxu0 %v3070
        %3361 = vmatprep.subr.bf16.mxu0 0
        %3362 = vmatpush2.bf16.msra.mxu0 %v3069
        %3363 = vmatprep.subr.bf16.mxu0 0
        %3364 = vmatpush2.bf16.msra.mxu0 %v3068
        %3365 = vmatprep.subr.bf16.mxu0 0
        %3366 = vmatpush2.bf16.msra.mxu0 %v3067
        %3367 = vmatprep.subr.bf16.mxu0 0
        %3368 = vmatpush2.bf16.msra.mxu0 %v3066
        %3369 = vmatprep.subr.bf16.mxu0 0
        %3370 = vmatpush2.bf16.msra.mxu0 %v3065
        %3371 = vmatprep.subr.bf16.mxu0 0
        %3372 = vmatpush2.bf16.msra.mxu0 %v3064
        %3373 = vmatprep.subr.bf16.mxu0 0
        %3374 = vmatpush2.bf16.msra.mxu0 %v3063
        %3375 = vmatprep.mubr.bf16.mxu0 %v2680
        %3376 = vmatmul.mubr.bf16.gmra.mxu0 %v2462
        %v3377 = vpop.f32.mrf.mxu0
        %v3378 = vadd.f32 %v2957, %v3377
        %v3379 = vpop.f32.mrf.mxu0
        %v3380 = vpop.f32.mrf.mxu0
        %v3381 = vpop.f32.mrf.mxu0
        %3382 = vdwg.mxu0
        %3383 = vmatprep.subr.bf16.mxu0 0
        %3384 = vmatpush1.bf16.msra.mxu0 %v3078
        %3385 = vmatprep.subr.bf16.mxu0 0
        %3386 = vmatpush1.bf16.msra.mxu0 %v3077
        %3387 = vmatprep.subr.bf16.mxu0 0
        %3388 = vmatpush1.bf16.msra.mxu0 %v3076
        %3389 = vmatprep.subr.bf16.mxu0 0
        %3390 = vmatpush1.bf16.msra.mxu0 %v3075
        %3391 = vmatprep.subr.bf16.mxu0 0
        %3392 = vmatpush1.bf16.msra.mxu0 %v3074
        %3393 = vmatprep.subr.bf16.mxu0 0
        %3394 = vmatpush1.bf16.msra.mxu0 %v3073
        %3395 = vmatprep.subr.bf16.mxu0 0
        %3396 = vmatpush1.bf16.msra.mxu0 %v3072
        %3397 = vmatprep.subr.bf16.mxu0 0
        %3398 = vmatpush1.bf16.msra.mxu0 %v3071
        %3399 = vmatprep.subr.bf16.mxu0 0
        %3400 = vmatpush2.bf16.msra.mxu0 0
        %3401 = vmatprep.subr.bf16.mxu0 0
        %3402 = vmatpush2.bf16.msra.mxu0 0
        %3403 = vmatprep.subr.bf16.mxu0 0
        %3404 = vmatpush2.bf16.msra.mxu0 0
        %3405 = vmatprep.subr.bf16.mxu0 0
        %3406 = vmatpush2.bf16.msra.mxu0 0
        %3407 = vmatprep.subr.bf16.mxu0 0
        %3408 = vmatpush2.bf16.msra.mxu0 0
        %3409 = vmatprep.subr.bf16.mxu0 0
        %3410 = vmatpush2.bf16.msra.mxu0 0
        %3411 = vmatprep.subr.bf16.mxu0 0
        %3412 = vmatpush2.bf16.msra.mxu0 0
        %3413 = vmatprep.subr.bf16.mxu0 0
        %3414 = vmatpush2.bf16.msra.mxu0 0
        %3415 = vmatprep.mubr.bf16.mxu0 0
        %3416 = vmatmul.mubr.bf16.gmra.mxu0 %v2898
        %v3417 = vpop.f32.mrf.mxu0
        %v3418 = vadd.f32 %v3378, %v3417
        %v3419 = vpop.f32.mrf.mxu0
        %v3420 = vpop.f32.mrf.mxu0
        %v3421 = vpop.f32.mrf.mxu0
        %3422 = vdwg.mxu0
        %3423 = vmatprep.subr.bf16.mxu0 0
        %3424 = vmatpush1.bf16.msra.mxu0 %v3062
        %3425 = vmatprep.subr.bf16.mxu0 0
        %3426 = vmatpush1.bf16.msra.mxu0 %v3061
        %3427 = vmatprep.subr.bf16.mxu0 0
        %3428 = vmatpush1.bf16.msra.mxu0 %v3060
        %3429 = vmatprep.subr.bf16.mxu0 0
        %3430 = vmatpush1.bf16.msra.mxu0 %v3059
        %3431 = vmatprep.subr.bf16.mxu0 0
        %3432 = vmatpush1.bf16.msra.mxu0 %v3058
        %3433 = vmatprep.subr.bf16.mxu0 0
        %3434 = vmatpush1.bf16.msra.mxu0 %v3057
        %3435 = vmatprep.subr.bf16.mxu0 0
        %3436 = vmatpush1.bf16.msra.mxu0 %v3056
        %3437 = vmatprep.subr.bf16.mxu0 0
        %3438 = vmatpush1.bf16.msra.mxu0 %v3055
        %3439 = vmatprep.subr.bf16.mxu0 0
        %3440 = vmatpush2.bf16.msra.mxu0 %v3070
        %3441 = vmatprep.subr.bf16.mxu0 0
        %3442 = vmatpush2.bf16.msra.mxu0 %v3069
        %3443 = vmatprep.subr.bf16.mxu0 0
        %3444 = vmatpush2.bf16.msra.mxu0 %v3068
        %3445 = vmatprep.subr.bf16.mxu0 0
        %3446 = vmatpush2.bf16.msra.mxu0 %v3067
        %3447 = vmatprep.subr.bf16.mxu0 0
        %3448 = vmatpush2.bf16.msra.mxu0 %v3066
        %3449 = vmatprep.subr.bf16.mxu0 0
        %3450 = vmatpush2.bf16.msra.mxu0 %v3065
        %3451 = vmatprep.subr.bf16.mxu0 0
        %3452 = vmatpush2.bf16.msra.mxu0 %v3064
        %3453 = vmatprep.subr.bf16.mxu0 0
        %3454 = vmatpush2.bf16.msra.mxu0 %v3063
        %3455 = vmatprep.mubr.bf16.mxu0 %v2681
        %3456 = vmatmul.mubr.bf16.gmra.mxu0 %v2463
        %v3457 = vpop.f32.mrf.mxu0
        %v3458 = vadd.f32 %v2957, %v3457
        %v3459 = vpop.f32.mrf.mxu0
        %v3460 = vpop.f32.mrf.mxu0
        %v3461 = vpop.f32.mrf.mxu0
        %3462 = vdwg.mxu0
        %3463 = vmatprep.subr.bf16.mxu0 0
        %3464 = vmatpush1.bf16.msra.mxu0 %v3078
        %3465 = vmatprep.subr.bf16.mxu0 0
        %3466 = vmatpush1.bf16.msra.mxu0 %v3077
        %3467 = vmatprep.subr.bf16.mxu0 0
        %3468 = vmatpush1.bf16.msra.mxu0 %v3076
        %3469 = vmatprep.subr.bf16.mxu0 0
        %3470 = vmatpush1.bf16.msra.mxu0 %v3075
        %3471 = vmatprep.subr.bf16.mxu0 0
        %3472 = vmatpush1.bf16.msra.mxu0 %v3074
        %3473 = vmatprep.subr.bf16.mxu0 0
        %3474 = vmatpush1.bf16.msra.mxu0 %v3073
        %3475 = vmatprep.subr.bf16.mxu0 0
        %3476 = vmatpush1.bf16.msra.mxu0 %v3072
        %3477 = vmatprep.subr.bf16.mxu0 0
        %3478 = vmatpush1.bf16.msra.mxu0 %v3071
        %3479 = vmatprep.subr.bf16.mxu0 0
        %3480 = vmatpush2.bf16.msra.mxu0 0
        %3481 = vmatprep.subr.bf16.mxu0 0
        %3482 = vmatpush2.bf16.msra.mxu0 0
        %3483 = vmatprep.subr.bf16.mxu0 0
        %3484 = vmatpush2.bf16.msra.mxu0 0
        %3485 = vmatprep.subr.bf16.mxu0 0
        %3486 = vmatpush2.bf16.msra.mxu0 0
        %3487 = vmatprep.subr.bf16.mxu0 0
        %3488 = vmatpush2.bf16.msra.mxu0 0
        %3489 = vmatprep.subr.bf16.mxu0 0
        %3490 = vmatpush2.bf16.msra.mxu0 0
        %3491 = vmatprep.subr.bf16.mxu0 0
        %3492 = vmatpush2.bf16.msra.mxu0 0
        %3493 = vmatprep.subr.bf16.mxu0 0
        %3494 = vmatpush2.bf16.msra.mxu0 0
        %3495 = vmatprep.mubr.bf16.mxu0 0
        %3496 = vmatmul.mubr.bf16.gmra.mxu0 %v2899
        %v3497 = vpop.f32.mrf.mxu0
        %v3498 = vadd.f32 %v3458, %v3497
        %v3499 = vpop.f32.mrf.mxu0
        %v3500 = vpop.f32.mrf.mxu0
        %v3501 = vpop.f32.mrf.mxu0
        %3502 = vdwg.mxu0
        %3503 = vmatprep.subr.bf16.mxu0 0
        %3504 = vmatpush1.bf16.msra.mxu0 %v3062
        %3505 = vmatprep.subr.bf16.mxu0 0
        %3506 = vmatpush1.bf16.msra.mxu0 %v3061
        %3507 = vmatprep.subr.bf16.mxu0 0
        %3508 = vmatpush1.bf16.msra.mxu0 %v3060
        %3509 = vmatprep.subr.bf16.mxu0 0
        %3510 = vmatpush1.bf16.msra.mxu0 %v3059
        %3511 = vmatprep.subr.bf16.mxu0 0
        %3512 = vmatpush1.bf16.msra.mxu0 %v3058
        %3513 = vmatprep.subr.bf16.mxu0 0
        %3514 = vmatpush1.bf16.msra.mxu0 %v3057
        %3515 = vmatprep.subr.bf16.mxu0 0
        %3516 = vmatpush1.bf16.msra.mxu0 %v3056
        %3517 = vmatprep.subr.bf16.mxu0 0
        %3518 = vmatpush1.bf16.msra.mxu0 %v3055
        %3519 = vmatprep.subr.bf16.mxu0 0
        %3520 = vmatpush2.bf16.msra.mxu0 %v3070
        %3521 = vmatprep.subr.bf16.mxu0 0
        %3522 = vmatpush2.bf16.msra.mxu0 %v3069
        %3523 = vmatprep.subr.bf16.mxu0 0
        %3524 = vmatpush2.bf16.msra.mxu0 %v3068
        %3525 = vmatprep.subr.bf16.mxu0 0
        %3526 = vmatpush2.bf16.msra.mxu0 %v3067
        %3527 = vmatprep.subr.bf16.mxu0 0
        %3528 = vmatpush2.bf16.msra.mxu0 %v3066
        %3529 = vmatprep.subr.bf16.mxu0 0
        %3530 = vmatpush2.bf16.msra.mxu0 %v3065
        %3531 = vmatprep.subr.bf16.mxu0 0
        %3532 = vmatpush2.bf16.msra.mxu0 %v3064
        %3533 = vmatprep.subr.bf16.mxu0 0
        %3534 = vmatpush2.bf16.msra.mxu0 %v3063
        %3535 = vmatprep.mubr.bf16.mxu0 %v2682
        %3536 = vmatmul.mubr.bf16.gmra.mxu0 %v2464
        %v3537 = vpop.f32.mrf.mxu0
        %v3538 = vadd.f32 %v2957, %v3537
        %v3539 = vpop.f32.mrf.mxu0
        %v3540 = vpop.f32.mrf.mxu0
        %v3541 = vpop.f32.mrf.mxu0
        %3542 = vdwg.mxu0
        %3543 = vmatprep.subr.bf16.mxu0 0
        %3544 = vmatpush1.bf16.msra.mxu0 %v3078
        %3545 = vmatprep.subr.bf16.mxu0 0
        %3546 = vmatpush1.bf16.msra.mxu0 %v3077
        %3547 = vmatprep.subr.bf16.mxu0 0
        %3548 = vmatpush1.bf16.msra.mxu0 %v3076
        %3549 = vmatprep.subr.bf16.mxu0 0
        %3550 = vmatpush1.bf16.msra.mxu0 %v3075
        %3551 = vmatprep.subr.bf16.mxu0 0
        %3552 = vmatpush1.bf16.msra.mxu0 %v3074
        %3553 = vmatprep.subr.bf16.mxu0 0
        %3554 = vmatpush1.bf16.msra.mxu0 %v3073
        %3555 = vmatprep.subr.bf16.mxu0 0
        %3556 = vmatpush1.bf16.msra.mxu0 %v3072
        %3557 = vmatprep.subr.bf16.mxu0 0
        %3558 = vmatpush1.bf16.msra.mxu0 %v3071
        %3559 = vmatprep.subr.bf16.mxu0 0
        %3560 = vmatpush2.bf16.msra.mxu0 0
        %3561 = vmatprep.subr.bf16.mxu0 0
        %3562 = vmatpush2.bf16.msra.mxu0 0
        %3563 = vmatprep.subr.bf16.mxu0 0
        %3564 = vmatpush2.bf16.msra.mxu0 0
        %3565 = vmatprep.subr.bf16.mxu0 0
        %3566 = vmatpush2.bf16.msra.mxu0 0
        %3567 = vmatprep.subr.bf16.mxu0 0
        %3568 = vmatpush2.bf16.msra.mxu0 0
        %3569 = vmatprep.subr.bf16.mxu0 0
        %3570 = vmatpush2.bf16.msra.mxu0 0
        %3571 = vmatprep.subr.bf16.mxu0 0
        %3572 = vmatpush2.bf16.msra.mxu0 0
        %3573 = vmatprep.subr.bf16.mxu0 0
        %3574 = vmatpush2.bf16.msra.mxu0 0
        %3575 = vmatprep.mubr.bf16.mxu0 0
        %3576 = vmatmul.mubr.bf16.gmra.mxu0 %v2900
        %v3577 = vpop.f32.mrf.mxu0
        %v3578 = vadd.f32 %v3538, %v3577
        %v3579 = vpop.f32.mrf.mxu0
        %v3580 = vpop.f32.mrf.mxu0
        %v3581 = vpop.f32.mrf.mxu0
        %3582 = vdwg.mxu0
        %3583 = vmatprep.subr.bf16.mxu0 0
        %3584 = vmatpush1.bf16.msra.mxu0 %v3062
        %3585 = vmatprep.subr.bf16.mxu0 0
        %3586 = vmatpush1.bf16.msra.mxu0 %v3061
        %3587 = vmatprep.subr.bf16.mxu0 0
        %3588 = vmatpush1.bf16.msra.mxu0 %v3060
        %3589 = vmatprep.subr.bf16.mxu0 0
        %3590 = vmatpush1.bf16.msra.mxu0 %v3059
        %3591 = vmatprep.subr.bf16.mxu0 0
        %3592 = vmatpush1.bf16.msra.mxu0 %v3058
        %3593 = vmatprep.subr.bf16.mxu0 0
        %3594 = vmatpush1.bf16.msra.mxu0 %v3057
        %3595 = vmatprep.subr.bf16.mxu0 0
        %3596 = vmatpush1.bf16.msra.mxu0 %v3056
        %3597 = vmatprep.subr.bf16.mxu0 0
        %3598 = vmatpush1.bf16.msra.mxu0 %v3055
        %3599 = vmatprep.subr.bf16.mxu0 0
        %3600 = vmatpush2.bf16.msra.mxu0 %v3070
        %3601 = vmatprep.subr.bf16.mxu0 0
        %3602 = vmatpush2.bf16.msra.mxu0 %v3069
        %3603 = vmatprep.subr.bf16.mxu0 0
        %3604 = vmatpush2.bf16.msra.mxu0 %v3068
        %3605 = vmatprep.subr.bf16.mxu0 0
        %3606 = vmatpush2.bf16.msra.mxu0 %v3067
        %3607 = vmatprep.subr.bf16.mxu0 0
        %3608 = vmatpush2.bf16.msra.mxu0 %v3066
        %3609 = vmatprep.subr.bf16.mxu0 0
        %3610 = vmatpush2.bf16.msra.mxu0 %v3065
        %3611 = vmatprep.subr.bf16.mxu0 0
        %3612 = vmatpush2.bf16.msra.mxu0 %v3064
        %3613 = vmatprep.subr.bf16.mxu0 0
        %3614 = vmatpush2.bf16.msra.mxu0 %v3063
        %3615 = vmatprep.mubr.bf16.mxu0 %v2683
        %3616 = vmatmul.mubr.bf16.gmra.mxu0 %v2465
        %v3617 = vpop.f32.mrf.mxu0
        %v3618 = vadd.f32 %v2957, %v3617
        %v3619 = vpop.f32.mrf.mxu0
        %v3620 = vpop.f32.mrf.mxu0
        %v3621 = vpop.f32.mrf.mxu0
        %3622 = vdwg.mxu0
        %3623 = vmatprep.subr.bf16.mxu0 0
        %3624 = vmatpush1.bf16.msra.mxu0 %v3078
        %3625 = vmatprep.subr.bf16.mxu0 0
        %3626 = vmatpush1.bf16.msra.mxu0 %v3077
        %3627 = vmatprep.subr.bf16.mxu0 0
        %3628 = vmatpush1.bf16.msra.mxu0 %v3076
        %3629 = vmatprep.subr.bf16.mxu0 0
        %3630 = vmatpush1.bf16.msra.mxu0 %v3075
        %3631 = vmatprep.subr.bf16.mxu0 0
        %3632 = vmatpush1.bf16.msra.mxu0 %v3074
        %3633 = vmatprep.subr.bf16.mxu0 0
        %3634 = vmatpush1.bf16.msra.mxu0 %v3073
        %3635 = vmatprep.subr.bf16.mxu0 0
        %3636 = vmatpush1.bf16.msra.mxu0 %v3072
        %3637 = vmatprep.subr.bf16.mxu0 0
        %3638 = vmatpush1.bf16.msra.mxu0 %v3071
        %3639 = vmatprep.subr.bf16.mxu0 0
        %3640 = vmatpush2.bf16.msra.mxu0 0
        %3641 = vmatprep.subr.bf16.mxu0 0
        %3642 = vmatpush2.bf16.msra.mxu0 0
        %3643 = vmatprep.subr.bf16.mxu0 0
        %3644 = vmatpush2.bf16.msra.mxu0 0
        %3645 = vmatprep.subr.bf16.mxu0 0
        %3646 = vmatpush2.bf16.msra.mxu0 0
        %3647 = vmatprep.subr.bf16.mxu0 0
        %3648 = vmatpush2.bf16.msra.mxu0 0
        %3649 = vmatprep.subr.bf16.mxu0 0
        %3650 = vmatpush2.bf16.msra.mxu0 0
        %3651 = vmatprep.subr.bf16.mxu0 0
        %3652 = vmatpush2.bf16.msra.mxu0 0
        %3653 = vmatprep.subr.bf16.mxu0 0
        %3654 = vmatpush2.bf16.msra.mxu0 0
        %3655 = vmatprep.mubr.bf16.mxu0 0
        %3656 = vmatmul.mubr.bf16.gmra.mxu0 %v2901
        %v3657 = vpop.f32.mrf.mxu0
        %v3658 = vadd.f32 %v3618, %v3657
        %v3659 = vpop.f32.mrf.mxu0
        %v3660 = vpop.f32.mrf.mxu0
        %v3661 = vpop.f32.mrf.mxu0
        %3662 = vdwg.mxu0
        %3663 = vmatprep.subr.bf16.mxu0 0
        %3664 = vmatpush1.bf16.msra.mxu0 %v3062
        %3665 = vmatprep.subr.bf16.mxu0 0
        %3666 = vmatpush1.bf16.msra.mxu0 %v3061
        %3667 = vmatprep.subr.bf16.mxu0 0
        %3668 = vmatpush1.bf16.msra.mxu0 %v3060
        %3669 = vmatprep.subr.bf16.mxu0 0
        %3670 = vmatpush1.bf16.msra.mxu0 %v3059
        %3671 = vmatprep.subr.bf16.mxu0 0
        %3672 = vmatpush1.bf16.msra.mxu0 %v3058
        %3673 = vmatprep.subr.bf16.mxu0 0
        %3674 = vmatpush1.bf16.msra.mxu0 %v3057
        %3675 = vmatprep.subr.bf16.mxu0 0
        %3676 = vmatpush1.bf16.msra.mxu0 %v3056
        %3677 = vmatprep.subr.bf16.mxu0 0
        %3678 = vmatpush1.bf16.msra.mxu0 %v3055
        %3679 = vmatprep.subr.bf16.mxu0 0
        %3680 = vmatpush2.bf16.msra.mxu0 %v3070
        %3681 = vmatprep.subr.bf16.mxu0 0
        %3682 = vmatpush2.bf16.msra.mxu0 %v3069
        %3683 = vmatprep.subr.bf16.mxu0 0
        %3684 = vmatpush2.bf16.msra.mxu0 %v3068
        %3685 = vmatprep.subr.bf16.mxu0 0
        %3686 = vmatpush2.bf16.msra.mxu0 %v3067
        %3687 = vmatprep.subr.bf16.mxu0 0
        %3688 = vmatpush2.bf16.msra.mxu0 %v3066
        %3689 = vmatprep.subr.bf16.mxu0 0
        %3690 = vmatpush2.bf16.msra.mxu0 %v3065
        %3691 = vmatprep.subr.bf16.mxu0 0
        %3692 = vmatpush2.bf16.msra.mxu0 %v3064
        %3693 = vmatprep.subr.bf16.mxu0 0
        %3694 = vmatpush2.bf16.msra.mxu0 %v3063
        %3695 = vmatprep.mubr.bf16.mxu0 %v2684
        %3696 = vmatmul.mubr.bf16.gmra.mxu0 %v2466
        %v3697 = vpop.f32.mrf.mxu0
        %v3698 = vadd.f32 %v2957, %v3697
        %v3699 = vpop.f32.mrf.mxu0
        %v3700 = vpop.f32.mrf.mxu0
        %v3701 = vpop.f32.mrf.mxu0
        %3702 = vdwg.mxu0
        %3703 = vmatprep.subr.bf16.mxu0 0
        %3704 = vmatpush1.bf16.msra.mxu0 %v3078
        %3705 = vmatprep.subr.bf16.mxu0 0
        %3706 = vmatpush1.bf16.msra.mxu0 %v3077
        %3707 = vmatprep.subr.bf16.mxu0 0
        %3708 = vmatpush1.bf16.msra.mxu0 %v3076
        %3709 = vmatprep.subr.bf16.mxu0 0
        %3710 = vmatpush1.bf16.msra.mxu0 %v3075
        %3711 = vmatprep.subr.bf16.mxu0 0
        %3712 = vmatpush1.bf16.msra.mxu0 %v3074
        %3713 = vmatprep.subr.bf16.mxu0 0
        %3714 = vmatpush1.bf16.msra.mxu0 %v3073
        %3715 = vmatprep.subr.bf16.mxu0 0
        %3716 = vmatpush1.bf16.msra.mxu0 %v3072
        %3717 = vmatprep.subr.bf16.mxu0 0
        %3718 = vmatpush1.bf16.msra.mxu0 %v3071
        %3719 = vmatprep.subr.bf16.mxu0 0
        %3720 = vmatpush2.bf16.msra.mxu0 0
        %3721 = vmatprep.subr.bf16.mxu0 0
        %3722 = vmatpush2.bf16.msra.mxu0 0
        %3723 = vmatprep.subr.bf16.mxu0 0
        %3724 = vmatpush2.bf16.msra.mxu0 0
        %3725 = vmatprep.subr.bf16.mxu0 0
        %3726 = vmatpush2.bf16.msra.mxu0 0
        %3727 = vmatprep.subr.bf16.mxu0 0
        %3728 = vmatpush2.bf16.msra.mxu0 0
        %3729 = vmatprep.subr.bf16.mxu0 0
        %3730 = vmatpush2.bf16.msra.mxu0 0
        %3731 = vmatprep.subr.bf16.mxu0 0
        %3732 = vmatpush2.bf16.msra.mxu0 0
        %3733 = vmatprep.subr.bf16.mxu0 0
        %3734 = vmatpush2.bf16.msra.mxu0 0
        %3735 = vmatprep.mubr.bf16.mxu0 0
        %3736 = vmatmul.mubr.bf16.gmra.mxu0 %v2902
        %v3737 = vpop.f32.mrf.mxu0
        %v3738 = vadd.f32 %v3698, %v3737
        %v3739 = vpop.f32.mrf.mxu0
        %v3740 = vpop.f32.mrf.mxu0
        %v3741 = vpop.f32.mrf.mxu0
        %3742 = vdwg.mxu0
        %3743 = vmatprep.subr.bf16.mxu0 0
        %3744 = vmatpush1.bf16.msra.mxu0 %v3062
        %3745 = vmatprep.subr.bf16.mxu0 0
        %3746 = vmatpush1.bf16.msra.mxu0 %v3061
        %3747 = vmatprep.subr.bf16.mxu0 0
        %3748 = vmatpush1.bf16.msra.mxu0 %v3060
        %3749 = vmatprep.subr.bf16.mxu0 0
        %3750 = vmatpush1.bf16.msra.mxu0 %v3059
        %3751 = vmatprep.subr.bf16.mxu0 0
        %3752 = vmatpush1.bf16.msra.mxu0 %v3058
        %3753 = vmatprep.subr.bf16.mxu0 0
        %3754 = vmatpush1.bf16.msra.mxu0 %v3057
        %3755 = vmatprep.subr.bf16.mxu0 0
        %3756 = vmatpush1.bf16.msra.mxu0 %v3056
        %3757 = vmatprep.subr.bf16.mxu0 0
        %3758 = vmatpush1.bf16.msra.mxu0 %v3055
        %3759 = vmatprep.subr.bf16.mxu0 0
        %3760 = vmatpush2.bf16.msra.mxu0 %v3070
        %3761 = vmatprep.subr.bf16.mxu0 0
        %3762 = vmatpush2.bf16.msra.mxu0 %v3069
        %3763 = vmatprep.subr.bf16.mxu0 0
        %3764 = vmatpush2.bf16.msra.mxu0 %v3068
        %3765 = vmatprep.subr.bf16.mxu0 0
        %3766 = vmatpush2.bf16.msra.mxu0 %v3067
        %3767 = vmatprep.subr.bf16.mxu0 0
        %3768 = vmatpush2.bf16.msra.mxu0 %v3066
        %3769 = vmatprep.subr.bf16.mxu0 0
        %3770 = vmatpush2.bf16.msra.mxu0 %v3065
        %3771 = vmatprep.subr.bf16.mxu0 0
        %3772 = vmatpush2.bf16.msra.mxu0 %v3064
        %3773 = vmatprep.subr.bf16.mxu0 0
        %3774 = vmatpush2.bf16.msra.mxu0 %v3063
        %3775 = vmatprep.mubr.bf16.mxu0 %v2685
        %3776 = vmatmul.mubr.bf16.gmra.mxu0 %v2467
        %v3777 = vpop.f32.mrf.mxu0
        %v3778 = vadd.f32 %v2957, %v3777
        %v3779 = vpop.f32.mrf.mxu0
        %v3780 = vpop.f32.mrf.mxu0
        %v3781 = vpop.f32.mrf.mxu0
        %3782 = vdwg.mxu0
        %3783 = vmatprep.subr.bf16.mxu0 0
        %3784 = vmatpush1.bf16.msra.mxu0 %v3078
        %3785 = vmatprep.subr.bf16.mxu0 0
        %3786 = vmatpush1.bf16.msra.mxu0 %v3077
        %3787 = vmatprep.subr.bf16.mxu0 0
        %3788 = vmatpush1.bf16.msra.mxu0 %v3076
        %3789 = vmatprep.subr.bf16.mxu0 0
        %3790 = vmatpush1.bf16.msra.mxu0 %v3075
        %3791 = vmatprep.subr.bf16.mxu0 0
        %3792 = vmatpush1.bf16.msra.mxu0 %v3074
        %3793 = vmatprep.subr.bf16.mxu0 0
        %3794 = vmatpush1.bf16.msra.mxu0 %v3073
        %3795 = vmatprep.subr.bf16.mxu0 0
        %3796 = vmatpush1.bf16.msra.mxu0 %v3072
        %3797 = vmatprep.subr.bf16.mxu0 0
        %3798 = vmatpush1.bf16.msra.mxu0 %v3071
        %3799 = vmatprep.subr.bf16.mxu0 0
        %3800 = vmatpush2.bf16.msra.mxu0 0
        %3801 = vmatprep.subr.bf16.mxu0 0
        %3802 = vmatpush2.bf16.msra.mxu0 0
        %3803 = vmatprep.subr.bf16.mxu0 0
        %3804 = vmatpush2.bf16.msra.mxu0 0
        %3805 = vmatprep.subr.bf16.mxu0 0
        %3806 = vmatpush2.bf16.msra.mxu0 0
        %3807 = vmatprep.subr.bf16.mxu0 0
        %3808 = vmatpush2.bf16.msra.mxu0 0
        %3809 = vmatprep.subr.bf16.mxu0 0
        %3810 = vmatpush2.bf16.msra.mxu0 0
        %3811 = vmatprep.subr.bf16.mxu0 0
        %3812 = vmatpush2.bf16.msra.mxu0 0
        %3813 = vmatprep.subr.bf16.mxu0 0
        %3814 = vmatpush2.bf16.msra.mxu0 0
        %3815 = vmatprep.mubr.bf16.mxu0 0
        %3816 = vmatmul.mubr.bf16.gmra.mxu0 %v2903
        %v3817 = vpop.f32.mrf.mxu0
        %v3818 = vadd.f32 %v3778, %v3817
        %v3819 = vpop.f32.mrf.mxu0
        %v3820 = vpop.f32.mrf.mxu0
        %v3821 = vpop.f32.mrf.mxu0
        %3822 = vdwg.mxu0
        %v3823 = vpack.c.bf16 %v3178, %v3178
        %v3824 = vpack.c.bf16 %v3258, %v3258
        %v3825 = vpack.c.bf16 %v3338, %v3338
        %v3826 = vpack.c.bf16 %v3418, %v3418
        %v3827 = vpack.c.bf16 %v3498, %v3498
        %v3828 = vpack.c.bf16 %v3578, %v3578
        %v3829 = vpack.c.bf16 %v3658, %v3658
        %v3830 = vpack.c.bf16 %v3738, %v3738
        %v3831 = vpack.c.bf16 %v3818, %v3818
        %v3832 = vld [vmem:[#allocation10] sm:$0xf]
        %vm3833 = vcmask 56320
        %v3835 = vsel %vm3833, %v3832, 0
        %vm3837 = vcmask 1042432
        %v3838 = vsel %vm3837, 4294967295, 65535
        %v3839 = vsel %vm1140, %v3838, 0
        %v3841 = vand.u32 %v3823, %v3839
        %v3844 = vand.u32 %v3824, %v3839
        %v3847 = vand.u32 %v3825, %v3839
        %v3850 = vand.u32 %v3826, %v3839
        %v3853 = vand.u32 %v3827, %v3839
        %v3856 = vand.u32 %v3828, %v3839
        %v3859 = vand.u32 %v3829, %v3839
        %v3862 = vand.u32 %v3830, %v3839
        %v3865 = vand.u32 %v3831, %v3839
        %3867 = vmatprep.subr.bf16.mxu0 0
        %3868 = vmatpush1.bf16.msra.mxu0 0
        %3869 = vmatprep.subr.bf16.mxu0 0
        %3870 = vmatpush1.bf16.msra.mxu0 0
        %3871 = vmatprep.subr.bf16.mxu0 0
        %3872 = vmatpush1.bf16.msra.mxu0 0
        %3873 = vmatprep.subr.bf16.mxu0 0
        %3874 = vmatpush1.bf16.msra.mxu0 0
        %3875 = vmatprep.subr.bf16.mxu0 0
        %3876 = vmatpush1.bf16.msra.mxu0 0
        %3877 = vmatprep.subr.bf16.mxu0 0
        %3878 = vmatpush1.bf16.msra.mxu0 0
        %3879 = vmatprep.subr.bf16.mxu0 0
        %3880 = vmatpush1.bf16.msra.mxu0 0
        %3881 = vmatprep.subr.bf16.mxu0 %v3844
        %3882 = vmatpush1.bf16.msra.mxu0 %v3841
        %3883 = vmatprep.subr.bf16.mxu0 0
        %3884 = vmatpush2.bf16.msra.mxu0 0
        %3885 = vmatprep.subr.bf16.mxu0 0
        %3886 = vmatpush2.bf16.msra.mxu0 0
        %3887 = vmatprep.subr.bf16.mxu0 0
        %3888 = vmatpush2.bf16.msra.mxu0 0
        %3889 = vmatprep.subr.bf16.mxu0 0
        %3890 = vmatpush2.bf16.msra.mxu0 0
        %3891 = vmatprep.subr.bf16.mxu0 0
        %3892 = vmatpush2.bf16.msra.mxu0 0
        %3893 = vmatprep.subr.bf16.mxu0 0
        %3894 = vmatpush2.bf16.msra.mxu0 0
        %3895 = vmatprep.subr.bf16.mxu0 0
        %3896 = vmatpush2.bf16.msra.mxu0 0
        %3897 = vmatprep.subr.bf16.mxu0 0
        %3898 = vmatpush2.bf16.msra.mxu0 0
        %3899 = vmatprep.mubr.bf16.mxu0 0
        %3900 = vmatmul.mubr.bf16.gmra.mxu0 %v3835
        %v3901 = vpop.f32.mrf.mxu0
        %v3902 = vadd.f32 0.0, %v3901
        %v3903 = vpop.f32.mrf.mxu0
        %v3904 = vadd.f32 0.0, %v3903
        %v3905 = vpop.f32.mrf.mxu0
        %v3906 = vpop.f32.mrf.mxu0
        %3907 = vdwg.mxu0
        %3908 = vmatprep.subr.bf16.mxu0 0
        %3909 = vmatpush1.bf16.msra.mxu0 0
        %3910 = vmatprep.subr.bf16.mxu0 0
        %3911 = vmatpush1.bf16.msra.mxu0 0
        %3912 = vmatprep.subr.bf16.mxu0 0
        %3913 = vmatpush1.bf16.msra.mxu0 0
        %3914 = vmatprep.subr.bf16.mxu0 0
        %3915 = vmatpush1.bf16.msra.mxu0 0
        %3916 = vmatprep.subr.bf16.mxu0 0
        %3917 = vmatpush1.bf16.msra.mxu0 0
        %3918 = vmatprep.subr.bf16.mxu0 0
        %3919 = vmatpush1.bf16.msra.mxu0 0
        %3920 = vmatprep.subr.bf16.mxu0 0
        %3921 = vmatpush1.bf16.msra.mxu0 0
        %3922 = vmatprep.subr.bf16.mxu0 %v3850
        %3923 = vmatpush1.bf16.msra.mxu0 %v3847
        %3924 = vmatprep.subr.bf16.mxu0 0
        %3925 = vmatpush2.bf16.msra.mxu0 0
        %3926 = vmatprep.subr.bf16.mxu0 0
        %3927 = vmatpush2.bf16.msra.mxu0 0
        %3928 = vmatprep.subr.bf16.mxu0 0
        %3929 = vmatpush2.bf16.msra.mxu0 0
        %3930 = vmatprep.subr.bf16.mxu0 0
        %3931 = vmatpush2.bf16.msra.mxu0 0
        %3932 = vmatprep.subr.bf16.mxu0 0
        %3933 = vmatpush2.bf16.msra.mxu0 0
        %3934 = vmatprep.subr.bf16.mxu0 0
        %3935 = vmatpush2.bf16.msra.mxu0 0
        %3936 = vmatprep.subr.bf16.mxu0 0
        %3937 = vmatpush2.bf16.msra.mxu0 0
        %3938 = vmatprep.subr.bf16.mxu0 0
        %3939 = vmatpush2.bf16.msra.mxu0 0
        %3940 = vmatprep.mubr.bf16.mxu0 0
        %3941 = vmatmul.mubr.bf16.gmra.mxu0 %v3835
        %v3942 = vpop.f32.mrf.mxu0
        %v3943 = vadd.f32 0.0, %v3942
        %v3944 = vpop.f32.mrf.mxu0
        %v3945 = vadd.f32 0.0, %v3944
        %v3946 = vpop.f32.mrf.mxu0
        %v3947 = vpop.f32.mrf.mxu0
        %3948 = vdwg.mxu0
        %3949 = vmatprep.subr.bf16.mxu0 0
        %3950 = vmatpush1.bf16.msra.mxu0 0
        %3951 = vmatprep.subr.bf16.mxu0 0
        %3952 = vmatpush1.bf16.msra.mxu0 0
        %3953 = vmatprep.subr.bf16.mxu0 0
        %3954 = vmatpush1.bf16.msra.mxu0 0
        %3955 = vmatprep.subr.bf16.mxu0 0
        %3956 = vmatpush1.bf16.msra.mxu0 0
        %3957 = vmatprep.subr.bf16.mxu0 0
        %3958 = vmatpush1.bf16.msra.mxu0 0
        %3959 = vmatprep.subr.bf16.mxu0 0
        %3960 = vmatpush1.bf16.msra.mxu0 0
        %3961 = vmatprep.subr.bf16.mxu0 0
        %3962 = vmatpush1.bf16.msra.mxu0 0
        %3963 = vmatprep.subr.bf16.mxu0 %v3856
        %3964 = vmatpush1.bf16.msra.mxu0 %v3853
        %3965 = vmatprep.subr.bf16.mxu0 0
        %3966 = vmatpush2.bf16.msra.mxu0 0
        %3967 = vmatprep.subr.bf16.mxu0 0
        %3968 = vmatpush2.bf16.msra.mxu0 0
        %3969 = vmatprep.subr.bf16.mxu0 0
        %3970 = vmatpush2.bf16.msra.mxu0 0
        %3971 = vmatprep.subr.bf16.mxu0 0
        %3972 = vmatpush2.bf16.msra.mxu0 0
        %3973 = vmatprep.subr.bf16.mxu0 0
        %3974 = vmatpush2.bf16.msra.mxu0 0
        %3975 = vmatprep.subr.bf16.mxu0 0
        %3976 = vmatpush2.bf16.msra.mxu0 0
        %3977 = vmatprep.subr.bf16.mxu0 0
        %3978 = vmatpush2.bf16.msra.mxu0 0
        %3979 = vmatprep.subr.bf16.mxu0 0
        %3980 = vmatpush2.bf16.msra.mxu0 0
        %3981 = vmatprep.mubr.bf16.mxu0 0
        %3982 = vmatmul.mubr.bf16.gmra.mxu0 %v3835
        %v3983 = vpop.f32.mrf.mxu0
        %v3984 = vadd.f32 0.0, %v3983
        %v3985 = vpop.f32.mrf.mxu0
        %v3986 = vadd.f32 0.0, %v3985
        %v3987 = vpop.f32.mrf.mxu0
        %v3988 = vpop.f32.mrf.mxu0
        %3989 = vdwg.mxu0
        %3990 = vmatprep.subr.bf16.mxu0 0
        %3991 = vmatpush1.bf16.msra.mxu0 0
        %3992 = vmatprep.subr.bf16.mxu0 0
        %3993 = vmatpush1.bf16.msra.mxu0 0
        %3994 = vmatprep.subr.bf16.mxu0 0
        %3995 = vmatpush1.bf16.msra.mxu0 0
        %3996 = vmatprep.subr.bf16.mxu0 0
        %3997 = vmatpush1.bf16.msra.mxu0 0
        %3998 = vmatprep.subr.bf16.mxu0 0
        %3999 = vmatpush1.bf16.msra.mxu0 0
        %4000 = vmatprep.subr.bf16.mxu0 0
        %4001 = vmatpush1.bf16.msra.mxu0 0
        %4002 = vmatprep.subr.bf16.mxu0 0
        %4003 = vmatpush1.bf16.msra.mxu0 0
        %4004 = vmatprep.subr.bf16.mxu0 %v3862
        %4005 = vmatpush1.bf16.msra.mxu0 %v3859
        %4006 = vmatprep.subr.bf16.mxu0 0
        %4007 = vmatpush2.bf16.msra.mxu0 0
        %4008 = vmatprep.subr.bf16.mxu0 0
        %4009 = vmatpush2.bf16.msra.mxu0 0
        %4010 = vmatprep.subr.bf16.mxu0 0
        %4011 = vmatpush2.bf16.msra.mxu0 0
        %4012 = vmatprep.subr.bf16.mxu0 0
        %4013 = vmatpush2.bf16.msra.mxu0 0
        %4014 = vmatprep.subr.bf16.mxu0 0
        %4015 = vmatpush2.bf16.msra.mxu0 0
        %4016 = vmatprep.subr.bf16.mxu0 0
        %4017 = vmatpush2.bf16.msra.mxu0 0
        %4018 = vmatprep.subr.bf16.mxu0 0
        %4019 = vmatpush2.bf16.msra.mxu0 0
        %4020 = vmatprep.subr.bf16.mxu0 0
        %4021 = vmatpush2.bf16.msra.mxu0 0
        %4022 = vmatprep.mubr.bf16.mxu0 0
        %4023 = vmatmul.mubr.bf16.gmra.mxu0 %v3835
        %v4024 = vpop.f32.mrf.mxu0
        %v4025 = vadd.f32 0.0, %v4024
        %v4026 = vpop.f32.mrf.mxu0
        %v4027 = vadd.f32 0.0, %v4026
        %v4028 = vpop.f32.mrf.mxu0
        %v4029 = vpop.f32.mrf.mxu0
        %4030 = vdwg.mxu0
        %4031 = vmatprep.subr.bf16.mxu0 0
        %4032 = vmatpush1.bf16.msra.mxu0 0
        %4033 = vmatprep.subr.bf16.mxu0 0
        %4034 = vmatpush1.bf16.msra.mxu0 0
        %4035 = vmatprep.subr.bf16.mxu0 0
        %4036 = vmatpush1.bf16.msra.mxu0 0
        %4037 = vmatprep.subr.bf16.mxu0 0
        %4038 = vmatpush1.bf16.msra.mxu0 0
        %4039 = vmatprep.subr.bf16.mxu0 0
        %4040 = vmatpush1.bf16.msra.mxu0 0
        %4041 = vmatprep.subr.bf16.mxu0 0
        %4042 = vmatpush1.bf16.msra.mxu0 0
        %4043 = vmatprep.subr.bf16.mxu0 0
        %4044 = vmatpush1.bf16.msra.mxu0 0
        %4045 = vmatprep.subr.bf16.mxu0 0
        %4046 = vmatpush1.bf16.msra.mxu0 %v3865
        %4047 = vmatprep.subr.bf16.mxu0 0
        %4048 = vmatpush2.bf16.msra.mxu0 0
        %4049 = vmatprep.subr.bf16.mxu0 0
        %4050 = vmatpush2.bf16.msra.mxu0 0
        %4051 = vmatprep.subr.bf16.mxu0 0
        %4052 = vmatpush2.bf16.msra.mxu0 0
        %4053 = vmatprep.subr.bf16.mxu0 0
        %4054 = vmatpush2.bf16.msra.mxu0 0
        %4055 = vmatprep.subr.bf16.mxu0 0
        %4056 = vmatpush2.bf16.msra.mxu0 0
        %4057 = vmatprep.subr.bf16.mxu0 0
        %4058 = vmatpush2.bf16.msra.mxu0 0
        %4059 = vmatprep.subr.bf16.mxu0 0
        %4060 = vmatpush2.bf16.msra.mxu0 0
        %4061 = vmatprep.subr.bf16.mxu0 0
        %4062 = vmatpush2.bf16.msra.mxu0 0
        %4063 = vmatprep.mubr.bf16.mxu0 0
        %4064 = vmatmul.mubr.bf16.gmra.mxu0 %v3835
        %v4065 = vpop.f32.mrf.mxu0
        %v4066 = vadd.f32 0.0, %v4065
        %v4067 = vpop.f32.mrf.mxu0
        %v4068 = vpop.f32.mrf.mxu0
        %v4069 = vpop.f32.mrf.mxu0
        %4070 = vdwg.mxu0
        %v4071 = vpack.c.bf16 %v3902, %v3902
        %v4072 = vpack.c.bf16 %v3904, %v3904
        %v4073 = vpack.c.bf16 %v3943, %v3943
        %v4074 = vpack.c.bf16 %v3945, %v3945
        %v4075 = vpack.c.bf16 %v3984, %v3984
        %v4076 = vpack.c.bf16 %v3986, %v3986
        %v4077 = vpack.c.bf16 %v4025, %v4025
        %v4078 = vpack.c.bf16 %v4027, %v4027
        %v4079 = vpack.c.bf16 %v4066, %v4066
        %s4080 = scalar_lea.vmem [#allocation10], 4
        %v4081 = vld [vmem:[%s4080] sm:$0xf]
        %v4083 = vsel %vm3833, %v4081, 0
        %4085 = vmatprep.subr.bf16.mxu0 0
        %4086 = vmatpush1.bf16.msra.mxu0 0
        %4087 = vmatprep.subr.bf16.mxu0 0
        %4088 = vmatpush1.bf16.msra.mxu0 0
        %4089 = vmatprep.subr.bf16.mxu0 0
        %4090 = vmatpush1.bf16.msra.mxu0 0
        %4091 = vmatprep.subr.bf16.mxu0 0
        %4092 = vmatpush1.bf16.msra.mxu0 0
        %4093 = vmatprep.subr.bf16.mxu0 0
        %4094 = vmatpush1.bf16.msra.mxu0 0
        %4095 = vmatprep.subr.bf16.mxu0 0
        %4096 = vmatpush1.bf16.msra.mxu0 0
        %4097 = vmatprep.subr.bf16.mxu0 0
        %4098 = vmatpush1.bf16.msra.mxu0 0
        %4099 = vmatprep.subr.bf16.mxu0 %v3844
        %4100 = vmatpush1.bf16.msra.mxu0 %v3841
        %4101 = vmatprep.subr.bf16.mxu0 0
        %4102 = vmatpush2.bf16.msra.mxu0 0
        %4103 = vmatprep.subr.bf16.mxu0 0
        %4104 = vmatpush2.bf16.msra.mxu0 0
        %4105 = vmatprep.subr.bf16.mxu0 0
        %4106 = vmatpush2.bf16.msra.mxu0 0
        %4107 = vmatprep.subr.bf16.mxu0 0
        %4108 = vmatpush2.bf16.msra.mxu0 0
        %4109 = vmatprep.subr.bf16.mxu0 0
        %4110 = vmatpush2.bf16.msra.mxu0 0
        %4111 = vmatprep.subr.bf16.mxu0 0
        %4112 = vmatpush2.bf16.msra.mxu0 0
        %4113 = vmatprep.subr.bf16.mxu0 0
        %4114 = vmatpush2.bf16.msra.mxu0 0
        %4115 = vmatprep.subr.bf16.mxu0 0
        %4116 = vmatpush2.bf16.msra.mxu0 0
        %4117 = vmatprep.mubr.bf16.mxu0 0
        %4118 = vmatmul.mubr.bf16.gmra.mxu0 %v4083
        %v4119 = vpop.f32.mrf.mxu0
        %v4120 = vadd.f32 0.0, %v4119
        %v4121 = vpop.f32.mrf.mxu0
        %v4122 = vadd.f32 0.0, %v4121
        %v4123 = vpop.f32.mrf.mxu0
        %v4124 = vpop.f32.mrf.mxu0
        %4125 = vdwg.mxu0
        %4126 = vmatprep.subr.bf16.mxu0 0
        %4127 = vmatpush1.bf16.msra.mxu0 0
        %4128 = vmatprep.subr.bf16.mxu0 0
        %4129 = vmatpush1.bf16.msra.mxu0 0
        %4130 = vmatprep.subr.bf16.mxu0 0
        %4131 = vmatpush1.bf16.msra.mxu0 0
        %4132 = vmatprep.subr.bf16.mxu0 0
        %4133 = vmatpush1.bf16.msra.mxu0 0
        %4134 = vmatprep.subr.bf16.mxu0 0
        %4135 = vmatpush1.bf16.msra.mxu0 0
        %4136 = vmatprep.subr.bf16.mxu0 0
        %4137 = vmatpush1.bf16.msra.mxu0 0
        %4138 = vmatprep.subr.bf16.mxu0 0
        %4139 = vmatpush1.bf16.msra.mxu0 0
        %4140 = vmatprep.subr.bf16.mxu0 %v3850
        %4141 = vmatpush1.bf16.msra.mxu0 %v3847
        %4142 = vmatprep.subr.bf16.mxu0 0
        %4143 = vmatpush2.bf16.msra.mxu0 0
        %4144 = vmatprep.subr.bf16.mxu0 0
        %4145 = vmatpush2.bf16.msra.mxu0 0
        %4146 = vmatprep.subr.bf16.mxu0 0
        %4147 = vmatpush2.bf16.msra.mxu0 0
        %4148 = vmatprep.subr.bf16.mxu0 0
        %4149 = vmatpush2.bf16.msra.mxu0 0
        %4150 = vmatprep.subr.bf16.mxu0 0
        %4151 = vmatpush2.bf16.msra.mxu0 0
        %4152 = vmatprep.subr.bf16.mxu0 0
        %4153 = vmatpush2.bf16.msra.mxu0 0
        %4154 = vmatprep.subr.bf16.mxu0 0
        %4155 = vmatpush2.bf16.msra.mxu0 0
        %4156 = vmatprep.subr.bf16.mxu0 0
        %4157 = vmatpush2.bf16.msra.mxu0 0
        %4158 = vmatprep.mubr.bf16.mxu0 0
        %4159 = vmatmul.mubr.bf16.gmra.mxu0 %v4083
        %v4160 = vpop.f32.mrf.mxu0
        %v4161 = vadd.f32 0.0, %v4160
        %v4162 = vpop.f32.mrf.mxu0
        %v4163 = vadd.f32 0.0, %v4162
        %v4164 = vpop.f32.mrf.mxu0
        %v4165 = vpop.f32.mrf.mxu0
        %4166 = vdwg.mxu0
        %4167 = vmatprep.subr.bf16.mxu0 0
        %4168 = vmatpush1.bf16.msra.mxu0 0
        %4169 = vmatprep.subr.bf16.mxu0 0
        %4170 = vmatpush1.bf16.msra.mxu0 0
        %4171 = vmatprep.subr.bf16.mxu0 0
        %4172 = vmatpush1.bf16.msra.mxu0 0
        %4173 = vmatprep.subr.bf16.mxu0 0
        %4174 = vmatpush1.bf16.msra.mxu0 0
        %4175 = vmatprep.subr.bf16.mxu0 0
        %4176 = vmatpush1.bf16.msra.mxu0 0
        %4177 = vmatprep.subr.bf16.mxu0 0
        %4178 = vmatpush1.bf16.msra.mxu0 0
        %4179 = vmatprep.subr.bf16.mxu0 0
        %4180 = vmatpush1.bf16.msra.mxu0 0
        %4181 = vmatprep.subr.bf16.mxu0 %v3856
        %4182 = vmatpush1.bf16.msra.mxu0 %v3853
        %4183 = vmatprep.subr.bf16.mxu0 0
        %4184 = vmatpush2.bf16.msra.mxu0 0
        %4185 = vmatprep.subr.bf16.mxu0 0
        %4186 = vmatpush2.bf16.msra.mxu0 0
        %4187 = vmatprep.subr.bf16.mxu0 0
        %4188 = vmatpush2.bf16.msra.mxu0 0
        %4189 = vmatprep.subr.bf16.mxu0 0
        %4190 = vmatpush2.bf16.msra.mxu0 0
        %4191 = vmatprep.subr.bf16.mxu0 0
        %4192 = vmatpush2.bf16.msra.mxu0 0
        %4193 = vmatprep.subr.bf16.mxu0 0
        %4194 = vmatpush2.bf16.msra.mxu0 0
        %4195 = vmatprep.subr.bf16.mxu0 0
        %4196 = vmatpush2.bf16.msra.mxu0 0
        %4197 = vmatprep.subr.bf16.mxu0 0
        %4198 = vmatpush2.bf16.msra.mxu0 0
        %4199 = vmatprep.mubr.bf16.mxu0 0
        %4200 = vmatmul.mubr.bf16.gmra.mxu0 %v4083
        %v4201 = vpop.f32.mrf.mxu0
        %v4202 = vadd.f32 0.0, %v4201
        %v4203 = vpop.f32.mrf.mxu0
        %v4204 = vadd.f32 0.0, %v4203
        %v4205 = vpop.f32.mrf.mxu0
        %v4206 = vpop.f32.mrf.mxu0
        %4207 = vdwg.mxu0
        %4208 = vmatprep.subr.bf16.mxu0 0
        %4209 = vmatpush1.bf16.msra.mxu0 0
        %4210 = vmatprep.subr.bf16.mxu0 0
        %4211 = vmatpush1.bf16.msra.mxu0 0
        %4212 = vmatprep.subr.bf16.mxu0 0
        %4213 = vmatpush1.bf16.msra.mxu0 0
        %4214 = vmatprep.subr.bf16.mxu0 0
        %4215 = vmatpush1.bf16.msra.mxu0 0
        %4216 = vmatprep.subr.bf16.mxu0 0
        %4217 = vmatpush1.bf16.msra.mxu0 0
        %4218 = vmatprep.subr.bf16.mxu0 0
        %4219 = vmatpush1.bf16.msra.mxu0 0
        %4220 = vmatprep.subr.bf16.mxu0 0
        %4221 = vmatpush1.bf16.msra.mxu0 0
        %4222 = vmatprep.subr.bf16.mxu0 %v3862
        %4223 = vmatpush1.bf16.msra.mxu0 %v3859
        %4224 = vmatprep.subr.bf16.mxu0 0
        %4225 = vmatpush2.bf16.msra.mxu0 0
        %4226 = vmatprep.subr.bf16.mxu0 0
        %4227 = vmatpush2.bf16.msra.mxu0 0
        %4228 = vmatprep.subr.bf16.mxu0 0
        %4229 = vmatpush2.bf16.msra.mxu0 0
        %4230 = vmatprep.subr.bf16.mxu0 0
        %4231 = vmatpush2.bf16.msra.mxu0 0
        %4232 = vmatprep.subr.bf16.mxu0 0
        %4233 = vmatpush2.bf16.msra.mxu0 0
        %4234 = vmatprep.subr.bf16.mxu0 0
        %4235 = vmatpush2.bf16.msra.mxu0 0
        %4236 = vmatprep.subr.bf16.mxu0 0
        %4237 = vmatpush2.bf16.msra.mxu0 0
        %4238 = vmatprep.subr.bf16.mxu0 0
        %4239 = vmatpush2.bf16.msra.mxu0 0
        %4240 = vmatprep.mubr.bf16.mxu0 0
        %4241 = vmatmul.mubr.bf16.gmra.mxu0 %v4083
        %v4242 = vpop.f32.mrf.mxu0
        %v4243 = vadd.f32 0.0, %v4242
        %v4244 = vpop.f32.mrf.mxu0
        %v4245 = vadd.f32 0.0, %v4244
        %v4246 = vpop.f32.mrf.mxu0
        %v4247 = vpop.f32.mrf.mxu0
        %4248 = vdwg.mxu0
        %4249 = vmatprep.subr.bf16.mxu0 0
        %4250 = vmatpush1.bf16.msra.mxu0 0
        %4251 = vmatprep.subr.bf16.mxu0 0
        %4252 = vmatpush1.bf16.msra.mxu0 0
        %4253 = vmatprep.subr.bf16.mxu0 0
        %4254 = vmatpush1.bf16.msra.mxu0 0
        %4255 = vmatprep.subr.bf16.mxu0 0
        %4256 = vmatpush1.bf16.msra.mxu0 0
        %4257 = vmatprep.subr.bf16.mxu0 0
        %4258 = vmatpush1.bf16.msra.mxu0 0
        %4259 = vmatprep.subr.bf16.mxu0 0
        %4260 = vmatpush1.bf16.msra.mxu0 0
        %4261 = vmatprep.subr.bf16.mxu0 0
        %4262 = vmatpush1.bf16.msra.mxu0 0
        %4263 = vmatprep.subr.bf16.mxu0 0
        %4264 = vmatpush1.bf16.msra.mxu0 %v3865
        %4265 = vmatprep.subr.bf16.mxu0 0
        %4266 = vmatpush2.bf16.msra.mxu0 0
        %4267 = vmatprep.subr.bf16.mxu0 0
        %4268 = vmatpush2.bf16.msra.mxu0 0
        %4269 = vmatprep.subr.bf16.mxu0 0
        %4270 = vmatpush2.bf16.msra.mxu0 0
        %4271 = vmatprep.subr.bf16.mxu0 0
        %4272 = vmatpush2.bf16.msra.mxu0 0
        %4273 = vmatprep.subr.bf16.mxu0 0
        %4274 = vmatpush2.bf16.msra.mxu0 0
        %4275 = vmatprep.subr.bf16.mxu0 0
        %4276 = vmatpush2.bf16.msra.mxu0 0
        %4277 = vmatprep.subr.bf16.mxu0 0
        %4278 = vmatpush2.bf16.msra.mxu0 0
        %4279 = vmatprep.subr.bf16.mxu0 0
        %4280 = vmatpush2.bf16.msra.mxu0 0
        %4281 = vmatprep.mubr.bf16.mxu0 0
        %4282 = vmatmul.mubr.bf16.gmra.mxu0 %v4083
        %v4283 = vpop.f32.mrf.mxu0
        %v4284 = vadd.f32 0.0, %v4283
        %v4285 = vpop.f32.mrf.mxu0
        %v4286 = vpop.f32.mrf.mxu0
        %v4287 = vpop.f32.mrf.mxu0
        %4288 = vdwg.mxu0
        %v4289 = vpack.c.bf16 %v4120, %v4120
        %v4290 = vpack.c.bf16 %v4122, %v4122
        %v4291 = vpack.c.bf16 %v4161, %v4161
        %v4292 = vpack.c.bf16 %v4163, %v4163
        %v4293 = vpack.c.bf16 %v4202, %v4202
        %v4294 = vpack.c.bf16 %v4204, %v4204
        %v4295 = vpack.c.bf16 %v4243, %v4243
        %v4296 = vpack.c.bf16 %v4245, %v4245
        %v4297 = vpack.c.bf16 %v4284, %v4284
        %s4298 = scalar_lea.vmem [#allocation10], 8
        %v4299 = vld [vmem:[%s4298] sm:$0xf]
        %v4301 = vsel %vm3833, %v4299, 0
        %4303 = vmatprep.subr.bf16.mxu0 0
        %4304 = vmatpush1.bf16.msra.mxu0 0
        %4305 = vmatprep.subr.bf16.mxu0 0
        %4306 = vmatpush1.bf16.msra.mxu0 0
        %4307 = vmatprep.subr.bf16.mxu0 0
        %4308 = vmatpush1.bf16.msra.mxu0 0
        %4309 = vmatprep.subr.bf16.mxu0 0
        %4310 = vmatpush1.bf16.msra.mxu0 0
        %4311 = vmatprep.subr.bf16.mxu0 0
        %4312 = vmatpush1.bf16.msra.mxu0 0
        %4313 = vmatprep.subr.bf16.mxu0 0
        %4314 = vmatpush1.bf16.msra.mxu0 0
        %4315 = vmatprep.subr.bf16.mxu0 0
        %4316 = vmatpush1.bf16.msra.mxu0 0
        %4317 = vmatprep.subr.bf16.mxu0 %v3844
        %4318 = vmatpush1.bf16.msra.mxu0 %v3841
        %4319 = vmatprep.subr.bf16.mxu0 0
        %4320 = vmatpush2.bf16.msra.mxu0 0
        %4321 = vmatprep.subr.bf16.mxu0 0
        %4322 = vmatpush2.bf16.msra.mxu0 0
        %4323 = vmatprep.subr.bf16.mxu0 0
        %4324 = vmatpush2.bf16.msra.mxu0 0
        %4325 = vmatprep.subr.bf16.mxu0 0
        %4326 = vmatpush2.bf16.msra.mxu0 0
        %4327 = vmatprep.subr.bf16.mxu0 0
        %4328 = vmatpush2.bf16.msra.mxu0 0
        %4329 = vmatprep.subr.bf16.mxu0 0
        %4330 = vmatpush2.bf16.msra.mxu0 0
        %4331 = vmatprep.subr.bf16.mxu0 0
        %4332 = vmatpush2.bf16.msra.mxu0 0
        %4333 = vmatprep.subr.bf16.mxu0 0
        %4334 = vmatpush2.bf16.msra.mxu0 0
        %4335 = vmatprep.mubr.bf16.mxu0 0
        %4336 = vmatmul.mubr.bf16.gmra.mxu0 %v4301
        %v4337 = vpop.f32.mrf.mxu0
        %v4338 = vadd.f32 0.0, %v4337
        %v4339 = vpop.f32.mrf.mxu0
        %v4340 = vadd.f32 0.0, %v4339
        %v4341 = vpop.f32.mrf.mxu0
        %v4342 = vpop.f32.mrf.mxu0
        %4343 = vdwg.mxu0
        %4344 = vmatprep.subr.bf16.mxu0 0
        %4345 = vmatpush1.bf16.msra.mxu0 0
        %4346 = vmatprep.subr.bf16.mxu0 0
        %4347 = vmatpush1.bf16.msra.mxu0 0
        %4348 = vmatprep.subr.bf16.mxu0 0
        %4349 = vmatpush1.bf16.msra.mxu0 0
        %4350 = vmatprep.subr.bf16.mxu0 0
        %4351 = vmatpush1.bf16.msra.mxu0 0
        %4352 = vmatprep.subr.bf16.mxu0 0
        %4353 = vmatpush1.bf16.msra.mxu0 0
        %4354 = vmatprep.subr.bf16.mxu0 0
        %4355 = vmatpush1.bf16.msra.mxu0 0
        %4356 = vmatprep.subr.bf16.mxu0 0
        %4357 = vmatpush1.bf16.msra.mxu0 0
        %4358 = vmatprep.subr.bf16.mxu0 %v3850
        %4359 = vmatpush1.bf16.msra.mxu0 %v3847
        %4360 = vmatprep.subr.bf16.mxu0 0
        %4361 = vmatpush2.bf16.msra.mxu0 0
        %4362 = vmatprep.subr.bf16.mxu0 0
        %4363 = vmatpush2.bf16.msra.mxu0 0
        %4364 = vmatprep.subr.bf16.mxu0 0
        %4365 = vmatpush2.bf16.msra.mxu0 0
        %4366 = vmatprep.subr.bf16.mxu0 0
        %4367 = vmatpush2.bf16.msra.mxu0 0
        %4368 = vmatprep.subr.bf16.mxu0 0
        %4369 = vmatpush2.bf16.msra.mxu0 0
        %4370 = vmatprep.subr.bf16.mxu0 0
        %4371 = vmatpush2.bf16.msra.mxu0 0
        %4372 = vmatprep.subr.bf16.mxu0 0
        %4373 = vmatpush2.bf16.msra.mxu0 0
        %4374 = vmatprep.subr.bf16.mxu0 0
        %4375 = vmatpush2.bf16.msra.mxu0 0
        %4376 = vmatprep.mubr.bf16.mxu0 0
        %4377 = vmatmul.mubr.bf16.gmra.mxu0 %v4301
        %v4378 = vpop.f32.mrf.mxu0
        %v4379 = vadd.f32 0.0, %v4378
        %v4380 = vpop.f32.mrf.mxu0
        %v4381 = vadd.f32 0.0, %v4380
        %v4382 = vpop.f32.mrf.mxu0
        %v4383 = vpop.f32.mrf.mxu0
        %4384 = vdwg.mxu0
        %4385 = vmatprep.subr.bf16.mxu0 0
        %4386 = vmatpush1.bf16.msra.mxu0 0
        %4387 = vmatprep.subr.bf16.mxu0 0
        %4388 = vmatpush1.bf16.msra.mxu0 0
        %4389 = vmatprep.subr.bf16.mxu0 0
        %4390 = vmatpush1.bf16.msra.mxu0 0
        %4391 = vmatprep.subr.bf16.mxu0 0
        %4392 = vmatpush1.bf16.msra.mxu0 0
        %4393 = vmatprep.subr.bf16.mxu0 0
        %4394 = vmatpush1.bf16.msra.mxu0 0
        %4395 = vmatprep.subr.bf16.mxu0 0
        %4396 = vmatpush1.bf16.msra.mxu0 0
        %4397 = vmatprep.subr.bf16.mxu0 0
        %4398 = vmatpush1.bf16.msra.mxu0 0
        %4399 = vmatprep.subr.bf16.mxu0 %v3856
        %4400 = vmatpush1.bf16.msra.mxu0 %v3853
        %4401 = vmatprep.subr.bf16.mxu0 0
        %4402 = vmatpush2.bf16.msra.mxu0 0
        %4403 = vmatprep.subr.bf16.mxu0 0
        %4404 = vmatpush2.bf16.msra.mxu0 0
        %4405 = vmatprep.subr.bf16.mxu0 0
        %4406 = vmatpush2.bf16.msra.mxu0 0
        %4407 = vmatprep.subr.bf16.mxu0 0
        %4408 = vmatpush2.bf16.msra.mxu0 0
        %4409 = vmatprep.subr.bf16.mxu0 0
        %4410 = vmatpush2.bf16.msra.mxu0 0
        %4411 = vmatprep.subr.bf16.mxu0 0
        %4412 = vmatpush2.bf16.msra.mxu0 0
        %4413 = vmatprep.subr.bf16.mxu0 0
        %4414 = vmatpush2.bf16.msra.mxu0 0
        %4415 = vmatprep.subr.bf16.mxu0 0
        %4416 = vmatpush2.bf16.msra.mxu0 0
        %4417 = vmatprep.mubr.bf16.mxu0 0
        %4418 = vmatmul.mubr.bf16.gmra.mxu0 %v4301
        %v4419 = vpop.f32.mrf.mxu0
        %v4420 = vadd.f32 0.0, %v4419
        %v4421 = vpop.f32.mrf.mxu0
        %v4422 = vadd.f32 0.0, %v4421
        %v4423 = vpop.f32.mrf.mxu0
        %v4424 = vpop.f32.mrf.mxu0
        %4425 = vdwg.mxu0
        %4426 = vmatprep.subr.bf16.mxu0 0
        %4427 = vmatpush1.bf16.msra.mxu0 0
        %4428 = vmatprep.subr.bf16.mxu0 0
        %4429 = vmatpush1.bf16.msra.mxu0 0
        %4430 = vmatprep.subr.bf16.mxu0 0
        %4431 = vmatpush1.bf16.msra.mxu0 0
        %4432 = vmatprep.subr.bf16.mxu0 0
        %4433 = vmatpush1.bf16.msra.mxu0 0
        %4434 = vmatprep.subr.bf16.mxu0 0
        %4435 = vmatpush1.bf16.msra.mxu0 0
        %4436 = vmatprep.subr.bf16.mxu0 0
        %4437 = vmatpush1.bf16.msra.mxu0 0
        %4438 = vmatprep.subr.bf16.mxu0 0
        %4439 = vmatpush1.bf16.msra.mxu0 0
        %4440 = vmatprep.subr.bf16.mxu0 %v3862
        %4441 = vmatpush1.bf16.msra.mxu0 %v3859
        %4442 = vmatprep.subr.bf16.mxu0 0
        %4443 = vmatpush2.bf16.msra.mxu0 0
        %4444 = vmatprep.subr.bf16.mxu0 0
        %4445 = vmatpush2.bf16.msra.mxu0 0
        %4446 = vmatprep.subr.bf16.mxu0 0
        %4447 = vmatpush2.bf16.msra.mxu0 0
        %4448 = vmatprep.subr.bf16.mxu0 0
        %4449 = vmatpush2.bf16.msra.mxu0 0
        %4450 = vmatprep.subr.bf16.mxu0 0
        %4451 = vmatpush2.bf16.msra.mxu0 0
        %4452 = vmatprep.subr.bf16.mxu0 0
        %4453 = vmatpush2.bf16.msra.mxu0 0
        %4454 = vmatprep.subr.bf16.mxu0 0
        %4455 = vmatpush2.bf16.msra.mxu0 0
        %4456 = vmatprep.subr.bf16.mxu0 0
        %4457 = vmatpush2.bf16.msra.mxu0 0
        %4458 = vmatprep.mubr.bf16.mxu0 0
        %4459 = vmatmul.mubr.bf16.gmra.mxu0 %v4301
        %v4460 = vpop.f32.mrf.mxu0
        %v4461 = vadd.f32 0.0, %v4460
        %v4462 = vpop.f32.mrf.mxu0
        %v4463 = vadd.f32 0.0, %v4462
        %v4464 = vpop.f32.mrf.mxu0
        %v4465 = vpop.f32.mrf.mxu0
        %4466 = vdwg.mxu0
        %4467 = vmatprep.subr.bf16.mxu0 0
        %4468 = vmatpush1.bf16.msra.mxu0 0
        %4469 = vmatprep.subr.bf16.mxu0 0
        %4470 = vmatpush1.bf16.msra.mxu0 0
        %4471 = vmatprep.subr.bf16.mxu0 0
        %4472 = vmatpush1.bf16.msra.mxu0 0
        %4473 = vmatprep.subr.bf16.mxu0 0
        %4474 = vmatpush1.bf16.msra.mxu0 0
        %4475 = vmatprep.subr.bf16.mxu0 0
        %4476 = vmatpush1.bf16.msra.mxu0 0
        %4477 = vmatprep.subr.bf16.mxu0 0
        %4478 = vmatpush1.bf16.msra.mxu0 0
        %4479 = vmatprep.subr.bf16.mxu0 0
        %4480 = vmatpush1.bf16.msra.mxu0 0
        %4481 = vmatprep.subr.bf16.mxu0 0
        %4482 = vmatpush1.bf16.msra.mxu0 %v3865
        %4483 = vmatprep.subr.bf16.mxu0 0
        %4484 = vmatpush2.bf16.msra.mxu0 0
        %4485 = vmatprep.subr.bf16.mxu0 0
        %4486 = vmatpush2.bf16.msra.mxu0 0
        %4487 = vmatprep.subr.bf16.mxu0 0
        %4488 = vmatpush2.bf16.msra.mxu0 0
        %4489 = vmatprep.subr.bf16.mxu0 0
        %4490 = vmatpush2.bf16.msra.mxu0 0
        %4491 = vmatprep.subr.bf16.mxu0 0
        %4492 = vmatpush2.bf16.msra.mxu0 0
        %4493 = vmatprep.subr.bf16.mxu0 0
        %4494 = vmatpush2.bf16.msra.mxu0 0
        %4495 = vmatprep.subr.bf16.mxu0 0
        %4496 = vmatpush2.bf16.msra.mxu0 0
        %4497 = vmatprep.subr.bf16.mxu0 0
        %4498 = vmatpush2.bf16.msra.mxu0 0
        %4499 = vmatprep.mubr.bf16.mxu0 0
        %4500 = vmatmul.mubr.bf16.gmra.mxu0 %v4301
        %v4501 = vpop.f32.mrf.mxu0
        %v4502 = vadd.f32 0.0, %v4501
        %v4503 = vpop.f32.mrf.mxu0
        %v4504 = vpop.f32.mrf.mxu0
        %v4505 = vpop.f32.mrf.mxu0
        %4506 = vdwg.mxu0
        %v4507 = vpack.c.bf16 %v4338, %v4338
        %v4508 = vpack.c.bf16 %v4340, %v4340
        %v4509 = vpack.c.bf16 %v4379, %v4379
        %v4510 = vpack.c.bf16 %v4381, %v4381
        %v4511 = vpack.c.bf16 %v4420, %v4420
        %v4512 = vpack.c.bf16 %v4422, %v4422
        %v4513 = vpack.c.bf16 %v4461, %v4461
        %v4514 = vpack.c.bf16 %v4463, %v4463
        %v4515 = vpack.c.bf16 %v4502, %v4502
        %v4516 = vld [vmem:[#allocation11] sm:$0xf]
        %v4517 = vld [vmem:[#allocation11 + $0x4] sm:$0xf]
        %v4518 = vld [vmem:[#allocation11 + $0x8] sm:$0xf]
        %v4519 = vld [vmem:[#allocation11 + $0xc] sm:$0xf]
        %v4520 = vld [vmem:[#allocation11 + $0x10] sm:$0xf]
        %v4521 = vld [vmem:[#allocation11 + $0x14] sm:$0xf]
        %v4522 = vld [vmem:[#allocation11 + $0x18] sm:$0xf]
        %v4523 = vld [vmem:[#allocation11 + $0x1c] sm:$0xf]
        %v4524 = vld [vmem:[#allocation11 + $0x20] sm:$0xf]
        %v4525 = vld [vmem:[#allocation11 + $0x24] sm:$0xf]
        %v4526 = vld [vmem:[#allocation11 + $0x28] sm:$0xf]
        %v4527 = vld [vmem:[#allocation11 + $0x2c] sm:$0xf]
        %v4528 = vld [vmem:[#allocation11 + $0x30] sm:$0xf]
        %v4529 = vld [vmem:[#allocation11 + $0x34] sm:$0xf]
        %v4530 = vld [vmem:[#allocation11 + $0x38] sm:$0xf]
        %v4531 = vld [vmem:[#allocation11 + $0x3c] sm:$0xf]
        %v4532 = vld [vmem:[#allocation11 + $0x40] sm:$0xf]
        %v4533 = vld [vmem:[#allocation11 + $0x44] sm:$0xf]
        %v4534 = vld [vmem:[#allocation11 + $0x48] sm:$0xf]
        %v4535 = vld [vmem:[#allocation11 + $0x4c] sm:$0xf]
        %v4536 = vld [vmem:[#allocation11 + $0x50] sm:$0xf]
        %v4537 = vld [vmem:[#allocation11 + $0x54] sm:$0xf]
        %v4538 = vld [vmem:[#allocation11 + $0x58] sm:$0xf]
        %v4539 = vld [vmem:[#allocation11 + $0x5c] sm:$0xf]
        %v4540 = vld [vmem:[#allocation11 + $0x60] sm:$0xf]
        %v4541 = vld [vmem:[#allocation11 + $0x64] sm:$0xf]
        %v4542 = vld [vmem:[#allocation11 + $0x68] sm:$0xf]
        %v4543 = vld [vmem:[#allocation11 + $0x6c] sm:$0xf]
        %v4544 = vld [vmem:[#allocation11 + $0x70] sm:$0xf]
        %v4545 = vld [vmem:[#allocation11 + $0x74] sm:$0xf]
        %v4546 = vld [vmem:[#allocation11 + $0x78] sm:$0xf]
        %v4547 = vld [vmem:[#allocation11 + $0x7c] sm:$0xf]
        %v4548 = vld [vmem:[#allocation11 + $0x80] sm:$0xf]
        %v4549 = vld [vmem:[#allocation11 + $0x84] sm:$0xf]
        %v4550 = vld [vmem:[#allocation11 + $0x88] sm:$0xf]
        %v4551 = vld [vmem:[#allocation11 + $0x8c] sm:$0xf]
        %v4552 = vld [vmem:[#allocation11 + $0x90] sm:$0xf]
        %v4553 = vld [vmem:[#allocation11 + $0x94] sm:$0xf]
        %v4554 = vld [vmem:[#allocation11 + $0x98] sm:$0xf]
        %v4555 = vld [vmem:[#allocation11 + $0x9c] sm:$0xf]
        %v4556 = vld [vmem:[#allocation11 + $0xa0] sm:$0xf]
        %v4557 = vld [vmem:[#allocation11 + $0xa4] sm:$0xf]
        %v4558 = vld [vmem:[#allocation11 + $0xa8] sm:$0xf]
        %v4559 = vld [vmem:[#allocation11 + $0xac] sm:$0xf]
        %v4560 = vld [vmem:[#allocation11 + $0xb0] sm:$0xf]
        %v4561 = vld [vmem:[#allocation11 + $0xb4] sm:$0xf]
        %v4562 = vld [vmem:[#allocation11 + $0xb8] sm:$0xf]
        %v4563 = vld [vmem:[#allocation11 + $0xbc] sm:$0xf]
        %v4564 = vld [vmem:[#allocation11 + $0xc0] sm:$0xf]
        %v4565 = vld [vmem:[#allocation11 + $0xc4] sm:$0xf]
        %v4566 = vld [vmem:[#allocation11 + $0xc8] sm:$0xf]
        %v4567 = vld [vmem:[#allocation11 + $0xcc] sm:$0xf]
        %v4568 = vld [vmem:[#allocation11 + $0xd0] sm:$0xf]
        %v4569 = vld [vmem:[#allocation11 + $0xd4] sm:$0xf]
        %v4570 = vld [vmem:[#allocation11 + $0xd8] sm:$0xf]
        %v4571 = vld [vmem:[#allocation11 + $0xdc] sm:$0xf]
        %v4572 = vld [vmem:[#allocation11 + $0xe0] sm:$0xf]
        %v4573 = vld [vmem:[#allocation11 + $0xe4] sm:$0xf]
        %v4574 = vld [vmem:[#allocation11 + $0xe8] sm:$0xf]
        %v4575 = vld [vmem:[#allocation11 + $0xec] sm:$0xf]
        %v4576 = vld [vmem:[#allocation11 + $0xf0] sm:$0xf]
        %v4577 = vld [vmem:[#allocation11 + $0xf4] sm:$0xf]
        %v4578 = vld [vmem:[#allocation11 + $0xf8] sm:$0xf]
        %v4579 = vld [vmem:[#allocation11 + $0xfc] sm:$0xf]
        %v4580 = vld [vmem:[#allocation11 + $0x100] sm:$0xf]
        %v4581 = vld [vmem:[#allocation11 + $0x104] sm:$0xf]
        %v4582 = vld [vmem:[#allocation11 + $0x108] sm:$0xf]
        %v4583 = vld [vmem:[#allocation11 + $0x10c] sm:$0xf]
        %v4584 = vld [vmem:[#allocation11 + $0x110] sm:$0xf]
        %v4585 = vld [vmem:[#allocation11 + $0x114] sm:$0xf]
        %v4586 = vld [vmem:[#allocation11 + $0x118] sm:$0xf]
        %v4587 = vld [vmem:[#allocation11 + $0x11c] sm:$0xf]
        %v4588 = vld [vmem:[#allocation11 + $0x120] sm:$0xf]
        %v4589 = vld [vmem:[#allocation11 + $0x124] sm:$0xf]
        %v4590 = vld [vmem:[#allocation11 + $0x128] sm:$0xf]
        %v4591 = vld [vmem:[#allocation11 + $0x12c] sm:$0xf]
        %v4592 = vld [vmem:[#allocation11 + $0x130] sm:$0xf]
        %v4593 = vld [vmem:[#allocation11 + $0x134] sm:$0xf]
        %v4594 = vld [vmem:[#allocation11 + $0x138] sm:$0xf]
        %v4595 = vld [vmem:[#allocation11 + $0x13c] sm:$0xf]
        %v4596 = vld [vmem:[#allocation11 + $0x140] sm:$0xf]
        %v4597 = vld [vmem:[#allocation11 + $0x144] sm:$0xf]
        %v4598 = vld [vmem:[#allocation11 + $0x148] sm:$0xf]
        %v4599 = vld [vmem:[#allocation11 + $0x14c] sm:$0xf]
        %v4600 = vld [vmem:[#allocation11 + $0x150] sm:$0xf]
        %v4601 = vld [vmem:[#allocation11 + $0x154] sm:$0xf]
        %v4602 = vld [vmem:[#allocation11 + $0x158] sm:$0xf]
        %v4603 = vld [vmem:[#allocation11 + $0x15c] sm:$0xf]
        %v4604 = vld [vmem:[#allocation11 + $0x160] sm:$0xf]
        %v4605 = vld [vmem:[#allocation11 + $0x164] sm:$0xf]
        %v4606 = vld [vmem:[#allocation11 + $0x168] sm:$0xf]
        %v4607 = vld [vmem:[#allocation11 + $0x16c] sm:$0xf]
        %v4608 = vld [vmem:[#allocation11 + $0x170] sm:$0xf]
        %v4609 = vld [vmem:[#allocation11 + $0x174] sm:$0xf]
        %v4610 = vld [vmem:[#allocation11 + $0x178] sm:$0xf]
        %v4611 = vld [vmem:[#allocation11 + $0x17c] sm:$0xf]
        %v4612 = vld [vmem:[#allocation11 + $0x180] sm:$0xf]
        %v4613 = vld [vmem:[#allocation11 + $0x184] sm:$0xf]
        %v4614 = vld [vmem:[#allocation11 + $0x188] sm:$0xf]
        %v4615 = vld [vmem:[#allocation11 + $0x18c] sm:$0xf]
        %v4616 = vld [vmem:[#allocation11 + $0x190] sm:$0xf]
        %v4617 = vld [vmem:[#allocation11 + $0x194] sm:$0xf]
        %v4618 = vld [vmem:[#allocation11 + $0x198] sm:$0xf]
        %v4619 = vld [vmem:[#allocation11 + $0x19c] sm:$0xf]
        %v4620 = vld [vmem:[#allocation11 + $0x1a0] sm:$0xf]
        %v4621 = vld [vmem:[#allocation11 + $0x1a4] sm:$0xf]
        %v4622 = vld [vmem:[#allocation11 + $0x1a8] sm:$0xf]
        %v4623 = vld [vmem:[#allocation11 + $0x1ac] sm:$0xf]
        %v4624 = vld [vmem:[#allocation11 + $0x1b0] sm:$0xf]
        %v4625 = vld [vmem:[#allocation11 + $0x1b4] sm:$0xf]
        %v4626 = vld [vmem:[#allocation11 + $0x1b8] sm:$0xf]
        %v4627 = vld [vmem:[#allocation11 + $0x1bc] sm:$0xf]
        %v4628 = vld [vmem:[#allocation11 + $0x1c0] sm:$0xf]
        %v4629 = vld [vmem:[#allocation11 + $0x1c4] sm:$0xf]
        %v4630 = vld [vmem:[#allocation11 + $0x1c8] sm:$0xf]
        %v4631 = vld [vmem:[#allocation11 + $0x1cc] sm:$0xf]
        %v4632 = vld [vmem:[#allocation11 + $0x1d0] sm:$0xf]
        %v4633 = vld [vmem:[#allocation11 + $0x1d4] sm:$0xf]
        %v4634 = vld [vmem:[#allocation11 + $0x1d8] sm:$0xf]
        %v4635 = vld [vmem:[#allocation11 + $0x1dc] sm:$0xf]
        %v4636 = vld [vmem:[#allocation11 + $0x1e0] sm:$0xf]
        %v4637 = vld [vmem:[#allocation11 + $0x1e4] sm:$0xf]
        %v4638 = vld [vmem:[#allocation11 + $0x1e8] sm:$0xf]
        %v4639 = vld [vmem:[#allocation11 + $0x1ec] sm:$0xf]
        %v4640 = vld [vmem:[#allocation11 + $0x1f0] sm:$0xf]
        %v4641 = vld [vmem:[#allocation11 + $0x1f4] sm:$0xf]
        %v4642 = vld [vmem:[#allocation11 + $0x1f8] sm:$0xf]
        %v4643 = vld [vmem:[#allocation11 + $0x1fc] sm:$0xf]
        %v4644 = vld [vmem:[#allocation11 + $0x200] sm:$0xf]
        %v4645 = vld [vmem:[#allocation11 + $0x204] sm:$0xf]
        %v4646 = vld [vmem:[#allocation11 + $0x208] sm:$0xf]
        %v4647 = vld [vmem:[#allocation11 + $0x20c] sm:$0xf]
        %v4648 = vld [vmem:[#allocation11 + $0x210] sm:$0xf]
        %v4649 = vld [vmem:[#allocation11 + $0x214] sm:$0xf]
        %v4650 = vld [vmem:[#allocation11 + $0x218] sm:$0xf]
        %v4651 = vld [vmem:[#allocation11 + $0x21c] sm:$0xf]
        %v4652 = vld [vmem:[#allocation11 + $0x220] sm:$0xf]
        %v4653 = vld [vmem:[#allocation11 + $0x224] sm:$0xf]
        %v4654 = vld [vmem:[#allocation11 + $0x228] sm:$0xf]
        %v4655 = vld [vmem:[#allocation11 + $0x22c] sm:$0xf]
        %v4656 = vld [vmem:[#allocation11 + $0x230] sm:$0xf]
        %v4657 = vld [vmem:[#allocation11 + $0x234] sm:$0xf]
        %v4658 = vld [vmem:[#allocation11 + $0x238] sm:$0xf]
        %v4659 = vld [vmem:[#allocation11 + $0x23c] sm:$0xf]
        %v4660 = vld [vmem:[#allocation11 + $0x240] sm:$0xf]
        %v4661 = vld [vmem:[#allocation11 + $0x244] sm:$0xf]
        %v4662 = vld [vmem:[#allocation11 + $0x248] sm:$0xf]
        %v4663 = vld [vmem:[#allocation11 + $0x24c] sm:$0xf]
        %v4664 = vld [vmem:[#allocation11 + $0x250] sm:$0xf]
        %v4665 = vld [vmem:[#allocation11 + $0x254] sm:$0xf]
        %v4666 = vld [vmem:[#allocation11 + $0x258] sm:$0xf]
        %v4667 = vld [vmem:[#allocation11 + $0x25c] sm:$0xf]
        %v4668 = vld [vmem:[#allocation11 + $0x260] sm:$0xf]
        %v4669 = vld [vmem:[#allocation11 + $0x264] sm:$0xf]
        %v4670 = vld [vmem:[#allocation11 + $0x268] sm:$0xf]
        %v4671 = vld [vmem:[#allocation11 + $0x26c] sm:$0xf]
        %v4672 = vld [vmem:[#allocation11 + $0x270] sm:$0xf]
        %v4673 = vld [vmem:[#allocation11 + $0x274] sm:$0xf]
        %v4674 = vld [vmem:[#allocation11 + $0x278] sm:$0xf]
        %v4675 = vld [vmem:[#allocation11 + $0x27c] sm:$0xf]
        %v4676 = vld [vmem:[#allocation11 + $0x280] sm:$0xf]
        %v4677 = vld [vmem:[#allocation11 + $0x284] sm:$0xf]
        %v4678 = vld [vmem:[#allocation11 + $0x288] sm:$0xf]
        %v4679 = vld [vmem:[#allocation11 + $0x28c] sm:$0xf]
        %v4680 = vld [vmem:[#allocation11 + $0x290] sm:$0xf]
        %v4681 = vld [vmem:[#allocation11 + $0x294] sm:$0xf]
        %v4682 = vld [vmem:[#allocation11 + $0x298] sm:$0xf]
        %v4683 = vld [vmem:[#allocation11 + $0x29c] sm:$0xf]
        %v4684 = vld [vmem:[#allocation11 + $0x2a0] sm:$0xf]
        %v4685 = vld [vmem:[#allocation11 + $0x2a4] sm:$0xf]
        %v4686 = vld [vmem:[#allocation11 + $0x2a8] sm:$0xf]
        %v4687 = vld [vmem:[#allocation11 + $0x2ac] sm:$0xf]
        %v4688 = vld [vmem:[#allocation11 + $0x2b0] sm:$0xf]
        %v4689 = vld [vmem:[#allocation11 + $0x2b4] sm:$0xf]
        %v4690 = vld [vmem:[#allocation11 + $0x2b8] sm:$0xf]
        %v4691 = vld [vmem:[#allocation11 + $0x2bc] sm:$0xf]
        %v4692 = vld [vmem:[#allocation11 + $0x2c0] sm:$0xf]
        %v4693 = vld [vmem:[#allocation11 + $0x2c4] sm:$0xf]
        %v4694 = vld [vmem:[#allocation11 + $0x2c8] sm:$0xf]
        %v4695 = vld [vmem:[#allocation11 + $0x2cc] sm:$0xf]
        %v4696 = vld [vmem:[#allocation11 + $0x2d0] sm:$0xf]
        %v4697 = vld [vmem:[#allocation11 + $0x2d4] sm:$0xf]
        %v4698 = vld [vmem:[#allocation11 + $0x2d8] sm:$0xf]
        %v4699 = vld [vmem:[#allocation11 + $0x2dc] sm:$0xf]
        %v4700 = vld [vmem:[#allocation11 + $0x2e0] sm:$0xf]
        %v4701 = vld [vmem:[#allocation11 + $0x2e4] sm:$0xf]
        %v4702 = vld [vmem:[#allocation11 + $0x2e8] sm:$0xf]
        %v4703 = vld [vmem:[#allocation11 + $0x2ec] sm:$0xf]
        %v4704 = vld [vmem:[#allocation11 + $0x2f0] sm:$0xf]
        %v4705 = vld [vmem:[#allocation11 + $0x2f4] sm:$0xf]
        %v4706 = vld [vmem:[#allocation11 + $0x2f8] sm:$0xf]
        %v4707 = vld [vmem:[#allocation11 + $0x2fc] sm:$0xf]
        %v4708 = vld [vmem:[#allocation11 + $0x300] sm:$0xf]
        %v4709 = vld [vmem:[#allocation11 + $0x304] sm:$0xf]
        %v4710 = vld [vmem:[#allocation11 + $0x308] sm:$0xf]
        %v4711 = vld [vmem:[#allocation11 + $0x30c] sm:$0xf]
        %v4712 = vld [vmem:[#allocation11 + $0x310] sm:$0xf]
        %v4713 = vld [vmem:[#allocation11 + $0x314] sm:$0xf]
        %v4714 = vld [vmem:[#allocation11 + $0x318] sm:$0xf]
        %v4715 = vld [vmem:[#allocation11 + $0x31c] sm:$0xf]
        %v4716 = vld [vmem:[#allocation11 + $0x320] sm:$0xf]
        %v4717 = vld [vmem:[#allocation11 + $0x324] sm:$0xf]
        %v4718 = vld [vmem:[#allocation11 + $0x328] sm:$0xf]
        %v4719 = vld [vmem:[#allocation11 + $0x32c] sm:$0xf]
        %v4720 = vld [vmem:[#allocation11 + $0x330] sm:$0xf]
        %v4721 = vld [vmem:[#allocation11 + $0x334] sm:$0xf]
        %v4722 = vld [vmem:[#allocation11 + $0x338] sm:$0xf]
        %v4723 = vld [vmem:[#allocation11 + $0x33c] sm:$0xf]
        %v4724 = vld [vmem:[#allocation11 + $0x340] sm:$0xf]
        %v4725 = vld [vmem:[#allocation11 + $0x344] sm:$0xf]
        %v4726 = vld [vmem:[#allocation11 + $0x348] sm:$0xf]
        %v4727 = vld [vmem:[#allocation11 + $0x34c] sm:$0xf]
        %v4728 = vld [vmem:[#allocation11 + $0x350] sm:$0xf]
        %v4729 = vld [vmem:[#allocation11 + $0x354] sm:$0xf]
        %v4730 = vld [vmem:[#allocation11 + $0x358] sm:$0xf]
        %v4731 = vld [vmem:[#allocation11 + $0x35c] sm:$0xf]
        %v4732 = vld [vmem:[#allocation11 + $0x360] sm:$0xf]
        %v4733 = vld [vmem:[#allocation11 + $0x364] sm:$0xf]
        %v4734 = vld [vmem:[#allocation11 + $0x368] sm:$0xf]
        %v4735 = vld [vmem:[#allocation11 + $0x36c] sm:$0xf]
        %v4736 = vld [vmem:[#allocation11 + $0x370] sm:$0xf]
        %v4737 = vld [vmem:[#allocation11 + $0x374] sm:$0xf]
        %v4738 = vld [vmem:[#allocation11 + $0x378] sm:$0xf]
        %v4739 = vld [vmem:[#allocation11 + $0x37c] sm:$0xf]
        %v4740 = vld [vmem:[#allocation11 + $0x380] sm:$0xf]
        %v4741 = vld [vmem:[#allocation11 + $0x384] sm:$0xf]
        %v4742 = vld [vmem:[#allocation11 + $0x388] sm:$0xf]
        %v4743 = vld [vmem:[#allocation11 + $0x38c] sm:$0xf]
        %v4744 = vld [vmem:[#allocation11 + $0x390] sm:$0xf]
        %v4745 = vld [vmem:[#allocation11 + $0x394] sm:$0xf]
        %v4746 = vld [vmem:[#allocation11 + $0x398] sm:$0xf]
        %v4747 = vld [vmem:[#allocation11 + $0x39c] sm:$0xf]
        %v4748 = vld [vmem:[#allocation11 + $0x3a0] sm:$0xf]
        %v4749 = vld [vmem:[#allocation11 + $0x3a4] sm:$0xf]
        %v4750 = vld [vmem:[#allocation11 + $0x3a8] sm:$0xf]
        %v4751 = vld [vmem:[#allocation11 + $0x3ac] sm:$0xf]
        %v4752 = vld [vmem:[#allocation11 + $0x3b0] sm:$0xf]
        %v4753 = vld [vmem:[#allocation11 + $0x3b4] sm:$0xf]
        %v4754 = vld [vmem:[#allocation11 + $0x3b8] sm:$0xf]
        %v4755 = vld [vmem:[#allocation11 + $0x3bc] sm:$0xf]
        %v4756 = vld [vmem:[#allocation11 + $0x3c0] sm:$0xf]
        %v4757 = vld [vmem:[#allocation11 + $0x3c4] sm:$0xf]
        %v4758 = vld [vmem:[#allocation11 + $0x3c8] sm:$0xf]
        %v4759 = vld [vmem:[#allocation11 + $0x3cc] sm:$0xf]
        %v4760 = vld [vmem:[#allocation11 + $0x3d0] sm:$0xf]
        %v4761 = vld [vmem:[#allocation11 + $0x3d4] sm:$0xf]
        %v4762 = vld [vmem:[#allocation11 + $0x3d8] sm:$0xf]
        %v4763 = vld [vmem:[#allocation11 + $0x3dc] sm:$0xf]
        %v4764 = vld [vmem:[#allocation11 + $0x3e0] sm:$0xf]
        %v4765 = vld [vmem:[#allocation11 + $0x3e4] sm:$0xf]
        %v4766 = vld [vmem:[#allocation11 + $0x3e8] sm:$0xf]
        %v4767 = vld [vmem:[#allocation11 + $0x3ec] sm:$0xf]
        %v4768 = vld [vmem:[#allocation11 + $0x3f0] sm:$0xf]
        %v4769 = vld [vmem:[#allocation11 + $0x3f4] sm:$0xf]
        %v4770 = vld [vmem:[#allocation11 + $0x3f8] sm:$0xf]
        %v4771 = vld [vmem:[#allocation11 + $0x3fc] sm:$0xf]
        %v4772 = vld [vmem:[#allocation11 + $0x400] sm:$0xf]
        %v4773 = vld [vmem:[#allocation11 + $0x404] sm:$0xf]
        %v4774 = vld [vmem:[#allocation11 + $0x408] sm:$0xf]
        %v4775 = vld [vmem:[#allocation11 + $0x40c] sm:$0xf]
        %v4776 = vld [vmem:[#allocation11 + $0x410] sm:$0xf]
        %v4777 = vld [vmem:[#allocation11 + $0x414] sm:$0xf]
        %v4778 = vld [vmem:[#allocation11 + $0x418] sm:$0xf]
        %v4779 = vld [vmem:[#allocation11 + $0x41c] sm:$0xf]
        %v4780 = vld [vmem:[#allocation11 + $0x420] sm:$0xf]
        %v4781 = vld [vmem:[#allocation11 + $0x424] sm:$0xf]
        %v4782 = vld [vmem:[#allocation11 + $0x428] sm:$0xf]
        %v4783 = vld [vmem:[#allocation11 + $0x42c] sm:$0xf]
        %v4784 = vld [vmem:[#allocation11 + $0x430] sm:$0xf]
        %v4785 = vld [vmem:[#allocation11 + $0x434] sm:$0xf]
        %v4786 = vld [vmem:[#allocation11 + $0x438] sm:$0xf]
        %v4787 = vld [vmem:[#allocation11 + $0x43c] sm:$0xf]
        %v4788 = vld [vmem:[#allocation11 + $0x440] sm:$0xf]
        %v4789 = vld [vmem:[#allocation11 + $0x444] sm:$0xf]
        %v4790 = vld [vmem:[#allocation11 + $0x448] sm:$0xf]
        %v4791 = vld [vmem:[#allocation11 + $0x44c] sm:$0xf]
        %v4792 = vld [vmem:[#allocation11 + $0x450] sm:$0xf]
        %v4793 = vld [vmem:[#allocation11 + $0x454] sm:$0xf]
        %v4794 = vld [vmem:[#allocation11 + $0x458] sm:$0xf]
        %v4795 = vld [vmem:[#allocation11 + $0x45c] sm:$0xf]
        %v4796 = vld [vmem:[#allocation11 + $0x460] sm:$0xf]
        %v4797 = vld [vmem:[#allocation11 + $0x464] sm:$0xf]
        %v4798 = vld [vmem:[#allocation11 + $0x468] sm:$0xf]
        %v4799 = vld [vmem:[#allocation11 + $0x46c] sm:$0xf]
        %v4800 = vld [vmem:[#allocation11 + $0x470] sm:$0xf]
        %v4801 = vld [vmem:[#allocation11 + $0x474] sm:$0xf]
        %v4802 = vld [vmem:[#allocation11 + $0x478] sm:$0xf]
        %v4803 = vld [vmem:[#allocation11 + $0x47c] sm:$0xf]
        %v4804 = vld [vmem:[#allocation11 + $0x480] sm:$0xf]
        %v4805 = vld [vmem:[#allocation11 + $0x484] sm:$0xf]
        %v4806 = vld [vmem:[#allocation11 + $0x488] sm:$0xf]
        %v4807 = vld [vmem:[#allocation11 + $0x48c] sm:$0xf]
        %v4808 = vld [vmem:[#allocation11 + $0x490] sm:$0xf]
        %v4809 = vld [vmem:[#allocation11 + $0x494] sm:$0xf]
        %v4810 = vld [vmem:[#allocation11 + $0x498] sm:$0xf]
        %v4811 = vld [vmem:[#allocation11 + $0x49c] sm:$0xf]
        %v4812 = vld [vmem:[#allocation11 + $0x4a0] sm:$0xf]
        %v4813 = vld [vmem:[#allocation11 + $0x4a4] sm:$0xf]
        %v4814 = vld [vmem:[#allocation11 + $0x4a8] sm:$0xf]
        %v4815 = vld [vmem:[#allocation11 + $0x4ac] sm:$0xf]
        %v4816 = vld [vmem:[#allocation11 + $0x4b0] sm:$0xf]
        %v4817 = vld [vmem:[#allocation11 + $0x4b4] sm:$0xf]
        %v4818 = vld [vmem:[#allocation11 + $0x4b8] sm:$0xf]
        %v4819 = vld [vmem:[#allocation11 + $0x4bc] sm:$0xf]
        %v4820 = vld [vmem:[#allocation11 + $0x4c0] sm:$0xf]
        %v4821 = vld [vmem:[#allocation11 + $0x4c4] sm:$0xf]
        %v4822 = vld [vmem:[#allocation11 + $0x4c8] sm:$0xf]
        %v4823 = vld [vmem:[#allocation11 + $0x4cc] sm:$0xf]
        %v4824 = vld [vmem:[#allocation11 + $0x4d0] sm:$0xf]
        %v4825 = vld [vmem:[#allocation11 + $0x4d4] sm:$0xf]
        %v4826 = vld [vmem:[#allocation11 + $0x4d8] sm:$0xf]
        %v4827 = vld [vmem:[#allocation11 + $0x4dc] sm:$0xf]
        %v4828 = vld [vmem:[#allocation11 + $0x4e0] sm:$0xf]
        %v4829 = vld [vmem:[#allocation11 + $0x4e4] sm:$0xf]
        %v4830 = vld [vmem:[#allocation11 + $0x4e8] sm:$0xf]
        %v4831 = vld [vmem:[#allocation11 + $0x4ec] sm:$0xf]
        %v4832 = vld [vmem:[#allocation11 + $0x4f0] sm:$0xf]
        %v4833 = vld [vmem:[#allocation11 + $0x4f4] sm:$0xf]
        %v4834 = vld [vmem:[#allocation11 + $0x4f8] sm:$0xf]
        %v4835 = vld [vmem:[#allocation11 + $0x4fc] sm:$0xf]
        %v4836 = vld [vmem:[#allocation11 + $0x500] sm:$0xf]
        %v4837 = vld [vmem:[#allocation11 + $0x504] sm:$0xf]
        %v4838 = vld [vmem:[#allocation11 + $0x508] sm:$0xf]
        %v4839 = vld [vmem:[#allocation11 + $0x50c] sm:$0xf]
        %v4840 = vld [vmem:[#allocation11 + $0x510] sm:$0xf]
        %v4841 = vld [vmem:[#allocation11 + $0x514] sm:$0xf]
        %v4842 = vld [vmem:[#allocation11 + $0x518] sm:$0xf]
        %v4843 = vld [vmem:[#allocation11 + $0x51c] sm:$0xf]
        %v4844 = vld [vmem:[#allocation11 + $0x520] sm:$0xf]
        %v4845 = vld [vmem:[#allocation11 + $0x524] sm:$0xf]
        %v4846 = vld [vmem:[#allocation11 + $0x528] sm:$0xf]
        %v4847 = vld [vmem:[#allocation11 + $0x52c] sm:$0xf]
        %v4848 = vld [vmem:[#allocation11 + $0x530] sm:$0xf]
        %v4849 = vld [vmem:[#allocation11 + $0x534] sm:$0xf]
        %v4850 = vld [vmem:[#allocation11 + $0x538] sm:$0xf]
        %v4851 = vld [vmem:[#allocation11 + $0x53c] sm:$0xf]
        %v4852 = vld [vmem:[#allocation11 + $0x540] sm:$0xf]
        %v4853 = vld [vmem:[#allocation11 + $0x544] sm:$0xf]
        %v4854 = vld [vmem:[#allocation11 + $0x548] sm:$0xf]
        %v4855 = vld [vmem:[#allocation11 + $0x54c] sm:$0xf]
        %v4856 = vld [vmem:[#allocation11 + $0x550] sm:$0xf]
        %v4857 = vld [vmem:[#allocation11 + $0x554] sm:$0xf]
        %v4858 = vld [vmem:[#allocation11 + $0x558] sm:$0xf]
        %v4859 = vld [vmem:[#allocation11 + $0x55c] sm:$0xf]
        %v4860 = vld [vmem:[#allocation11 + $0x560] sm:$0xf]
        %v4861 = vld [vmem:[#allocation11 + $0x564] sm:$0xf]
        %v4862 = vld [vmem:[#allocation11 + $0x568] sm:$0xf]
        %v4863 = vld [vmem:[#allocation11 + $0x56c] sm:$0xf]
        %v4864 = vld [vmem:[#allocation11 + $0x570] sm:$0xf]
        %v4865 = vld [vmem:[#allocation11 + $0x574] sm:$0xf]
        %v4866 = vld [vmem:[#allocation11 + $0x578] sm:$0xf]
        %v4867 = vld [vmem:[#allocation11 + $0x57c] sm:$0xf]
        %v4868 = vld [vmem:[#allocation11 + $0x580] sm:$0xf]
        %v4869 = vld [vmem:[#allocation11 + $0x584] sm:$0xf]
        %v4870 = vld [vmem:[#allocation11 + $0x588] sm:$0xf]
        %v4871 = vld [vmem:[#allocation11 + $0x58c] sm:$0xf]
        %v4872 = vld [vmem:[#allocation11 + $0x590] sm:$0xf]
        %v4873 = vld [vmem:[#allocation11 + $0x594] sm:$0xf]
        %v4874 = vld [vmem:[#allocation11 + $0x598] sm:$0xf]
        %v4875 = vld [vmem:[#allocation11 + $0x59c] sm:$0xf]
        %v4876 = vld [vmem:[#allocation11 + $0x5a0] sm:$0xf]
        %v4877 = vld [vmem:[#allocation11 + $0x5a4] sm:$0xf]
        %v4878 = vld [vmem:[#allocation11 + $0x5a8] sm:$0xf]
        %v4879 = vld [vmem:[#allocation11 + $0x5ac] sm:$0xf]
        %v4880 = vld [vmem:[#allocation11 + $0x5b0] sm:$0xf]
        %v4881 = vld [vmem:[#allocation11 + $0x5b4] sm:$0xf]
        %v4882 = vld [vmem:[#allocation11 + $0x5b8] sm:$0xf]
        %v4883 = vld [vmem:[#allocation11 + $0x5bc] sm:$0xf]
        %v4884 = vld [vmem:[#allocation11 + $0x5c0] sm:$0xf]
        %v4885 = vld [vmem:[#allocation11 + $0x5c4] sm:$0xf]
        %v4886 = vld [vmem:[#allocation11 + $0x5c8] sm:$0xf]
        %v4887 = vld [vmem:[#allocation11 + $0x5cc] sm:$0xf]
        %v4888 = vld [vmem:[#allocation11 + $0x5d0] sm:$0xf]
        %v4889 = vld [vmem:[#allocation11 + $0x5d4] sm:$0xf]
        %v4890 = vld [vmem:[#allocation11 + $0x5d8] sm:$0xf]
        %v4891 = vld [vmem:[#allocation11 + $0x5dc] sm:$0xf]
        %v4892 = vld [vmem:[#allocation11 + $0x5e0] sm:$0xf]
        %v4893 = vld [vmem:[#allocation11 + $0x5e4] sm:$0xf]
        %v4894 = vld [vmem:[#allocation11 + $0x5e8] sm:$0xf]
        %v4895 = vld [vmem:[#allocation11 + $0x5ec] sm:$0xf]
        %v4896 = vld [vmem:[#allocation11 + $0x5f0] sm:$0xf]
        %v4897 = vld [vmem:[#allocation11 + $0x5f4] sm:$0xf]
        %v4898 = vld [vmem:[#allocation11 + $0x5f8] sm:$0xf]
        %v4899 = vld [vmem:[#allocation11 + $0x5fc] sm:$0xf]
        %v4900 = vld [vmem:[#allocation11 + $0x600] sm:$0xf]
        %v4901 = vld [vmem:[#allocation11 + $0x604] sm:$0xf]
        %v4902 = vld [vmem:[#allocation11 + $0x608] sm:$0xf]
        %v4903 = vld [vmem:[#allocation11 + $0x60c] sm:$0xf]
        %v4904 = vld [vmem:[#allocation11 + $0x610] sm:$0xf]
        %v4905 = vld [vmem:[#allocation11 + $0x614] sm:$0xf]
        %v4906 = vld [vmem:[#allocation11 + $0x618] sm:$0xf]
        %v4907 = vld [vmem:[#allocation11 + $0x61c] sm:$0xf]
        %v4908 = vld [vmem:[#allocation11 + $0x620] sm:$0xf]
        %v4909 = vld [vmem:[#allocation11 + $0x624] sm:$0xf]
        %v4910 = vld [vmem:[#allocation11 + $0x628] sm:$0xf]
        %v4911 = vld [vmem:[#allocation11 + $0x62c] sm:$0xf]
        %v4912 = vld [vmem:[#allocation11 + $0x630] sm:$0xf]
        %v4913 = vld [vmem:[#allocation11 + $0x634] sm:$0xf]
        %v4914 = vld [vmem:[#allocation11 + $0x638] sm:$0xf]
        %v4915 = vld [vmem:[#allocation11 + $0x63c] sm:$0xf]
        %v4916 = vld [vmem:[#allocation11 + $0x640] sm:$0xf]
        %v4917 = vld [vmem:[#allocation11 + $0x644] sm:$0xf]
        %v4918 = vld [vmem:[#allocation11 + $0x648] sm:$0xf]
        %v4919 = vld [vmem:[#allocation11 + $0x64c] sm:$0xf]
        %v4920 = vld [vmem:[#allocation11 + $0x650] sm:$0xf]
        %v4921 = vld [vmem:[#allocation11 + $0x654] sm:$0xf]
        %v4922 = vld [vmem:[#allocation11 + $0x658] sm:$0xf]
        %v4923 = vld [vmem:[#allocation11 + $0x65c] sm:$0xf]
        %v4924 = vld [vmem:[#allocation11 + $0x660] sm:$0xf]
        %v4925 = vld [vmem:[#allocation11 + $0x664] sm:$0xf]
        %v4926 = vld [vmem:[#allocation11 + $0x668] sm:$0xf]
        %v4927 = vld [vmem:[#allocation11 + $0x66c] sm:$0xf]
        %v4928 = vld [vmem:[#allocation11 + $0x670] sm:$0xf]
        %v4929 = vld [vmem:[#allocation11 + $0x674] sm:$0xf]
        %v4930 = vld [vmem:[#allocation11 + $0x678] sm:$0xf]
        %v4931 = vld [vmem:[#allocation11 + $0x67c] sm:$0xf]
        %v4932 = vld [vmem:[#allocation11 + $0x680] sm:$0xf]
        %v4933 = vld [vmem:[#allocation11 + $0x684] sm:$0xf]
        %v4934 = vld [vmem:[#allocation11 + $0x688] sm:$0xf]
        %v4935 = vld [vmem:[#allocation11 + $0x68c] sm:$0xf]
        %v4936 = vld [vmem:[#allocation11 + $0x690] sm:$0xf]
        %v4937 = vld [vmem:[#allocation11 + $0x694] sm:$0xf]
        %v4938 = vld [vmem:[#allocation11 + $0x698] sm:$0xf]
        %v4939 = vld [vmem:[#allocation11 + $0x69c] sm:$0xf]
        %v4940 = vld [vmem:[#allocation11 + $0x6a0] sm:$0xf]
        %v4941 = vld [vmem:[#allocation11 + $0x6a4] sm:$0xf]
        %v4942 = vld [vmem:[#allocation11 + $0x6a8] sm:$0xf]
        %v4943 = vld [vmem:[#allocation11 + $0x6ac] sm:$0xf]
        %v4944 = vld [vmem:[#allocation11 + $0x6b0] sm:$0xf]
        %v4945 = vld [vmem:[#allocation11 + $0x6b4] sm:$0xf]
        %v4946 = vld [vmem:[#allocation11 + $0x6b8] sm:$0xf]
        %v4947 = vld [vmem:[#allocation11 + $0x6bc] sm:$0xf]
        %v4948 = vld [vmem:[#allocation13] sm:$0x1]
        %v4950 = vlaneseq
        %v4951 = vshrl.u32 %v4950, 7
        %v4952 = vsub.s32 0, %v4951
        %v4953 = vrot.slane %v4948, %v4952
        %v5387 = vunpack.c.l.b16 %v4516
        %v5388 = vunpack.c.l.b16 %v4517
        %v5389 = vunpack.c.l.b16 %v4518
        %v5390 = vunpack.c.l.b16 %v4519
        %v5391 = vunpack.c.l.b16 %v4520
        %v5392 = vunpack.c.l.b16 %v4521
        %v5393 = vunpack.c.l.b16 %v4522
        %v5394 = vunpack.c.l.b16 %v4523
        %v5395 = vunpack.c.l.b16 %v4524
        %v5396 = vunpack.c.l.b16 %v4525
        %v5397 = vunpack.c.l.b16 %v4526
        %v5398 = vunpack.c.l.b16 %v4527
        %v5399 = vunpack.c.l.b16 %v4528
        %v5400 = vunpack.c.l.b16 %v4529
        %v5401 = vunpack.c.l.b16 %v4530
        %v5402 = vunpack.c.l.b16 %v4531
        %v5403 = vunpack.c.l.b16 %v4532
        %v5404 = vunpack.c.l.b16 %v4533
        %v5405 = vunpack.c.l.b16 %v4534
        %v5406 = vunpack.c.l.b16 %v4535
        %v5407 = vunpack.c.l.b16 %v4536
        %v5408 = vunpack.c.l.b16 %v4537
        %v5409 = vunpack.c.l.b16 %v4538
        %v5410 = vunpack.c.l.b16 %v4539
        %v5411 = vunpack.c.l.b16 %v4540
        %v5412 = vunpack.c.l.b16 %v4541
        %v5413 = vunpack.c.l.b16 %v4542
        %v5414 = vunpack.c.l.b16 %v4543
        %v5415 = vunpack.c.l.b16 %v4544
        %v5416 = vunpack.c.l.b16 %v4545
        %v5417 = vunpack.c.l.b16 %v4546
        %v5418 = vunpack.c.l.b16 %v4547
        %v5419 = vunpack.c.l.b16 %v4548
        %v5420 = vunpack.c.l.b16 %v4549
        %v5421 = vunpack.c.l.b16 %v4550
        %v5422 = vunpack.c.l.b16 %v4551
        %v5423 = vunpack.c.l.b16 %v4552
        %v5424 = vunpack.c.l.b16 %v4553
        %v5425 = vunpack.c.l.b16 %v4554
        %v5426 = vunpack.c.l.b16 %v4555
        %v5427 = vunpack.c.l.b16 %v4556
        %v5428 = vunpack.c.l.b16 %v4557
        %v5429 = vunpack.c.l.b16 %v4558
        %v5430 = vunpack.c.l.b16 %v4559
        %v5431 = vunpack.c.l.b16 %v4560
        %v5432 = vunpack.c.l.b16 %v4561
        %v5433 = vunpack.c.l.b16 %v4562
        %v5434 = vunpack.c.l.b16 %v4563
        %v5435 = vunpack.c.l.b16 %v4564
        %v5436 = vunpack.c.l.b16 %v4565
        %v5437 = vunpack.c.l.b16 %v4566
        %v5438 = vunpack.c.l.b16 %v4567
        %v5439 = vunpack.c.l.b16 %v4568
        %v5440 = vunpack.c.l.b16 %v4569
        %v5441 = vunpack.c.l.b16 %v4570
        %v5442 = vunpack.c.l.b16 %v4571
        %v5443 = vunpack.c.l.b16 %v4572
        %v5444 = vunpack.c.l.b16 %v4573
        %v5445 = vunpack.c.l.b16 %v4574
        %v5446 = vunpack.c.l.b16 %v4575
        %v5447 = vunpack.c.l.b16 %v4576
        %v5448 = vunpack.c.l.b16 %v4577
        %v5449 = vunpack.c.l.b16 %v4578
        %v5450 = vunpack.c.l.b16 %v4579
        %v5451 = vunpack.c.l.b16 %v4580
        %v5452 = vunpack.c.l.b16 %v4581
        %v5453 = vunpack.c.l.b16 %v4582
        %v5454 = vunpack.c.l.b16 %v4583
        %v5455 = vunpack.c.l.b16 %v4584
        %v5456 = vunpack.c.l.b16 %v4585
        %v5457 = vunpack.c.l.b16 %v4586
        %v5458 = vunpack.c.l.b16 %v4587
        %v5459 = vunpack.c.l.b16 %v4588
        %v5460 = vunpack.c.l.b16 %v4589
        %v5461 = vunpack.c.l.b16 %v4590
        %v5462 = vunpack.c.l.b16 %v4591
        %v5463 = vunpack.c.l.b16 %v4592
        %v5464 = vunpack.c.l.b16 %v4593
        %v5465 = vunpack.c.l.b16 %v4594
        %v5466 = vunpack.c.l.b16 %v4595
        %v5467 = vunpack.c.l.b16 %v4596
        %v5468 = vunpack.c.l.b16 %v4597
        %v5469 = vunpack.c.l.b16 %v4598
        %v5470 = vunpack.c.l.b16 %v4599
        %v5471 = vunpack.c.l.b16 %v4600
        %v5472 = vunpack.c.l.b16 %v4601
        %v5473 = vunpack.c.l.b16 %v4602
        %v5474 = vunpack.c.l.b16 %v4603
        %v5475 = vunpack.c.l.b16 %v4604
        %v5476 = vunpack.c.l.b16 %v4605
        %v5477 = vunpack.c.l.b16 %v4606
        %v5478 = vunpack.c.l.b16 %v4607
        %v5479 = vunpack.c.l.b16 %v4608
        %v5480 = vunpack.c.l.b16 %v4609
        %v5481 = vunpack.c.l.b16 %v4610
        %v5482 = vunpack.c.l.b16 %v4611
        %v5483 = vunpack.c.l.b16 %v4612
        %v5484 = vunpack.c.l.b16 %v4613
        %v5485 = vunpack.c.l.b16 %v4614
        %v5486 = vunpack.c.l.b16 %v4615
        %v5487 = vunpack.c.l.b16 %v4616
        %v5488 = vunpack.c.l.b16 %v4617
        %v5489 = vunpack.c.l.b16 %v4618
        %v5490 = vunpack.c.l.b16 %v4619
        %v5491 = vunpack.c.l.b16 %v4620
        %v5492 = vunpack.c.l.b16 %v4621
        %v5493 = vunpack.c.l.b16 %v4622
        %v5494 = vunpack.c.l.b16 %v4623
        %v5495 = vunpack.c.l.b16 %v4624
        %v5496 = vunpack.c.l.b16 %v4625
        %v5497 = vunpack.c.l.b16 %v4626
        %v5498 = vunpack.c.l.b16 %v4627
        %v5499 = vunpack.c.l.b16 %v4628
        %v5500 = vunpack.c.l.b16 %v4629
        %v5501 = vunpack.c.l.b16 %v4630
        %v5502 = vunpack.c.l.b16 %v4631
        %v5503 = vunpack.c.l.b16 %v4632
        %v5504 = vunpack.c.l.b16 %v4633
        %v5505 = vunpack.c.l.b16 %v4634
        %v5506 = vunpack.c.l.b16 %v4635
        %v5507 = vunpack.c.l.b16 %v4636
        %v5508 = vunpack.c.l.b16 %v4637
        %v5509 = vunpack.c.l.b16 %v4638
        %v5510 = vunpack.c.l.b16 %v4639
        %v5511 = vunpack.c.l.b16 %v4640
        %v5512 = vunpack.c.l.b16 %v4641
        %v5513 = vunpack.c.l.b16 %v4642
        %v5514 = vunpack.c.l.b16 %v4643
        %v5515 = vunpack.c.l.b16 %v4644
        %v5516 = vunpack.c.l.b16 %v4645
        %v5517 = vunpack.c.l.b16 %v4646
        %v5518 = vunpack.c.l.b16 %v4647
        %v5519 = vunpack.c.l.b16 %v4648
        %v5520 = vunpack.c.l.b16 %v4649
        %v5521 = vunpack.c.l.b16 %v4650
        %v5522 = vunpack.c.l.b16 %v4651
        %v5523 = vunpack.c.l.b16 %v4652
        %v5524 = vunpack.c.l.b16 %v4653
        %v5525 = vunpack.c.l.b16 %v4654
        %v5526 = vunpack.c.l.b16 %v4655
        %v5527 = vunpack.c.l.b16 %v4656
        %v5528 = vunpack.c.l.b16 %v4657
        %v5529 = vunpack.c.l.b16 %v4658
        %v5530 = vunpack.c.l.b16 %v4659
        %v5531 = vunpack.c.l.b16 %v4660
        %v5532 = vunpack.c.l.b16 %v4661
        %v5533 = vunpack.c.l.b16 %v4662
        %v5534 = vunpack.c.l.b16 %v4663
        %v5535 = vunpack.c.l.b16 %v4664
        %v5536 = vunpack.c.l.b16 %v4665
        %v5537 = vunpack.c.l.b16 %v4666
        %v5538 = vunpack.c.l.b16 %v4667
        %v5539 = vunpack.c.l.b16 %v4668
        %v5540 = vunpack.c.l.b16 %v4669
        %v5541 = vunpack.c.l.b16 %v4670
        %v5542 = vunpack.c.l.b16 %v4671
        %v5543 = vunpack.c.l.b16 %v4672
        %v5544 = vunpack.c.l.b16 %v4673
        %v5545 = vunpack.c.l.b16 %v4674
        %v5546 = vunpack.c.l.b16 %v4675
        %v5547 = vunpack.c.l.b16 %v4676
        %v5548 = vunpack.c.l.b16 %v4677
        %v5549 = vunpack.c.l.b16 %v4678
        %v5550 = vunpack.c.l.b16 %v4679
        %v5551 = vunpack.c.l.b16 %v4680
        %v5552 = vunpack.c.l.b16 %v4681
        %v5553 = vunpack.c.l.b16 %v4682
        %v5554 = vunpack.c.l.b16 %v4683
        %v5555 = vunpack.c.l.b16 %v4684
        %v5556 = vunpack.c.l.b16 %v4685
        %v5557 = vunpack.c.l.b16 %v4686
        %v5558 = vunpack.c.l.b16 %v4687
        %v5559 = vunpack.c.l.b16 %v4688
        %v5560 = vunpack.c.l.b16 %v4689
        %v5561 = vunpack.c.l.b16 %v4690
        %v5562 = vunpack.c.l.b16 %v4691
        %v5563 = vunpack.c.l.b16 %v4692
        %v5564 = vunpack.c.l.b16 %v4693
        %v5565 = vunpack.c.l.b16 %v4694
        %v5566 = vunpack.c.l.b16 %v4695
        %v5567 = vunpack.c.l.b16 %v4696
        %v5568 = vunpack.c.l.b16 %v4697
        %v5569 = vunpack.c.l.b16 %v4698
        %v5570 = vunpack.c.l.b16 %v4699
        %v5571 = vunpack.c.l.b16 %v4700
        %v5572 = vunpack.c.l.b16 %v4701
        %v5573 = vunpack.c.l.b16 %v4702
        %v5574 = vunpack.c.l.b16 %v4703
        %v5575 = vunpack.c.l.b16 %v4704
        %v5576 = vunpack.c.l.b16 %v4705
        %v5577 = vunpack.c.l.b16 %v4706
        %v5578 = vunpack.c.l.b16 %v4707
        %v5579 = vunpack.c.l.b16 %v4708
        %v5580 = vunpack.c.l.b16 %v4709
        %v5581 = vunpack.c.l.b16 %v4710
        %v5582 = vunpack.c.l.b16 %v4711
        %v5583 = vunpack.c.l.b16 %v4712
        %v5584 = vunpack.c.l.b16 %v4713
        %v5585 = vunpack.c.l.b16 %v4714
        %v5586 = vunpack.c.l.b16 %v4715
        %v5587 = vunpack.c.l.b16 %v4716
        %v5588 = vunpack.c.l.b16 %v4717
        %v5589 = vunpack.c.l.b16 %v4718
        %v5590 = vunpack.c.l.b16 %v4719
        %v5591 = vunpack.c.l.b16 %v4720
        %v5592 = vunpack.c.l.b16 %v4721
        %v5593 = vunpack.c.l.b16 %v4722
        %v5594 = vunpack.c.l.b16 %v4723
        %v5595 = vunpack.c.l.b16 %v4724
        %v5596 = vunpack.c.l.b16 %v4725
        %v5597 = vunpack.c.l.b16 %v4726
        %v5598 = vunpack.c.l.b16 %v4727
        %v5599 = vunpack.c.l.b16 %v4728
        %v5600 = vunpack.c.l.b16 %v4729
        %v5601 = vunpack.c.l.b16 %v4730
        %v5602 = vunpack.c.l.b16 %v4731
        %v5603 = vunpack.c.l.b16 %v4732
        %v5604 = vunpack.c.l.b16 %v4733
        %v5605 = vunpack.c.l.b16 %v4734
        %v5606 = vunpack.c.l.b16 %v4735
        %v5607 = vunpack.c.l.b16 %v4736
        %v5608 = vunpack.c.l.b16 %v4737
        %v5609 = vunpack.c.l.b16 %v4738
        %v5610 = vunpack.c.l.b16 %v4739
        %v5611 = vunpack.c.l.b16 %v4740
        %v5612 = vunpack.c.l.b16 %v4741
        %v5613 = vunpack.c.l.b16 %v4742
        %v5614 = vunpack.c.l.b16 %v4743
        %v5615 = vunpack.c.l.b16 %v4744
        %v5616 = vunpack.c.l.b16 %v4745
        %v5617 = vunpack.c.l.b16 %v4746
        %v5618 = vunpack.c.l.b16 %v4747
        %v5619 = vunpack.c.l.b16 %v4748
        %v5620 = vunpack.c.l.b16 %v4749
        %v5621 = vunpack.c.l.b16 %v4750
        %v5622 = vunpack.c.l.b16 %v4751
        %v5623 = vunpack.c.l.b16 %v4752
        %v5624 = vunpack.c.l.b16 %v4753
        %v5625 = vunpack.c.l.b16 %v4754
        %v5626 = vunpack.c.l.b16 %v4755
        %v5627 = vunpack.c.l.b16 %v4756
        %v5628 = vunpack.c.l.b16 %v4757
        %v5629 = vunpack.c.l.b16 %v4758
        %v5630 = vunpack.c.l.b16 %v4759
        %v5631 = vunpack.c.l.b16 %v4760
        %v5632 = vunpack.c.l.b16 %v4761
        %v5633 = vunpack.c.l.b16 %v4762
        %v5634 = vunpack.c.l.b16 %v4763
        %v5635 = vunpack.c.l.b16 %v4764
        %v5636 = vunpack.c.l.b16 %v4765
        %v5637 = vunpack.c.l.b16 %v4766
        %v5638 = vunpack.c.l.b16 %v4767
        %v5639 = vunpack.c.l.b16 %v4768
        %v5640 = vunpack.c.l.b16 %v4769
        %v5641 = vunpack.c.l.b16 %v4770
        %v5642 = vunpack.c.l.b16 %v4771
        %v5643 = vunpack.c.l.b16 %v4772
        %v5644 = vunpack.c.l.b16 %v4773
        %v5645 = vunpack.c.l.b16 %v4774
        %v5646 = vunpack.c.l.b16 %v4775
        %v5647 = vunpack.c.l.b16 %v4776
        %v5648 = vunpack.c.l.b16 %v4777
        %v5649 = vunpack.c.l.b16 %v4778
        %v5650 = vunpack.c.l.b16 %v4779
        %v5651 = vunpack.c.l.b16 %v4780
        %v5652 = vunpack.c.l.b16 %v4781
        %v5653 = vunpack.c.l.b16 %v4782
        %v5654 = vunpack.c.l.b16 %v4783
        %v5655 = vunpack.c.l.b16 %v4784
        %v5656 = vunpack.c.l.b16 %v4785
        %v5657 = vunpack.c.l.b16 %v4786
        %v5658 = vunpack.c.l.b16 %v4787
        %v5659 = vunpack.c.l.b16 %v4788
        %v5660 = vunpack.c.l.b16 %v4789
        %v5661 = vunpack.c.l.b16 %v4790
        %v5662 = vunpack.c.l.b16 %v4791
        %v5663 = vunpack.c.l.b16 %v4792
        %v5664 = vunpack.c.l.b16 %v4793
        %v5665 = vunpack.c.l.b16 %v4794
        %v5666 = vunpack.c.l.b16 %v4795
        %v5667 = vunpack.c.l.b16 %v4796
        %v5668 = vunpack.c.l.b16 %v4797
        %v5669 = vunpack.c.l.b16 %v4798
        %v5670 = vunpack.c.l.b16 %v4799
        %v5671 = vunpack.c.l.b16 %v4800
        %v5672 = vunpack.c.l.b16 %v4801
        %v5673 = vunpack.c.l.b16 %v4802
        %v5674 = vunpack.c.l.b16 %v4803
        %v5675 = vunpack.c.l.b16 %v4804
        %v5676 = vunpack.c.l.b16 %v4805
        %v5677 = vunpack.c.l.b16 %v4806
        %v5678 = vunpack.c.l.b16 %v4807
        %v5679 = vunpack.c.l.b16 %v4808
        %v5680 = vunpack.c.l.b16 %v4809
        %v5681 = vunpack.c.l.b16 %v4810
        %v5682 = vunpack.c.l.b16 %v4811
        %v5683 = vunpack.c.l.b16 %v4812
        %v5684 = vunpack.c.l.b16 %v4813
        %v5685 = vunpack.c.l.b16 %v4814
        %v5686 = vunpack.c.l.b16 %v4815
        %v5687 = vunpack.c.l.b16 %v4816
        %v5688 = vunpack.c.l.b16 %v4817
        %v5689 = vunpack.c.l.b16 %v4818
        %v5690 = vunpack.c.l.b16 %v4819
        %v5691 = vunpack.c.l.b16 %v4820
        %v5692 = vunpack.c.l.b16 %v4821
        %v5693 = vunpack.c.l.b16 %v4822
        %v5694 = vunpack.c.l.b16 %v4823
        %v5695 = vunpack.c.l.b16 %v4824
        %v5696 = vunpack.c.l.b16 %v4825
        %v5697 = vunpack.c.l.b16 %v4826
        %v5698 = vunpack.c.l.b16 %v4827
        %v5699 = vunpack.c.l.b16 %v4828
        %v5700 = vunpack.c.l.b16 %v4829
        %v5701 = vunpack.c.l.b16 %v4830
        %v5702 = vunpack.c.l.b16 %v4831
        %v5703 = vunpack.c.l.b16 %v4832
        %v5704 = vunpack.c.l.b16 %v4833
        %v5705 = vunpack.c.l.b16 %v4834
        %v5706 = vunpack.c.l.b16 %v4835
        %v5707 = vunpack.c.l.b16 %v4836
        %v5708 = vunpack.c.l.b16 %v4837
        %v5709 = vunpack.c.l.b16 %v4838
        %v5710 = vunpack.c.l.b16 %v4839
        %v5711 = vunpack.c.l.b16 %v4840
        %v5712 = vunpack.c.l.b16 %v4841
        %v5713 = vunpack.c.l.b16 %v4842
        %v5714 = vunpack.c.l.b16 %v4843
        %v5715 = vunpack.c.l.b16 %v4844
        %v5716 = vunpack.c.l.b16 %v4845
        %v5717 = vunpack.c.l.b16 %v4846
        %v5718 = vunpack.c.l.b16 %v4847
        %v5719 = vunpack.c.l.b16 %v4848
        %v5720 = vunpack.c.l.b16 %v4849
        %v5721 = vunpack.c.l.b16 %v4850
        %v5722 = vunpack.c.l.b16 %v4851
        %v5723 = vunpack.c.l.b16 %v4852
        %v5724 = vunpack.c.l.b16 %v4853
        %v5725 = vunpack.c.l.b16 %v4854
        %v5726 = vunpack.c.l.b16 %v4855
        %v5727 = vunpack.c.l.b16 %v4856
        %v5728 = vunpack.c.l.b16 %v4857
        %v5729 = vunpack.c.l.b16 %v4858
        %v5730 = vunpack.c.l.b16 %v4859
        %v5731 = vunpack.c.l.b16 %v4860
        %v5732 = vunpack.c.l.b16 %v4861
        %v5733 = vunpack.c.l.b16 %v4862
        %v5734 = vunpack.c.l.b16 %v4863
        %v5735 = vunpack.c.l.b16 %v4864
        %v5736 = vunpack.c.l.b16 %v4865
        %v5737 = vunpack.c.l.b16 %v4866
        %v5738 = vunpack.c.l.b16 %v4867
        %v5739 = vunpack.c.l.b16 %v4868
        %v5740 = vunpack.c.l.b16 %v4869
        %v5741 = vunpack.c.l.b16 %v4870
        %v5742 = vunpack.c.l.b16 %v4871
        %v5743 = vunpack.c.l.b16 %v4872
        %v5744 = vunpack.c.l.b16 %v4873
        %v5745 = vunpack.c.l.b16 %v4874
        %v5746 = vunpack.c.l.b16 %v4875
        %v5747 = vunpack.c.l.b16 %v4876
        %v5748 = vunpack.c.l.b16 %v4877
        %v5749 = vunpack.c.l.b16 %v4878
        %v5750 = vunpack.c.l.b16 %v4879
        %v5751 = vunpack.c.l.b16 %v4880
        %v5752 = vunpack.c.l.b16 %v4881
        %v5753 = vunpack.c.l.b16 %v4882
        %v5754 = vunpack.c.l.b16 %v4883
        %v5755 = vunpack.c.l.b16 %v4884
        %v5756 = vunpack.c.l.b16 %v4885
        %v5757 = vunpack.c.l.b16 %v4886
        %v5758 = vunpack.c.l.b16 %v4887
        %v5759 = vunpack.c.l.b16 %v4888
        %v5760 = vunpack.c.l.b16 %v4889
        %v5761 = vunpack.c.l.b16 %v4890
        %v5762 = vunpack.c.l.b16 %v4891
        %v5763 = vunpack.c.l.b16 %v4892
        %v5764 = vunpack.c.l.b16 %v4893
        %v5765 = vunpack.c.l.b16 %v4894
        %v5766 = vunpack.c.l.b16 %v4895
        %v5767 = vunpack.c.l.b16 %v4896
        %v5768 = vunpack.c.l.b16 %v4897
        %v5769 = vunpack.c.l.b16 %v4898
        %v5770 = vunpack.c.l.b16 %v4899
        %v5771 = vunpack.c.l.b16 %v4900
        %v5772 = vunpack.c.l.b16 %v4901
        %v5773 = vunpack.c.l.b16 %v4902
        %v5774 = vunpack.c.l.b16 %v4903
        %v5775 = vunpack.c.l.b16 %v4904
        %v5776 = vunpack.c.l.b16 %v4905
        %v5777 = vunpack.c.l.b16 %v4906
        %v5778 = vunpack.c.l.b16 %v4907
        %v5779 = vunpack.c.l.b16 %v4908
        %v5780 = vunpack.c.l.b16 %v4909
        %v5781 = vunpack.c.l.b16 %v4910
        %v5782 = vunpack.c.l.b16 %v4911
        %v5783 = vunpack.c.l.b16 %v4912
        %v5784 = vunpack.c.l.b16 %v4913
        %v5785 = vunpack.c.l.b16 %v4914
        %v5786 = vunpack.c.l.b16 %v4915
        %v5787 = vunpack.c.l.b16 %v4916
        %v5788 = vunpack.c.l.b16 %v4917
        %v5789 = vunpack.c.l.b16 %v4918
        %v5790 = vunpack.c.l.b16 %v4919
        %v5791 = vunpack.c.l.b16 %v4920
        %v5792 = vunpack.c.l.b16 %v4921
        %v5793 = vunpack.c.l.b16 %v4922
        %v5794 = vunpack.c.l.b16 %v4923
        %v5795 = vunpack.c.l.b16 %v4924
        %v5796 = vunpack.c.l.b16 %v4925
        %v5797 = vunpack.c.l.b16 %v4926
        %v5798 = vunpack.c.l.b16 %v4927
        %v5799 = vunpack.c.l.b16 %v4928
        %v5800 = vunpack.c.l.b16 %v4929
        %v5801 = vunpack.c.l.b16 %v4930
        %v5802 = vunpack.c.l.b16 %v4931
        %v5803 = vunpack.c.l.b16 %v4932
        %v5804 = vunpack.c.l.b16 %v4933
        %v5805 = vunpack.c.l.b16 %v4934
        %v5806 = vunpack.c.l.b16 %v4935
        %v5807 = vunpack.c.l.b16 %v4936
        %v5808 = vunpack.c.l.b16 %v4937
        %v5809 = vunpack.c.l.b16 %v4938
        %v5810 = vunpack.c.l.b16 %v4939
        %v5811 = vunpack.c.l.b16 %v4940
        %v5812 = vunpack.c.l.b16 %v4941
        %v5813 = vunpack.c.l.b16 %v4942
        %v5814 = vunpack.c.l.b16 %v4943
        %v5815 = vunpack.c.l.b16 %v4944
        %v5816 = vunpack.c.l.b16 %v4945
        %v5817 = vunpack.c.l.b16 %v4946
        %v5818 = vunpack.c.l.b16 %v4947
        %v5819 = vpack.c.b16 %v5388, %v5387
        %v5820 = vpack.c.b16 %v5390, %v5389
        %v5821 = vpack.c.b16 %v5392, %v5391
        %v5822 = vpack.c.b16 %v5394, %v5393
        %v5823 = vpack.c.b16 %v5396, %v5395
        %v5824 = vpack.c.b16 %v5398, %v5397
        %v5825 = vpack.c.b16 %v5400, %v5399
        %v5826 = vpack.c.b16 %v5402, %v5401
        %v5827 = vpack.c.b16 %v5404, %v5403
        %v5828 = vpack.c.b16 %v5406, %v5405
        %v5829 = vpack.c.b16 %v5408, %v5407
        %v5830 = vpack.c.b16 %v5410, %v5409
        %v5831 = vpack.c.b16 %v5412, %v5411
        %v5832 = vpack.c.b16 %v5414, %v5413
        %v5833 = vpack.c.b16 %v5416, %v5415
        %v5834 = vpack.c.b16 %v5418, %v5417
        %v5835 = vpack.c.b16 %v5420, %v5419
        %v5836 = vpack.c.b16 %v5422, %v5421
        %v5837 = vpack.c.b16 %v5424, %v5423
        %v5838 = vpack.c.b16 %v5426, %v5425
        %v5839 = vpack.c.b16 %v5428, %v5427
        %v5840 = vpack.c.b16 %v5430, %v5429
        %v5841 = vpack.c.b16 %v5432, %v5431
        %v5842 = vpack.c.b16 %v5434, %v5433
        %v5843 = vpack.c.b16 %v5436, %v5435
        %v5844 = vpack.c.b16 %v5438, %v5437
        %v5845 = vpack.c.b16 %v5440, %v5439
        %v5846 = vpack.c.b16 %v5442, %v5441
        %v5847 = vpack.c.b16 %v5444, %v5443
        %v5848 = vpack.c.b16 %v5446, %v5445
        %v5849 = vpack.c.b16 %v5448, %v5447
        %v5850 = vpack.c.b16 %v5450, %v5449
        %v5851 = vpack.c.b16 %v5452, %v5451
        %v5852 = vpack.c.b16 %v5454, %v5453
        %v5853 = vpack.c.b16 %v5456, %v5455
        %v5854 = vpack.c.b16 %v5458, %v5457
        %v5855 = vpack.c.b16 %v5460, %v5459
        %v5856 = vpack.c.b16 %v5462, %v5461
        %v5857 = vpack.c.b16 %v5464, %v5463
        %v5858 = vpack.c.b16 %v5466, %v5465
        %v5859 = vpack.c.b16 %v5468, %v5467
        %v5860 = vpack.c.b16 %v5470, %v5469
        %v5861 = vpack.c.b16 %v5472, %v5471
        %v5862 = vpack.c.b16 %v5474, %v5473
        %v5863 = vpack.c.b16 %v5476, %v5475
        %v5864 = vpack.c.b16 %v5478, %v5477
        %v5865 = vpack.c.b16 %v5480, %v5479
        %v5866 = vpack.c.b16 %v5482, %v5481
        %v5867 = vpack.c.b16 %v5484, %v5483
        %v5868 = vpack.c.b16 %v5486, %v5485
        %v5869 = vpack.c.b16 %v5488, %v5487
        %v5870 = vpack.c.b16 %v5490, %v5489
        %v5871 = vpack.c.b16 %v5492, %v5491
        %v5872 = vpack.c.b16 %v5494, %v5493
        %v5873 = vpack.c.b16 %v5496, %v5495
        %v5874 = vpack.c.b16 %v5498, %v5497
        %v5875 = vpack.c.b16 %v5500, %v5499
        %v5876 = vpack.c.b16 %v5502, %v5501
        %v5877 = vpack.c.b16 %v5504, %v5503
        %v5878 = vpack.c.b16 %v5506, %v5505
        %v5879 = vpack.c.b16 %v5508, %v5507
        %v5880 = vpack.c.b16 %v5510, %v5509
        %v5881 = vpack.c.b16 %v5512, %v5511
        %v5882 = vpack.c.b16 %v5514, %v5513
        %v5883 = vpack.c.b16 %v5516, %v5515
        %v5884 = vpack.c.b16 %v5518, %v5517
        %v5885 = vpack.c.b16 %v5520, %v5519
        %v5886 = vpack.c.b16 %v5522, %v5521
        %v5887 = vpack.c.b16 %v5524, %v5523
        %v5888 = vpack.c.b16 %v5526, %v5525
        %v5889 = vpack.c.b16 %v5528, %v5527
        %v5890 = vpack.c.b16 %v5530, %v5529
        %v5891 = vpack.c.b16 %v5532, %v5531
        %v5892 = vpack.c.b16 %v5534, %v5533
        %v5893 = vpack.c.b16 %v5536, %v5535
        %v5894 = vpack.c.b16 %v5538, %v5537
        %v5895 = vpack.c.b16 %v5540, %v5539
        %v5896 = vpack.c.b16 %v5542, %v5541
        %v5897 = vpack.c.b16 %v5544, %v5543
        %v5898 = vpack.c.b16 %v5546, %v5545
        %v5899 = vpack.c.b16 %v5548, %v5547
        %v5900 = vpack.c.b16 %v5550, %v5549
        %v5901 = vpack.c.b16 %v5552, %v5551
        %v5902 = vpack.c.b16 %v5554, %v5553
        %v5903 = vpack.c.b16 %v5556, %v5555
        %v5904 = vpack.c.b16 %v5558, %v5557
        %v5905 = vpack.c.b16 %v5560, %v5559
        %v5906 = vpack.c.b16 %v5562, %v5561
        %v5907 = vpack.c.b16 %v5564, %v5563
        %v5908 = vpack.c.b16 %v5566, %v5565
        %v5909 = vpack.c.b16 %v5568, %v5567
        %v5910 = vpack.c.b16 %v5570, %v5569
        %v5911 = vpack.c.b16 %v5572, %v5571
        %v5912 = vpack.c.b16 %v5574, %v5573
        %v5913 = vpack.c.b16 %v5576, %v5575
        %v5914 = vpack.c.b16 %v5578, %v5577
        %v5915 = vpack.c.b16 %v5580, %v5579
        %v5916 = vpack.c.b16 %v5582, %v5581
        %v5917 = vpack.c.b16 %v5584, %v5583
        %v5918 = vpack.c.b16 %v5586, %v5585
        %v5919 = vpack.c.b16 %v5588, %v5587
        %v5920 = vpack.c.b16 %v5590, %v5589
        %v5921 = vpack.c.b16 %v5592, %v5591
        %v5922 = vpack.c.b16 %v5594, %v5593
        %v5923 = vpack.c.b16 %v5596, %v5595
        %v5924 = vpack.c.b16 %v5598, %v5597
        %v5925 = vpack.c.b16 %v5600, %v5599
        %v5926 = vpack.c.b16 %v5602, %v5601
        %v5927 = vpack.c.b16 %v5604, %v5603
        %v5928 = vpack.c.b16 %v5606, %v5605
        %v5929 = vpack.c.b16 %v5608, %v5607
        %v5930 = vpack.c.b16 %v5610, %v5609
        %v5931 = vpack.c.b16 %v5612, %v5611
        %v5932 = vpack.c.b16 %v5614, %v5613
        %v5933 = vpack.c.b16 %v5616, %v5615
        %v5934 = vpack.c.b16 %v5618, %v5617
        %v5935 = vpack.c.b16 %v5620, %v5619
        %v5936 = vpack.c.b16 %v5622, %v5621
        %v5937 = vpack.c.b16 %v5624, %v5623
        %v5938 = vpack.c.b16 %v5626, %v5625
        %v5939 = vpack.c.b16 %v5628, %v5627
        %v5940 = vpack.c.b16 %v5630, %v5629
        %v5941 = vpack.c.b16 %v5632, %v5631
        %v5942 = vpack.c.b16 %v5634, %v5633
        %v5943 = vpack.c.b16 %v5636, %v5635
        %v5944 = vpack.c.b16 %v5638, %v5637
        %v5945 = vpack.c.b16 %v5640, %v5639
        %v5946 = vpack.c.b16 %v5642, %v5641
        %v5947 = vpack.c.b16 %v5644, %v5643
        %v5948 = vpack.c.b16 %v5646, %v5645
        %v5949 = vpack.c.b16 %v5648, %v5647
        %v5950 = vpack.c.b16 %v5650, %v5649
        %v5951 = vpack.c.b16 %v5652, %v5651
        %v5952 = vpack.c.b16 %v5654, %v5653
        %v5953 = vpack.c.b16 %v5656, %v5655
        %v5954 = vpack.c.b16 %v5658, %v5657
        %v5955 = vpack.c.b16 %v5660, %v5659
        %v5956 = vpack.c.b16 %v5662, %v5661
        %v5957 = vpack.c.b16 %v5664, %v5663
        %v5958 = vpack.c.b16 %v5666, %v5665
        %v5959 = vpack.c.b16 %v5668, %v5667
        %v5960 = vpack.c.b16 %v5670, %v5669
        %v5961 = vpack.c.b16 %v5672, %v5671
        %v5962 = vpack.c.b16 %v5674, %v5673
        %v5963 = vpack.c.b16 %v5676, %v5675
        %v5964 = vpack.c.b16 %v5678, %v5677
        %v5965 = vpack.c.b16 %v5680, %v5679
        %v5966 = vpack.c.b16 %v5682, %v5681
        %v5967 = vpack.c.b16 %v5684, %v5683
        %v5968 = vpack.c.b16 %v5686, %v5685
        %v5969 = vpack.c.b16 %v5688, %v5687
        %v5970 = vpack.c.b16 %v5690, %v5689
        %v5971 = vpack.c.b16 %v5692, %v5691
        %v5972 = vpack.c.b16 %v5694, %v5693
        %v5973 = vpack.c.b16 %v5696, %v5695
        %v5974 = vpack.c.b16 %v5698, %v5697
        %v5975 = vpack.c.b16 %v5700, %v5699
        %v5976 = vpack.c.b16 %v5702, %v5701
        %v5977 = vpack.c.b16 %v5704, %v5703
        %v5978 = vpack.c.b16 %v5706, %v5705
        %v5979 = vpack.c.b16 %v5708, %v5707
        %v5980 = vpack.c.b16 %v5710, %v5709
        %v5981 = vpack.c.b16 %v5712, %v5711
        %v5982 = vpack.c.b16 %v5714, %v5713
        %v5983 = vpack.c.b16 %v5716, %v5715
        %v5984 = vpack.c.b16 %v5718, %v5717
        %v5985 = vpack.c.b16 %v5720, %v5719
        %v5986 = vpack.c.b16 %v5722, %v5721
        %v5987 = vpack.c.b16 %v5724, %v5723
        %v5988 = vpack.c.b16 %v5726, %v5725
        %v5989 = vpack.c.b16 %v5728, %v5727
        %v5990 = vpack.c.b16 %v5730, %v5729
        %v5991 = vpack.c.b16 %v5732, %v5731
        %v5992 = vpack.c.b16 %v5734, %v5733
        %v5993 = vpack.c.b16 %v5736, %v5735
        %v5994 = vpack.c.b16 %v5738, %v5737
        %v5995 = vpack.c.b16 %v5740, %v5739
        %v5996 = vpack.c.b16 %v5742, %v5741
        %v5997 = vpack.c.b16 %v5744, %v5743
        %v5998 = vpack.c.b16 %v5746, %v5745
        %v5999 = vpack.c.b16 %v5748, %v5747
        %v6000 = vpack.c.b16 %v5750, %v5749
        %v6001 = vpack.c.b16 %v5752, %v5751
        %v6002 = vpack.c.b16 %v5754, %v5753
        %v6003 = vpack.c.b16 %v5756, %v5755
        %v6004 = vpack.c.b16 %v5758, %v5757
        %v6005 = vpack.c.b16 %v5760, %v5759
        %v6006 = vpack.c.b16 %v5762, %v5761
        %v6007 = vpack.c.b16 %v5764, %v5763
        %v6008 = vpack.c.b16 %v5766, %v5765
        %v6009 = vpack.c.b16 %v5768, %v5767
        %v6010 = vpack.c.b16 %v5770, %v5769
        %v6011 = vpack.c.b16 %v5772, %v5771
        %v6012 = vpack.c.b16 %v5774, %v5773
        %v6013 = vpack.c.b16 %v5776, %v5775
        %v6014 = vpack.c.b16 %v5778, %v5777
        %v6015 = vpack.c.b16 %v5780, %v5779
        %v6016 = vpack.c.b16 %v5782, %v5781
        %v6017 = vpack.c.b16 %v5784, %v5783
        %v6018 = vpack.c.b16 %v5786, %v5785
        %v6019 = vpack.c.b16 %v5788, %v5787
        %v6020 = vpack.c.b16 %v5790, %v5789
        %v6021 = vpack.c.b16 %v5792, %v5791
        %v6022 = vpack.c.b16 %v5794, %v5793
        %v6023 = vpack.c.b16 %v5796, %v5795
        %v6024 = vpack.c.b16 %v5798, %v5797
        %v6025 = vpack.c.b16 %v5800, %v5799
        %v6026 = vpack.c.b16 %v5802, %v5801
        %v6027 = vpack.c.b16 %v5804, %v5803
        %v6028 = vpack.c.b16 %v5806, %v5805
        %v6029 = vpack.c.b16 %v5808, %v5807
        %v6030 = vpack.c.b16 %v5810, %v5809
        %v6031 = vpack.c.b16 %v5812, %v5811
        %v6032 = vpack.c.b16 %v5814, %v5813
        %v6033 = vpack.c.b16 %v5816, %v5815
        %v6034 = vpack.c.b16 %v5818, %v5817
        %6251 = vmatprep.subr.bf16.mxu0 0
        %6252 = vmatpush1.bf16.msra.mxu0 %v5826
        %6253 = vmatprep.subr.bf16.mxu0 0
        %6254 = vmatpush1.bf16.msra.mxu0 %v5825
        %6255 = vmatprep.subr.bf16.mxu0 0
        %6256 = vmatpush1.bf16.msra.mxu0 %v5824
        %6257 = vmatprep.subr.bf16.mxu0 0
        %6258 = vmatpush1.bf16.msra.mxu0 %v5823
        %6259 = vmatprep.subr.bf16.mxu0 0
        %6260 = vmatpush1.bf16.msra.mxu0 %v5822
        %6261 = vmatprep.subr.bf16.mxu0 0
        %6262 = vmatpush1.bf16.msra.mxu0 %v5821
        %6263 = vmatprep.subr.bf16.mxu0 0
        %6264 = vmatpush1.bf16.msra.mxu0 %v5820
        %6265 = vmatprep.subr.bf16.mxu0 0
        %6266 = vmatpush1.bf16.msra.mxu0 %v5819
        %6267 = vmatprep.subr.bf16.mxu0 0
        %6268 = vmatpush2.bf16.msra.mxu0 %v5834
        %6269 = vmatprep.subr.bf16.mxu0 0
        %6270 = vmatpush2.bf16.msra.mxu0 %v5833
        %6271 = vmatprep.subr.bf16.mxu0 0
        %6272 = vmatpush2.bf16.msra.mxu0 %v5832
        %6273 = vmatprep.subr.bf16.mxu0 0
        %6274 = vmatpush2.bf16.msra.mxu0 %v5831
        %6275 = vmatprep.subr.bf16.mxu0 0
        %6276 = vmatpush2.bf16.msra.mxu0 %v5830
        %6277 = vmatprep.subr.bf16.mxu0 0
        %6278 = vmatpush2.bf16.msra.mxu0 %v5829
        %6279 = vmatprep.subr.bf16.mxu0 0
        %6280 = vmatpush2.bf16.msra.mxu0 %v5828
        %6281 = vmatprep.subr.bf16.mxu0 0
        %6282 = vmatpush2.bf16.msra.mxu0 %v5827
        %6283 = vmatprep.mubr.bf16.mxu0 %v4289
        %6284 = vmatmul.mubr.bf16.gmra.mxu0 %v4071
        %v6285 = vpop.f32.mrf.mxu0
        %v6286 = vadd.f32 %v4953, %v6285
        %v6287 = vpop.f32.mrf.mxu0
        %v6288 = vpop.f32.mrf.mxu0
        %v6289 = vpop.f32.mrf.mxu0
        %6290 = vdwg.mxu0
        %6291 = vmatprep.subr.bf16.mxu0 0
        %6292 = vmatpush1.bf16.msra.mxu0 %v5842
        %6293 = vmatprep.subr.bf16.mxu0 0
        %6294 = vmatpush1.bf16.msra.mxu0 %v5841
        %6295 = vmatprep.subr.bf16.mxu0 0
        %6296 = vmatpush1.bf16.msra.mxu0 %v5840
        %6297 = vmatprep.subr.bf16.mxu0 0
        %6298 = vmatpush1.bf16.msra.mxu0 %v5839
        %6299 = vmatprep.subr.bf16.mxu0 0
        %6300 = vmatpush1.bf16.msra.mxu0 %v5838
        %6301 = vmatprep.subr.bf16.mxu0 0
        %6302 = vmatpush1.bf16.msra.mxu0 %v5837
        %6303 = vmatprep.subr.bf16.mxu0 0
        %6304 = vmatpush1.bf16.msra.mxu0 %v5836
        %6305 = vmatprep.subr.bf16.mxu0 0
        %6306 = vmatpush1.bf16.msra.mxu0 %v5835
        %6307 = vmatprep.subr.bf16.mxu0 0
        %6308 = vmatpush2.bf16.msra.mxu0 %v5850
        %6309 = vmatprep.subr.bf16.mxu0 0
        %6310 = vmatpush2.bf16.msra.mxu0 %v5849
        %6311 = vmatprep.subr.bf16.mxu0 0
        %6312 = vmatpush2.bf16.msra.mxu0 %v5848
        %6313 = vmatprep.subr.bf16.mxu0 0
        %6314 = vmatpush2.bf16.msra.mxu0 %v5847
        %6315 = vmatprep.subr.bf16.mxu0 0
        %6316 = vmatpush2.bf16.msra.mxu0 %v5846
        %6317 = vmatprep.subr.bf16.mxu0 0
        %6318 = vmatpush2.bf16.msra.mxu0 %v5845
        %6319 = vmatprep.subr.bf16.mxu0 0
        %6320 = vmatpush2.bf16.msra.mxu0 %v5844
        %6321 = vmatprep.subr.bf16.mxu0 0
        %6322 = vmatpush2.bf16.msra.mxu0 %v5843
        %6323 = vmatprep.mubr.bf16.mxu0 %v4072
        %6324 = vmatmul.mubr.bf16.gmra.mxu0 %v4507
        %v6325 = vpop.f32.mrf.mxu0
        %v6326 = vadd.f32 %v6286, %v6325
        %v6327 = vpop.f32.mrf.mxu0
        %v6328 = vpop.f32.mrf.mxu0
        %v6329 = vpop.f32.mrf.mxu0
        %6330 = vdwg.mxu0
        %6331 = vmatprep.subr.bf16.mxu0 0
        %6332 = vmatpush1.bf16.msra.mxu0 %v5858
        %6333 = vmatprep.subr.bf16.mxu0 0
        %6334 = vmatpush1.bf16.msra.mxu0 %v5857
        %6335 = vmatprep.subr.bf16.mxu0 0
        %6336 = vmatpush1.bf16.msra.mxu0 %v5856
        %6337 = vmatprep.subr.bf16.mxu0 0
        %6338 = vmatpush1.bf16.msra.mxu0 %v5855
        %6339 = vmatprep.subr.bf16.mxu0 0
        %6340 = vmatpush1.bf16.msra.mxu0 %v5854
        %6341 = vmatprep.subr.bf16.mxu0 0
        %6342 = vmatpush1.bf16.msra.mxu0 %v5853
        %6343 = vmatprep.subr.bf16.mxu0 0
        %6344 = vmatpush1.bf16.msra.mxu0 %v5852
        %6345 = vmatprep.subr.bf16.mxu0 0
        %6346 = vmatpush1.bf16.msra.mxu0 %v5851
        %6347 = vmatprep.subr.bf16.mxu0 0
        %6348 = vmatpush2.bf16.msra.mxu0 %v5866
        %6349 = vmatprep.subr.bf16.mxu0 0
        %6350 = vmatpush2.bf16.msra.mxu0 %v5865
        %6351 = vmatprep.subr.bf16.mxu0 0
        %6352 = vmatpush2.bf16.msra.mxu0 %v5864
        %6353 = vmatprep.subr.bf16.mxu0 0
        %6354 = vmatpush2.bf16.msra.mxu0 %v5863
        %6355 = vmatprep.subr.bf16.mxu0 0
        %6356 = vmatpush2.bf16.msra.mxu0 %v5862
        %6357 = vmatprep.subr.bf16.mxu0 0
        %6358 = vmatpush2.bf16.msra.mxu0 %v5861
        %6359 = vmatprep.subr.bf16.mxu0 0
        %6360 = vmatpush2.bf16.msra.mxu0 %v5860
        %6361 = vmatprep.subr.bf16.mxu0 0
        %6362 = vmatpush2.bf16.msra.mxu0 %v5859
        %6363 = vmatprep.mubr.bf16.mxu0 %v4508
        %6364 = vmatmul.mubr.bf16.gmra.mxu0 %v4290
        %v6365 = vpop.f32.mrf.mxu0
        %v6366 = vadd.f32 %v6326, %v6365
        %v6367 = vpop.f32.mrf.mxu0
        %v6368 = vpop.f32.mrf.mxu0
        %v6369 = vpop.f32.mrf.mxu0
        %6370 = vdwg.mxu0
        %6371 = vmatprep.subr.bf16.mxu0 0
        %6372 = vmatpush1.bf16.msra.mxu0 %v5874
        %6373 = vmatprep.subr.bf16.mxu0 0
        %6374 = vmatpush1.bf16.msra.mxu0 %v5873
        %6375 = vmatprep.subr.bf16.mxu0 0
        %6376 = vmatpush1.bf16.msra.mxu0 %v5872
        %6377 = vmatprep.subr.bf16.mxu0 0
        %6378 = vmatpush1.bf16.msra.mxu0 %v5871
        %6379 = vmatprep.subr.bf16.mxu0 0
        %6380 = vmatpush1.bf16.msra.mxu0 %v5870
        %6381 = vmatprep.subr.bf16.mxu0 0
        %6382 = vmatpush1.bf16.msra.mxu0 %v5869
        %6383 = vmatprep.subr.bf16.mxu0 0
        %6384 = vmatpush1.bf16.msra.mxu0 %v5868
        %6385 = vmatprep.subr.bf16.mxu0 0
        %6386 = vmatpush1.bf16.msra.mxu0 %v5867
        %6387 = vmatprep.subr.bf16.mxu0 0
        %6388 = vmatpush2.bf16.msra.mxu0 %v5882
        %6389 = vmatprep.subr.bf16.mxu0 0
        %6390 = vmatpush2.bf16.msra.mxu0 %v5881
        %6391 = vmatprep.subr.bf16.mxu0 0
        %6392 = vmatpush2.bf16.msra.mxu0 %v5880
        %6393 = vmatprep.subr.bf16.mxu0 0
        %6394 = vmatpush2.bf16.msra.mxu0 %v5879
        %6395 = vmatprep.subr.bf16.mxu0 0
        %6396 = vmatpush2.bf16.msra.mxu0 %v5878
        %6397 = vmatprep.subr.bf16.mxu0 0
        %6398 = vmatpush2.bf16.msra.mxu0 %v5877
        %6399 = vmatprep.subr.bf16.mxu0 0
        %6400 = vmatpush2.bf16.msra.mxu0 %v5876
        %6401 = vmatprep.subr.bf16.mxu0 0
        %6402 = vmatpush2.bf16.msra.mxu0 %v5875
        %6403 = vmatprep.mubr.bf16.mxu0 %v4291
        %6404 = vmatmul.mubr.bf16.gmra.mxu0 %v4073
        %v6405 = vpop.f32.mrf.mxu0
        %v6406 = vadd.f32 %v6366, %v6405
        %v6407 = vpop.f32.mrf.mxu0
        %v6408 = vpop.f32.mrf.mxu0
        %v6409 = vpop.f32.mrf.mxu0
        %6410 = vdwg.mxu0
        %6411 = vmatprep.subr.bf16.mxu0 0
        %6412 = vmatpush1.bf16.msra.mxu0 %v5890
        %6413 = vmatprep.subr.bf16.mxu0 0
        %6414 = vmatpush1.bf16.msra.mxu0 %v5889
        %6415 = vmatprep.subr.bf16.mxu0 0
        %6416 = vmatpush1.bf16.msra.mxu0 %v5888
        %6417 = vmatprep.subr.bf16.mxu0 0
        %6418 = vmatpush1.bf16.msra.mxu0 %v5887
        %6419 = vmatprep.subr.bf16.mxu0 0
        %6420 = vmatpush1.bf16.msra.mxu0 %v5886
        %6421 = vmatprep.subr.bf16.mxu0 0
        %6422 = vmatpush1.bf16.msra.mxu0 %v5885
        %6423 = vmatprep.subr.bf16.mxu0 0
        %6424 = vmatpush1.bf16.msra.mxu0 %v5884
        %6425 = vmatprep.subr.bf16.mxu0 0
        %6426 = vmatpush1.bf16.msra.mxu0 %v5883
        %6427 = vmatprep.subr.bf16.mxu0 0
        %6428 = vmatpush2.bf16.msra.mxu0 %v5898
        %6429 = vmatprep.subr.bf16.mxu0 0
        %6430 = vmatpush2.bf16.msra.mxu0 %v5897
        %6431 = vmatprep.subr.bf16.mxu0 0
        %6432 = vmatpush2.bf16.msra.mxu0 %v5896
        %6433 = vmatprep.subr.bf16.mxu0 0
        %6434 = vmatpush2.bf16.msra.mxu0 %v5895
        %6435 = vmatprep.subr.bf16.mxu0 0
        %6436 = vmatpush2.bf16.msra.mxu0 %v5894
        %6437 = vmatprep.subr.bf16.mxu0 0
        %6438 = vmatpush2.bf16.msra.mxu0 %v5893
        %6439 = vmatprep.subr.bf16.mxu0 0
        %6440 = vmatpush2.bf16.msra.mxu0 %v5892
        %6441 = vmatprep.subr.bf16.mxu0 0
        %6442 = vmatpush2.bf16.msra.mxu0 %v5891
        %6443 = vmatprep.mubr.bf16.mxu0 %v4074
        %6444 = vmatmul.mubr.bf16.gmra.mxu0 %v4509
        %v6445 = vpop.f32.mrf.mxu0
        %v6446 = vadd.f32 %v6406, %v6445
        %v6447 = vpop.f32.mrf.mxu0
        %v6448 = vpop.f32.mrf.mxu0
        %v6449 = vpop.f32.mrf.mxu0
        %6450 = vdwg.mxu0
        %6451 = vmatprep.subr.bf16.mxu0 0
        %6452 = vmatpush1.bf16.msra.mxu0 %v5906
        %6453 = vmatprep.subr.bf16.mxu0 0
        %6454 = vmatpush1.bf16.msra.mxu0 %v5905
        %6455 = vmatprep.subr.bf16.mxu0 0
        %6456 = vmatpush1.bf16.msra.mxu0 %v5904
        %6457 = vmatprep.subr.bf16.mxu0 0
        %6458 = vmatpush1.bf16.msra.mxu0 %v5903
        %6459 = vmatprep.subr.bf16.mxu0 0
        %6460 = vmatpush1.bf16.msra.mxu0 %v5902
        %6461 = vmatprep.subr.bf16.mxu0 0
        %6462 = vmatpush1.bf16.msra.mxu0 %v5901
        %6463 = vmatprep.subr.bf16.mxu0 0
        %6464 = vmatpush1.bf16.msra.mxu0 %v5900
        %6465 = vmatprep.subr.bf16.mxu0 0
        %6466 = vmatpush1.bf16.msra.mxu0 %v5899
        %6467 = vmatprep.subr.bf16.mxu0 0
        %6468 = vmatpush2.bf16.msra.mxu0 %v5914
        %6469 = vmatprep.subr.bf16.mxu0 0
        %6470 = vmatpush2.bf16.msra.mxu0 %v5913
        %6471 = vmatprep.subr.bf16.mxu0 0
        %6472 = vmatpush2.bf16.msra.mxu0 %v5912
        %6473 = vmatprep.subr.bf16.mxu0 0
        %6474 = vmatpush2.bf16.msra.mxu0 %v5911
        %6475 = vmatprep.subr.bf16.mxu0 0
        %6476 = vmatpush2.bf16.msra.mxu0 %v5910
        %6477 = vmatprep.subr.bf16.mxu0 0
        %6478 = vmatpush2.bf16.msra.mxu0 %v5909
        %6479 = vmatprep.subr.bf16.mxu0 0
        %6480 = vmatpush2.bf16.msra.mxu0 %v5908
        %6481 = vmatprep.subr.bf16.mxu0 0
        %6482 = vmatpush2.bf16.msra.mxu0 %v5907
        %6483 = vmatprep.mubr.bf16.mxu0 %v4510
        %6484 = vmatmul.mubr.bf16.gmra.mxu0 %v4292
        %v6485 = vpop.f32.mrf.mxu0
        %v6486 = vadd.f32 %v6446, %v6485
        %v6487 = vpop.f32.mrf.mxu0
        %v6488 = vpop.f32.mrf.mxu0
        %v6489 = vpop.f32.mrf.mxu0
        %6490 = vdwg.mxu0
        %6491 = vmatprep.subr.bf16.mxu0 0
        %6492 = vmatpush1.bf16.msra.mxu0 %v5922
        %6493 = vmatprep.subr.bf16.mxu0 0
        %6494 = vmatpush1.bf16.msra.mxu0 %v5921
        %6495 = vmatprep.subr.bf16.mxu0 0
        %6496 = vmatpush1.bf16.msra.mxu0 %v5920
        %6497 = vmatprep.subr.bf16.mxu0 0
        %6498 = vmatpush1.bf16.msra.mxu0 %v5919
        %6499 = vmatprep.subr.bf16.mxu0 0
        %6500 = vmatpush1.bf16.msra.mxu0 %v5918
        %6501 = vmatprep.subr.bf16.mxu0 0
        %6502 = vmatpush1.bf16.msra.mxu0 %v5917
        %6503 = vmatprep.subr.bf16.mxu0 0
        %6504 = vmatpush1.bf16.msra.mxu0 %v5916
        %6505 = vmatprep.subr.bf16.mxu0 0
        %6506 = vmatpush1.bf16.msra.mxu0 %v5915
        %6507 = vmatprep.subr.bf16.mxu0 0
        %6508 = vmatpush2.bf16.msra.mxu0 %v5930
        %6509 = vmatprep.subr.bf16.mxu0 0
        %6510 = vmatpush2.bf16.msra.mxu0 %v5929
        %6511 = vmatprep.subr.bf16.mxu0 0
        %6512 = vmatpush2.bf16.msra.mxu0 %v5928
        %6513 = vmatprep.subr.bf16.mxu0 0
        %6514 = vmatpush2.bf16.msra.mxu0 %v5927
        %6515 = vmatprep.subr.bf16.mxu0 0
        %6516 = vmatpush2.bf16.msra.mxu0 %v5926
        %6517 = vmatprep.subr.bf16.mxu0 0
        %6518 = vmatpush2.bf16.msra.mxu0 %v5925
        %6519 = vmatprep.subr.bf16.mxu0 0
        %6520 = vmatpush2.bf16.msra.mxu0 %v5924
        %6521 = vmatprep.subr.bf16.mxu0 0
        %6522 = vmatpush2.bf16.msra.mxu0 %v5923
        %6523 = vmatprep.mubr.bf16.mxu0 %v4293
        %6524 = vmatmul.mubr.bf16.gmra.mxu0 %v4075
        %v6525 = vpop.f32.mrf.mxu0
        %v6526 = vadd.f32 %v6486, %v6525
        %v6527 = vpop.f32.mrf.mxu0
        %v6528 = vpop.f32.mrf.mxu0
        %v6529 = vpop.f32.mrf.mxu0
        %6530 = vdwg.mxu0
        %6531 = vmatprep.subr.bf16.mxu0 0
        %6532 = vmatpush1.bf16.msra.mxu0 %v5938
        %6533 = vmatprep.subr.bf16.mxu0 0
        %6534 = vmatpush1.bf16.msra.mxu0 %v5937
        %6535 = vmatprep.subr.bf16.mxu0 0
        %6536 = vmatpush1.bf16.msra.mxu0 %v5936
        %6537 = vmatprep.subr.bf16.mxu0 0
        %6538 = vmatpush1.bf16.msra.mxu0 %v5935
        %6539 = vmatprep.subr.bf16.mxu0 0
        %6540 = vmatpush1.bf16.msra.mxu0 %v5934
        %6541 = vmatprep.subr.bf16.mxu0 0
        %6542 = vmatpush1.bf16.msra.mxu0 %v5933
        %6543 = vmatprep.subr.bf16.mxu0 0
        %6544 = vmatpush1.bf16.msra.mxu0 %v5932
        %6545 = vmatprep.subr.bf16.mxu0 0
        %6546 = vmatpush1.bf16.msra.mxu0 %v5931
        %6547 = vmatprep.subr.bf16.mxu0 0
        %6548 = vmatpush2.bf16.msra.mxu0 %v5946
        %6549 = vmatprep.subr.bf16.mxu0 0
        %6550 = vmatpush2.bf16.msra.mxu0 %v5945
        %6551 = vmatprep.subr.bf16.mxu0 0
        %6552 = vmatpush2.bf16.msra.mxu0 %v5944
        %6553 = vmatprep.subr.bf16.mxu0 0
        %6554 = vmatpush2.bf16.msra.mxu0 %v5943
        %6555 = vmatprep.subr.bf16.mxu0 0
        %6556 = vmatpush2.bf16.msra.mxu0 %v5942
        %6557 = vmatprep.subr.bf16.mxu0 0
        %6558 = vmatpush2.bf16.msra.mxu0 %v5941
        %6559 = vmatprep.subr.bf16.mxu0 0
        %6560 = vmatpush2.bf16.msra.mxu0 %v5940
        %6561 = vmatprep.subr.bf16.mxu0 0
        %6562 = vmatpush2.bf16.msra.mxu0 %v5939
        %6563 = vmatprep.mubr.bf16.mxu0 %v4076
        %6564 = vmatmul.mubr.bf16.gmra.mxu0 %v4511
        %v6565 = vpop.f32.mrf.mxu0
        %v6566 = vadd.f32 %v6526, %v6565
        %v6567 = vpop.f32.mrf.mxu0
        %v6568 = vpop.f32.mrf.mxu0
        %v6569 = vpop.f32.mrf.mxu0
        %6570 = vdwg.mxu0
        %6571 = vmatprep.subr.bf16.mxu0 0
        %6572 = vmatpush1.bf16.msra.mxu0 %v5954
        %6573 = vmatprep.subr.bf16.mxu0 0
        %6574 = vmatpush1.bf16.msra.mxu0 %v5953
        %6575 = vmatprep.subr.bf16.mxu0 0
        %6576 = vmatpush1.bf16.msra.mxu0 %v5952
        %6577 = vmatprep.subr.bf16.mxu0 0
        %6578 = vmatpush1.bf16.msra.mxu0 %v5951
        %6579 = vmatprep.subr.bf16.mxu0 0
        %6580 = vmatpush1.bf16.msra.mxu0 %v5950
        %6581 = vmatprep.subr.bf16.mxu0 0
        %6582 = vmatpush1.bf16.msra.mxu0 %v5949
        %6583 = vmatprep.subr.bf16.mxu0 0
        %6584 = vmatpush1.bf16.msra.mxu0 %v5948
        %6585 = vmatprep.subr.bf16.mxu0 0
        %6586 = vmatpush1.bf16.msra.mxu0 %v5947
        %6587 = vmatprep.subr.bf16.mxu0 0
        %6588 = vmatpush2.bf16.msra.mxu0 %v5962
        %6589 = vmatprep.subr.bf16.mxu0 0
        %6590 = vmatpush2.bf16.msra.mxu0 %v5961
        %6591 = vmatprep.subr.bf16.mxu0 0
        %6592 = vmatpush2.bf16.msra.mxu0 %v5960
        %6593 = vmatprep.subr.bf16.mxu0 0
        %6594 = vmatpush2.bf16.msra.mxu0 %v5959
        %6595 = vmatprep.subr.bf16.mxu0 0
        %6596 = vmatpush2.bf16.msra.mxu0 %v5958
        %6597 = vmatprep.subr.bf16.mxu0 0
        %6598 = vmatpush2.bf16.msra.mxu0 %v5957
        %6599 = vmatprep.subr.bf16.mxu0 0
        %6600 = vmatpush2.bf16.msra.mxu0 %v5956
        %6601 = vmatprep.subr.bf16.mxu0 0
        %6602 = vmatpush2.bf16.msra.mxu0 %v5955
        %6603 = vmatprep.mubr.bf16.mxu0 %v4512
        %6604 = vmatmul.mubr.bf16.gmra.mxu0 %v4294
        %v6605 = vpop.f32.mrf.mxu0
        %v6606 = vadd.f32 %v6566, %v6605
        %v6607 = vpop.f32.mrf.mxu0
        %v6608 = vpop.f32.mrf.mxu0
        %v6609 = vpop.f32.mrf.mxu0
        %6610 = vdwg.mxu0
        %6611 = vmatprep.subr.bf16.mxu0 0
        %6612 = vmatpush1.bf16.msra.mxu0 %v5970
        %6613 = vmatprep.subr.bf16.mxu0 0
        %6614 = vmatpush1.bf16.msra.mxu0 %v5969
        %6615 = vmatprep.subr.bf16.mxu0 0
        %6616 = vmatpush1.bf16.msra.mxu0 %v5968
        %6617 = vmatprep.subr.bf16.mxu0 0
        %6618 = vmatpush1.bf16.msra.mxu0 %v5967
        %6619 = vmatprep.subr.bf16.mxu0 0
        %6620 = vmatpush1.bf16.msra.mxu0 %v5966
        %6621 = vmatprep.subr.bf16.mxu0 0
        %6622 = vmatpush1.bf16.msra.mxu0 %v5965
        %6623 = vmatprep.subr.bf16.mxu0 0
        %6624 = vmatpush1.bf16.msra.mxu0 %v5964
        %6625 = vmatprep.subr.bf16.mxu0 0
        %6626 = vmatpush1.bf16.msra.mxu0 %v5963
        %6627 = vmatprep.subr.bf16.mxu0 0
        %6628 = vmatpush2.bf16.msra.mxu0 %v5978
        %6629 = vmatprep.subr.bf16.mxu0 0
        %6630 = vmatpush2.bf16.msra.mxu0 %v5977
        %6631 = vmatprep.subr.bf16.mxu0 0
        %6632 = vmatpush2.bf16.msra.mxu0 %v5976
        %6633 = vmatprep.subr.bf16.mxu0 0
        %6634 = vmatpush2.bf16.msra.mxu0 %v5975
        %6635 = vmatprep.subr.bf16.mxu0 0
        %6636 = vmatpush2.bf16.msra.mxu0 %v5974
        %6637 = vmatprep.subr.bf16.mxu0 0
        %6638 = vmatpush2.bf16.msra.mxu0 %v5973
        %6639 = vmatprep.subr.bf16.mxu0 0
        %6640 = vmatpush2.bf16.msra.mxu0 %v5972
        %6641 = vmatprep.subr.bf16.mxu0 0
        %6642 = vmatpush2.bf16.msra.mxu0 %v5971
        %6643 = vmatprep.mubr.bf16.mxu0 %v4295
        %6644 = vmatmul.mubr.bf16.gmra.mxu0 %v4077
        %v6645 = vpop.f32.mrf.mxu0
        %v6646 = vadd.f32 %v6606, %v6645
        %v6647 = vpop.f32.mrf.mxu0
        %v6648 = vpop.f32.mrf.mxu0
        %v6649 = vpop.f32.mrf.mxu0
        %6650 = vdwg.mxu0
        %6651 = vmatprep.subr.bf16.mxu0 0
        %6652 = vmatpush1.bf16.msra.mxu0 %v5986
        %6653 = vmatprep.subr.bf16.mxu0 0
        %6654 = vmatpush1.bf16.msra.mxu0 %v5985
        %6655 = vmatprep.subr.bf16.mxu0 0
        %6656 = vmatpush1.bf16.msra.mxu0 %v5984
        %6657 = vmatprep.subr.bf16.mxu0 0
        %6658 = vmatpush1.bf16.msra.mxu0 %v5983
        %6659 = vmatprep.subr.bf16.mxu0 0
        %6660 = vmatpush1.bf16.msra.mxu0 %v5982
        %6661 = vmatprep.subr.bf16.mxu0 0
        %6662 = vmatpush1.bf16.msra.mxu0 %v5981
        %6663 = vmatprep.subr.bf16.mxu0 0
        %6664 = vmatpush1.bf16.msra.mxu0 %v5980
        %6665 = vmatprep.subr.bf16.mxu0 0
        %6666 = vmatpush1.bf16.msra.mxu0 %v5979
        %6667 = vmatprep.subr.bf16.mxu0 0
        %6668 = vmatpush2.bf16.msra.mxu0 %v5994
        %6669 = vmatprep.subr.bf16.mxu0 0
        %6670 = vmatpush2.bf16.msra.mxu0 %v5993
        %6671 = vmatprep.subr.bf16.mxu0 0
        %6672 = vmatpush2.bf16.msra.mxu0 %v5992
        %6673 = vmatprep.subr.bf16.mxu0 0
        %6674 = vmatpush2.bf16.msra.mxu0 %v5991
        %6675 = vmatprep.subr.bf16.mxu0 0
        %6676 = vmatpush2.bf16.msra.mxu0 %v5990
        %6677 = vmatprep.subr.bf16.mxu0 0
        %6678 = vmatpush2.bf16.msra.mxu0 %v5989
        %6679 = vmatprep.subr.bf16.mxu0 0
        %6680 = vmatpush2.bf16.msra.mxu0 %v5988
        %6681 = vmatprep.subr.bf16.mxu0 0
        %6682 = vmatpush2.bf16.msra.mxu0 %v5987
        %6683 = vmatprep.mubr.bf16.mxu0 %v4078
        %6684 = vmatmul.mubr.bf16.gmra.mxu0 %v4513
        %v6685 = vpop.f32.mrf.mxu0
        %v6686 = vadd.f32 %v6646, %v6685
        %v6687 = vpop.f32.mrf.mxu0
        %v6688 = vpop.f32.mrf.mxu0
        %v6689 = vpop.f32.mrf.mxu0
        %6690 = vdwg.mxu0
        %6691 = vmatprep.subr.bf16.mxu0 0
        %6692 = vmatpush1.bf16.msra.mxu0 %v6002
        %6693 = vmatprep.subr.bf16.mxu0 0
        %6694 = vmatpush1.bf16.msra.mxu0 %v6001
        %6695 = vmatprep.subr.bf16.mxu0 0
        %6696 = vmatpush1.bf16.msra.mxu0 %v6000
        %6697 = vmatprep.subr.bf16.mxu0 0
        %6698 = vmatpush1.bf16.msra.mxu0 %v5999
        %6699 = vmatprep.subr.bf16.mxu0 0
        %6700 = vmatpush1.bf16.msra.mxu0 %v5998
        %6701 = vmatprep.subr.bf16.mxu0 0
        %6702 = vmatpush1.bf16.msra.mxu0 %v5997
        %6703 = vmatprep.subr.bf16.mxu0 0
        %6704 = vmatpush1.bf16.msra.mxu0 %v5996
        %6705 = vmatprep.subr.bf16.mxu0 0
        %6706 = vmatpush1.bf16.msra.mxu0 %v5995
        %6707 = vmatprep.subr.bf16.mxu0 0
        %6708 = vmatpush2.bf16.msra.mxu0 %v6010
        %6709 = vmatprep.subr.bf16.mxu0 0
        %6710 = vmatpush2.bf16.msra.mxu0 %v6009
        %6711 = vmatprep.subr.bf16.mxu0 0
        %6712 = vmatpush2.bf16.msra.mxu0 %v6008
        %6713 = vmatprep.subr.bf16.mxu0 0
        %6714 = vmatpush2.bf16.msra.mxu0 %v6007
        %6715 = vmatprep.subr.bf16.mxu0 0
        %6716 = vmatpush2.bf16.msra.mxu0 %v6006
        %6717 = vmatprep.subr.bf16.mxu0 0
        %6718 = vmatpush2.bf16.msra.mxu0 %v6005
        %6719 = vmatprep.subr.bf16.mxu0 0
        %6720 = vmatpush2.bf16.msra.mxu0 %v6004
        %6721 = vmatprep.subr.bf16.mxu0 0
        %6722 = vmatpush2.bf16.msra.mxu0 %v6003
        %6723 = vmatprep.mubr.bf16.mxu0 %v4514
        %6724 = vmatmul.mubr.bf16.gmra.mxu0 %v4296
        %v6725 = vpop.f32.mrf.mxu0
        %v6726 = vadd.f32 %v6686, %v6725
        %v6727 = vpop.f32.mrf.mxu0
        %v6728 = vpop.f32.mrf.mxu0
        %v6729 = vpop.f32.mrf.mxu0
        %6730 = vdwg.mxu0
        %6731 = vmatprep.subr.bf16.mxu0 0
        %6732 = vmatpush1.bf16.msra.mxu0 %v6018
        %6733 = vmatprep.subr.bf16.mxu0 0
        %6734 = vmatpush1.bf16.msra.mxu0 %v6017
        %6735 = vmatprep.subr.bf16.mxu0 0
        %6736 = vmatpush1.bf16.msra.mxu0 %v6016
        %6737 = vmatprep.subr.bf16.mxu0 0
        %6738 = vmatpush1.bf16.msra.mxu0 %v6015
        %6739 = vmatprep.subr.bf16.mxu0 0
        %6740 = vmatpush1.bf16.msra.mxu0 %v6014
        %6741 = vmatprep.subr.bf16.mxu0 0
        %6742 = vmatpush1.bf16.msra.mxu0 %v6013
        %6743 = vmatprep.subr.bf16.mxu0 0
        %6744 = vmatpush1.bf16.msra.mxu0 %v6012
        %6745 = vmatprep.subr.bf16.mxu0 0
        %6746 = vmatpush1.bf16.msra.mxu0 %v6011
        %6747 = vmatprep.subr.bf16.mxu0 0
        %6748 = vmatpush2.bf16.msra.mxu0 %v6026
        %6749 = vmatprep.subr.bf16.mxu0 0
        %6750 = vmatpush2.bf16.msra.mxu0 %v6025
        %6751 = vmatprep.subr.bf16.mxu0 0
        %6752 = vmatpush2.bf16.msra.mxu0 %v6024
        %6753 = vmatprep.subr.bf16.mxu0 0
        %6754 = vmatpush2.bf16.msra.mxu0 %v6023
        %6755 = vmatprep.subr.bf16.mxu0 0
        %6756 = vmatpush2.bf16.msra.mxu0 %v6022
        %6757 = vmatprep.subr.bf16.mxu0 0
        %6758 = vmatpush2.bf16.msra.mxu0 %v6021
        %6759 = vmatprep.subr.bf16.mxu0 0
        %6760 = vmatpush2.bf16.msra.mxu0 %v6020
        %6761 = vmatprep.subr.bf16.mxu0 0
        %6762 = vmatpush2.bf16.msra.mxu0 %v6019
        %6763 = vmatprep.mubr.bf16.mxu0 %v4297
        %6764 = vmatmul.mubr.bf16.gmra.mxu0 %v4079
        %v6765 = vpop.f32.mrf.mxu0
        %v6766 = vadd.f32 %v6726, %v6765
        %v6767 = vpop.f32.mrf.mxu0
        %v6768 = vpop.f32.mrf.mxu0
        %v6769 = vpop.f32.mrf.mxu0
        %6770 = vdwg.mxu0
        %6771 = vmatprep.subr.bf16.mxu0 0
        %6772 = vmatpush1.bf16.msra.mxu0 %v6034
        %6773 = vmatprep.subr.bf16.mxu0 0
        %6774 = vmatpush1.bf16.msra.mxu0 %v6033
        %6775 = vmatprep.subr.bf16.mxu0 0
        %6776 = vmatpush1.bf16.msra.mxu0 %v6032
        %6777 = vmatprep.subr.bf16.mxu0 0
        %6778 = vmatpush1.bf16.msra.mxu0 %v6031
        %6779 = vmatprep.subr.bf16.mxu0 0
        %6780 = vmatpush1.bf16.msra.mxu0 %v6030
        %6781 = vmatprep.subr.bf16.mxu0 0
        %6782 = vmatpush1.bf16.msra.mxu0 %v6029
        %6783 = vmatprep.subr.bf16.mxu0 0
        %6784 = vmatpush1.bf16.msra.mxu0 %v6028
        %6785 = vmatprep.subr.bf16.mxu0 0
        %6786 = vmatpush1.bf16.msra.mxu0 %v6027
        %6787 = vmatprep.subr.bf16.mxu0 0
        %6788 = vmatpush2.bf16.msra.mxu0 0
        %6789 = vmatprep.subr.bf16.mxu0 0
        %6790 = vmatpush2.bf16.msra.mxu0 0
        %6791 = vmatprep.subr.bf16.mxu0 0
        %6792 = vmatpush2.bf16.msra.mxu0 0
        %6793 = vmatprep.subr.bf16.mxu0 0
        %6794 = vmatpush2.bf16.msra.mxu0 0
        %6795 = vmatprep.subr.bf16.mxu0 0
        %6796 = vmatpush2.bf16.msra.mxu0 0
        %6797 = vmatprep.subr.bf16.mxu0 0
        %6798 = vmatpush2.bf16.msra.mxu0 0
        %6799 = vmatprep.subr.bf16.mxu0 0
        %6800 = vmatpush2.bf16.msra.mxu0 0
        %6801 = vmatprep.subr.bf16.mxu0 0
        %6802 = vmatpush2.bf16.msra.mxu0 0
        %6803 = vmatprep.mubr.bf16.mxu0 0
        %6804 = vmatmul.mubr.bf16.gmra.mxu0 %v4515
        %v6805 = vpop.f32.mrf.mxu0
        %v6806 = vadd.f32 %v6766, %v6805
        %v6807 = vpop.f32.mrf.mxu0
        %v6808 = vpop.f32.mrf.mxu0
        %v6809 = vpop.f32.mrf.mxu0
        %6810 = vdwg.mxu0
        %v6811 = vmax.f32 %v6806, 0.0
        %v6812 = vpack.c.bf16 %v6811, %v6811
        %v6813 = vld [vmem:[#allocation14] sm:$0x3]
        %v6815 = vsel %vm3833, %v6813, 0
        %v6818 = vand.u32 %v6812, %v3839
        %6820 = vmatprep.subr.bf16.mxu0 0
        %6821 = vmatpush1.bf16.msra.mxu0 0
        %6822 = vmatprep.subr.bf16.mxu0 0
        %6823 = vmatpush1.bf16.msra.mxu0 0
        %6824 = vmatprep.subr.bf16.mxu0 0
        %6825 = vmatpush1.bf16.msra.mxu0 0
        %6826 = vmatprep.subr.bf16.mxu0 0
        %6827 = vmatpush1.bf16.msra.mxu0 0
        %6828 = vmatprep.subr.bf16.mxu0 0
        %6829 = vmatpush1.bf16.msra.mxu0 0
        %6830 = vmatprep.subr.bf16.mxu0 0
        %6831 = vmatpush1.bf16.msra.mxu0 0
        %6832 = vmatprep.subr.bf16.mxu0 0
        %6833 = vmatpush1.bf16.msra.mxu0 0
        %6834 = vmatprep.subr.bf16.mxu0 0
        %6835 = vmatpush1.bf16.msra.mxu0 %v6818
        %6836 = vmatprep.subr.bf16.mxu0 0
        %6837 = vmatpush2.bf16.msra.mxu0 0
        %6838 = vmatprep.subr.bf16.mxu0 0
        %6839 = vmatpush2.bf16.msra.mxu0 0
        %6840 = vmatprep.subr.bf16.mxu0 0
        %6841 = vmatpush2.bf16.msra.mxu0 0
        %6842 = vmatprep.subr.bf16.mxu0 0
        %6843 = vmatpush2.bf16.msra.mxu0 0
        %6844 = vmatprep.subr.bf16.mxu0 0
        %6845 = vmatpush2.bf16.msra.mxu0 0
        %6846 = vmatprep.subr.bf16.mxu0 0
        %6847 = vmatpush2.bf16.msra.mxu0 0
        %6848 = vmatprep.subr.bf16.mxu0 0
        %6849 = vmatpush2.bf16.msra.mxu0 0
        %6850 = vmatprep.subr.bf16.mxu0 0
        %6851 = vmatpush2.bf16.msra.mxu0 0
        %6852 = vmatprep.mubr.bf16.mxu0 0
        %6853 = vmatmul.mubr.bf16.gmra.mxu0 %v6815
        %v6854 = vpop.f32.mrf.mxu0
        %v6855 = vadd.f32 0.0, %v6854
        %v6856 = vpop.f32.mrf.mxu0
        %v6857 = vpop.f32.mrf.mxu0
        %v6858 = vpop.f32.mrf.mxu0
        %6859 = vdwg.mxu0
        %v6860 = vpack.c.bf16 %v6855, %v6855
        %s6861 = scalar_lea.vmem [#allocation14], 2
        %v6862 = vld [vmem:[%s6861] sm:$0x3]
        %v6864 = vsel %vm3833, %v6862, 0
        %6866 = vmatprep.subr.bf16.mxu0 0
        %6867 = vmatpush1.bf16.msra.mxu0 0
        %6868 = vmatprep.subr.bf16.mxu0 0
        %6869 = vmatpush1.bf16.msra.mxu0 0
        %6870 = vmatprep.subr.bf16.mxu0 0
        %6871 = vmatpush1.bf16.msra.mxu0 0
        %6872 = vmatprep.subr.bf16.mxu0 0
        %6873 = vmatpush1.bf16.msra.mxu0 0
        %6874 = vmatprep.subr.bf16.mxu0 0
        %6875 = vmatpush1.bf16.msra.mxu0 0
        %6876 = vmatprep.subr.bf16.mxu0 0
        %6877 = vmatpush1.bf16.msra.mxu0 0
        %6878 = vmatprep.subr.bf16.mxu0 0
        %6879 = vmatpush1.bf16.msra.mxu0 0
        %6880 = vmatprep.subr.bf16.mxu0 0
        %6881 = vmatpush1.bf16.msra.mxu0 %v6818
        %6882 = vmatprep.subr.bf16.mxu0 0
        %6883 = vmatpush2.bf16.msra.mxu0 0
        %6884 = vmatprep.subr.bf16.mxu0 0
        %6885 = vmatpush2.bf16.msra.mxu0 0
        %6886 = vmatprep.subr.bf16.mxu0 0
        %6887 = vmatpush2.bf16.msra.mxu0 0
        %6888 = vmatprep.subr.bf16.mxu0 0
        %6889 = vmatpush2.bf16.msra.mxu0 0
        %6890 = vmatprep.subr.bf16.mxu0 0
        %6891 = vmatpush2.bf16.msra.mxu0 0
        %6892 = vmatprep.subr.bf16.mxu0 0
        %6893 = vmatpush2.bf16.msra.mxu0 0
        %6894 = vmatprep.subr.bf16.mxu0 0
        %6895 = vmatpush2.bf16.msra.mxu0 0
        %6896 = vmatprep.subr.bf16.mxu0 0
        %6897 = vmatpush2.bf16.msra.mxu0 0
        %6898 = vmatprep.mubr.bf16.mxu0 0
        %6899 = vmatmul.mubr.bf16.gmra.mxu0 %v6864
        %v6900 = vpop.f32.mrf.mxu0
        %v6901 = vadd.f32 0.0, %v6900
        %v6902 = vpop.f32.mrf.mxu0
        %v6903 = vpop.f32.mrf.mxu0
        %v6904 = vpop.f32.mrf.mxu0
        %6905 = vdwg.mxu0
        %v6906 = vpack.c.bf16 %v6901, %v6901
        %s6907 = scalar_lea.vmem [#allocation14], 4
        %v6908 = vld [vmem:[%s6907] sm:$0x3]
        %v6910 = vsel %vm3833, %v6908, 0
        %6912 = vmatprep.subr.bf16.mxu0 0
        %6913 = vmatpush1.bf16.msra.mxu0 0
        %6914 = vmatprep.subr.bf16.mxu0 0
        %6915 = vmatpush1.bf16.msra.mxu0 0
        %6916 = vmatprep.subr.bf16.mxu0 0
        %6917 = vmatpush1.bf16.msra.mxu0 0
        %6918 = vmatprep.subr.bf16.mxu0 0
        %6919 = vmatpush1.bf16.msra.mxu0 0
        %6920 = vmatprep.subr.bf16.mxu0 0
        %6921 = vmatpush1.bf16.msra.mxu0 0
        %6922 = vmatprep.subr.bf16.mxu0 0
        %6923 = vmatpush1.bf16.msra.mxu0 0
        %6924 = vmatprep.subr.bf16.mxu0 0
        %6925 = vmatpush1.bf16.msra.mxu0 0
        %6926 = vmatprep.subr.bf16.mxu0 0
        %6927 = vmatpush1.bf16.msra.mxu0 %v6818
        %6928 = vmatprep.subr.bf16.mxu0 0
        %6929 = vmatpush2.bf16.msra.mxu0 0
        %6930 = vmatprep.subr.bf16.mxu0 0
        %6931 = vmatpush2.bf16.msra.mxu0 0
        %6932 = vmatprep.subr.bf16.mxu0 0
        %6933 = vmatpush2.bf16.msra.mxu0 0
        %6934 = vmatprep.subr.bf16.mxu0 0
        %6935 = vmatpush2.bf16.msra.mxu0 0
        %6936 = vmatprep.subr.bf16.mxu0 0
        %6937 = vmatpush2.bf16.msra.mxu0 0
        %6938 = vmatprep.subr.bf16.mxu0 0
        %6939 = vmatpush2.bf16.msra.mxu0 0
        %6940 = vmatprep.subr.bf16.mxu0 0
        %6941 = vmatpush2.bf16.msra.mxu0 0
        %6942 = vmatprep.subr.bf16.mxu0 0
        %6943 = vmatpush2.bf16.msra.mxu0 0
        %6944 = vmatprep.mubr.bf16.mxu0 0
        %6945 = vmatmul.mubr.bf16.gmra.mxu0 %v6910
        %v6946 = vpop.f32.mrf.mxu0
        %v6947 = vadd.f32 0.0, %v6946
        %v6948 = vpop.f32.mrf.mxu0
        %v6949 = vpop.f32.mrf.mxu0
        %v6950 = vpop.f32.mrf.mxu0
        %6951 = vdwg.mxu0
        %v6952 = vpack.c.bf16 %v6947, %v6947
        %v6953 = vld [vmem:[#allocation16] sm:$0xf]
        %v6954 = vld [vmem:[#allocation16 + $0x4] sm:$0xf]
        %v6955 = vld [vmem:[#allocation16 + $0x8] sm:$0xf]
        %v6956 = vld [vmem:[#allocation16 + $0xc] sm:$0xf]
        %v6957 = vld [vmem:[#allocation16 + $0x10] sm:$0xf]
        %v6958 = vld [vmem:[#allocation16 + $0x14] sm:$0xf]
        %v6959 = vld [vmem:[#allocation16 + $0x18] sm:$0xf]
        %v6960 = vld [vmem:[#allocation16 + $0x1c] sm:$0xf]
        %v6961 = vld [vmem:[#allocation16 + $0x20] sm:$0xf]
        %v6962 = vld [vmem:[#allocation16 + $0x24] sm:$0xf]
        %v6963 = vld [vmem:[#allocation16 + $0x28] sm:$0xf]
        %v6964 = vld [vmem:[#allocation16 + $0x2c] sm:$0xf]
        %v6965 = vld [vmem:[#allocation16 + $0x30] sm:$0xf]
        %v6966 = vld [vmem:[#allocation16 + $0x34] sm:$0xf]
        %v6967 = vld [vmem:[#allocation16 + $0x38] sm:$0xf]
        %v6968 = vld [vmem:[#allocation16 + $0x3c] sm:$0xf]
        %v6969 = vld [vmem:[#allocation16 + $0x40] sm:$0xf]
        %v6970 = vld [vmem:[#allocation16 + $0x44] sm:$0xf]
        %v6971 = vld [vmem:[#allocation16 + $0x48] sm:$0xf]
        %v6972 = vld [vmem:[#allocation16 + $0x4c] sm:$0xf]
        %v6973 = vld [vmem:[#allocation16 + $0x50] sm:$0xf]
        %v6974 = vld [vmem:[#allocation16 + $0x54] sm:$0xf]
        %v6975 = vld [vmem:[#allocation16 + $0x58] sm:$0xf]
        %v6976 = vld [vmem:[#allocation16 + $0x5c] sm:$0xf]
        %v6977 = vld [vmem:[#allocation16 + $0x60] sm:$0xf]
        %v6978 = vld [vmem:[#allocation16 + $0x64] sm:$0xf]
        %v6979 = vld [vmem:[#allocation16 + $0x68] sm:$0xf]
        %v6980 = vld [vmem:[#allocation16 + $0x6c] sm:$0xf]
        %v6981 = vld [vmem:[#allocation16 + $0x70] sm:$0xf]
        %v6982 = vld [vmem:[#allocation16 + $0x74] sm:$0xf]
        %v6983 = vld [vmem:[#allocation16 + $0x78] sm:$0xf]
        %v6984 = vld [vmem:[#allocation16 + $0x7c] sm:$0xf]
        %v6985 = vld [vmem:[#allocation16 + $0x80] sm:$0xf]
        %v6986 = vld [vmem:[#allocation16 + $0x84] sm:$0xf]
        %v6987 = vld [vmem:[#allocation16 + $0x88] sm:$0xf]
        %v6988 = vld [vmem:[#allocation16 + $0x8c] sm:$0xf]
        %v6989 = vld [vmem:[#allocation16 + $0x90] sm:$0xf]
        %v6990 = vld [vmem:[#allocation16 + $0x94] sm:$0xf]
        %v6991 = vld [vmem:[#allocation16 + $0x98] sm:$0xf]
        %v6992 = vld [vmem:[#allocation16 + $0x9c] sm:$0xf]
        %v6993 = vld [vmem:[#allocation16 + $0xa0] sm:$0xf]
        %v6994 = vld [vmem:[#allocation16 + $0xa4] sm:$0xf]
        %v6995 = vld [vmem:[#allocation16 + $0xa8] sm:$0xf]
        %v6996 = vld [vmem:[#allocation16 + $0xac] sm:$0xf]
        %v6997 = vld [vmem:[#allocation16 + $0xb0] sm:$0xf]
        %v6998 = vld [vmem:[#allocation16 + $0xb4] sm:$0xf]
        %v6999 = vld [vmem:[#allocation16 + $0xb8] sm:$0xf]
        %v7000 = vld [vmem:[#allocation16 + $0xbc] sm:$0xf]
        %v7001 = vld [vmem:[%s12] sm:$0x1]
        %v7003 = vlaneseq
        %v7004 = vshrl.u32 %v7003, 7
        %v7005 = vsub.s32 0, %v7004
        %v7006 = vrot.slane %v7001, %v7005
        %v7056 = vunpack.c.l.b16 %v6953
        %v7057 = vunpack.c.l.b16 %v6954
        %v7058 = vunpack.c.l.b16 %v6955
        %v7059 = vunpack.c.l.b16 %v6956
        %v7060 = vunpack.c.l.b16 %v6957
        %v7061 = vunpack.c.l.b16 %v6958
        %v7062 = vunpack.c.l.b16 %v6959
        %v7063 = vunpack.c.l.b16 %v6960
        %v7064 = vunpack.c.l.b16 %v6961
        %v7065 = vunpack.c.l.b16 %v6962
        %v7066 = vunpack.c.l.b16 %v6963
        %v7067 = vunpack.c.l.b16 %v6964
        %v7068 = vunpack.c.l.b16 %v6965
        %v7069 = vunpack.c.l.b16 %v6966
        %v7070 = vunpack.c.l.b16 %v6967
        %v7071 = vunpack.c.l.b16 %v6968
        %v7072 = vunpack.c.l.b16 %v6969
        %v7073 = vunpack.c.l.b16 %v6970
        %v7074 = vunpack.c.l.b16 %v6971
        %v7075 = vunpack.c.l.b16 %v6972
        %v7076 = vunpack.c.l.b16 %v6973
        %v7077 = vunpack.c.l.b16 %v6974
        %v7078 = vunpack.c.l.b16 %v6975
        %v7079 = vunpack.c.l.b16 %v6976
        %v7080 = vunpack.c.l.b16 %v6977
        %v7081 = vunpack.c.l.b16 %v6978
        %v7082 = vunpack.c.l.b16 %v6979
        %v7083 = vunpack.c.l.b16 %v6980
        %v7084 = vunpack.c.l.b16 %v6981
        %v7085 = vunpack.c.l.b16 %v6982
        %v7086 = vunpack.c.l.b16 %v6983
        %v7087 = vunpack.c.l.b16 %v6984
        %v7088 = vunpack.c.l.b16 %v6985
        %v7089 = vunpack.c.l.b16 %v6986
        %v7090 = vunpack.c.l.b16 %v6987
        %v7091 = vunpack.c.l.b16 %v6988
        %v7092 = vunpack.c.l.b16 %v6989
        %v7093 = vunpack.c.l.b16 %v6990
        %v7094 = vunpack.c.l.b16 %v6991
        %v7095 = vunpack.c.l.b16 %v6992
        %v7096 = vunpack.c.l.b16 %v6993
        %v7097 = vunpack.c.l.b16 %v6994
        %v7098 = vunpack.c.l.b16 %v6995
        %v7099 = vunpack.c.l.b16 %v6996
        %v7100 = vunpack.c.l.b16 %v6997
        %v7101 = vunpack.c.l.b16 %v6998
        %v7102 = vunpack.c.l.b16 %v6999
        %v7103 = vunpack.c.l.b16 %v7000
        %v7104 = vpack.c.b16 %v7057, %v7056
        %v7105 = vpack.c.b16 %v7059, %v7058
        %v7106 = vpack.c.b16 %v7061, %v7060
        %v7107 = vpack.c.b16 %v7063, %v7062
        %v7108 = vpack.c.b16 %v7065, %v7064
        %v7109 = vpack.c.b16 %v7067, %v7066
        %v7110 = vpack.c.b16 %v7069, %v7068
        %v7111 = vpack.c.b16 %v7071, %v7070
        %v7112 = vpack.c.b16 %v7073, %v7072
        %v7113 = vpack.c.b16 %v7075, %v7074
        %v7114 = vpack.c.b16 %v7077, %v7076
        %v7115 = vpack.c.b16 %v7079, %v7078
        %v7116 = vpack.c.b16 %v7081, %v7080
        %v7117 = vpack.c.b16 %v7083, %v7082
        %v7118 = vpack.c.b16 %v7085, %v7084
        %v7119 = vpack.c.b16 %v7087, %v7086
        %v7120 = vpack.c.b16 %v7089, %v7088
        %v7121 = vpack.c.b16 %v7091, %v7090
        %v7122 = vpack.c.b16 %v7093, %v7092
        %v7123 = vpack.c.b16 %v7095, %v7094
        %v7124 = vpack.c.b16 %v7097, %v7096
        %v7125 = vpack.c.b16 %v7099, %v7098
        %v7126 = vpack.c.b16 %v7101, %v7100
        %v7127 = vpack.c.b16 %v7103, %v7102
        %7152 = vmatprep.subr.bf16.mxu0 0
        %7153 = vmatpush1.bf16.msra.mxu0 %v7111
        %7154 = vmatprep.subr.bf16.mxu0 0
        %7155 = vmatpush1.bf16.msra.mxu0 %v7110
        %7156 = vmatprep.subr.bf16.mxu0 0
        %7157 = vmatpush1.bf16.msra.mxu0 %v7109
        %7158 = vmatprep.subr.bf16.mxu0 0
        %7159 = vmatpush1.bf16.msra.mxu0 %v7108
        %7160 = vmatprep.subr.bf16.mxu0 0
        %7161 = vmatpush1.bf16.msra.mxu0 %v7107
        %7162 = vmatprep.subr.bf16.mxu0 0
        %7163 = vmatpush1.bf16.msra.mxu0 %v7106
        %7164 = vmatprep.subr.bf16.mxu0 0
        %7165 = vmatpush1.bf16.msra.mxu0 %v7105
        %7166 = vmatprep.subr.bf16.mxu0 0
        %7167 = vmatpush1.bf16.msra.mxu0 %v7104
        %7168 = vmatprep.subr.bf16.mxu0 0
        %7169 = vmatpush2.bf16.msra.mxu0 %v7119
        %7170 = vmatprep.subr.bf16.mxu0 0
        %7171 = vmatpush2.bf16.msra.mxu0 %v7118
        %7172 = vmatprep.subr.bf16.mxu0 0
        %7173 = vmatpush2.bf16.msra.mxu0 %v7117
        %7174 = vmatprep.subr.bf16.mxu0 0
        %7175 = vmatpush2.bf16.msra.mxu0 %v7116
        %7176 = vmatprep.subr.bf16.mxu0 0
        %7177 = vmatpush2.bf16.msra.mxu0 %v7115
        %7178 = vmatprep.subr.bf16.mxu0 0
        %7179 = vmatpush2.bf16.msra.mxu0 %v7114
        %7180 = vmatprep.subr.bf16.mxu0 0
        %7181 = vmatpush2.bf16.msra.mxu0 %v7113
        %7182 = vmatprep.subr.bf16.mxu0 0
        %7183 = vmatpush2.bf16.msra.mxu0 %v7112
        %7184 = vmatprep.mubr.bf16.mxu0 %v6906
        %7185 = vmatmul.mubr.bf16.gmra.mxu0 %v6860
        %v7186 = vpop.f32.mrf.mxu0
        %v7187 = vadd.f32 %v7006, %v7186
        %v7188 = vpop.f32.mrf.mxu0
        %v7189 = vpop.f32.mrf.mxu0
        %v7190 = vpop.f32.mrf.mxu0
        %7191 = vdwg.mxu0
        %7192 = vmatprep.subr.bf16.mxu0 0
        %7193 = vmatpush1.bf16.msra.mxu0 %v7127
        %7194 = vmatprep.subr.bf16.mxu0 0
        %7195 = vmatpush1.bf16.msra.mxu0 %v7126
        %7196 = vmatprep.subr.bf16.mxu0 0
        %7197 = vmatpush1.bf16.msra.mxu0 %v7125
        %7198 = vmatprep.subr.bf16.mxu0 0
        %7199 = vmatpush1.bf16.msra.mxu0 %v7124
        %7200 = vmatprep.subr.bf16.mxu0 0
        %7201 = vmatpush1.bf16.msra.mxu0 %v7123
        %7202 = vmatprep.subr.bf16.mxu0 0
        %7203 = vmatpush1.bf16.msra.mxu0 %v7122
        %7204 = vmatprep.subr.bf16.mxu0 0
        %7205 = vmatpush1.bf16.msra.mxu0 %v7121
        %7206 = vmatprep.subr.bf16.mxu0 0
        %7207 = vmatpush1.bf16.msra.mxu0 %v7120
        %7208 = vmatprep.subr.bf16.mxu0 0
        %7209 = vmatpush2.bf16.msra.mxu0 0
        %7210 = vmatprep.subr.bf16.mxu0 0
        %7211 = vmatpush2.bf16.msra.mxu0 0
        %7212 = vmatprep.subr.bf16.mxu0 0
        %7213 = vmatpush2.bf16.msra.mxu0 0
        %7214 = vmatprep.subr.bf16.mxu0 0
        %7215 = vmatpush2.bf16.msra.mxu0 0
        %7216 = vmatprep.subr.bf16.mxu0 0
        %7217 = vmatpush2.bf16.msra.mxu0 0
        %7218 = vmatprep.subr.bf16.mxu0 0
        %7219 = vmatpush2.bf16.msra.mxu0 0
        %7220 = vmatprep.subr.bf16.mxu0 0
        %7221 = vmatpush2.bf16.msra.mxu0 0
        %7222 = vmatprep.subr.bf16.mxu0 0
        %7223 = vmatpush2.bf16.msra.mxu0 0
        %7224 = vmatprep.mubr.bf16.mxu0 0
        %7225 = vmatmul.mubr.bf16.gmra.mxu0 %v6952
        %v7226 = vpop.f32.mrf.mxu0
        %v7227 = vadd.f32 %v7187, %v7226
        %v7228 = vpop.f32.mrf.mxu0
        %v7229 = vpop.f32.mrf.mxu0
        %v7230 = vpop.f32.mrf.mxu0
        %7231 = vdwg.mxu0
        %v7232 = vpack.c.bf16 %v7227, %v7227
        %v7233 = vld [vmem:[#allocation17] sm:$0x3]
        %vm7234 = vcmask 31744
        %v7236 = vsel %vm7234, %v7233, 0
        %vm7238 = vcmask 1041408
        %v7240 = vsel %vm7238, %v7232, 0
        %7242 = vmatprep.subr.bf16.mxu0 0
        %7243 = vmatpush1.bf16.msra.mxu0 0
        %7244 = vmatprep.subr.bf16.mxu0 0
        %7245 = vmatpush1.bf16.msra.mxu0 0
        %7246 = vmatprep.subr.bf16.mxu0 0
        %7247 = vmatpush1.bf16.msra.mxu0 0
        %7248 = vmatprep.subr.bf16.mxu0 0
        %7249 = vmatpush1.bf16.msra.mxu0 0
        %7250 = vmatprep.subr.bf16.mxu0 0
        %7251 = vmatpush1.bf16.msra.mxu0 0
        %7252 = vmatprep.subr.bf16.mxu0 0
        %7253 = vmatpush1.bf16.msra.mxu0 0
        %7254 = vmatprep.subr.bf16.mxu0 0
        %7255 = vmatpush1.bf16.msra.mxu0 0
        %7256 = vmatprep.subr.bf16.mxu0 0
        %7257 = vmatpush1.bf16.msra.mxu0 %v7240
        %7258 = vmatprep.subr.bf16.mxu0 0
        %7259 = vmatpush2.bf16.msra.mxu0 0
        %7260 = vmatprep.subr.bf16.mxu0 0
        %7261 = vmatpush2.bf16.msra.mxu0 0
        %7262 = vmatprep.subr.bf16.mxu0 0
        %7263 = vmatpush2.bf16.msra.mxu0 0
        %7264 = vmatprep.subr.bf16.mxu0 0
        %7265 = vmatpush2.bf16.msra.mxu0 0
        %7266 = vmatprep.subr.bf16.mxu0 0
        %7267 = vmatpush2.bf16.msra.mxu0 0
        %7268 = vmatprep.subr.bf16.mxu0 0
        %7269 = vmatpush2.bf16.msra.mxu0 0
        %7270 = vmatprep.subr.bf16.mxu0 0
        %7271 = vmatpush2.bf16.msra.mxu0 0
        %7272 = vmatprep.subr.bf16.mxu0 0
        %7273 = vmatpush2.bf16.msra.mxu0 0
        %7274 = vmatprep.mubr.bf16.mxu0 0
        %7275 = vmatmul.mubr.bf16.gmra.mxu0 %v7236
        %v7276 = vpop.f32.mrf.mxu0
        %v7277 = vadd.f32 0.0, %v7276
        %v7278 = vpop.f32.mrf.mxu0
        %v7279 = vpop.f32.mrf.mxu0
        %v7280 = vpop.f32.mrf.mxu0
        %7281 = vdwg.mxu0
        %v7282 = vpack.c.bf16 %v7277, %v7277
        %s7283 = scalar_lea.vmem [#allocation17], 2
        %v7284 = vld [vmem:[%s7283] sm:$0x3]
        %v7286 = vsel %vm7234, %v7284, 0
        %7288 = vmatprep.subr.bf16.mxu0 0
        %7289 = vmatpush1.bf16.msra.mxu0 0
        %7290 = vmatprep.subr.bf16.mxu0 0
        %7291 = vmatpush1.bf16.msra.mxu0 0
        %7292 = vmatprep.subr.bf16.mxu0 0
        %7293 = vmatpush1.bf16.msra.mxu0 0
        %7294 = vmatprep.subr.bf16.mxu0 0
        %7295 = vmatpush1.bf16.msra.mxu0 0
        %7296 = vmatprep.subr.bf16.mxu0 0
        %7297 = vmatpush1.bf16.msra.mxu0 0
        %7298 = vmatprep.subr.bf16.mxu0 0
        %7299 = vmatpush1.bf16.msra.mxu0 0
        %7300 = vmatprep.subr.bf16.mxu0 0
        %7301 = vmatpush1.bf16.msra.mxu0 0
        %7302 = vmatprep.subr.bf16.mxu0 0
        %7303 = vmatpush1.bf16.msra.mxu0 %v7240
        %7304 = vmatprep.subr.bf16.mxu0 0
        %7305 = vmatpush2.bf16.msra.mxu0 0
        %7306 = vmatprep.subr.bf16.mxu0 0
        %7307 = vmatpush2.bf16.msra.mxu0 0
        %7308 = vmatprep.subr.bf16.mxu0 0
        %7309 = vmatpush2.bf16.msra.mxu0 0
        %7310 = vmatprep.subr.bf16.mxu0 0
        %7311 = vmatpush2.bf16.msra.mxu0 0
        %7312 = vmatprep.subr.bf16.mxu0 0
        %7313 = vmatpush2.bf16.msra.mxu0 0
        %7314 = vmatprep.subr.bf16.mxu0 0
        %7315 = vmatpush2.bf16.msra.mxu0 0
        %7316 = vmatprep.subr.bf16.mxu0 0
        %7317 = vmatpush2.bf16.msra.mxu0 0
        %7318 = vmatprep.subr.bf16.mxu0 0
        %7319 = vmatpush2.bf16.msra.mxu0 0
        %7320 = vmatprep.mubr.bf16.mxu0 0
        %7321 = vmatmul.mubr.bf16.gmra.mxu0 %v7286
        %v7322 = vpop.f32.mrf.mxu0
        %v7323 = vadd.f32 0.0, %v7322
        %v7324 = vpop.f32.mrf.mxu0
        %v7325 = vpop.f32.mrf.mxu0
        %v7326 = vpop.f32.mrf.mxu0
        %7327 = vdwg.mxu0
        %v7328 = vpack.c.bf16 %v7323, %v7323
        %s7329 = scalar_lea.vmem [#allocation17], 4
        %v7330 = vld [vmem:[%s7329] sm:$0x3]
        %v7332 = vsel %vm7234, %v7330, 0
        %7334 = vmatprep.subr.bf16.mxu0 0
        %7335 = vmatpush1.bf16.msra.mxu0 0
        %7336 = vmatprep.subr.bf16.mxu0 0
        %7337 = vmatpush1.bf16.msra.mxu0 0
        %7338 = vmatprep.subr.bf16.mxu0 0
        %7339 = vmatpush1.bf16.msra.mxu0 0
        %7340 = vmatprep.subr.bf16.mxu0 0
        %7341 = vmatpush1.bf16.msra.mxu0 0
        %7342 = vmatprep.subr.bf16.mxu0 0
        %7343 = vmatpush1.bf16.msra.mxu0 0
        %7344 = vmatprep.subr.bf16.mxu0 0
        %7345 = vmatpush1.bf16.msra.mxu0 0
        %7346 = vmatprep.subr.bf16.mxu0 0
        %7347 = vmatpush1.bf16.msra.mxu0 0
        %7348 = vmatprep.subr.bf16.mxu0 0
        %7349 = vmatpush1.bf16.msra.mxu0 %v7240
        %7350 = vmatprep.subr.bf16.mxu0 0
        %7351 = vmatpush2.bf16.msra.mxu0 0
        %7352 = vmatprep.subr.bf16.mxu0 0
        %7353 = vmatpush2.bf16.msra.mxu0 0
        %7354 = vmatprep.subr.bf16.mxu0 0
        %7355 = vmatpush2.bf16.msra.mxu0 0
        %7356 = vmatprep.subr.bf16.mxu0 0
        %7357 = vmatpush2.bf16.msra.mxu0 0
        %7358 = vmatprep.subr.bf16.mxu0 0
        %7359 = vmatpush2.bf16.msra.mxu0 0
        %7360 = vmatprep.subr.bf16.mxu0 0
        %7361 = vmatpush2.bf16.msra.mxu0 0
        %7362 = vmatprep.subr.bf16.mxu0 0
        %7363 = vmatpush2.bf16.msra.mxu0 0
        %7364 = vmatprep.subr.bf16.mxu0 0
        %7365 = vmatpush2.bf16.msra.mxu0 0
        %7366 = vmatprep.mubr.bf16.mxu0 0
        %7367 = vmatmul.mubr.bf16.gmra.mxu0 %v7332
        %v7368 = vpop.f32.mrf.mxu0
        %v7369 = vadd.f32 0.0, %v7368
        %v7370 = vpop.f32.mrf.mxu0
        %v7371 = vpop.f32.mrf.mxu0
        %v7372 = vpop.f32.mrf.mxu0
        %7373 = vdwg.mxu0
        %v7374 = vpack.c.bf16 %v7369, %v7369
        %v7375 = vld [vmem:[#allocation19] sm:$0xf]
        %v7376 = vld [vmem:[#allocation19 + $0x4] sm:$0xf]
        %v7377 = vld [vmem:[#allocation19 + $0x8] sm:$0xf]
        %v7378 = vld [vmem:[#allocation19 + $0xc] sm:$0xf]
        %v7379 = vld [vmem:[#allocation19 + $0x10] sm:$0xf]
        %v7380 = vld [vmem:[#allocation19 + $0x14] sm:$0xf]
        %v7381 = vld [vmem:[#allocation19 + $0x18] sm:$0xf]
        %v7382 = vld [vmem:[#allocation19 + $0x1c] sm:$0xf]
        %v7383 = vld [vmem:[#allocation19 + $0x20] sm:$0xf]
        %v7384 = vld [vmem:[#allocation19 + $0x24] sm:$0xf]
        %v7385 = vld [vmem:[#allocation19 + $0x28] sm:$0xf]
        %v7386 = vld [vmem:[#allocation19 + $0x2c] sm:$0xf]
        %v7387 = vld [vmem:[#allocation19 + $0x30] sm:$0xf]
        %v7388 = vld [vmem:[#allocation19 + $0x34] sm:$0xf]
        %v7389 = vld [vmem:[#allocation19 + $0x38] sm:$0xf]
        %v7390 = vld [vmem:[#allocation19 + $0x3c] sm:$0xf]
        %v7391 = vld [vmem:[#allocation19 + $0x40] sm:$0xf]
        %v7392 = vld [vmem:[#allocation19 + $0x44] sm:$0xf]
        %v7393 = vld [vmem:[#allocation19 + $0x48] sm:$0xf]
        %v7394 = vld [vmem:[#allocation19 + $0x4c] sm:$0xf]
        %v7395 = vld [vmem:[#allocation19 + $0x50] sm:$0xf]
        %v7396 = vld [vmem:[#allocation19 + $0x54] sm:$0xf]
        %v7397 = vld [vmem:[#allocation19 + $0x58] sm:$0xf]
        %v7398 = vld [vmem:[#allocation19 + $0x5c] sm:$0xf]
        %v7399 = vld [vmem:[#allocation19 + $0x60] sm:$0xf]
        %v7400 = vld [vmem:[#allocation19 + $0x64] sm:$0xf]
        %v7401 = vld [vmem:[#allocation19 + $0x68] sm:$0xf]
        %v7402 = vld [vmem:[#allocation19 + $0x6c] sm:$0xf]
        %v7403 = vld [vmem:[#allocation19 + $0x70] sm:$0xf]
        %v7404 = vld [vmem:[#allocation19 + $0x74] sm:$0xf]
        %v7405 = vld [vmem:[#allocation19 + $0x78] sm:$0xf]
        %v7406 = vld [vmem:[#allocation19 + $0x7c] sm:$0xf]
        %v7407 = vld [vmem:[#allocation19 + $0x80] sm:$0xf]
        %v7408 = vld [vmem:[#allocation19 + $0x84] sm:$0xf]
        %v7409 = vld [vmem:[#allocation19 + $0x88] sm:$0xf]
        %v7410 = vld [vmem:[#allocation19 + $0x8c] sm:$0xf]
        %v7411 = vld [vmem:[#allocation19 + $0x90] sm:$0xf]
        %v7412 = vld [vmem:[#allocation19 + $0x94] sm:$0xf]
        %v7413 = vld [vmem:[#allocation19 + $0x98] sm:$0xf]
        %v7414 = vld [vmem:[#allocation19 + $0x9c] sm:$0xf]
        %v7415 = vld [vmem:[#allocation19 + $0xa0] sm:$0xf]
        %v7416 = vld [vmem:[#allocation19 + $0xa4] sm:$0xf]
        %v7417 = vld [vmem:[#allocation19 + $0xa8] sm:$0xf]
        %v7418 = vld [vmem:[#allocation19 + $0xac] sm:$0xf]
        %v7419 = vld [vmem:[#allocation19 + $0xb0] sm:$0xf]
        %v7420 = vld [vmem:[#allocation19 + $0xb4] sm:$0xf]
        %v7421 = vld [vmem:[#allocation19 + $0xb8] sm:$0xf]
        %v7422 = vld [vmem:[#allocation19 + $0xbc] sm:$0xf]
        %v7423 = vld [vmem:[#allocation20] sm:$0x1]
        %v7425 = vlaneseq
        %v7426 = vshrl.u32 %v7425, 7
        %v7427 = vsub.s32 0, %v7426
        %v7428 = vrot.slane %v7423, %v7427
        %v7478 = vunpack.c.l.b16 %v7375
        %v7479 = vunpack.c.l.b16 %v7376
        %v7480 = vunpack.c.l.b16 %v7377
        %v7481 = vunpack.c.l.b16 %v7378
        %v7482 = vunpack.c.l.b16 %v7379
        %v7483 = vunpack.c.l.b16 %v7380
        %v7484 = vunpack.c.l.b16 %v7381
        %v7485 = vunpack.c.l.b16 %v7382
        %v7486 = vunpack.c.l.b16 %v7383
        %v7487 = vunpack.c.l.b16 %v7384
        %v7488 = vunpack.c.l.b16 %v7385
        %v7489 = vunpack.c.l.b16 %v7386
        %v7490 = vunpack.c.l.b16 %v7387
        %v7491 = vunpack.c.l.b16 %v7388
        %v7492 = vunpack.c.l.b16 %v7389
        %v7493 = vunpack.c.l.b16 %v7390
        %v7494 = vunpack.c.l.b16 %v7391
        %v7495 = vunpack.c.l.b16 %v7392
        %v7496 = vunpack.c.l.b16 %v7393
        %v7497 = vunpack.c.l.b16 %v7394
        %v7498 = vunpack.c.l.b16 %v7395
        %v7499 = vunpack.c.l.b16 %v7396
        %v7500 = vunpack.c.l.b16 %v7397
        %v7501 = vunpack.c.l.b16 %v7398
        %v7502 = vunpack.c.l.b16 %v7399
        %v7503 = vunpack.c.l.b16 %v7400
        %v7504 = vunpack.c.l.b16 %v7401
        %v7505 = vunpack.c.l.b16 %v7402
        %v7506 = vunpack.c.l.b16 %v7403
        %v7507 = vunpack.c.l.b16 %v7404
        %v7508 = vunpack.c.l.b16 %v7405
        %v7509 = vunpack.c.l.b16 %v7406
        %v7510 = vunpack.c.l.b16 %v7407
        %v7511 = vunpack.c.l.b16 %v7408
        %v7512 = vunpack.c.l.b16 %v7409
        %v7513 = vunpack.c.l.b16 %v7410
        %v7514 = vunpack.c.l.b16 %v7411
        %v7515 = vunpack.c.l.b16 %v7412
        %v7516 = vunpack.c.l.b16 %v7413
        %v7517 = vunpack.c.l.b16 %v7414
        %v7518 = vunpack.c.l.b16 %v7415
        %v7519 = vunpack.c.l.b16 %v7416
        %v7520 = vunpack.c.l.b16 %v7417
        %v7521 = vunpack.c.l.b16 %v7418
        %v7522 = vunpack.c.l.b16 %v7419
        %v7523 = vunpack.c.l.b16 %v7420
        %v7524 = vunpack.c.l.b16 %v7421
        %v7525 = vunpack.c.l.b16 %v7422
        %v7526 = vpack.c.b16 %v7479, %v7478
        %v7527 = vpack.c.b16 %v7481, %v7480
        %v7528 = vpack.c.b16 %v7483, %v7482
        %v7529 = vpack.c.b16 %v7485, %v7484
        %v7530 = vpack.c.b16 %v7487, %v7486
        %v7531 = vpack.c.b16 %v7489, %v7488
        %v7532 = vpack.c.b16 %v7491, %v7490
        %v7533 = vpack.c.b16 %v7493, %v7492
        %v7534 = vpack.c.b16 %v7495, %v7494
        %v7535 = vpack.c.b16 %v7497, %v7496
        %v7536 = vpack.c.b16 %v7499, %v7498
        %v7537 = vpack.c.b16 %v7501, %v7500
        %v7538 = vpack.c.b16 %v7503, %v7502
        %v7539 = vpack.c.b16 %v7505, %v7504
        %v7540 = vpack.c.b16 %v7507, %v7506
        %v7541 = vpack.c.b16 %v7509, %v7508
        %v7542 = vpack.c.b16 %v7511, %v7510
        %v7543 = vpack.c.b16 %v7513, %v7512
        %v7544 = vpack.c.b16 %v7515, %v7514
        %v7545 = vpack.c.b16 %v7517, %v7516
        %v7546 = vpack.c.b16 %v7519, %v7518
        %v7547 = vpack.c.b16 %v7521, %v7520
        %v7548 = vpack.c.b16 %v7523, %v7522
        %v7549 = vpack.c.b16 %v7525, %v7524
        %7574 = vmatprep.subr.bf16.mxu0 0
        %7575 = vmatpush1.bf16.msra.mxu0 %v7533
        %7576 = vmatprep.subr.bf16.mxu0 0
        %7577 = vmatpush1.bf16.msra.mxu0 %v7532
        %7578 = vmatprep.subr.bf16.mxu0 0
        %7579 = vmatpush1.bf16.msra.mxu0 %v7531
        %7580 = vmatprep.subr.bf16.mxu0 0
        %7581 = vmatpush1.bf16.msra.mxu0 %v7530
        %7582 = vmatprep.subr.bf16.mxu0 0
        %7583 = vmatpush1.bf16.msra.mxu0 %v7529
        %7584 = vmatprep.subr.bf16.mxu0 0
        %7585 = vmatpush1.bf16.msra.mxu0 %v7528
        %7586 = vmatprep.subr.bf16.mxu0 0
        %7587 = vmatpush1.bf16.msra.mxu0 %v7527
        %7588 = vmatprep.subr.bf16.mxu0 0
        %7589 = vmatpush1.bf16.msra.mxu0 %v7526
        %7590 = vmatprep.subr.bf16.mxu0 0
        %7591 = vmatpush2.bf16.msra.mxu0 %v7541
        %7592 = vmatprep.subr.bf16.mxu0 0
        %7593 = vmatpush2.bf16.msra.mxu0 %v7540
        %7594 = vmatprep.subr.bf16.mxu0 0
        %7595 = vmatpush2.bf16.msra.mxu0 %v7539
        %7596 = vmatprep.subr.bf16.mxu0 0
        %7597 = vmatpush2.bf16.msra.mxu0 %v7538
        %7598 = vmatprep.subr.bf16.mxu0 0
        %7599 = vmatpush2.bf16.msra.mxu0 %v7537
        %7600 = vmatprep.subr.bf16.mxu0 0
        %7601 = vmatpush2.bf16.msra.mxu0 %v7536
        %7602 = vmatprep.subr.bf16.mxu0 0
        %7603 = vmatpush2.bf16.msra.mxu0 %v7535
        %7604 = vmatprep.subr.bf16.mxu0 0
        %7605 = vmatpush2.bf16.msra.mxu0 %v7534
        %7606 = vmatprep.mubr.bf16.mxu0 %v7328
        %7607 = vmatmul.mubr.bf16.gmra.mxu0 %v7282
        %v7608 = vpop.f32.mrf.mxu0
        %v7609 = vadd.f32 %v7428, %v7608
        %v7610 = vpop.f32.mrf.mxu0
        %v7611 = vpop.f32.mrf.mxu0
        %v7612 = vpop.f32.mrf.mxu0
        %7613 = vdwg.mxu0
        %7614 = vmatprep.subr.bf16.mxu0 0
        %7615 = vmatpush1.bf16.msra.mxu0 %v7549
        %7616 = vmatprep.subr.bf16.mxu0 0
        %7617 = vmatpush1.bf16.msra.mxu0 %v7548
        %7618 = vmatprep.subr.bf16.mxu0 0
        %7619 = vmatpush1.bf16.msra.mxu0 %v7547
        %7620 = vmatprep.subr.bf16.mxu0 0
        %7621 = vmatpush1.bf16.msra.mxu0 %v7546
        %7622 = vmatprep.subr.bf16.mxu0 0
        %7623 = vmatpush1.bf16.msra.mxu0 %v7545
        %7624 = vmatprep.subr.bf16.mxu0 0
        %7625 = vmatpush1.bf16.msra.mxu0 %v7544
        %7626 = vmatprep.subr.bf16.mxu0 0
        %7627 = vmatpush1.bf16.msra.mxu0 %v7543
        %7628 = vmatprep.subr.bf16.mxu0 0
        %7629 = vmatpush1.bf16.msra.mxu0 %v7542
        %7630 = vmatprep.subr.bf16.mxu0 0
        %7631 = vmatpush2.bf16.msra.mxu0 0
        %7632 = vmatprep.subr.bf16.mxu0 0
        %7633 = vmatpush2.bf16.msra.mxu0 0
        %7634 = vmatprep.subr.bf16.mxu0 0
        %7635 = vmatpush2.bf16.msra.mxu0 0
        %7636 = vmatprep.subr.bf16.mxu0 0
        %7637 = vmatpush2.bf16.msra.mxu0 0
        %7638 = vmatprep.subr.bf16.mxu0 0
        %7639 = vmatpush2.bf16.msra.mxu0 0
        %7640 = vmatprep.subr.bf16.mxu0 0
        %7641 = vmatpush2.bf16.msra.mxu0 0
        %7642 = vmatprep.subr.bf16.mxu0 0
        %7643 = vmatpush2.bf16.msra.mxu0 0
        %7644 = vmatprep.subr.bf16.mxu0 0
        %7645 = vmatpush2.bf16.msra.mxu0 0
        %7646 = vmatprep.mubr.bf16.mxu0 0
        %7647 = vmatmul.mubr.bf16.gmra.mxu0 %v7374
        %v7648 = vpop.f32.mrf.mxu0
        %v7649 = vadd.f32 %v7609, %v7648
        %v7650 = vpop.f32.mrf.mxu0
        %v7651 = vpop.f32.mrf.mxu0
        %v7652 = vpop.f32.mrf.mxu0
        %7653 = vdwg.mxu0
        %v7654 = vmax.f32 %v7649, 0.0
        %v7655 = vpack.c.bf16 %v7654, %v7654
        %v7656 = vld [vmem:[%s16] sm:$0x3]
        %v7658 = vsel %vm7234, %v7656, 0
        %v7661 = vsel %vm7238, %v7655, 0
        %7663 = vmatprep.subr.bf16.mxu0 0
        %7664 = vmatpush1.bf16.msra.mxu0 0
        %7665 = vmatprep.subr.bf16.mxu0 0
        %7666 = vmatpush1.bf16.msra.mxu0 0
        %7667 = vmatprep.subr.bf16.mxu0 0
        %7668 = vmatpush1.bf16.msra.mxu0 0
        %7669 = vmatprep.subr.bf16.mxu0 0
        %7670 = vmatpush1.bf16.msra.mxu0 0
        %7671 = vmatprep.subr.bf16.mxu0 0
        %7672 = vmatpush1.bf16.msra.mxu0 0
        %7673 = vmatprep.subr.bf16.mxu0 0
        %7674 = vmatpush1.bf16.msra.mxu0 0
        %7675 = vmatprep.subr.bf16.mxu0 0
        %7676 = vmatpush1.bf16.msra.mxu0 0
        %7677 = vmatprep.subr.bf16.mxu0 0
        %7678 = vmatpush1.bf16.msra.mxu0 %v7661
        %7679 = vmatprep.subr.bf16.mxu0 0
        %7680 = vmatpush2.bf16.msra.mxu0 0
        %7681 = vmatprep.subr.bf16.mxu0 0
        %7682 = vmatpush2.bf16.msra.mxu0 0
        %7683 = vmatprep.subr.bf16.mxu0 0
        %7684 = vmatpush2.bf16.msra.mxu0 0
        %7685 = vmatprep.subr.bf16.mxu0 0
        %7686 = vmatpush2.bf16.msra.mxu0 0
        %7687 = vmatprep.subr.bf16.mxu0 0
        %7688 = vmatpush2.bf16.msra.mxu0 0
        %7689 = vmatprep.subr.bf16.mxu0 0
        %7690 = vmatpush2.bf16.msra.mxu0 0
        %7691 = vmatprep.subr.bf16.mxu0 0
        %7692 = vmatpush2.bf16.msra.mxu0 0
        %7693 = vmatprep.subr.bf16.mxu0 0
        %7694 = vmatpush2.bf16.msra.mxu0 0
        %7695 = vmatprep.mubr.bf16.mxu0 0
        %7696 = vmatmul.mubr.bf16.gmra.mxu0 %v7658
        %v7697 = vpop.f32.mrf.mxu0
        %v7698 = vadd.f32 0.0, %v7697
        %v7699 = vpop.f32.mrf.mxu0
        %v7700 = vpop.f32.mrf.mxu0
        %v7701 = vpop.f32.mrf.mxu0
        %7702 = vdwg.mxu0
        %v7703 = vpack.c.bf16 %v7698, %v7698
        %s7704 = scalar_lea.vmem %s16, 2
        %v7705 = vld [vmem:[%s7704] sm:$0x3]
        %v7707 = vsel %vm7234, %v7705, 0
        %7709 = vmatprep.subr.bf16.mxu0 0
        %7710 = vmatpush1.bf16.msra.mxu0 0
        %7711 = vmatprep.subr.bf16.mxu0 0
        %7712 = vmatpush1.bf16.msra.mxu0 0
        %7713 = vmatprep.subr.bf16.mxu0 0
        %7714 = vmatpush1.bf16.msra.mxu0 0
        %7715 = vmatprep.subr.bf16.mxu0 0
        %7716 = vmatpush1.bf16.msra.mxu0 0
        %7717 = vmatprep.subr.bf16.mxu0 0
        %7718 = vmatpush1.bf16.msra.mxu0 0
        %7719 = vmatprep.subr.bf16.mxu0 0
        %7720 = vmatpush1.bf16.msra.mxu0 0
        %7721 = vmatprep.subr.bf16.mxu0 0
        %7722 = vmatpush1.bf16.msra.mxu0 0
        %7723 = vmatprep.subr.bf16.mxu0 0
        %7724 = vmatpush1.bf16.msra.mxu0 %v7661
        %7725 = vmatprep.subr.bf16.mxu0 0
        %7726 = vmatpush2.bf16.msra.mxu0 0
        %7727 = vmatprep.subr.bf16.mxu0 0
        %7728 = vmatpush2.bf16.msra.mxu0 0
        %7729 = vmatprep.subr.bf16.mxu0 0
        %7730 = vmatpush2.bf16.msra.mxu0 0
        %7731 = vmatprep.subr.bf16.mxu0 0
        %7732 = vmatpush2.bf16.msra.mxu0 0
        %7733 = vmatprep.subr.bf16.mxu0 0
        %7734 = vmatpush2.bf16.msra.mxu0 0
        %7735 = vmatprep.subr.bf16.mxu0 0
        %7736 = vmatpush2.bf16.msra.mxu0 0
        %7737 = vmatprep.subr.bf16.mxu0 0
        %7738 = vmatpush2.bf16.msra.mxu0 0
        %7739 = vmatprep.subr.bf16.mxu0 0
        %7740 = vmatpush2.bf16.msra.mxu0 0
        %7741 = vmatprep.mubr.bf16.mxu0 0
        %7742 = vmatmul.mubr.bf16.gmra.mxu0 %v7707
        %v7743 = vpop.f32.mrf.mxu0
        %v7744 = vadd.f32 0.0, %v7743
        %v7745 = vpop.f32.mrf.mxu0
        %v7746 = vpop.f32.mrf.mxu0
        %v7747 = vpop.f32.mrf.mxu0
        %7748 = vdwg.mxu0
        %v7749 = vpack.c.bf16 %v7744, %v7744
        %v7750 = vld [vmem:[#allocation22] sm:$0xf]
        %v7751 = vld [vmem:[#allocation22 + $0x4] sm:$0xf]
        %v7752 = vld [vmem:[#allocation22 + $0x8] sm:$0xf]
        %v7753 = vld [vmem:[#allocation22 + $0xc] sm:$0xf]
        %v7754 = vld [vmem:[#allocation22 + $0x10] sm:$0xf]
        %v7755 = vld [vmem:[#allocation22 + $0x14] sm:$0xf]
        %v7756 = vld [vmem:[#allocation22 + $0x18] sm:$0xf]
        %v7757 = vld [vmem:[#allocation22 + $0x1c] sm:$0xf]
        %v7758 = vld [vmem:[#allocation22 + $0x20] sm:$0xf]
        %v7759 = vld [vmem:[#allocation22 + $0x24] sm:$0xf]
        %v7760 = vld [vmem:[#allocation22 + $0x28] sm:$0xf]
        %v7761 = vld [vmem:[#allocation22 + $0x2c] sm:$0xf]
        %v7762 = vld [vmem:[#allocation22 + $0x30] sm:$0xf]
        %v7763 = vld [vmem:[#allocation22 + $0x34] sm:$0xf]
        %v7764 = vld [vmem:[#allocation22 + $0x38] sm:$0xf]
        %v7765 = vld [vmem:[#allocation22 + $0x3c] sm:$0xf]
        %v7766 = vld [vmem:[#allocation22 + $0x40] sm:$0xf]
        %v7767 = vld [vmem:[#allocation22 + $0x44] sm:$0xf]
        %v7768 = vld [vmem:[#allocation22 + $0x48] sm:$0xf]
        %v7769 = vld [vmem:[#allocation22 + $0x4c] sm:$0xf]
        %v7770 = vld [vmem:[#allocation22 + $0x50] sm:$0xf]
        %v7771 = vld [vmem:[#allocation22 + $0x54] sm:$0xf]
        %v7772 = vld [vmem:[#allocation22 + $0x58] sm:$0xf]
        %v7773 = vld [vmem:[#allocation22 + $0x5c] sm:$0xf]
        %v7774 = vld [vmem:[#allocation22 + $0x60] sm:$0xf]
        %v7775 = vld [vmem:[#allocation22 + $0x64] sm:$0xf]
        %v7776 = vld [vmem:[#allocation22 + $0x68] sm:$0xf]
        %v7777 = vld [vmem:[#allocation22 + $0x6c] sm:$0xf]
        %v7778 = vld [vmem:[#allocation22 + $0x70] sm:$0xf]
        %v7779 = vld [vmem:[#allocation22 + $0x74] sm:$0xf]
        %v7780 = vld [vmem:[#allocation22 + $0x78] sm:$0xf]
        %v7781 = vld [vmem:[#allocation22 + $0x7c] sm:$0xf]
        %v7782 = vld [vmem:[#allocation23] sm:$0x1]
        %v7784 = vlaneseq
        %v7785 = vshrl.u32 %v7784, 7
        %v7786 = vsub.s32 0, %v7785
        %v7787 = vrot.slane %v7782, %v7786
        %v7821 = vunpack.c.l.b16 %v7750
        %v7822 = vunpack.c.l.b16 %v7751
        %v7823 = vunpack.c.l.b16 %v7752
        %v7824 = vunpack.c.l.b16 %v7753
        %v7825 = vunpack.c.l.b16 %v7754
        %v7826 = vunpack.c.l.b16 %v7755
        %v7827 = vunpack.c.l.b16 %v7756
        %v7828 = vunpack.c.l.b16 %v7757
        %v7829 = vunpack.c.l.b16 %v7758
        %v7830 = vunpack.c.l.b16 %v7759
        %v7831 = vunpack.c.l.b16 %v7760
        %v7832 = vunpack.c.l.b16 %v7761
        %v7833 = vunpack.c.l.b16 %v7762
        %v7834 = vunpack.c.l.b16 %v7763
        %v7835 = vunpack.c.l.b16 %v7764
        %v7836 = vunpack.c.l.b16 %v7765
        %v7837 = vunpack.c.l.b16 %v7766
        %v7838 = vunpack.c.l.b16 %v7767
        %v7839 = vunpack.c.l.b16 %v7768
        %v7840 = vunpack.c.l.b16 %v7769
        %v7841 = vunpack.c.l.b16 %v7770
        %v7842 = vunpack.c.l.b16 %v7771
        %v7843 = vunpack.c.l.b16 %v7772
        %v7844 = vunpack.c.l.b16 %v7773
        %v7845 = vunpack.c.l.b16 %v7774
        %v7846 = vunpack.c.l.b16 %v7775
        %v7847 = vunpack.c.l.b16 %v7776
        %v7848 = vunpack.c.l.b16 %v7777
        %v7849 = vunpack.c.l.b16 %v7778
        %v7850 = vunpack.c.l.b16 %v7779
        %v7851 = vunpack.c.l.b16 %v7780
        %v7852 = vunpack.c.l.b16 %v7781
        %v7853 = vpack.c.b16 %v7822, %v7821
        %v7854 = vpack.c.b16 %v7824, %v7823
        %v7855 = vpack.c.b16 %v7826, %v7825
        %v7856 = vpack.c.b16 %v7828, %v7827
        %v7857 = vpack.c.b16 %v7830, %v7829
        %v7858 = vpack.c.b16 %v7832, %v7831
        %v7859 = vpack.c.b16 %v7834, %v7833
        %v7860 = vpack.c.b16 %v7836, %v7835
        %v7861 = vpack.c.b16 %v7838, %v7837
        %v7862 = vpack.c.b16 %v7840, %v7839
        %v7863 = vpack.c.b16 %v7842, %v7841
        %v7864 = vpack.c.b16 %v7844, %v7843
        %v7865 = vpack.c.b16 %v7846, %v7845
        %v7866 = vpack.c.b16 %v7848, %v7847
        %v7867 = vpack.c.b16 %v7850, %v7849
        %v7868 = vpack.c.b16 %v7852, %v7851
        %7885 = vmatprep.subr.bf16.mxu0 0
        %7886 = vmatpush1.bf16.msra.mxu0 %v7860
        %7887 = vmatprep.subr.bf16.mxu0 0
        %7888 = vmatpush1.bf16.msra.mxu0 %v7859
        %7889 = vmatprep.subr.bf16.mxu0 0
        %7890 = vmatpush1.bf16.msra.mxu0 %v7858
        %7891 = vmatprep.subr.bf16.mxu0 0
        %7892 = vmatpush1.bf16.msra.mxu0 %v7857
        %7893 = vmatprep.subr.bf16.mxu0 0
        %7894 = vmatpush1.bf16.msra.mxu0 %v7856
        %7895 = vmatprep.subr.bf16.mxu0 0
        %7896 = vmatpush1.bf16.msra.mxu0 %v7855
        %7897 = vmatprep.subr.bf16.mxu0 0
        %7898 = vmatpush1.bf16.msra.mxu0 %v7854
        %7899 = vmatprep.subr.bf16.mxu0 0
        %7900 = vmatpush1.bf16.msra.mxu0 %v7853
        %7901 = vmatprep.subr.bf16.mxu0 0
        %7902 = vmatpush2.bf16.msra.mxu0 %v7868
        %7903 = vmatprep.subr.bf16.mxu0 0
        %7904 = vmatpush2.bf16.msra.mxu0 %v7867
        %7905 = vmatprep.subr.bf16.mxu0 0
        %7906 = vmatpush2.bf16.msra.mxu0 %v7866
        %7907 = vmatprep.subr.bf16.mxu0 0
        %7908 = vmatpush2.bf16.msra.mxu0 %v7865
        %7909 = vmatprep.subr.bf16.mxu0 0
        %7910 = vmatpush2.bf16.msra.mxu0 %v7864
        %7911 = vmatprep.subr.bf16.mxu0 0
        %7912 = vmatpush2.bf16.msra.mxu0 %v7863
        %7913 = vmatprep.subr.bf16.mxu0 0
        %7914 = vmatpush2.bf16.msra.mxu0 %v7862
        %7915 = vmatprep.subr.bf16.mxu0 0
        %7916 = vmatpush2.bf16.msra.mxu0 %v7861
        %7917 = vmatprep.mubr.bf16.mxu0 %v7749
        %7918 = vmatmul.mubr.bf16.gmra.mxu0 %v7703
        %v7919 = vpop.f32.mrf.mxu0
        %v7920 = vadd.f32 %v7787, %v7919
        %v7921 = vpop.f32.mrf.mxu0
        %v7922 = vpop.f32.mrf.mxu0
        %v7923 = vpop.f32.mrf.mxu0
        %7924 = vdwg.mxu0
        %v7925 = vmax.f32 %v7920, 0.0
        %v7926 = vpack.c.bf16 %v7925, %v7925
        %v7927 = vld [vmem:[%s19] sm:$0x1]
        %vm7928 = vcmask 23552
        %v7930 = vsel %vm7928, %v7927, 0
        %vm7932 = vcmask 1040384
        %v7933 = vsel %vm7932, 4294967295, 65535
        %v7934 = vsel %vm7238, %v7933, 0
        %v7936 = vand.u32 %v7926, %v7934
        %7938 = vmatprep.subr.bf16.mxu0 0
        %7939 = vmatpush1.bf16.msra.mxu0 0
        %7940 = vmatprep.subr.bf16.mxu0 0
        %7941 = vmatpush1.bf16.msra.mxu0 0
        %7942 = vmatprep.subr.bf16.mxu0 0
        %7943 = vmatpush1.bf16.msra.mxu0 0
        %7944 = vmatprep.subr.bf16.mxu0 0
        %7945 = vmatpush1.bf16.msra.mxu0 0
        %7946 = vmatprep.subr.bf16.mxu0 0
        %7947 = vmatpush1.bf16.msra.mxu0 0
        %7948 = vmatprep.subr.bf16.mxu0 0
        %7949 = vmatpush1.bf16.msra.mxu0 0
        %7950 = vmatprep.subr.bf16.mxu0 0
        %7951 = vmatpush1.bf16.msra.mxu0 0
        %7952 = vmatprep.subr.bf16.mxu0 0
        %7953 = vmatpush1.bf16.msra.mxu0 %v7936
        %7954 = vmatprep.subr.bf16.mxu0 0
        %7955 = vmatpush2.bf16.msra.mxu0 0
        %7956 = vmatprep.subr.bf16.mxu0 0
        %7957 = vmatpush2.bf16.msra.mxu0 0
        %7958 = vmatprep.subr.bf16.mxu0 0
        %7959 = vmatpush2.bf16.msra.mxu0 0
        %7960 = vmatprep.subr.bf16.mxu0 0
        %7961 = vmatpush2.bf16.msra.mxu0 0
        %7962 = vmatprep.subr.bf16.mxu0 0
        %7963 = vmatpush2.bf16.msra.mxu0 0
        %7964 = vmatprep.subr.bf16.mxu0 0
        %7965 = vmatpush2.bf16.msra.mxu0 0
        %7966 = vmatprep.subr.bf16.mxu0 0
        %7967 = vmatpush2.bf16.msra.mxu0 0
        %7968 = vmatprep.subr.bf16.mxu0 0
        %7969 = vmatpush2.bf16.msra.mxu0 0
        %7970 = vmatprep.mubr.bf16.mxu0 0
        %7971 = vmatmul.mubr.bf16.gmra.mxu0 %v7930
        %v7972 = vpop.f32.mrf.mxu0
        %v7973 = vadd.f32 0.0, %v7972
        %v7974 = vpop.f32.mrf.mxu0
        %v7975 = vpop.f32.mrf.mxu0
        %v7976 = vpop.f32.mrf.mxu0
        %7977 = vdwg.mxu0
        %v7978 = vpack.c.bf16 %v7973, %v7973
        %s7979 = scalar_lea.vmem %s19, 1
        %v7980 = vld [vmem:[%s7979] sm:$0x1]
        %v7982 = vsel %vm7928, %v7980, 0
        %7984 = vmatprep.subr.bf16.mxu0 0
        %7985 = vmatpush1.bf16.msra.mxu0 0
        %7986 = vmatprep.subr.bf16.mxu0 0
        %7987 = vmatpush1.bf16.msra.mxu0 0
        %7988 = vmatprep.subr.bf16.mxu0 0
        %7989 = vmatpush1.bf16.msra.mxu0 0
        %7990 = vmatprep.subr.bf16.mxu0 0
        %7991 = vmatpush1.bf16.msra.mxu0 0
        %7992 = vmatprep.subr.bf16.mxu0 0
        %7993 = vmatpush1.bf16.msra.mxu0 0
        %7994 = vmatprep.subr.bf16.mxu0 0
        %7995 = vmatpush1.bf16.msra.mxu0 0
        %7996 = vmatprep.subr.bf16.mxu0 0
        %7997 = vmatpush1.bf16.msra.mxu0 0
        %7998 = vmatprep.subr.bf16.mxu0 0
        %7999 = vmatpush1.bf16.msra.mxu0 %v7936
        %8000 = vmatprep.subr.bf16.mxu0 0
        %8001 = vmatpush2.bf16.msra.mxu0 0
        %8002 = vmatprep.subr.bf16.mxu0 0
        %8003 = vmatpush2.bf16.msra.mxu0 0
        %8004 = vmatprep.subr.bf16.mxu0 0
        %8005 = vmatpush2.bf16.msra.mxu0 0
        %8006 = vmatprep.subr.bf16.mxu0 0
        %8007 = vmatpush2.bf16.msra.mxu0 0
        %8008 = vmatprep.subr.bf16.mxu0 0
        %8009 = vmatpush2.bf16.msra.mxu0 0
        %8010 = vmatprep.subr.bf16.mxu0 0
        %8011 = vmatpush2.bf16.msra.mxu0 0
        %8012 = vmatprep.subr.bf16.mxu0 0
        %8013 = vmatpush2.bf16.msra.mxu0 0
        %8014 = vmatprep.subr.bf16.mxu0 0
        %8015 = vmatpush2.bf16.msra.mxu0 0
        %8016 = vmatprep.mubr.bf16.mxu0 0
        %8017 = vmatmul.mubr.bf16.gmra.mxu0 %v7982
        %v8018 = vpop.f32.mrf.mxu0
        %v8019 = vadd.f32 0.0, %v8018
        %v8020 = vpop.f32.mrf.mxu0
        %v8021 = vpop.f32.mrf.mxu0
        %v8022 = vpop.f32.mrf.mxu0
        %8023 = vdwg.mxu0
        %v8024 = vpack.c.bf16 %v8019, %v8019
        %s8025 = scalar_lea.vmem %s19, 2
        %v8026 = vld [vmem:[%s8025] sm:$0x1]
        %v8028 = vsel %vm7928, %v8026, 0
        %8030 = vmatprep.subr.bf16.mxu0 0
        %8031 = vmatpush1.bf16.msra.mxu0 0
        %8032 = vmatprep.subr.bf16.mxu0 0
        %8033 = vmatpush1.bf16.msra.mxu0 0
        %8034 = vmatprep.subr.bf16.mxu0 0
        %8035 = vmatpush1.bf16.msra.mxu0 0
        %8036 = vmatprep.subr.bf16.mxu0 0
        %8037 = vmatpush1.bf16.msra.mxu0 0
        %8038 = vmatprep.subr.bf16.mxu0 0
        %8039 = vmatpush1.bf16.msra.mxu0 0
        %8040 = vmatprep.subr.bf16.mxu0 0
        %8041 = vmatpush1.bf16.msra.mxu0 0
        %8042 = vmatprep.subr.bf16.mxu0 0
        %8043 = vmatpush1.bf16.msra.mxu0 0
        %8044 = vmatprep.subr.bf16.mxu0 0
        %8045 = vmatpush1.bf16.msra.mxu0 %v7936
        %8046 = vmatprep.subr.bf16.mxu0 0
        %8047 = vmatpush2.bf16.msra.mxu0 0
        %8048 = vmatprep.subr.bf16.mxu0 0
        %8049 = vmatpush2.bf16.msra.mxu0 0
        %8050 = vmatprep.subr.bf16.mxu0 0
        %8051 = vmatpush2.bf16.msra.mxu0 0
        %8052 = vmatprep.subr.bf16.mxu0 0
        %8053 = vmatpush2.bf16.msra.mxu0 0
        %8054 = vmatprep.subr.bf16.mxu0 0
        %8055 = vmatpush2.bf16.msra.mxu0 0
        %8056 = vmatprep.subr.bf16.mxu0 0
        %8057 = vmatpush2.bf16.msra.mxu0 0
        %8058 = vmatprep.subr.bf16.mxu0 0
        %8059 = vmatpush2.bf16.msra.mxu0 0
        %8060 = vmatprep.subr.bf16.mxu0 0
        %8061 = vmatpush2.bf16.msra.mxu0 0
        %8062 = vmatprep.mubr.bf16.mxu0 0
        %8063 = vmatmul.mubr.bf16.gmra.mxu0 %v8028
        %v8064 = vpop.f32.mrf.mxu0
        %v8065 = vadd.f32 0.0, %v8064
        %v8066 = vpop.f32.mrf.mxu0
        %v8067 = vpop.f32.mrf.mxu0
        %v8068 = vpop.f32.mrf.mxu0
        %8069 = vdwg.mxu0
        %v8070 = vpack.c.bf16 %v8065, %v8065
        %v8071 = vld [vmem:[#allocation25] sm:$0xf]
        %v8072 = vld [vmem:[#allocation25 + $0x4] sm:$0xf]
        %v8073 = vld [vmem:[#allocation25 + $0x8] sm:$0xf]
        %v8074 = vld [vmem:[#allocation25 + $0xc] sm:$0xf]
        %v8075 = vld [vmem:[#allocation25 + $0x10] sm:$0xf]
        %v8076 = vld [vmem:[#allocation25 + $0x14] sm:$0xf]
        %v8077 = vld [vmem:[#allocation25 + $0x18] sm:$0xf]
        %v8078 = vld [vmem:[#allocation25 + $0x1c] sm:$0xf]
        %v8079 = vld [vmem:[#allocation25 + $0x20] sm:$0xf]
        %v8080 = vld [vmem:[#allocation25 + $0x24] sm:$0xf]
        %v8081 = vld [vmem:[#allocation25 + $0x28] sm:$0xf]
        %v8082 = vld [vmem:[#allocation25 + $0x2c] sm:$0xf]
        %v8083 = vld [vmem:[#allocation25 + $0x30] sm:$0xf]
        %v8084 = vld [vmem:[#allocation25 + $0x34] sm:$0xf]
        %v8085 = vld [vmem:[#allocation25 + $0x38] sm:$0xf]
        %v8086 = vld [vmem:[#allocation25 + $0x3c] sm:$0xf]
        %v8087 = vld [vmem:[#allocation25 + $0x40] sm:$0xf]
        %v8088 = vld [vmem:[#allocation25 + $0x44] sm:$0xf]
        %v8089 = vld [vmem:[#allocation25 + $0x48] sm:$0xf]
        %v8090 = vld [vmem:[#allocation25 + $0x4c] sm:$0xf]
        %v8091 = vld [vmem:[#allocation25 + $0x50] sm:$0xf]
        %v8092 = vld [vmem:[#allocation25 + $0x54] sm:$0xf]
        %v8093 = vld [vmem:[#allocation25 + $0x58] sm:$0xf]
        %v8094 = vld [vmem:[#allocation25 + $0x5c] sm:$0xf]
        %v8095 = vld [vmem:[#allocation25 + $0x60] sm:$0xf]
        %v8096 = vld [vmem:[#allocation25 + $0x64] sm:$0xf]
        %v8097 = vld [vmem:[#allocation25 + $0x68] sm:$0xf]
        %v8098 = vld [vmem:[#allocation25 + $0x6c] sm:$0xf]
        %v8099 = vld [vmem:[#allocation25 + $0x70] sm:$0xf]
        %v8100 = vld [vmem:[#allocation25 + $0x74] sm:$0xf]
        %v8101 = vld [vmem:[#allocation25 + $0x78] sm:$0xf]
        %v8102 = vld [vmem:[#allocation25 + $0x7c] sm:$0xf]
        %v8103 = vld [vmem:[#allocation25 + $0x80] sm:$0xf]
        %v8104 = vld [vmem:[#allocation25 + $0x84] sm:$0xf]
        %v8105 = vld [vmem:[#allocation25 + $0x88] sm:$0xf]
        %v8106 = vld [vmem:[#allocation25 + $0x8c] sm:$0xf]
        %v8107 = vld [vmem:[#allocation25 + $0x90] sm:$0xf]
        %v8108 = vld [vmem:[#allocation25 + $0x94] sm:$0xf]
        %v8109 = vld [vmem:[#allocation25 + $0x98] sm:$0xf]
        %v8110 = vld [vmem:[#allocation25 + $0x9c] sm:$0xf]
        %v8111 = vld [vmem:[#allocation25 + $0xa0] sm:$0xf]
        %v8112 = vld [vmem:[#allocation25 + $0xa4] sm:$0xf]
        %v8113 = vld [vmem:[#allocation25 + $0xa8] sm:$0xf]
        %v8114 = vld [vmem:[#allocation25 + $0xac] sm:$0xf]
        %v8115 = vld [vmem:[#allocation25 + $0xb0] sm:$0xf]
        %v8116 = vld [vmem:[#allocation25 + $0xb4] sm:$0xf]
        %v8117 = vld [vmem:[#allocation25 + $0xb8] sm:$0xf]
        %v8118 = vld [vmem:[#allocation25 + $0xbc] sm:$0xf]
        %v8119 = vld [vmem:[#allocation26] sm:$0x1]
        %v8168 = vunpack.c.l.b16 %v8071
        %v8169 = vunpack.c.l.b16 %v8072
        %v8170 = vunpack.c.l.b16 %v8073
        %v8171 = vunpack.c.l.b16 %v8074
        %v8172 = vunpack.c.l.b16 %v8075
        %v8173 = vunpack.c.l.b16 %v8076
        %v8174 = vunpack.c.l.b16 %v8077
        %v8175 = vunpack.c.l.b16 %v8078
        %v8176 = vunpack.c.l.b16 %v8079
        %v8177 = vunpack.c.l.b16 %v8080
        %v8178 = vunpack.c.l.b16 %v8081
        %v8179 = vunpack.c.l.b16 %v8082
        %v8180 = vunpack.c.l.b16 %v8083
        %v8181 = vunpack.c.l.b16 %v8084
        %v8182 = vunpack.c.l.b16 %v8085
        %v8183 = vunpack.c.l.b16 %v8086
        %v8184 = vunpack.c.l.b16 %v8087
        %v8185 = vunpack.c.l.b16 %v8088
        %v8186 = vunpack.c.l.b16 %v8089
        %v8187 = vunpack.c.l.b16 %v8090
        %v8188 = vunpack.c.l.b16 %v8091
        %v8189 = vunpack.c.l.b16 %v8092
        %v8190 = vunpack.c.l.b16 %v8093
        %v8191 = vunpack.c.l.b16 %v8094
        %v8192 = vunpack.c.l.b16 %v8095
        %v8193 = vunpack.c.l.b16 %v8096
        %v8194 = vunpack.c.l.b16 %v8097
        %v8195 = vunpack.c.l.b16 %v8098
        %v8196 = vunpack.c.l.b16 %v8099
        %v8197 = vunpack.c.l.b16 %v8100
        %v8198 = vunpack.c.l.b16 %v8101
        %v8199 = vunpack.c.l.b16 %v8102
        %v8200 = vunpack.c.l.b16 %v8103
        %v8201 = vunpack.c.l.b16 %v8104
        %v8202 = vunpack.c.l.b16 %v8105
        %v8203 = vunpack.c.l.b16 %v8106
        %v8204 = vunpack.c.l.b16 %v8107
        %v8205 = vunpack.c.l.b16 %v8108
        %v8206 = vunpack.c.l.b16 %v8109
        %v8207 = vunpack.c.l.b16 %v8110
        %v8208 = vunpack.c.l.b16 %v8111
        %v8209 = vunpack.c.l.b16 %v8112
        %v8210 = vunpack.c.l.b16 %v8113
        %v8211 = vunpack.c.l.b16 %v8114
        %v8212 = vunpack.c.l.b16 %v8115
        %v8213 = vunpack.c.l.b16 %v8116
        %v8214 = vunpack.c.l.b16 %v8117
        %v8215 = vunpack.c.l.b16 %v8118
        %v8216 = vpack.c.b16 %v8169, %v8168
        %v8217 = vpack.c.b16 %v8171, %v8170
        %v8218 = vpack.c.b16 %v8173, %v8172
        %v8219 = vpack.c.b16 %v8175, %v8174
        %v8220 = vpack.c.b16 %v8177, %v8176
        %v8221 = vpack.c.b16 %v8179, %v8178
        %v8222 = vpack.c.b16 %v8181, %v8180
        %v8223 = vpack.c.b16 %v8183, %v8182
        %v8224 = vpack.c.b16 %v8185, %v8184
        %v8225 = vpack.c.b16 %v8187, %v8186
        %v8226 = vpack.c.b16 %v8189, %v8188
        %v8227 = vpack.c.b16 %v8191, %v8190
        %v8228 = vpack.c.b16 %v8193, %v8192
        %v8229 = vpack.c.b16 %v8195, %v8194
        %v8230 = vpack.c.b16 %v8197, %v8196
        %v8231 = vpack.c.b16 %v8199, %v8198
        %v8232 = vpack.c.b16 %v8201, %v8200
        %v8233 = vpack.c.b16 %v8203, %v8202
        %v8234 = vpack.c.b16 %v8205, %v8204
        %v8235 = vpack.c.b16 %v8207, %v8206
        %v8236 = vpack.c.b16 %v8209, %v8208
        %v8237 = vpack.c.b16 %v8211, %v8210
        %v8238 = vpack.c.b16 %v8213, %v8212
        %v8239 = vpack.c.b16 %v8215, %v8214
        %8264 = vmatprep.subr.bf16.mxu0 0
        %8265 = vmatpush1.bf16.msra.mxu0 %v8223
        %8266 = vmatprep.subr.bf16.mxu0 0
        %8267 = vmatpush1.bf16.msra.mxu0 %v8222
        %8268 = vmatprep.subr.bf16.mxu0 0
        %8269 = vmatpush1.bf16.msra.mxu0 %v8221
        %8270 = vmatprep.subr.bf16.mxu0 0
        %8271 = vmatpush1.bf16.msra.mxu0 %v8220
        %8272 = vmatprep.subr.bf16.mxu0 0
        %8273 = vmatpush1.bf16.msra.mxu0 %v8219
        %8274 = vmatprep.subr.bf16.mxu0 0
        %8275 = vmatpush1.bf16.msra.mxu0 %v8218
        %8276 = vmatprep.subr.bf16.mxu0 0
        %8277 = vmatpush1.bf16.msra.mxu0 %v8217
        %8278 = vmatprep.subr.bf16.mxu0 0
        %8279 = vmatpush1.bf16.msra.mxu0 %v8216
        %8280 = vmatprep.subr.bf16.mxu0 0
        %8281 = vmatpush2.bf16.msra.mxu0 %v8231
        %8282 = vmatprep.subr.bf16.mxu0 0
        %8283 = vmatpush2.bf16.msra.mxu0 %v8230
        %8284 = vmatprep.subr.bf16.mxu0 0
        %8285 = vmatpush2.bf16.msra.mxu0 %v8229
        %8286 = vmatprep.subr.bf16.mxu0 0
        %8287 = vmatpush2.bf16.msra.mxu0 %v8228
        %8288 = vmatprep.subr.bf16.mxu0 0
        %8289 = vmatpush2.bf16.msra.mxu0 %v8227
        %8290 = vmatprep.subr.bf16.mxu0 0
        %8291 = vmatpush2.bf16.msra.mxu0 %v8226
        %8292 = vmatprep.subr.bf16.mxu0 0
        %8293 = vmatpush2.bf16.msra.mxu0 %v8225
        %8294 = vmatprep.subr.bf16.mxu0 0
        %8295 = vmatpush2.bf16.msra.mxu0 %v8224
        %8296 = vmatprep.mubr.bf16.mxu0 %v8024
        %8297 = vmatmul.mubr.bf16.gmra.mxu0 %v7978
        %v8298 = vpop.f32.mrf.mxu0
        %v8299 = vadd.f32 %v8119, %v8298
        %v8300 = vpop.f32.mrf.mxu0
        %v8301 = vpop.f32.mrf.mxu0
        %v8302 = vpop.f32.mrf.mxu0
        %8303 = vdwg.mxu0
        %8304 = vmatprep.subr.bf16.mxu0 0
        %8305 = vmatpush1.bf16.msra.mxu0 %v8239
        %8306 = vmatprep.subr.bf16.mxu0 0
        %8307 = vmatpush1.bf16.msra.mxu0 %v8238
        %8308 = vmatprep.subr.bf16.mxu0 0
        %8309 = vmatpush1.bf16.msra.mxu0 %v8237
        %8310 = vmatprep.subr.bf16.mxu0 0
        %8311 = vmatpush1.bf16.msra.mxu0 %v8236
        %8312 = vmatprep.subr.bf16.mxu0 0
        %8313 = vmatpush1.bf16.msra.mxu0 %v8235
        %8314 = vmatprep.subr.bf16.mxu0 0
        %8315 = vmatpush1.bf16.msra.mxu0 %v8234
        %8316 = vmatprep.subr.bf16.mxu0 0
        %8317 = vmatpush1.bf16.msra.mxu0 %v8233
        %8318 = vmatprep.subr.bf16.mxu0 0
        %8319 = vmatpush1.bf16.msra.mxu0 %v8232
        %8320 = vmatprep.subr.bf16.mxu0 0
        %8321 = vmatpush2.bf16.msra.mxu0 0
        %8322 = vmatprep.subr.bf16.mxu0 0
        %8323 = vmatpush2.bf16.msra.mxu0 0
        %8324 = vmatprep.subr.bf16.mxu0 0
        %8325 = vmatpush2.bf16.msra.mxu0 0
        %8326 = vmatprep.subr.bf16.mxu0 0
        %8327 = vmatpush2.bf16.msra.mxu0 0
        %8328 = vmatprep.subr.bf16.mxu0 0
        %8329 = vmatpush2.bf16.msra.mxu0 0
        %8330 = vmatprep.subr.bf16.mxu0 0
        %8331 = vmatpush2.bf16.msra.mxu0 0
        %8332 = vmatprep.subr.bf16.mxu0 0
        %8333 = vmatpush2.bf16.msra.mxu0 0
        %8334 = vmatprep.subr.bf16.mxu0 0
        %8335 = vmatpush2.bf16.msra.mxu0 0
        %8336 = vmatprep.mubr.bf16.mxu0 0
        %8337 = vmatmul.mubr.bf16.gmra.mxu0 %v8070
        %v8338 = vpop.f32.mrf.mxu0
        %v8339 = vadd.f32 %v8299, %v8338
        %v8340 = vpop.f32.mrf.mxu0
        %v8341 = vpop.f32.mrf.mxu0
        %v8342 = vpop.f32.mrf.mxu0
        %8343 = vdwg.mxu0
        %8344 = vst [vmem:[%s896] sm:$0x1] %v8339
        %s8345 = sand.u32 %s520, 1
        %s8346 = scalar_lea.sflag [#allocation4], %s8345
        %s8347 = sand.u32 %s520, 1
        %s8348 = scalar_lea.vmem [#allocation28], %s8347
        // Predicated region
        $region173: #{fwd.1} parent=107 // pred_check
          %p8349 = pneg %p530
        $region174: #{fwd.1} parent=107 // pred_check_branch
          %8351 = sbr.rel (%p8349) target = $region176
        $region175: #{fwd.1} parent=107 // pred_region
          %s8353 = ssub.s32 16, 16
          %8354 = vsyncadd %s8346, %s8353
          %s8355 = smul.addr %s45, 16
          %s8356 = scalar_lea.hbm %s22, %s8355
          %s8358 = sshll.u32 %s8348, 4
          %s8359 = int_to_ptr.vmem [resolvable:$true] %s8358
          %8361 = dma.vmem_to_hbm [thread:$0]  %s8359, 16, %s8356, %s8346
        $region176: #{fwd.1} parent=107 // pred_fallthru
          _
      $region108: #{fwd.1} parent=5 // pred_fallthru
        _
      %p8362 = scmp.le.s32.totalorder 2, %s40
      // Predicated region
      $region177: #{fwd.1} parent=5 // pred_check
        %p8363 = pneg %p8362
      $region178: #{fwd.1} parent=5 // pred_check_branch
        %8365 = sbr.rel (%p8363) target = $region180
      $region179: #{fwd.1} parent=5 // pred_region
        %s8366 = ssub.s32 %s40, 2
        // Predicated region
        $region181: #{fwd.1} parent=179 // pred_check
          %p8367 = pneg %p536
        $region182: #{fwd.1} parent=179 // pred_check_branch
          %8369 = sbr.rel (%p8367) target = $region184
        $region183: #{fwd.1} parent=179 // pred_region
          %s8370 = sand.u32 %s521, 1
          %s8371 = scalar_lea.sflag [#allocation4], %s8370
          %s8372 = sand.u32 %s521, 1
          %s8373 = scalar_lea.vmem [#allocation28], %s8372
          %8374 = dma.done %s8371, 16
        $region184: #{fwd.1} parent=179 // pred_fallthru
          _
      $region180: #{fwd.1} parent=5 // pred_fallthru
        _
    $region6: #{fwd.1} parent=1 // loop_footer
      %s44 = sadd.s32 1, %s40
    $region7: #{fwd.1} parent=1 // loop_footer_branch
      %39 = sbr.rel target = $region3
    $region8: #{fwd.1} parent=1 // loop_exit
      _
    %8375 = vsyncpa [#allocation3], 1
    %s8376 = scalar_lea.sflag [#allocation3], 1
    %8377 = vsyncpa %s8376, 1
    %8378 = vsyncpa [#allocation6], 1
    %8379 = vsyncpa [#allocation9], 1
    %8380 = vsyncpa [#allocation12], 1
    %8381 = vsyncpa [#allocation15], 1
    %8382 = vsyncpa [#allocation18], 1
    %8383 = vsyncpa [#allocation21], 1
    %8384 = vsyncpa [#allocation24], 1
    %8385 = vsyncpa [#allocation27], 1
    %8386 = vsyncpa [#allocation4], 1
    %s8387 = scalar_lea.sflag [#allocation4], 1
    %8388 = vsyncpa %s8387, 1

</llo_original>
